<compile_context>
chip_gen: v7x
topology: tpu7x:2x2x1
jax: 0.10.0
libtpu: 0.0.40
codegen_flags: <defaults>
</compile_context>

<pallas_src>
import functools

import jax
import jax.numpy as jnp
from jax.experimental import pallas as pl
from jax.experimental.pallas import tpu as pltpu

NEG_SLOPE = 0.01   # nn.LeakyReLU default
LN_EPS = 1e-5      # nn.LayerNorm default

# Row indices into the packed (13, H) bias / LayerNorm-parameter array.
(B_EMB, B_Q, B_K, B_V, B_O, LN1_G, LN1_B,
 B_FF1, B_FF2, LN2_G, LN2_B, B_R1, B_R2) = range(13)
# Indices into the packed (5, H, H) square-weight array.
W_O, W_FF1, W_FF2, W_R1, W_R2 = range(5)


def _layer_norm(x, gamma, beta):
    mean = jnp.mean(x, axis=-1, keepdims=True)
    xc = x - mean
    var = jnp.mean(xc * xc, axis=-1, keepdims=True)
    inv = jax.lax.rsqrt(var + LN_EPS)
    return xc * inv * gamma + beta


def _leaky_relu(x):
    return jnp.where(x > 0, x, NEG_SLOPE * x)


def generator_kernel(nhead, seq,
                     z_ref, w_emb_ref, w_qkv_ref, mat_ref, vec_ref,
                     w_out_ref, b_out_ref, o_ref):
    TM, in_dim = z_ref.shape           # TM = block_b * seq (flat 2D slab)
    H = w_emb_ref.shape[-1]
    S = seq
    TB = TM // S
    hd = H // nhead
    scale = 1.0 / float(hd) ** 0.5

    vec = vec_ref[...]                 # (13, H) f32, single load

    def vrow(i):                       # (1, H) broadcast row
        return vec[i:i + 1, :]

    def dense(x, w, bias=None):
        # bf16 operands, f32 MXU accumulation; bias add stays f32.
        y = jnp.dot(x.astype(w.dtype), w, preferred_element_type=jnp.float32)
        if bias is not None:
            y = y + bias
        return y

    # --- embedding Linear on the flat (TM, in) slab ---
    x = dense(z_ref[...], w_emb_ref[...], vrow(B_EMB))            # (TM, H) f32
    xm = x.astype(w_qkv_ref.dtype)

    # --- fused QKV projection: one MXU push with N = 3H ---
    qkv = jnp.dot(xm, w_qkv_ref[...], preferred_element_type=jnp.float32)  # (TM, 3H)
    q = (qkv[:, 0:H] + vrow(B_Q)) * scale
    k = qkv[:, H:2 * H] + vrow(B_K)
    v = qkv[:, 2 * H:3 * H] + vrow(B_V)

    # --- heads merged into the einsum batch dimension: (nhead*TB, S, hd) ---
    def to_heads(a):
        return jnp.concatenate(
            [a[:, h * hd:(h + 1) * hd].reshape(TB, S, hd) for h in range(nhead)],
            axis=0)

    qh, kh, vh = to_heads(q), to_heads(k), to_heads(v)
    s = jnp.einsum('bqd,bkd->bqk', qh, kh,
                   preferred_element_type=jnp.float32)            # (nhead*TB, S, S)
    s = s - jnp.max(s, axis=-1, keepdims=True)
    p = jnp.exp(s)
    p = p * pl.reciprocal(jnp.sum(p, axis=-1, keepdims=True), approx=True)
    ctx = jnp.einsum('bqk,bkd->bqd', p, vh,
                     preferred_element_type=jnp.float32)          # (nhead*TB, S, hd)

    # Heads back onto lanes (stays inside one 128-lane vreg), single out-projection.
    ctx_all = jnp.concatenate(
        [ctx[h * TB:(h + 1) * TB].reshape(TM, hd) for h in range(nhead)], axis=-1)
    attn = dense(ctx_all, mat_ref[W_O], vrow(B_O))                # (TM, H)

    # --- residual + LayerNorm 1 (post-norm) ---
    x = _layer_norm(x + attn, vrow(LN1_G), vrow(LN1_B))

    # --- feed-forward (ReLU), residual + LayerNorm 2 ---
    ff = jnp.maximum(dense(x, mat_ref[W_FF1], vrow(B_FF1)), 0.0)
    ff = dense(ff, mat_ref[W_FF2], vrow(B_FF2))
    x = _layer_norm(x + ff, vrow(LN2_G), vrow(LN2_B))

    # --- blocks: LeakyReLU, ResidualBlock x2, final Linear (lane-dense, padded) ---
    y = _leaky_relu(x)
    y = y + _leaky_relu(dense(y, mat_ref[W_R1], vrow(B_R1)))
    y = y + _leaky_relu(dense(y, mat_ref[W_R2], vrow(B_R2)))
    o_ref[...] = dense(y, w_out_ref[...], b_out_ref[...]).astype(o_ref.dtype)


def _default_grid_steps():
    # v7x has 2 TensorCores -> exactly 2 "parallel" grid steps (one block per core);
    # single-TC v5e/v6e -> grid=(1,) (extra grid steps are pure serial overhead).
    try:
        kind = jax.devices()[0].device_kind.lower()
    except Exception:
        return 1
    return 2 if "7" in kind else 1


def etransformer_generator(z, kernel_params, *, nhead, data_dim, grid_steps=None):
    B, S, in_dim = z.shape
    if grid_steps is None:
        grid_steps = _default_grid_steps()
    if B % grid_steps != 0:
        grid_steps = 1
    block_b = B // grid_steps
    TM = block_b * S

    w_emb, w_qkv, mat, vec, w_out, b_out = kernel_params
    H = w_emb.shape[-1]
    out_pad = w_out.shape[-1]
    M = B * S

    # Flat lane-dense 2D slabs at the pallas_call boundary.
    z2 = z.reshape(M, in_dim)

    # Advisory cost estimate for XLA scheduling around the custom call.
    flops = 2 * M * (in_dim * H + 3 * H * H + 5 * H * H + H * out_pad) \
        + 4 * B * nhead * S * S * (H // nhead)
    transcendentals = B * nhead * S * S + 4 * M
    bytes_accessed = (z2.size * z2.dtype.itemsize
                      + sum(int(p.size) * p.dtype.itemsize for p in kernel_params)
                      + M * out_pad * 4)

    weight_specs = [pl.BlockSpec(memory_space=pltpu.MemorySpace.VMEM)] * len(kernel_params)
    out = pl.pallas_call(
        functools.partial(generator_kernel, nhead, S),
        out_shape=jax.ShapeDtypeStruct((M, out_pad), jnp.float32),
        grid=(grid_steps,),
        in_specs=[pl.BlockSpec((TM, in_dim), lambda i: (i, 0))] + weight_specs,
        out_specs=pl.BlockSpec((TM, out_pad), lambda i: (i, 0)),
        compiler_params=pltpu.CompilerParams(dimension_semantics=("parallel",)),
        cost_estimate=pl.CostEstimate(flops=int(flops),
                                      transcendentals=int(transcendentals),
                                      bytes_accessed=int(bytes_accessed)),
    )(z2, *kernel_params)
    return out[:, :data_dim].reshape(B, S, data_dim)


def make_module_params(key, in_dim, hidden_dim, data_dim):
    """Deterministic synthetic 'module-style' f32 params. Weights are (in, out)."""
    ks = jax.random.split(key, 16)
    f32 = jnp.float32

    def w(k, shape, scale=0.1):
        return scale * jax.random.normal(k, shape, dtype=f32)

    H = hidden_dim
    return dict(
        w_emb=w(ks[0], (in_dim, H)), b_emb=w(ks[1], (H,)),
        w_q=w(ks[2], (H, H)), w_k=w(ks[3], (H, H)), w_v=w(ks[4], (H, H)),
        b_q=w(ks[5], (H,)), b_k=w(ks[6], (H,)), b_v=w(ks[7], (H,)),
        w_o=w(ks[8], (H, H)), b_o=w(ks[9], (H,)),
        ln1_g=jnp.ones((H,), f32), ln1_b=jnp.zeros((H,), f32),
        w_ff1=w(ks[10], (H, H)), b_ff1=w(ks[11], (H,)),
        w_ff2=w(ks[12], (H, H)), b_ff2=w(ks[13], (H,)),
        ln2_g=jnp.ones((H,), f32), ln2_b=jnp.zeros((H,), f32),
        w_r1=w(ks[14], (H, H)), b_r1=jnp.zeros((H,), f32),
        w_r2=w(ks[15], (H, H)), b_r2=jnp.zeros((H,), f32),
        w_out=w(jax.random.PRNGKey(123), (H, data_dim)),
        b_out=jnp.zeros((data_dim,), f32),
    )


def prepare_kernel_params(mp, *, out_pad, matmul_dtype=jnp.bfloat16):
    """Pack module params for the kernel:
       * w_qkv: fused (H, 3H) bf16 QKV weight (head columns stay contiguous per chunk)
       * mat:   (5, H, H) bf16 stacked square weights [w_o, w_ff1, w_ff2, w_r1, w_r2]
       * vec:   (13, H) f32 stacked biases + LayerNorm gammas/betas
       * w_out/b_out: zero-padded to a lane-dense OUT_PAD width."""
    H = mp['w_emb'].shape[-1]
    data_dim = mp['w_out'].shape[-1]

    w_emb = mp['w_emb'].astype(matmul_dtype)
    w_qkv = jnp.concatenate([mp['w_q'], mp['w_k'], mp['w_v']], axis=-1).astype(matmul_dtype)
    mat = jnp.stack([mp['w_o'], mp['w_ff1'], mp['w_ff2'],
                     mp['w_r1'], mp['w_r2']]).astype(matmul_dtype)
    vec = jnp.stack([mp['b_emb'], mp['b_q'], mp['b_k'], mp['b_v'], mp['b_o'],
                     mp['ln1_g'], mp['ln1_b'], mp['b_ff1'], mp['b_ff2'],
                     mp['ln2_g'], mp['ln2_b'], mp['b_r1'], mp['b_r2']]).astype(jnp.float32)
    w_out = (jnp.zeros((H, out_pad), jnp.float32)
             .at[:, :data_dim].set(mp['w_out'])).astype(matmul_dtype)
    b_out = (jnp.zeros((1, out_pad), jnp.float32)
             .at[:, :data_dim].set(mp['b_out'].reshape(1, -1)))
    return w_emb, w_qkv, mat, vec, w_out, b_out


def reference(z, mp, nhead):
    """Plain-JAX f32 reference with identical math (for validation). z: (B, S, in)."""
    x = z @ mp['w_emb'] + mp['b_emb']
    H = x.shape[-1]
    hd = H // nhead
    scale = 1.0 / float(hd) ** 0.5
    q = x @ mp['w_q'] + mp['b_q']
    k = x @ mp['w_k'] + mp['b_k']
    v = x @ mp['w_v'] + mp['b_v']
    heads = []
    for h in range(nhead):
        qh = q[..., h * hd:(h + 1) * hd] * scale
        kh = k[..., h * hd:(h + 1) * hd]
        vh = v[..., h * hd:(h + 1) * hd]
        p = jax.nn.softmax(jnp.einsum('bqd,bkd->bqk', qh, kh), axis=-1)
        heads.append(jnp.einsum('bqk,bkd->bqd', p, vh))
    attn = jnp.concatenate(heads, axis=-1) @ mp['w_o'] + mp['b_o']
    x = _layer_norm(x + attn, mp['ln1_g'], mp['ln1_b'])
    ff = jnp.maximum(x @ mp['w_ff1'] + mp['b_ff1'], 0.0) @ mp['w_ff2'] + mp['b_ff2']
    x = _layer_norm(x + ff, mp['ln2_g'], mp['ln2_b'])
    y = _leaky_relu(x)
    y = y + _leaky_relu(y @ mp['w_r1'] + mp['b_r1'])
    y = y + _leaky_relu(y @ mp['w_r2'] + mp['b_r2'])
    return y @ mp['w_out'] + mp['b_out']


if __name__ == "__main__":
    # Small shapes consistent with the module's forward.
    B = 16                      # independent generator samples per call
    SEQ = 8
    NOISE_DIM, COND_DIM = 12, 4
    HIDDEN_DIM = 32
    NUM_HEADS = 2
    DATA_DIM = 16
    OUT_PAD = 128               # lane-dense output slab, sliced back to DATA_DIM

    key = jax.random.PRNGKey(0)
    kz, kp = jax.random.split(key)
    z = jax.random.normal(kz, (B, SEQ, NOISE_DIM + COND_DIM), dtype=jnp.float32)
    mp = make_module_params(kp, NOISE_DIM + COND_DIM, HIDDEN_DIM, DATA_DIM)
    kparams = prepare_kernel_params(mp, out_pad=OUT_PAD)

    out = etransformer_generator(z, kparams, nhead=NUM_HEADS, data_dim=DATA_DIM)
    out = jax.block_until_ready(out)

    ref = reference(z, mp, NUM_HEADS)
    assert out.shape == (B, SEQ, DATA_DIM), out.shape
    # bf16 matmul operands + approx reciprocal in softmax -> loosened tolerance vs f32 ref.
    max_err = float(jnp.max(jnp.abs(out - ref)))
    assert jnp.allclose(out, ref, rtol=5e-2, atol=5e-2), max_err

    print("KERNEL_OK")
</pallas_src>

<mosaic_0001>
module attributes {stable_mosaic.version = 11 : i64} {
  func.func @generator_kernel(%arg0: i32, %arg1: memref<128x16xf32, #tpu.memory_space<vmem>>, %arg2: memref<16x32xbf16, #tpu.memory_space<vmem>>, %arg3: memref<32x96xbf16, #tpu.memory_space<vmem>>, %arg4: memref<5x32x32xbf16, #tpu.memory_space<vmem>>, %arg5: memref<13x32xf32, #tpu.memory_space<vmem>>, %arg6: memref<32x128xbf16, #tpu.memory_space<vmem>>, %arg7: memref<1x128xf32, #tpu.memory_space<vmem>>, %arg8: memref<128x128xf32, #tpu.memory_space<vmem>>) attributes {dimension_semantics = [#tpu.dimension_semantics<parallel>], iteration_bounds = array<i64: 1>, scalar_prefetch = 0 : i64, scratch_operands = 0 : i64, tpu.core_type = #tpu.core_type<tc>, window_params = [{transform_indices = @transform_0, window_bounds = array<i64: 128, 16>}, {pipeline_mode = #tpu.pipeline_mode<synchronous>, transform_indices = @transform_1, window_bounds = array<i64: 16, 32>}, {pipeline_mode = #tpu.pipeline_mode<synchronous>, transform_indices = @transform_2, window_bounds = array<i64: 32, 96>}, {pipeline_mode = #tpu.pipeline_mode<synchronous>, transform_indices = @transform_3, window_bounds = array<i64: 5, 32, 32>}, {pipeline_mode = #tpu.pipeline_mode<synchronous>, transform_indices = @transform_4, window_bounds = array<i64: 13, 32>}, {pipeline_mode = #tpu.pipeline_mode<synchronous>, transform_indices = @transform_5, window_bounds = array<i64: 32, 128>}, {pipeline_mode = #tpu.pipeline_mode<synchronous>, transform_indices = @transform_6, window_bounds = array<i64: 1, 128>}, {transform_indices = @transform_7, window_bounds = array<i64: 128, 128>}]} {
    %c0 = arith.constant 0 : index
    %c0_0 = arith.constant 0 : index
    %0 = vector.load %arg5[%c0, %c0_0] : memref<13x32xf32, #tpu.memory_space<vmem>>, vector<13x32xf32>
    %c0_1 = arith.constant 0 : index
    %c0_2 = arith.constant 0 : index
    %1 = vector.load %arg1[%c0_1, %c0_2] : memref<128x16xf32, #tpu.memory_space<vmem>>, vector<128x16xf32>
    %c0_3 = arith.constant 0 : index
    %c0_4 = arith.constant 0 : index
    %2 = vector.load %arg2[%c0_3, %c0_4] : memref<16x32xbf16, #tpu.memory_space<vmem>>, vector<16x32xbf16>
    %3 = vector.extract_strided_slice %0 {offsets = [0, 0], sizes = [1, 32], strides = [1, 1]} : vector<13x32xf32> to vector<1x32xf32>
    %4 = arith.truncf %1 : vector<128x16xf32> to vector<128x16xbf16>
    %cst = arith.constant dense<0.000000e+00> : vector<128x32xf32>
    %5 = tpu.matmul %4, %2, %cst {dimension_numbers = #tpu.dot_dimension_numbers<[1], [0], [0], [1], [0, 0, 1, 1], [], []>} : vector<128x16xbf16>, vector<16x32xbf16>, vector<128x32xf32> -> vector<128x32xf32>
    %6 = vector.broadcast %3 : vector<1x32xf32> to vector<128x32xf32>
    %7 = arith.addf %5, %6 : vector<128x32xf32>
    %8 = arith.truncf %7 : vector<128x32xf32> to vector<128x32xbf16>
    %c0_5 = arith.constant 0 : index
    %c0_6 = arith.constant 0 : index
    %9 = vector.load %arg3[%c0_5, %c0_6] : memref<32x96xbf16, #tpu.memory_space<vmem>>, vector<32x96xbf16>
    %cst_7 = arith.constant dense<0.000000e+00> : vector<128x96xf32>
    %10 = tpu.matmul %8, %9, %cst_7 {dimension_numbers = #tpu.dot_dimension_numbers<[1], [0], [0], [1], [0, 0, 1, 1], [], []>} : vector<128x32xbf16>, vector<32x96xbf16>, vector<128x96xf32> -> vector<128x96xf32>
    %11 = vector.extract_strided_slice %10 {offsets = [0, 0], sizes = [128, 32], strides = [1, 1]} : vector<128x96xf32> to vector<128x32xf32>
    %12 = vector.extract_strided_slice %0 {offsets = [1, 0], sizes = [1, 32], strides = [1, 1]} : vector<13x32xf32> to vector<1x32xf32>
    %13 = vector.broadcast %12 : vector<1x32xf32> to vector<128x32xf32>
    %14 = arith.addf %11, %13 : vector<128x32xf32>
    %cst_8 = arith.constant 2.500000e-01 : f32
    %15 = vector.broadcast %cst_8 : f32 to vector<128x32xf32>
    %16 = arith.mulf %14, %15 : vector<128x32xf32>
    %17 = vector.extract_strided_slice %10 {offsets = [0, 32], sizes = [128, 32], strides = [1, 1]} : vector<128x96xf32> to vector<128x32xf32>
    %18 = vector.extract_strided_slice %0 {offsets = [2, 0], sizes = [1, 32], strides = [1, 1]} : vector<13x32xf32> to vector<1x32xf32>
    %19 = vector.broadcast %18 : vector<1x32xf32> to vector<128x32xf32>
    %20 = arith.addf %17, %19 : vector<128x32xf32>
    %21 = vector.extract_strided_slice %10 {offsets = [0, 64], sizes = [128, 32], strides = [1, 1]} : vector<128x96xf32> to vector<128x32xf32>
    %22 = vector.extract_strided_slice %0 {offsets = [3, 0], sizes = [1, 32], strides = [1, 1]} : vector<13x32xf32> to vector<1x32xf32>
    %23 = vector.broadcast %22 : vector<1x32xf32> to vector<128x32xf32>
    %24 = arith.addf %21, %23 : vector<128x32xf32>
    %25 = vector.extract_strided_slice %16 {offsets = [0, 0], sizes = [128, 16], strides = [1, 1]} : vector<128x32xf32> to vector<128x16xf32>
    %26 = vector.shape_cast %25 : vector<128x16xf32> to vector<16x8x16xf32>
    %27 = vector.extract_strided_slice %16 {offsets = [0, 16], sizes = [128, 16], strides = [1, 1]} : vector<128x32xf32> to vector<128x16xf32>
    %28 = vector.shape_cast %27 : vector<128x16xf32> to vector<16x8x16xf32>
    %29 = tpu.concatenate %26, %28 in 0 : vector<16x8x16xf32>, vector<16x8x16xf32> -> vector<32x8x16xf32>
    %30 = vector.extract_strided_slice %20 {offsets = [0, 0], sizes = [128, 16], strides = [1, 1]} : vector<128x32xf32> to vector<128x16xf32>
    %31 = vector.shape_cast %30 : vector<128x16xf32> to vector<16x8x16xf32>
    %32 = vector.extract_strided_slice %20 {offsets = [0, 16], sizes = [128, 16], strides = [1, 1]} : vector<128x32xf32> to vector<128x16xf32>
    %33 = vector.shape_cast %32 : vector<128x16xf32> to vector<16x8x16xf32>
    %34 = tpu.concatenate %31, %33 in 0 : vector<16x8x16xf32>, vector<16x8x16xf32> -> vector<32x8x16xf32>
    %35 = vector.extract_strided_slice %24 {offsets = [0, 0], sizes = [128, 16], strides = [1, 1]} : vector<128x32xf32> to vector<128x16xf32>
    %36 = vector.shape_cast %35 : vector<128x16xf32> to vector<16x8x16xf32>
    %37 = vector.extract_strided_slice %24 {offsets = [0, 16], sizes = [128, 16], strides = [1, 1]} : vector<128x32xf32> to vector<128x16xf32>
    %38 = vector.shape_cast %37 : vector<128x16xf32> to vector<16x8x16xf32>
    %39 = tpu.concatenate %36, %38 in 0 : vector<16x8x16xf32>, vector<16x8x16xf32> -> vector<32x8x16xf32>
    "tpu.trace_start"() <{level = 10 : i32, message = "bqd,bkd->bqk"}> : () -> ()
    %cst_9 = arith.constant dense<0.000000e+00> : vector<32x8x8xf32>
    %40 = tpu.matmul %29, %34, %cst_9 {dimension_numbers = #tpu.dot_dimension_numbers<[2], [2], [1], [1], [0, 0, 0, 1, 1, 1], [0], [0]>} : vector<32x8x16xf32>, vector<32x8x16xf32>, vector<32x8x8xf32> -> vector<32x8x8xf32>
    "tpu.trace_stop"() : () -> ()
    %cst_10 = arith.constant dense<0xFF800000> : vector<32x8xf32>
    %41 = vector.multi_reduction <maximumf>, %40, %cst_10 [2] : vector<32x8x8xf32> to vector<32x8xf32>
    %42 = vector.shape_cast %41 : vector<32x8xf32> to vector<32x8x1xf32>
    %43 = vector.broadcast %42 : vector<32x8x1xf32> to vector<32x8x8xf32>
    %44 = arith.subf %40, %43 : vector<32x8x8xf32>
    %45 = math.exp %44 : vector<32x8x8xf32>
    %cst_11 = arith.constant dense<0.000000e+00> : vector<32x8xf32>
    %46 = vector.multi_reduction <add>, %45, %cst_11 [2] : vector<32x8x8xf32> to vector<32x8xf32>
    %47 = vector.shape_cast %46 : vector<32x8xf32> to vector<32x8x1xf32>
    %48 = tpu.reciprocal %47 {approx = true} : vector<32x8x1xf32> -> vector<32x8x1xf32>
    %49 = vector.broadcast %48 : vector<32x8x1xf32> to vector<32x8x8xf32>
    %50 = arith.mulf %45, %49 : vector<32x8x8xf32>
    "tpu.trace_start"() <{level = 10 : i32, message = "bqk,bkd->bqd"}> : () -> ()
    %cst_12 = arith.constant dense<0.000000e+00> : vector<32x8x16xf32>
    %51 = tpu.matmul %50, %39, %cst_12 {dimension_numbers = #tpu.dot_dimension_numbers<[2], [1], [1], [2], [0, 0, 0, 1, 1, 2], [0], [0]>} : vector<32x8x8xf32>, vector<32x8x16xf32>, vector<32x8x16xf32> -> vector<32x8x16xf32>
    "tpu.trace_stop"() : () -> ()
    %52 = vector.extract_strided_slice %51 {offsets = [0, 0, 0], sizes = [16, 8, 16], strides = [1, 1, 1]} : vector<32x8x16xf32> to vector<16x8x16xf32>
    %53 = vector.shape_cast %52 : vector<16x8x16xf32> to vector<128x16xf32>
    %54 = vector.extract_strided_slice %51 {offsets = [16, 0, 0], sizes = [16, 8, 16], strides = [1, 1, 1]} : vector<32x8x16xf32> to vector<16x8x16xf32>
    %55 = vector.shape_cast %54 : vector<16x8x16xf32> to vector<128x16xf32>
    %56 = tpu.concatenate %53, %55 in 1 : vector<128x16xf32>, vector<128x16xf32> -> vector<128x32xf32>
    %c0_13 = arith.constant 0 : index
    %c0_14 = arith.constant 0 : index
    %c0_15 = arith.constant 0 : index
    %57 = vector.load %arg4[%c0_13, %c0_14, %c0_15] : memref<5x32x32xbf16, #tpu.memory_space<vmem>>, vector<1x32x32xbf16>
    %58 = vector.shape_cast %57 : vector<1x32x32xbf16> to vector<32x32xbf16>
    %59 = vector.extract_strided_slice %0 {offsets = [4, 0], sizes = [1, 32], strides = [1, 1]} : vector<13x32xf32> to vector<1x32xf32>
    %60 = arith.truncf %56 : vector<128x32xf32> to vector<128x32xbf16>
    %cst_16 = arith.constant dense<0.000000e+00> : vector<128x32xf32>
    %61 = tpu.matmul %60, %58, %cst_16 {dimension_numbers = #tpu.dot_dimension_numbers<[1], [0], [0], [1], [0, 0, 1, 1], [], []>} : vector<128x32xbf16>, vector<32x32xbf16>, vector<128x32xf32> -> vector<128x32xf32>
    %62 = vector.broadcast %59 : vector<1x32xf32> to vector<128x32xf32>
    %63 = arith.addf %61, %62 : vector<128x32xf32>
    %64 = arith.addf %7, %63 : vector<128x32xf32>
    %65 = vector.extract_strided_slice %0 {offsets = [5, 0], sizes = [1, 32], strides = [1, 1]} : vector<13x32xf32> to vector<1x32xf32>
    %66 = vector.extract_strided_slice %0 {offsets = [6, 0], sizes = [1, 32], strides = [1, 1]} : vector<13x32xf32> to vector<1x32xf32>
    %cst_17 = arith.constant dense<0.000000e+00> : vector<128xf32>
    %67 = vector.multi_reduction <add>, %64, %cst_17 [1] : vector<128x32xf32> to vector<128xf32>
    %68 = vector.shape_cast %67 : vector<128xf32> to vector<128x1xf32>
    %cst_18 = arith.constant 3.200000e+01 : f32
    %69 = vector.broadcast %cst_18 : f32 to vector<128x1xf32>
    %70 = arith.divf %68, %69 : vector<128x1xf32>
    %71 = vector.broadcast %70 : vector<128x1xf32> to vector<128x32xf32>
    %72 = arith.subf %64, %71 : vector<128x32xf32>
    %73 = arith.mulf %72, %72 : vector<128x32xf32>
    %cst_19 = arith.constant dense<0.000000e+00> : vector<128xf32>
    %74 = vector.multi_reduction <add>, %73, %cst_19 [1] : vector<128x32xf32> to vector<128xf32>
    %75 = vector.shape_cast %74 : vector<128xf32> to vector<128x1xf32>
    %cst_20 = arith.constant 3.200000e+01 : f32
    %76 = vector.broadcast %cst_20 : f32 to vector<128x1xf32>
    %77 = arith.divf %75, %76 : vector<128x1xf32>
    %cst_21 = arith.constant 9.99999974E-6 : f32
    %78 = vector.broadcast %cst_21 : f32 to vector<128x1xf32>
    %79 = arith.addf %77, %78 : vector<128x1xf32>
    %80 = math.rsqrt %79 : vector<128x1xf32>
    %81 = vector.broadcast %80 : vector<128x1xf32> to vector<128x32xf32>
    %82 = arith.mulf %72, %81 : vector<128x32xf32>
    %83 = vector.broadcast %65 : vector<1x32xf32> to vector<128x32xf32>
    %84 = arith.mulf %82, %83 : vector<128x32xf32>
    %85 = vector.broadcast %66 : vector<1x32xf32> to vector<128x32xf32>
    %86 = arith.addf %84, %85 : vector<128x32xf32>
    %c1 = arith.constant 1 : index
    %c0_22 = arith.constant 0 : index
    %c0_23 = arith.constant 0 : index
    %87 = vector.load %arg4[%c1, %c0_22, %c0_23] : memref<5x32x32xbf16, #tpu.memory_space<vmem>>, vector<1x32x32xbf16>
    %88 = vector.shape_cast %87 : vector<1x32x32xbf16> to vector<32x32xbf16>
    %89 = vector.extract_strided_slice %0 {offsets = [7, 0], sizes = [1, 32], strides = [1, 1]} : vector<13x32xf32> to vector<1x32xf32>
    %90 = arith.truncf %86 : vector<128x32xf32> to vector<128x32xbf16>
    %cst_24 = arith.constant dense<0.000000e+00> : vector<128x32xf32>
    %91 = tpu.matmul %90, %88, %cst_24 {dimension_numbers = #tpu.dot_dimension_numbers<[1], [0], [0], [1], [0, 0, 1, 1], [], []>} : vector<128x32xbf16>, vector<32x32xbf16>, vector<128x32xf32> -> vector<128x32xf32>
    %92 = vector.broadcast %89 : vector<1x32xf32> to vector<128x32xf32>
    %93 = arith.addf %91, %92 : vector<128x32xf32>
    %cst_25 = arith.constant 0.000000e+00 : f32
    %94 = vector.broadcast %cst_25 : f32 to vector<128x32xf32>
    %95 = arith.maximumf %93, %94 : vector<128x32xf32>
    %c2 = arith.constant 2 : index
    %c0_26 = arith.constant 0 : index
    %c0_27 = arith.constant 0 : index
    %96 = vector.load %arg4[%c2, %c0_26, %c0_27] : memref<5x32x32xbf16, #tpu.memory_space<vmem>>, vector<1x32x32xbf16>
    %97 = vector.shape_cast %96 : vector<1x32x32xbf16> to vector<32x32xbf16>
    %98 = vector.extract_strided_slice %0 {offsets = [8, 0], sizes = [1, 32], strides = [1, 1]} : vector<13x32xf32> to vector<1x32xf32>
    %99 = arith.truncf %95 : vector<128x32xf32> to vector<128x32xbf16>
    %cst_28 = arith.constant dense<0.000000e+00> : vector<128x32xf32>
    %100 = tpu.matmul %99, %97, %cst_28 {dimension_numbers = #tpu.dot_dimension_numbers<[1], [0], [0], [1], [0, 0, 1, 1], [], []>} : vector<128x32xbf16>, vector<32x32xbf16>, vector<128x32xf32> -> vector<128x32xf32>
    %101 = vector.broadcast %98 : vector<1x32xf32> to vector<128x32xf32>
    %102 = arith.addf %100, %101 : vector<128x32xf32>
    %103 = arith.addf %86, %102 : vector<128x32xf32>
    %104 = vector.extract_strided_slice %0 {offsets = [9, 0], sizes = [1, 32], strides = [1, 1]} : vector<13x32xf32> to vector<1x32xf32>
    %105 = vector.extract_strided_slice %0 {offsets = [10, 0], sizes = [1, 32], strides = [1, 1]} : vector<13x32xf32> to vector<1x32xf32>
    %cst_29 = arith.constant dense<0.000000e+00> : vector<128xf32>
    %106 = vector.multi_reduction <add>, %103, %cst_29 [1] : vector<128x32xf32> to vector<128xf32>
    %107 = vector.shape_cast %106 : vector<128xf32> to vector<128x1xf32>
    %cst_30 = arith.constant 3.200000e+01 : f32
    %108 = vector.broadcast %cst_30 : f32 to vector<128x1xf32>
    %109 = arith.divf %107, %108 : vector<128x1xf32>
    %110 = vector.broadcast %109 : vector<128x1xf32> to vector<128x32xf32>
    %111 = arith.subf %103, %110 : vector<128x32xf32>
    %112 = arith.mulf %111, %111 : vector<128x32xf32>
    %cst_31 = arith.constant dense<0.000000e+00> : vector<128xf32>
    %113 = vector.multi_reduction <add>, %112, %cst_31 [1] : vector<128x32xf32> to vector<128xf32>
    %114 = vector.shape_cast %113 : vector<128xf32> to vector<128x1xf32>
    %cst_32 = arith.constant 3.200000e+01 : f32
    %115 = vector.broadcast %cst_32 : f32 to vector<128x1xf32>
    %116 = arith.divf %114, %115 : vector<128x1xf32>
    %cst_33 = arith.constant 9.99999974E-6 : f32
    %117 = vector.broadcast %cst_33 : f32 to vector<128x1xf32>
    %118 = arith.addf %116, %117 : vector<128x1xf32>
    %119 = math.rsqrt %118 : vector<128x1xf32>
    %120 = vector.broadcast %119 : vector<128x1xf32> to vector<128x32xf32>
    %121 = arith.mulf %111, %120 : vector<128x32xf32>
    %122 = vector.broadcast %104 : vector<1x32xf32> to vector<128x32xf32>
    %123 = arith.mulf %121, %122 : vector<128x32xf32>
    %124 = vector.broadcast %105 : vector<1x32xf32> to vector<128x32xf32>
    %125 = arith.addf %123, %124 : vector<128x32xf32>
    %cst_34 = arith.constant 0.000000e+00 : f32
    %126 = vector.broadcast %cst_34 : f32 to vector<128x32xf32>
    %127 = arith.cmpf ogt, %125, %126 : vector<128x32xf32>
    %cst_35 = arith.constant 0.00999999977 : f32
    %128 = vector.broadcast %cst_35 : f32 to vector<128x32xf32>
    %129 = arith.mulf %128, %125 : vector<128x32xf32>
    %130 = arith.select %127, %125, %129 : vector<128x32xi1>, vector<128x32xf32>
    %c3 = arith.constant 3 : index
    %c0_36 = arith.constant 0 : index
    %c0_37 = arith.constant 0 : index
    %131 = vector.load %arg4[%c3, %c0_36, %c0_37] : memref<5x32x32xbf16, #tpu.memory_space<vmem>>, vector<1x32x32xbf16>
    %132 = vector.shape_cast %131 : vector<1x32x32xbf16> to vector<32x32xbf16>
    %133 = vector.extract_strided_slice %0 {offsets = [11, 0], sizes = [1, 32], strides = [1, 1]} : vector<13x32xf32> to vector<1x32xf32>
    %134 = arith.truncf %130 : vector<128x32xf32> to vector<128x32xbf16>
    %cst_38 = arith.constant dense<0.000000e+00> : vector<128x32xf32>
    %135 = tpu.matmul %134, %132, %cst_38 {dimension_numbers = #tpu.dot_dimension_numbers<[1], [0], [0], [1], [0, 0, 1, 1], [], []>} : vector<128x32xbf16>, vector<32x32xbf16>, vector<128x32xf32> -> vector<128x32xf32>
    %136 = vector.broadcast %133 : vector<1x32xf32> to vector<128x32xf32>
    %137 = arith.addf %135, %136 : vector<128x32xf32>
    %cst_39 = arith.constant 0.000000e+00 : f32
    %138 = vector.broadcast %cst_39 : f32 to vector<128x32xf32>
    %139 = arith.cmpf ogt, %137, %138 : vector<128x32xf32>
    %cst_40 = arith.constant 0.00999999977 : f32
    %140 = vector.broadcast %cst_40 : f32 to vector<128x32xf32>
    %141 = arith.mulf %140, %137 : vector<128x32xf32>
    %142 = arith.select %139, %137, %141 : vector<128x32xi1>, vector<128x32xf32>
    %143 = arith.addf %130, %142 : vector<128x32xf32>
    %c4 = arith.constant 4 : index
    %c0_41 = arith.constant 0 : index
    %c0_42 = arith.constant 0 : index
    %144 = vector.load %arg4[%c4, %c0_41, %c0_42] : memref<5x32x32xbf16, #tpu.memory_space<vmem>>, vector<1x32x32xbf16>
    %145 = vector.shape_cast %144 : vector<1x32x32xbf16> to vector<32x32xbf16>
    %146 = vector.extract_strided_slice %0 {offsets = [12, 0], sizes = [1, 32], strides = [1, 1]} : vector<13x32xf32> to vector<1x32xf32>
    %147 = arith.truncf %143 : vector<128x32xf32> to vector<128x32xbf16>
    %cst_43 = arith.constant dense<0.000000e+00> : vector<128x32xf32>
    %148 = tpu.matmul %147, %145, %cst_43 {dimension_numbers = #tpu.dot_dimension_numbers<[1], [0], [0], [1], [0, 0, 1, 1], [], []>} : vector<128x32xbf16>, vector<32x32xbf16>, vector<128x32xf32> -> vector<128x32xf32>
    %149 = vector.broadcast %146 : vector<1x32xf32> to vector<128x32xf32>
    %150 = arith.addf %148, %149 : vector<128x32xf32>
    %cst_44 = arith.constant 0.000000e+00 : f32
    %151 = vector.broadcast %cst_44 : f32 to vector<128x32xf32>
    %152 = arith.cmpf ogt, %150, %151 : vector<128x32xf32>
    %cst_45 = arith.constant 0.00999999977 : f32
    %153 = vector.broadcast %cst_45 : f32 to vector<128x32xf32>
    %154 = arith.mulf %153, %150 : vector<128x32xf32>
    %155 = arith.select %152, %150, %154 : vector<128x32xi1>, vector<128x32xf32>
    %156 = arith.addf %143, %155 : vector<128x32xf32>
    %c0_46 = arith.constant 0 : index
    %c0_47 = arith.constant 0 : index
    %157 = vector.load %arg6[%c0_46, %c0_47] : memref<32x128xbf16, #tpu.memory_space<vmem>>, vector<32x128xbf16>
    %c0_48 = arith.constant 0 : index
    %c0_49 = arith.constant 0 : index
    %158 = vector.load %arg7[%c0_48, %c0_49] : memref<1x128xf32, #tpu.memory_space<vmem>>, vector<1x128xf32>
    %159 = arith.truncf %156 : vector<128x32xf32> to vector<128x32xbf16>
    %cst_50 = arith.constant dense<0.000000e+00> : vector<128x128xf32>
    %160 = tpu.matmul %159, %157, %cst_50 {dimension_numbers = #tpu.dot_dimension_numbers<[1], [0], [0], [1], [0, 0, 1, 1], [], []>} : vector<128x32xbf16>, vector<32x128xbf16>, vector<128x128xf32> -> vector<128x128xf32>
    %161 = vector.broadcast %158 : vector<1x128xf32> to vector<128x128xf32>
    %162 = arith.addf %160, %161 : vector<128x128xf32>
    %c0_51 = arith.constant 0 : index
    %c0_52 = arith.constant 0 : index
    %163 = vector.load %arg8[%c0_51, %c0_52] : memref<128x128xf32, #tpu.memory_space<vmem>>, vector<128x128xf32>
    tpu.vector_store %arg8[%c0_51, %c0_52], %162 {strides = array<i32>} : memref<128x128xf32, #tpu.memory_space<vmem>>, vector<128x128xf32>,
    return
  }
  func.func @transform_0(%arg0: i32) -> (i32, i32) {
    %c0_i32 = arith.constant 0 : i32
    %c0_i32_0 = arith.constant 0 : i32
    return %arg0, %c0_i32 : i32, i32
  }
  func.func @transform_1(%arg0: i32) -> (i32, i32) {
    %c0_i32 = arith.constant 0 : i32
    %c0_i32_0 = arith.constant 0 : i32
    %c0_i32_1 = arith.constant 0 : i32
    return %c0_i32, %c0_i32_0 : i32, i32
  }
  func.func @transform_2(%arg0: i32) -> (i32, i32) {
    %c0_i32 = arith.constant 0 : i32
    %c0_i32_0 = arith.constant 0 : i32
    %c0_i32_1 = arith.constant 0 : i32
    return %c0_i32, %c0_i32_0 : i32, i32
  }
  func.func @transform_3(%arg0: i32) -> (i32, i32, i32) {
    %c0_i32 = arith.constant 0 : i32
    %c0_i32_0 = arith.constant 0 : i32
    %c0_i32_1 = arith.constant 0 : i32
    %c0_i32_2 = arith.constant 0 : i32
    return %c0_i32, %c0_i32_0, %c0_i32_1 : i32, i32, i32
  }
  func.func @transform_4(%arg0: i32) -> (i32, i32) {
    %c0_i32 = arith.constant 0 : i32
    %c0_i32_0 = arith.constant 0 : i32
    %c0_i32_1 = arith.constant 0 : i32
    return %c0_i32, %c0_i32_0 : i32, i32
  }
  func.func @transform_5(%arg0: i32) -> (i32, i32) {
    %c0_i32 = arith.constant 0 : i32
    %c0_i32_0 = arith.constant 0 : i32
    %c0_i32_1 = arith.constant 0 : i32
    return %c0_i32, %c0_i32_0 : i32, i32
  }
  func.func @transform_6(%arg0: i32) -> (i32, i32) {
    %c0_i32 = arith.constant 0 : i32
    %c0_i32_0 = arith.constant 0 : i32
    %c0_i32_1 = arith.constant 0 : i32
    return %c0_i32, %c0_i32_0 : i32, i32
  }
  func.func @transform_7(%arg0: i32) -> (i32, i32) {
    %c0_i32 = arith.constant 0 : i32
    %c0_i32_0 = arith.constant 0 : i32
    return %arg0, %c0_i32 : i32, i32
  }
}

</mosaic_0001>

<llo_original>
// kernel: tpu_custom_call.1
$region0: #{tpu_custom_call.1}
  #allocation0 [shape = 'u32[]', space=smem, size = 0x4, offset = 0x4, fixed_abs, tag = 'smem constant byte address 0x4 - core index']
  #allocation1 [shape = 'u32[144,128]{1,0:T(1,128)}', space=vmem, size = 0x12000, scoped, tag = 'internal scratch']
  %s0 = inlined_call_operand.vmem [shape: f32[128,16], index: 0, kind: input, shape index: {}]
  %s1 = inlined_call_operand.vmem [shape: bf16[16,32], index: 1, kind: input, shape index: {}]
  %s2 = inlined_call_operand.vmem [shape: bf16[32,96], index: 2, kind: input, shape index: {}]
  %s3 = inlined_call_operand.vmem [shape: bf16[5,32,32], index: 3, kind: input, shape index: {}]
  %s4 = inlined_call_operand.vmem [shape: f32[13,32], index: 4, kind: input, shape index: {}]
  %s5 = inlined_call_operand.vmem [shape: bf16[32,128], index: 5, kind: input, shape index: {}]
  %s6 = inlined_call_operand.vmem [shape: f32[1,128], index: 6, kind: input, shape index: {}]
  %s7 = inlined_call_operand.hbm [shape: f32[128,128], index: 7, kind: output, shape index: {}]
  %s8 = sld [smem:[#allocation0]]
  $region38: #{tpu_custom_call.1} parent=0
    _
  %s10 = ssub.s32 1, %s8
  %s11 = scalar_select 0, %s10, %s8
  $region1: #{tpu_custom_call.1} parent=0
    #allocation2 [shape = 'u8[65536]{0}', space=vmem, size = 0x10000, scoped, tag = 'output window, operand 0, single buffered']
    #allocation3 [shape = 's32[1]{0}', space=sflag, size = 0x4, scoped, tag = 'scoped memory for tpu_custom_call.1']
    %12 = vsyncpa [#allocation3], 0
    // Predicated region
    $region2: #{tpu_custom_call.1} parent=1 // pred_check
      _
    $region3: #{tpu_custom_call.1} parent=1 // pred_check_branch
      %14 = sbr.rel (0) target = $region5
    $region4: #{tpu_custom_call.1} parent=1 // pred_region
      _
    $region5: #{tpu_custom_call.1} parent=1 // pred_fallthru
      _
    // Predicated region
    $region6: #{tpu_custom_call.1} parent=1 // pred_check
      _
    $region7: #{tpu_custom_call.1} parent=1 // pred_check_branch
      %16 = sbr.rel (0) target = $region9
    $region8: #{tpu_custom_call.1} parent=1 // pred_region
      _
    $region9: #{tpu_custom_call.1} parent=1 // pred_fallthru
      _
    // Predicated region
    $region10: #{tpu_custom_call.1} parent=1 // pred_check
      _
    $region11: #{tpu_custom_call.1} parent=1 // pred_check_branch
      %18 = sbr.rel (0) target = $region13
    $region12: #{tpu_custom_call.1} parent=1 // pred_region
      _
    $region13: #{tpu_custom_call.1} parent=1 // pred_fallthru
      _
    // Predicated region
    $region14: #{tpu_custom_call.1} parent=1 // pred_check
      _
    $region15: #{tpu_custom_call.1} parent=1 // pred_check_branch
      %20 = sbr.rel (0) target = $region17
    $region16: #{tpu_custom_call.1} parent=1 // pred_region
      _
    $region17: #{tpu_custom_call.1} parent=1 // pred_fallthru
      _
    // Predicated region
    $region18: #{tpu_custom_call.1} parent=1 // pred_check
      _
    $region19: #{tpu_custom_call.1} parent=1 // pred_check_branch
      %22 = sbr.rel (0) target = $region21
    $region20: #{tpu_custom_call.1} parent=1 // pred_region
      _
    $region21: #{tpu_custom_call.1} parent=1 // pred_fallthru
      _
    // Predicated region
    $region22: #{tpu_custom_call.1} parent=1 // pred_check
      _
    $region23: #{tpu_custom_call.1} parent=1 // pred_check_branch
      %24 = sbr.rel (0) target = $region25
    $region24: #{tpu_custom_call.1} parent=1 // pred_region
      _
    $region25: #{tpu_custom_call.1} parent=1 // pred_fallthru
      _
    // Predicated region
    $region26: #{tpu_custom_call.1} parent=1 // pred_check
      _
    $region27: #{tpu_custom_call.1} parent=1 // pred_check_branch
      %26 = sbr.rel (0) target = $region29
    $region28: #{tpu_custom_call.1} parent=1 // pred_region
      _
    $region29: #{tpu_custom_call.1} parent=1 // pred_fallthru
      _
    %v28 = vld [vmem:[%s4] sm:$0xff]
    %v29 = vld [vmem:[%s4 + $0x8] sm:$0x1f]
    %v30 = vld [vmem:[%s0] sm:$0xff]
    %v31 = vld [vmem:[%s0 + $0x8] sm:$0xff]
    %v32 = vld [vmem:[%s0 + $0x10] sm:$0xff]
    %v33 = vld [vmem:[%s0 + $0x18] sm:$0xff]
    %v34 = vld [vmem:[%s0 + $0x20] sm:$0xff]
    %v35 = vld [vmem:[%s0 + $0x28] sm:$0xff]
    %v36 = vld [vmem:[%s0 + $0x30] sm:$0xff]
    %v37 = vld [vmem:[%s0 + $0x38] sm:$0xff]
    %v38 = vld [vmem:[%s0 + $0x40] sm:$0xff]
    %v39 = vld [vmem:[%s0 + $0x48] sm:$0xff]
    %v40 = vld [vmem:[%s0 + $0x50] sm:$0xff]
    %v41 = vld [vmem:[%s0 + $0x58] sm:$0xff]
    %v42 = vld [vmem:[%s0 + $0x60] sm:$0xff]
    %v43 = vld [vmem:[%s0 + $0x68] sm:$0xff]
    %v44 = vld [vmem:[%s0 + $0x70] sm:$0xff]
    %v45 = vld [vmem:[%s0 + $0x78] sm:$0xff]
    %v46 = vld [vmem:[%s1] sm:$0xf]
    %v47 = vld [vmem:[%s1 + $0x4] sm:$0xf]
    %v48 = vpack.c.bf16 %v31, %v30
    %v49 = vpack.c.bf16 %v33, %v32
    %v50 = vpack.c.bf16 %v35, %v34
    %v51 = vpack.c.bf16 %v37, %v36
    %v52 = vpack.c.bf16 %v39, %v38
    %v53 = vpack.c.bf16 %v41, %v40
    %v54 = vpack.c.bf16 %v43, %v42
    %v55 = vpack.c.bf16 %v45, %v44
    %v56 = vlaneseq
    %v57 = vshrl.u32 %v56, 7
    %v58 = vsub.s32 0, %v57
    %v59 = vrot.slane %v28, %v58
    %v62 = vunpack.c.l.b16 %v46
    %v63 = vunpack.c.l.b16 %v47
    %v64 = vpack.c.b16 %v63, %v62
    %vm66 = vcmask 130048
    %v68 = vsel %vm66, %v48, 0
    %v71 = vsel %vm66, %v49, 0
    %v74 = vsel %vm66, %v50, 0
    %v77 = vsel %vm66, %v51, 0
    %v80 = vsel %vm66, %v52, 0
    %v83 = vsel %vm66, %v53, 0
    %v86 = vsel %vm66, %v54, 0
    %v89 = vsel %vm66, %v55, 0
    %91 = vmatprep.subr.bf16.mxu0 0
    %92 = vmatpush1.bf16.msra.mxu0 %v64
    %93 = vmatprep.subr.bf16.mxu0 0
    %94 = vmatpush1.bf16.msra.mxu0 0
    %95 = vmatprep.subr.bf16.mxu0 0
    %96 = vmatpush1.bf16.msra.mxu0 0
    %97 = vmatprep.subr.bf16.mxu0 0
    %98 = vmatpush1.bf16.msra.mxu0 0
    %99 = vmatprep.subr.bf16.mxu0 0
    %100 = vmatpush1.bf16.msra.mxu0 0
    %101 = vmatprep.subr.bf16.mxu0 0
    %102 = vmatpush1.bf16.msra.mxu0 0
    %103 = vmatprep.subr.bf16.mxu0 0
    %104 = vmatpush1.bf16.msra.mxu0 0
    %105 = vmatprep.subr.bf16.mxu0 0
    %106 = vmatpush1.bf16.msra.mxu0 0
    %107 = vmatprep.subr.bf16.mxu0 0
    %108 = vmatpush1.bf16.msra.mxu0 0
    %109 = vmatprep.subr.bf16.mxu0 0
    %110 = vmatpush1.bf16.msra.mxu0 0
    %111 = vmatprep.subr.bf16.mxu0 0
    %112 = vmatpush1.bf16.msra.mxu0 0
    %113 = vmatprep.subr.bf16.mxu0 0
    %114 = vmatpush1.bf16.msra.mxu0 0
    %115 = vmatprep.subr.bf16.mxu0 0
    %116 = vmatpush1.bf16.msra.mxu0 0
    %117 = vmatprep.subr.bf16.mxu0 0
    %118 = vmatpush1.bf16.msra.mxu0 0
    %119 = vmatprep.subr.bf16.mxu0 0
    %120 = vmatpush1.bf16.msra.mxu0 0
    %121 = vmatprep.subr.bf16.mxu0 0
    %122 = vmatpush1.bf16.msra.mxu0 0
    %123 = vmatprep.mubr.bf16.mxu0 0
    %124 = vmatmul.mubr.bf16.gmra.mrb[0].mxu0 %v68
    %v125 = vpop.f32.mrb[0].mxu0
    %v126 = vadd.f32 %v59, %v125
    %v127 = vpop.f32.mrb[0].mxu0
    %v128 = vpop.f32.mrb[0].mxu0
    %v129 = vadd.f32 %v59, %v128
    %v130 = vpop.f32.mrb[0].mxu0
    %131 = vmatprep.mubr.bf16.mxu0 0
    %132 = vmatmul.mubr.bf16.gmra.mrb[0].mxu0 %v71
    %v133 = vpop.f32.mrb[0].mxu0
    %v134 = vadd.f32 %v59, %v133
    %v135 = vpop.f32.mrb[0].mxu0
    %v136 = vpop.f32.mrb[0].mxu0
    %v137 = vadd.f32 %v59, %v136
    %v138 = vpop.f32.mrb[0].mxu0
    %139 = vmatprep.mubr.bf16.mxu0 0
    %140 = vmatmul.mubr.bf16.gmra.mrb[0].mxu0 %v74
    %v141 = vpop.f32.mrb[0].mxu0
    %v142 = vadd.f32 %v59, %v141
    %v143 = vpop.f32.mrb[0].mxu0
    %v144 = vpop.f32.mrb[0].mxu0
    %v145 = vadd.f32 %v59, %v144
    %v146 = vpop.f32.mrb[0].mxu0
    %147 = vmatprep.mubr.bf16.mxu0 0
    %148 = vmatmul.mubr.bf16.gmra.mrb[0].mxu0 %v77
    %v149 = vpop.f32.mrb[0].mxu0
    %v150 = vadd.f32 %v59, %v149
    %v151 = vpop.f32.mrb[0].mxu0
    %v152 = vpop.f32.mrb[0].mxu0
    %v153 = vadd.f32 %v59, %v152
    %v154 = vpop.f32.mrb[0].mxu0
    %155 = vmatprep.mubr.bf16.mxu0 0
    %156 = vmatmul.mubr.bf16.gmra.mrb[0].mxu0 %v80
    %v157 = vpop.f32.mrb[0].mxu0
    %v158 = vadd.f32 %v59, %v157
    %v159 = vpop.f32.mrb[0].mxu0
    %v160 = vpop.f32.mrb[0].mxu0
    %v161 = vadd.f32 %v59, %v160
    %v162 = vpop.f32.mrb[0].mxu0
    %163 = vmatprep.mubr.bf16.mxu0 0
    %164 = vmatmul.mubr.bf16.gmra.mrb[0].mxu0 %v83
    %v165 = vpop.f32.mrb[0].mxu0
    %v166 = vadd.f32 %v59, %v165
    %v167 = vpop.f32.mrb[0].mxu0
    %v168 = vpop.f32.mrb[0].mxu0
    %v169 = vadd.f32 %v59, %v168
    %v170 = vpop.f32.mrb[0].mxu0
    %171 = vmatprep.mubr.bf16.mxu0 0
    %172 = vmatmul.mubr.bf16.gmra.mrb[0].mxu0 %v86
    %v173 = vpop.f32.mrb[0].mxu0
    %v174 = vadd.f32 %v59, %v173
    %v175 = vpop.f32.mrb[0].mxu0
    %v176 = vpop.f32.mrb[0].mxu0
    %v177 = vadd.f32 %v59, %v176
    %v178 = vpop.f32.mrb[0].mxu0
    %179 = vmatprep.mubr.bf16.mxu0 0
    %180 = vmatmul.mubr.bf16.gmra.mrb[0].mxu0 %v89
    %v181 = vpop.f32.mrb[0].mxu0
    %v182 = vadd.f32 %v59, %v181
    %v183 = vpop.f32.mrb[0].mxu0
    %v184 = vpop.f32.mrb[0].mxu0
    %v185 = vadd.f32 %v59, %v184
    %v186 = vpop.f32.mrb[0].mxu0
    %187 = vdwg.mxu0
    %v188 = vpack.c.bf16 %v129, %v126
    %v189 = vpack.c.bf16 %v137, %v134
    %v190 = vpack.c.bf16 %v145, %v142
    %v191 = vpack.c.bf16 %v153, %v150
    %v192 = vpack.c.bf16 %v161, %v158
    %v193 = vpack.c.bf16 %v169, %v166
    %v194 = vpack.c.bf16 %v177, %v174
    %v195 = vpack.c.bf16 %v185, %v182
    %v196 = vld [vmem:[%s2] sm:$0xf]
    %v197 = vld [vmem:[%s2 + $0x4] sm:$0xf]
    %v198 = vld [vmem:[%s2 + $0x8] sm:$0xf]
    %v199 = vld [vmem:[%s2 + $0xc] sm:$0xf]
    %v204 = vunpack.c.l.b16 %v196
    %v205 = vunpack.c.l.b16 %v197
    %v206 = vunpack.c.l.b16 %v198
    %v207 = vunpack.c.l.b16 %v199
    %v208 = vpack.c.b16 %v205, %v204
    %v209 = vpack.c.b16 %v207, %v206
    %vm212 = vcmask 261120
    %v214 = vsel %vm212, %v188, 0
    %v217 = vsel %vm212, %v189, 0
    %v220 = vsel %vm212, %v190, 0
    %v223 = vsel %vm212, %v191, 0
    %v226 = vsel %vm212, %v192, 0
    %v229 = vsel %vm212, %v193, 0
    %v232 = vsel %vm212, %v194, 0
    %v235 = vsel %vm212, %v195, 0
    %237 = vmatprep.subr.bf16.mxu0 0
    %238 = vmatpush1.bf16.msra.mxu0 %v208
    %239 = vmatprep.subr.bf16.mxu0 0
    %240 = vmatpush1.bf16.msra.mxu0 %v209
    %241 = vmatprep.subr.bf16.mxu0 0
    %242 = vmatpush1.bf16.msra.mxu0 0
    %243 = vmatprep.subr.bf16.mxu0 0
    %244 = vmatpush1.bf16.msra.mxu0 0
    %245 = vmatprep.subr.bf16.mxu0 0
    %246 = vmatpush1.bf16.msra.mxu0 0
    %247 = vmatprep.subr.bf16.mxu0 0
    %248 = vmatpush1.bf16.msra.mxu0 0
    %249 = vmatprep.subr.bf16.mxu0 0
    %250 = vmatpush1.bf16.msra.mxu0 0
    %251 = vmatprep.subr.bf16.mxu0 0
    %252 = vmatpush1.bf16.msra.mxu0 0
    %253 = vmatprep.subr.bf16.mxu0 0
    %254 = vmatpush1.bf16.msra.mxu0 0
    %255 = vmatprep.subr.bf16.mxu0 0
    %256 = vmatpush1.bf16.msra.mxu0 0
    %257 = vmatprep.subr.bf16.mxu0 0
    %258 = vmatpush1.bf16.msra.mxu0 0
    %259 = vmatprep.subr.bf16.mxu0 0
    %260 = vmatpush1.bf16.msra.mxu0 0
    %261 = vmatprep.subr.bf16.mxu0 0
    %262 = vmatpush1.bf16.msra.mxu0 0
    %263 = vmatprep.subr.bf16.mxu0 0
    %264 = vmatpush1.bf16.msra.mxu0 0
    %265 = vmatprep.subr.bf16.mxu0 0
    %266 = vmatpush1.bf16.msra.mxu0 0
    %267 = vmatprep.subr.bf16.mxu0 0
    %268 = vmatpush1.bf16.msra.mxu0 0
    %269 = vmatprep.mubr.bf16.mxu0 0
    %270 = vmatmul.mubr.bf16.gmra.mrb[0].mxu0 %v214
    %v271 = vpop.f32.mrb[0].mxu0
    %v272 = vadd.f32 0.0, %v271
    %v273 = vpop.f32.mrb[0].mxu0
    %v274 = vpop.f32.mrb[0].mxu0
    %v275 = vadd.f32 0.0, %v274
    %v276 = vpop.f32.mrb[0].mxu0
    %277 = vmatprep.mubr.bf16.mxu0 0
    %278 = vmatmul.mubr.bf16.gmra.mrb[0].mxu0 %v217
    %v279 = vpop.f32.mrb[0].mxu0
    %v280 = vadd.f32 0.0, %v279
    %v281 = vpop.f32.mrb[0].mxu0
    %v282 = vpop.f32.mrb[0].mxu0
    %v283 = vadd.f32 0.0, %v282
    %v284 = vpop.f32.mrb[0].mxu0
    %285 = vmatprep.mubr.bf16.mxu0 0
    %286 = vmatmul.mubr.bf16.gmra.mrb[0].mxu0 %v220
    %v287 = vpop.f32.mrb[0].mxu0
    %v288 = vadd.f32 0.0, %v287
    %v289 = vpop.f32.mrb[0].mxu0
    %v290 = vpop.f32.mrb[0].mxu0
    %v291 = vadd.f32 0.0, %v290
    %v292 = vpop.f32.mrb[0].mxu0
    %293 = vmatprep.mubr.bf16.mxu0 0
    %294 = vmatmul.mubr.bf16.gmra.mrb[0].mxu0 %v223
    %v295 = vpop.f32.mrb[0].mxu0
    %v296 = vadd.f32 0.0, %v295
    %v297 = vpop.f32.mrb[0].mxu0
    %v298 = vpop.f32.mrb[0].mxu0
    %v299 = vadd.f32 0.0, %v298
    %v300 = vpop.f32.mrb[0].mxu0
    %301 = vmatprep.mubr.bf16.mxu0 0
    %302 = vmatmul.mubr.bf16.gmra.mrb[0].mxu0 %v226
    %v303 = vpop.f32.mrb[0].mxu0
    %v304 = vadd.f32 0.0, %v303
    %v305 = vpop.f32.mrb[0].mxu0
    %v306 = vpop.f32.mrb[0].mxu0
    %v307 = vadd.f32 0.0, %v306
    %v308 = vpop.f32.mrb[0].mxu0
    %309 = vmatprep.mubr.bf16.mxu0 0
    %310 = vmatmul.mubr.bf16.gmra.mrb[0].mxu0 %v229
    %v311 = vpop.f32.mrb[0].mxu0
    %v312 = vadd.f32 0.0, %v311
    %v313 = vpop.f32.mrb[0].mxu0
    %v314 = vpop.f32.mrb[0].mxu0
    %v315 = vadd.f32 0.0, %v314
    %v316 = vpop.f32.mrb[0].mxu0
    %317 = vmatprep.mubr.bf16.mxu0 0
    %318 = vmatmul.mubr.bf16.gmra.mrb[0].mxu0 %v232
    %v319 = vpop.f32.mrb[0].mxu0
    %v320 = vadd.f32 0.0, %v319
    %v321 = vpop.f32.mrb[0].mxu0
    %v322 = vpop.f32.mrb[0].mxu0
    %v323 = vadd.f32 0.0, %v322
    %v324 = vpop.f32.mrb[0].mxu0
    %325 = vmatprep.mubr.bf16.mxu0 0
    %326 = vmatmul.mubr.bf16.gmra.mrb[0].mxu0 %v235
    %v327 = vpop.f32.mrb[0].mxu0
    %v328 = vadd.f32 0.0, %v327
    %v329 = vpop.f32.mrb[0].mxu0
    %v330 = vpop.f32.mrb[0].mxu0
    %v331 = vadd.f32 0.0, %v330
    %v332 = vpop.f32.mrb[0].mxu0
    %333 = vdwg.mxu0
    %v334 = vlaneseq
    %v335 = vshrl.u32 %v334, 7
    %v336 = vsub.s32 1, %v335
    %v337 = vrot.slane %v28, %v336
    %v338 = vadd.f32 %v272, %v337
    %v339 = vadd.f32 %v275, %v337
    %v340 = vadd.f32 %v280, %v337
    %v341 = vadd.f32 %v283, %v337
    %v342 = vadd.f32 %v288, %v337
    %v343 = vadd.f32 %v291, %v337
    %v344 = vadd.f32 %v296, %v337
    %v345 = vadd.f32 %v299, %v337
    %v346 = vadd.f32 %v304, %v337
    %v347 = vadd.f32 %v307, %v337
    %v348 = vadd.f32 %v312, %v337
    %v349 = vadd.f32 %v315, %v337
    %v350 = vadd.f32 %v320, %v337
    %v351 = vadd.f32 %v323, %v337
    %v352 = vadd.f32 %v328, %v337
    %v353 = vadd.f32 %v331, %v337
    %v354 = vmul.f32 %v338, 0.25
    %v355 = vmul.f32 %v339, 0.25
    %v356 = vmul.f32 %v340, 0.25
    %v357 = vmul.f32 %v341, 0.25
    %v358 = vmul.f32 %v342, 0.25
    %v359 = vmul.f32 %v343, 0.25
    %v360 = vmul.f32 %v344, 0.25
    %v361 = vmul.f32 %v345, 0.25
    %v362 = vmul.f32 %v346, 0.25
    %v363 = vmul.f32 %v347, 0.25
    %v364 = vmul.f32 %v348, 0.25
    %v365 = vmul.f32 %v349, 0.25
    %v366 = vmul.f32 %v350, 0.25
    %v367 = vmul.f32 %v351, 0.25
    %v368 = vmul.f32 %v352, 0.25
    %v369 = vmul.f32 %v353, 0.25
    %v370 = vlaneseq
    %v371 = vshrl.u32 %v370, 7
    %v372 = vsub.s32 2, %v371
    %v373 = vrot.slane %v28, %v372
    %375 = vrot.lane.b32.xlu0 %v373, 32
    %v376 = vpop.permute.xlu0 %375
    %v378 = vadd.f32 %v272, %v376
    %v379 = vadd.f32 %v275, %v376
    %v380 = vadd.f32 %v280, %v376
    %v381 = vadd.f32 %v283, %v376
    %v382 = vadd.f32 %v288, %v376
    %v383 = vadd.f32 %v291, %v376
    %v384 = vadd.f32 %v296, %v376
    %v385 = vadd.f32 %v299, %v376
    %v386 = vadd.f32 %v304, %v376
    %v387 = vadd.f32 %v307, %v376
    %v388 = vadd.f32 %v312, %v376
    %v389 = vadd.f32 %v315, %v376
    %v390 = vadd.f32 %v320, %v376
    %v391 = vadd.f32 %v323, %v376
    %v392 = vadd.f32 %v328, %v376
    %v393 = vadd.f32 %v331, %v376
    %v394 = vlaneseq
    %v395 = vshrl.u32 %v394, 7
    %v396 = vsub.s32 3, %v395
    %v397 = vrot.slane %v28, %v396
    %399 = vrot.lane.b32.xlu0 %v397, 64
    %v400 = vpop.permute.xlu0 %399
    %v402 = vadd.f32 %v272, %v400
    %v403 = vadd.f32 %v275, %v400
    %v404 = vadd.f32 %v280, %v400
    %v405 = vadd.f32 %v283, %v400
    %v406 = vadd.f32 %v288, %v400
    %v407 = vadd.f32 %v291, %v400
    %v408 = vadd.f32 %v296, %v400
    %v409 = vadd.f32 %v299, %v400
    %v410 = vadd.f32 %v304, %v400
    %v411 = vadd.f32 %v307, %v400
    %v412 = vadd.f32 %v312, %v400
    %v413 = vadd.f32 %v315, %v400
    %v414 = vadd.f32 %v320, %v400
    %v415 = vadd.f32 %v323, %v400
    %v416 = vadd.f32 %v328, %v400
    %v417 = vadd.f32 %v331, %v400
    %434 = vrot.lane.b32.xlu0 %v354, 112
    %v435 = vpop.permute.xlu0 %434
    %436 = vrot.lane.b32.xlu0 %v355, 112
    %v437 = vpop.permute.xlu0 %436
    %438 = vrot.lane.b32.xlu0 %v356, 112
    %v439 = vpop.permute.xlu0 %438
    %440 = vrot.lane.b32.xlu0 %v357, 112
    %v441 = vpop.permute.xlu0 %440
    %442 = vrot.lane.b32.xlu0 %v358, 112
    %v443 = vpop.permute.xlu0 %442
    %444 = vrot.lane.b32.xlu0 %v359, 112
    %v445 = vpop.permute.xlu0 %444
    %446 = vrot.lane.b32.xlu0 %v360, 112
    %v447 = vpop.permute.xlu0 %446
    %448 = vrot.lane.b32.xlu0 %v361, 112
    %v449 = vpop.permute.xlu0 %448
    %450 = vrot.lane.b32.xlu0 %v362, 112
    %v451 = vpop.permute.xlu0 %450
    %452 = vrot.lane.b32.xlu0 %v363, 112
    %v453 = vpop.permute.xlu0 %452
    %454 = vrot.lane.b32.xlu0 %v364, 112
    %v455 = vpop.permute.xlu0 %454
    %456 = vrot.lane.b32.xlu0 %v365, 112
    %v457 = vpop.permute.xlu0 %456
    %458 = vrot.lane.b32.xlu0 %v366, 112
    %v459 = vpop.permute.xlu0 %458
    %460 = vrot.lane.b32.xlu0 %v367, 112
    %v461 = vpop.permute.xlu0 %460
    %462 = vrot.lane.b32.xlu0 %v368, 112
    %v463 = vpop.permute.xlu0 %462
    %464 = vrot.lane.b32.xlu0 %v369, 112
    %v465 = vpop.permute.xlu0 %464
    %482 = vrot.lane.b32.xlu0 %v378, 112
    %v483 = vpop.permute.xlu0 %482
    %484 = vrot.lane.b32.xlu0 %v379, 112
    %v485 = vpop.permute.xlu0 %484
    %486 = vrot.lane.b32.xlu0 %v380, 112
    %v487 = vpop.permute.xlu0 %486
    %488 = vrot.lane.b32.xlu0 %v381, 112
    %v489 = vpop.permute.xlu0 %488
    %490 = vrot.lane.b32.xlu0 %v382, 112
    %v491 = vpop.permute.xlu0 %490
    %492 = vrot.lane.b32.xlu0 %v383, 112
    %v493 = vpop.permute.xlu0 %492
    %494 = vrot.lane.b32.xlu0 %v384, 112
    %v495 = vpop.permute.xlu0 %494
    %496 = vrot.lane.b32.xlu0 %v385, 112
    %v497 = vpop.permute.xlu0 %496
    %498 = vrot.lane.b32.xlu0 %v386, 112
    %v499 = vpop.permute.xlu0 %498
    %500 = vrot.lane.b32.xlu0 %v387, 112
    %v501 = vpop.permute.xlu0 %500
    %502 = vrot.lane.b32.xlu0 %v388, 112
    %v503 = vpop.permute.xlu0 %502
    %504 = vrot.lane.b32.xlu0 %v389, 112
    %v505 = vpop.permute.xlu0 %504
    %506 = vrot.lane.b32.xlu0 %v390, 112
    %v507 = vpop.permute.xlu0 %506
    %508 = vrot.lane.b32.xlu0 %v391, 112
    %v509 = vpop.permute.xlu0 %508
    %510 = vrot.lane.b32.xlu0 %v392, 112
    %v511 = vpop.permute.xlu0 %510
    %512 = vrot.lane.b32.xlu0 %v393, 112
    %v513 = vpop.permute.xlu0 %512
    %530 = vrot.lane.b32.xlu0 %v402, 112
    %v531 = vpop.permute.xlu0 %530
    %532 = vrot.lane.b32.xlu0 %v403, 112
    %v533 = vpop.permute.xlu0 %532
    %534 = vrot.lane.b32.xlu0 %v404, 112
    %v535 = vpop.permute.xlu0 %534
    %536 = vrot.lane.b32.xlu0 %v405, 112
    %v537 = vpop.permute.xlu0 %536
    %538 = vrot.lane.b32.xlu0 %v406, 112
    %v539 = vpop.permute.xlu0 %538
    %540 = vrot.lane.b32.xlu0 %v407, 112
    %v541 = vpop.permute.xlu0 %540
    %542 = vrot.lane.b32.xlu0 %v408, 112
    %v543 = vpop.permute.xlu0 %542
    %544 = vrot.lane.b32.xlu0 %v409, 112
    %v545 = vpop.permute.xlu0 %544
    %546 = vrot.lane.b32.xlu0 %v410, 112
    %v547 = vpop.permute.xlu0 %546
    %548 = vrot.lane.b32.xlu0 %v411, 112
    %v549 = vpop.permute.xlu0 %548
    %550 = vrot.lane.b32.xlu0 %v412, 112
    %v551 = vpop.permute.xlu0 %550
    %552 = vrot.lane.b32.xlu0 %v413, 112
    %v553 = vpop.permute.xlu0 %552
    %554 = vrot.lane.b32.xlu0 %v414, 112
    %v555 = vpop.permute.xlu0 %554
    %556 = vrot.lane.b32.xlu0 %v415, 112
    %v557 = vpop.permute.xlu0 %556
    %558 = vrot.lane.b32.xlu0 %v416, 112
    %v559 = vpop.permute.xlu0 %558
    %560 = vrot.lane.b32.xlu0 %v417, 112
    %v561 = vpop.permute.xlu0 %560
    %562 = vrot.lane.b32.xlu0 %v378, 96
    %v563 = vpop.permute.xlu0 %562
    %v564 = vsel %vm66, %v354, 0
    %v566 = vsel %vm66, %v563, 0
    %568 = vmatprep.subr.mxu0 0.0
    %569 = vmatpush1.xpose.msra.mxu0 %v566
    %570 = vmatprep.subr.mxu0 0.0
    %571 = vmatpush1.xpose.msra.mxu0 0.0
    %572 = vmatprep.subr.mxu0 0.0
    %573 = vmatpush1.xpose.msra.mxu0 0.0
    %574 = vmatprep.subr.mxu0 0.0
    %575 = vmatpush1.xpose.msra.mxu0 0.0
    %576 = vmatprep.subr.mxu0 0.0
    %577 = vmatpush1.xpose.msra.mxu0 0.0
    %578 = vmatprep.subr.mxu0 0.0
    %579 = vmatpush1.xpose.msra.mxu0 0.0
    %580 = vmatprep.subr.mxu0 0.0
    %581 = vmatpush1.xpose.msra.mxu0 0.0
    %582 = vmatprep.subr.mxu0 0.0
    %583 = vmatpush1.xpose.msra.mxu0 0.0
    %584 = vmatprep.subr.mxu0 0.0
    %585 = vmatpush1.xpose.msra.mxu0 0.0
    %586 = vmatprep.subr.mxu0 0.0
    %587 = vmatpush1.xpose.msra.mxu0 0.0
    %588 = vmatprep.subr.mxu0 0.0
    %589 = vmatpush1.xpose.msra.mxu0 0.0
    %590 = vmatprep.subr.mxu0 0.0
    %591 = vmatpush1.xpose.msra.mxu0 0.0
    %592 = vmatprep.subr.mxu0 0.0
    %593 = vmatpush1.xpose.msra.mxu0 0.0
    %594 = vmatprep.subr.mxu0 0.0
    %595 = vmatpush1.xpose.msra.mxu0 0.0
    %596 = vmatprep.subr.mxu0 0.0
    %597 = vmatpush1.xpose.msra.mxu0 0.0
    %598 = vmatprep.subr.mxu0 0.0
    %599 = vmatpush1.xpose.msra.mxu0 0.0
    %600 = vmatprep.subr.mxu0 0.0
    %601 = vmatpush1.xpose.msra.mxu0 0.0
    %602 = vmatprep.subr.mxu0 0.0
    %603 = vmatpush1.xpose.msra.mxu0 0.0
    %604 = vmatprep.subr.mxu0 0.0
    %605 = vmatpush1.xpose.msra.mxu0 0.0
    %606 = vmatprep.subr.mxu0 0.0
    %607 = vmatpush1.xpose.msra.mxu0 0.0
    %608 = vmatprep.subr.mxu0 0.0
    %609 = vmatpush1.xpose.msra.mxu0 0.0
    %610 = vmatprep.subr.mxu0 0.0
    %611 = vmatpush1.xpose.msra.mxu0 0.0
    %612 = vmatprep.subr.mxu0 0.0
    %613 = vmatpush1.xpose.msra.mxu0 0.0
    %614 = vmatprep.subr.mxu0 0.0
    %615 = vmatpush1.xpose.msra.mxu0 0.0
    %616 = vmatprep.subr.mxu0 0.0
    %617 = vmatpush1.xpose.msra.mxu0 0.0
    %618 = vmatprep.subr.mxu0 0.0
    %619 = vmatpush1.xpose.msra.mxu0 0.0
    %620 = vmatprep.subr.mxu0 0.0
    %621 = vmatpush1.xpose.msra.mxu0 0.0
    %622 = vmatprep.subr.mxu0 0.0
    %623 = vmatpush1.xpose.msra.mxu0 0.0
    %624 = vmatprep.subr.mxu0 0.0
    %625 = vmatpush1.xpose.msra.mxu0 0.0
    %626 = vmatprep.subr.mxu0 0.0
    %627 = vmatpush1.xpose.msra.mxu0 0.0
    %628 = vmatprep.subr.mxu0 0.0
    %629 = vmatpush1.xpose.msra.mxu0 0.0
    %630 = vmatprep.subr.mxu0 0.0
    %631 = vmatpush1.xpose.msra.mxu0 0.0
    %632 = vmatprep.mubr.f32.mxu0 0.0
    %633 = vmatmul.mubr.f32.gmra.mrb[0].mxu0 %v564
    %v634 = vpop.f32.mrb[0].mxu0
    %v635 = vadd.f32 0.0, %v634
    %v636 = vpop.f32.mrb[0].mxu0
    %637 = vdwg.mxu0
    %638 = vrot.lane.b32.xlu0 %v379, 96
    %v639 = vpop.permute.xlu0 %638
    %v640 = vsel %vm66, %v355, 0
    %v642 = vsel %vm66, %v639, 0
    %644 = vmatprep.subr.mxu0 0.0
    %645 = vmatpush1.xpose.msra.mxu0 %v642
    %646 = vmatprep.subr.mxu0 0.0
    %647 = vmatpush1.xpose.msra.mxu0 0.0
    %648 = vmatprep.subr.mxu0 0.0
    %649 = vmatpush1.xpose.msra.mxu0 0.0
    %650 = vmatprep.subr.mxu0 0.0
    %651 = vmatpush1.xpose.msra.mxu0 0.0
    %652 = vmatprep.subr.mxu0 0.0
    %653 = vmatpush1.xpose.msra.mxu0 0.0
    %654 = vmatprep.subr.mxu0 0.0
    %655 = vmatpush1.xpose.msra.mxu0 0.0
    %656 = vmatprep.subr.mxu0 0.0
    %657 = vmatpush1.xpose.msra.mxu0 0.0
    %658 = vmatprep.subr.mxu0 0.0
    %659 = vmatpush1.xpose.msra.mxu0 0.0
    %660 = vmatprep.subr.mxu0 0.0
    %661 = vmatpush1.xpose.msra.mxu0 0.0
    %662 = vmatprep.subr.mxu0 0.0
    %663 = vmatpush1.xpose.msra.mxu0 0.0
    %664 = vmatprep.subr.mxu0 0.0
    %665 = vmatpush1.xpose.msra.mxu0 0.0
    %666 = vmatprep.subr.mxu0 0.0
    %667 = vmatpush1.xpose.msra.mxu0 0.0
    %668 = vmatprep.subr.mxu0 0.0
    %669 = vmatpush1.xpose.msra.mxu0 0.0
    %670 = vmatprep.subr.mxu0 0.0
    %671 = vmatpush1.xpose.msra.mxu0 0.0
    %672 = vmatprep.subr.mxu0 0.0
    %673 = vmatpush1.xpose.msra.mxu0 0.0
    %674 = vmatprep.subr.mxu0 0.0
    %675 = vmatpush1.xpose.msra.mxu0 0.0
    %676 = vmatprep.subr.mxu0 0.0
    %677 = vmatpush1.xpose.msra.mxu0 0.0
    %678 = vmatprep.subr.mxu0 0.0
    %679 = vmatpush1.xpose.msra.mxu0 0.0
    %680 = vmatprep.subr.mxu0 0.0
    %681 = vmatpush1.xpose.msra.mxu0 0.0
    %682 = vmatprep.subr.mxu0 0.0
    %683 = vmatpush1.xpose.msra.mxu0 0.0
    %684 = vmatprep.subr.mxu0 0.0
    %685 = vmatpush1.xpose.msra.mxu0 0.0
    %686 = vmatprep.subr.mxu0 0.0
    %687 = vmatpush1.xpose.msra.mxu0 0.0
    %688 = vmatprep.subr.mxu0 0.0
    %689 = vmatpush1.xpose.msra.mxu0 0.0
    %690 = vmatprep.subr.mxu0 0.0
    %691 = vmatpush1.xpose.msra.mxu0 0.0
    %692 = vmatprep.subr.mxu0 0.0
    %693 = vmatpush1.xpose.msra.mxu0 0.0
    %694 = vmatprep.subr.mxu0 0.0
    %695 = vmatpush1.xpose.msra.mxu0 0.0
    %696 = vmatprep.subr.mxu0 0.0
    %697 = vmatpush1.xpose.msra.mxu0 0.0
    %698 = vmatprep.subr.mxu0 0.0
    %699 = vmatpush1.xpose.msra.mxu0 0.0
    %700 = vmatprep.subr.mxu0 0.0
    %701 = vmatpush1.xpose.msra.mxu0 0.0
    %702 = vmatprep.subr.mxu0 0.0
    %703 = vmatpush1.xpose.msra.mxu0 0.0
    %704 = vmatprep.subr.mxu0 0.0
    %705 = vmatpush1.xpose.msra.mxu0 0.0
    %706 = vmatprep.subr.mxu0 0.0
    %707 = vmatpush1.xpose.msra.mxu0 0.0
    %708 = vmatprep.mubr.f32.mxu0 0.0
    %709 = vmatmul.mubr.f32.gmra.mrb[0].mxu0 %v640
    %v710 = vpop.f32.mrb[0].mxu0
    %v711 = vadd.f32 0.0, %v710
    %v712 = vpop.f32.mrb[0].mxu0
    %713 = vdwg.mxu0
    %714 = vrot.lane.b32.xlu0 %v380, 96
    %v715 = vpop.permute.xlu0 %714
    %v716 = vsel %vm66, %v356, 0
    %v718 = vsel %vm66, %v715, 0
    %720 = vmatprep.subr.mxu0 0.0
    %721 = vmatpush1.xpose.msra.mxu0 %v718
    %722 = vmatprep.subr.mxu0 0.0
    %723 = vmatpush1.xpose.msra.mxu0 0.0
    %724 = vmatprep.subr.mxu0 0.0
    %725 = vmatpush1.xpose.msra.mxu0 0.0
    %726 = vmatprep.subr.mxu0 0.0
    %727 = vmatpush1.xpose.msra.mxu0 0.0
    %728 = vmatprep.subr.mxu0 0.0
    %729 = vmatpush1.xpose.msra.mxu0 0.0
    %730 = vmatprep.subr.mxu0 0.0
    %731 = vmatpush1.xpose.msra.mxu0 0.0
    %732 = vmatprep.subr.mxu0 0.0
    %733 = vmatpush1.xpose.msra.mxu0 0.0
    %734 = vmatprep.subr.mxu0 0.0
    %735 = vmatpush1.xpose.msra.mxu0 0.0
    %736 = vmatprep.subr.mxu0 0.0
    %737 = vmatpush1.xpose.msra.mxu0 0.0
    %738 = vmatprep.subr.mxu0 0.0
    %739 = vmatpush1.xpose.msra.mxu0 0.0
    %740 = vmatprep.subr.mxu0 0.0
    %741 = vmatpush1.xpose.msra.mxu0 0.0
    %742 = vmatprep.subr.mxu0 0.0
    %743 = vmatpush1.xpose.msra.mxu0 0.0
    %744 = vmatprep.subr.mxu0 0.0
    %745 = vmatpush1.xpose.msra.mxu0 0.0
    %746 = vmatprep.subr.mxu0 0.0
    %747 = vmatpush1.xpose.msra.mxu0 0.0
    %748 = vmatprep.subr.mxu0 0.0
    %749 = vmatpush1.xpose.msra.mxu0 0.0
    %750 = vmatprep.subr.mxu0 0.0
    %751 = vmatpush1.xpose.msra.mxu0 0.0
    %752 = vmatprep.subr.mxu0 0.0
    %753 = vmatpush1.xpose.msra.mxu0 0.0
    %754 = vmatprep.subr.mxu0 0.0
    %755 = vmatpush1.xpose.msra.mxu0 0.0
    %756 = vmatprep.subr.mxu0 0.0
    %757 = vmatpush1.xpose.msra.mxu0 0.0
    %758 = vmatprep.subr.mxu0 0.0
    %759 = vmatpush1.xpose.msra.mxu0 0.0
    %760 = vmatprep.subr.mxu0 0.0
    %761 = vmatpush1.xpose.msra.mxu0 0.0
    %762 = vmatprep.subr.mxu0 0.0
    %763 = vmatpush1.xpose.msra.mxu0 0.0
    %764 = vmatprep.subr.mxu0 0.0
    %765 = vmatpush1.xpose.msra.mxu0 0.0
    %766 = vmatprep.subr.mxu0 0.0
    %767 = vmatpush1.xpose.msra.mxu0 0.0
    %768 = vmatprep.subr.mxu0 0.0
    %769 = vmatpush1.xpose.msra.mxu0 0.0
    %770 = vmatprep.subr.mxu0 0.0
    %771 = vmatpush1.xpose.msra.mxu0 0.0
    %772 = vmatprep.subr.mxu0 0.0
    %773 = vmatpush1.xpose.msra.mxu0 0.0
    %774 = vmatprep.subr.mxu0 0.0
    %775 = vmatpush1.xpose.msra.mxu0 0.0
    %776 = vmatprep.subr.mxu0 0.0
    %777 = vmatpush1.xpose.msra.mxu0 0.0
    %778 = vmatprep.subr.mxu0 0.0
    %779 = vmatpush1.xpose.msra.mxu0 0.0
    %780 = vmatprep.subr.mxu0 0.0
    %781 = vmatpush1.xpose.msra.mxu0 0.0
    %782 = vmatprep.subr.mxu0 0.0
    %783 = vmatpush1.xpose.msra.mxu0 0.0
    %784 = vmatprep.mubr.f32.mxu0 0.0
    %785 = vmatmul.mubr.f32.gmra.mrb[0].mxu0 %v716
    %v786 = vpop.f32.mrb[0].mxu0
    %v787 = vadd.f32 0.0, %v786
    %v788 = vpop.f32.mrb[0].mxu0
    %789 = vdwg.mxu0
    %790 = vrot.lane.b32.xlu0 %v381, 96
    %v791 = vpop.permute.xlu0 %790
    %v792 = vsel %vm66, %v357, 0
    %v794 = vsel %vm66, %v791, 0
    %796 = vmatprep.subr.mxu0 0.0
    %797 = vmatpush1.xpose.msra.mxu0 %v794
    %798 = vmatprep.subr.mxu0 0.0
    %799 = vmatpush1.xpose.msra.mxu0 0.0
    %800 = vmatprep.subr.mxu0 0.0
    %801 = vmatpush1.xpose.msra.mxu0 0.0
    %802 = vmatprep.subr.mxu0 0.0
    %803 = vmatpush1.xpose.msra.mxu0 0.0
    %804 = vmatprep.subr.mxu0 0.0
    %805 = vmatpush1.xpose.msra.mxu0 0.0
    %806 = vmatprep.subr.mxu0 0.0
    %807 = vmatpush1.xpose.msra.mxu0 0.0
    %808 = vmatprep.subr.mxu0 0.0
    %809 = vmatpush1.xpose.msra.mxu0 0.0
    %810 = vmatprep.subr.mxu0 0.0
    %811 = vmatpush1.xpose.msra.mxu0 0.0
    %812 = vmatprep.subr.mxu0 0.0
    %813 = vmatpush1.xpose.msra.mxu0 0.0
    %814 = vmatprep.subr.mxu0 0.0
    %815 = vmatpush1.xpose.msra.mxu0 0.0
    %816 = vmatprep.subr.mxu0 0.0
    %817 = vmatpush1.xpose.msra.mxu0 0.0
    %818 = vmatprep.subr.mxu0 0.0
    %819 = vmatpush1.xpose.msra.mxu0 0.0
    %820 = vmatprep.subr.mxu0 0.0
    %821 = vmatpush1.xpose.msra.mxu0 0.0
    %822 = vmatprep.subr.mxu0 0.0
    %823 = vmatpush1.xpose.msra.mxu0 0.0
    %824 = vmatprep.subr.mxu0 0.0
    %825 = vmatpush1.xpose.msra.mxu0 0.0
    %826 = vmatprep.subr.mxu0 0.0
    %827 = vmatpush1.xpose.msra.mxu0 0.0
    %828 = vmatprep.subr.mxu0 0.0
    %829 = vmatpush1.xpose.msra.mxu0 0.0
    %830 = vmatprep.subr.mxu0 0.0
    %831 = vmatpush1.xpose.msra.mxu0 0.0
    %832 = vmatprep.subr.mxu0 0.0
    %833 = vmatpush1.xpose.msra.mxu0 0.0
    %834 = vmatprep.subr.mxu0 0.0
    %835 = vmatpush1.xpose.msra.mxu0 0.0
    %836 = vmatprep.subr.mxu0 0.0
    %837 = vmatpush1.xpose.msra.mxu0 0.0
    %838 = vmatprep.subr.mxu0 0.0
    %839 = vmatpush1.xpose.msra.mxu0 0.0
    %840 = vmatprep.subr.mxu0 0.0
    %841 = vmatpush1.xpose.msra.mxu0 0.0
    %842 = vmatprep.subr.mxu0 0.0
    %843 = vmatpush1.xpose.msra.mxu0 0.0
    %844 = vmatprep.subr.mxu0 0.0
    %845 = vmatpush1.xpose.msra.mxu0 0.0
    %846 = vmatprep.subr.mxu0 0.0
    %847 = vmatpush1.xpose.msra.mxu0 0.0
    %848 = vmatprep.subr.mxu0 0.0
    %849 = vmatpush1.xpose.msra.mxu0 0.0
    %850 = vmatprep.subr.mxu0 0.0
    %851 = vmatpush1.xpose.msra.mxu0 0.0
    %852 = vmatprep.subr.mxu0 0.0
    %853 = vmatpush1.xpose.msra.mxu0 0.0
    %854 = vmatprep.subr.mxu0 0.0
    %855 = vmatpush1.xpose.msra.mxu0 0.0
    %856 = vmatprep.subr.mxu0 0.0
    %857 = vmatpush1.xpose.msra.mxu0 0.0
    %858 = vmatprep.subr.mxu0 0.0
    %859 = vmatpush1.xpose.msra.mxu0 0.0
    %860 = vmatprep.mubr.f32.mxu0 0.0
    %861 = vmatmul.mubr.f32.gmra.mrb[0].mxu0 %v792
    %v862 = vpop.f32.mrb[0].mxu0
    %v863 = vadd.f32 0.0, %v862
    %v864 = vpop.f32.mrb[0].mxu0
    %865 = vdwg.mxu0
    %866 = vrot.lane.b32.xlu0 %v382, 96
    %v867 = vpop.permute.xlu0 %866
    %v868 = vsel %vm66, %v358, 0
    %v870 = vsel %vm66, %v867, 0
    %872 = vmatprep.subr.mxu0 0.0
    %873 = vmatpush1.xpose.msra.mxu0 %v870
    %874 = vmatprep.subr.mxu0 0.0
    %875 = vmatpush1.xpose.msra.mxu0 0.0
    %876 = vmatprep.subr.mxu0 0.0
    %877 = vmatpush1.xpose.msra.mxu0 0.0
    %878 = vmatprep.subr.mxu0 0.0
    %879 = vmatpush1.xpose.msra.mxu0 0.0
    %880 = vmatprep.subr.mxu0 0.0
    %881 = vmatpush1.xpose.msra.mxu0 0.0
    %882 = vmatprep.subr.mxu0 0.0
    %883 = vmatpush1.xpose.msra.mxu0 0.0
    %884 = vmatprep.subr.mxu0 0.0
    %885 = vmatpush1.xpose.msra.mxu0 0.0
    %886 = vmatprep.subr.mxu0 0.0
    %887 = vmatpush1.xpose.msra.mxu0 0.0
    %888 = vmatprep.subr.mxu0 0.0
    %889 = vmatpush1.xpose.msra.mxu0 0.0
    %890 = vmatprep.subr.mxu0 0.0
    %891 = vmatpush1.xpose.msra.mxu0 0.0
    %892 = vmatprep.subr.mxu0 0.0
    %893 = vmatpush1.xpose.msra.mxu0 0.0
    %894 = vmatprep.subr.mxu0 0.0
    %895 = vmatpush1.xpose.msra.mxu0 0.0
    %896 = vmatprep.subr.mxu0 0.0
    %897 = vmatpush1.xpose.msra.mxu0 0.0
    %898 = vmatprep.subr.mxu0 0.0
    %899 = vmatpush1.xpose.msra.mxu0 0.0
    %900 = vmatprep.subr.mxu0 0.0
    %901 = vmatpush1.xpose.msra.mxu0 0.0
    %902 = vmatprep.subr.mxu0 0.0
    %903 = vmatpush1.xpose.msra.mxu0 0.0
    %904 = vmatprep.subr.mxu0 0.0
    %905 = vmatpush1.xpose.msra.mxu0 0.0
    %906 = vmatprep.subr.mxu0 0.0
    %907 = vmatpush1.xpose.msra.mxu0 0.0
    %908 = vmatprep.subr.mxu0 0.0
    %909 = vmatpush1.xpose.msra.mxu0 0.0
    %910 = vmatprep.subr.mxu0 0.0
    %911 = vmatpush1.xpose.msra.mxu0 0.0
    %912 = vmatprep.subr.mxu0 0.0
    %913 = vmatpush1.xpose.msra.mxu0 0.0
    %914 = vmatprep.subr.mxu0 0.0
    %915 = vmatpush1.xpose.msra.mxu0 0.0
    %916 = vmatprep.subr.mxu0 0.0
    %917 = vmatpush1.xpose.msra.mxu0 0.0
    %918 = vmatprep.subr.mxu0 0.0
    %919 = vmatpush1.xpose.msra.mxu0 0.0
    %920 = vmatprep.subr.mxu0 0.0
    %921 = vmatpush1.xpose.msra.mxu0 0.0
    %922 = vmatprep.subr.mxu0 0.0
    %923 = vmatpush1.xpose.msra.mxu0 0.0
    %924 = vmatprep.subr.mxu0 0.0
    %925 = vmatpush1.xpose.msra.mxu0 0.0
    %926 = vmatprep.subr.mxu0 0.0
    %927 = vmatpush1.xpose.msra.mxu0 0.0
    %928 = vmatprep.subr.mxu0 0.0
    %929 = vmatpush1.xpose.msra.mxu0 0.0
    %930 = vmatprep.subr.mxu0 0.0
    %931 = vmatpush1.xpose.msra.mxu0 0.0
    %932 = vmatprep.subr.mxu0 0.0
    %933 = vmatpush1.xpose.msra.mxu0 0.0
    %934 = vmatprep.subr.mxu0 0.0
    %935 = vmatpush1.xpose.msra.mxu0 0.0
    %936 = vmatprep.mubr.f32.mxu0 0.0
    %937 = vmatmul.mubr.f32.gmra.mrb[0].mxu0 %v868
    %v938 = vpop.f32.mrb[0].mxu0
    %v939 = vadd.f32 0.0, %v938
    %v940 = vpop.f32.mrb[0].mxu0
    %941 = vdwg.mxu0
    %942 = vrot.lane.b32.xlu0 %v383, 96
    %v943 = vpop.permute.xlu0 %942
    %v944 = vsel %vm66, %v359, 0
    %v946 = vsel %vm66, %v943, 0
    %948 = vmatprep.subr.mxu0 0.0
    %949 = vmatpush1.xpose.msra.mxu0 %v946
    %950 = vmatprep.subr.mxu0 0.0
    %951 = vmatpush1.xpose.msra.mxu0 0.0
    %952 = vmatprep.subr.mxu0 0.0
    %953 = vmatpush1.xpose.msra.mxu0 0.0
    %954 = vmatprep.subr.mxu0 0.0
    %955 = vmatpush1.xpose.msra.mxu0 0.0
    %956 = vmatprep.subr.mxu0 0.0
    %957 = vmatpush1.xpose.msra.mxu0 0.0
    %958 = vmatprep.subr.mxu0 0.0
    %959 = vmatpush1.xpose.msra.mxu0 0.0
    %960 = vmatprep.subr.mxu0 0.0
    %961 = vmatpush1.xpose.msra.mxu0 0.0
    %962 = vmatprep.subr.mxu0 0.0
    %963 = vmatpush1.xpose.msra.mxu0 0.0
    %964 = vmatprep.subr.mxu0 0.0
    %965 = vmatpush1.xpose.msra.mxu0 0.0
    %966 = vmatprep.subr.mxu0 0.0
    %967 = vmatpush1.xpose.msra.mxu0 0.0
    %968 = vmatprep.subr.mxu0 0.0
    %969 = vmatpush1.xpose.msra.mxu0 0.0
    %970 = vmatprep.subr.mxu0 0.0
    %971 = vmatpush1.xpose.msra.mxu0 0.0
    %972 = vmatprep.subr.mxu0 0.0
    %973 = vmatpush1.xpose.msra.mxu0 0.0
    %974 = vmatprep.subr.mxu0 0.0
    %975 = vmatpush1.xpose.msra.mxu0 0.0
    %976 = vmatprep.subr.mxu0 0.0
    %977 = vmatpush1.xpose.msra.mxu0 0.0
    %978 = vmatprep.subr.mxu0 0.0
    %979 = vmatpush1.xpose.msra.mxu0 0.0
    %980 = vmatprep.subr.mxu0 0.0
    %981 = vmatpush1.xpose.msra.mxu0 0.0
    %982 = vmatprep.subr.mxu0 0.0
    %983 = vmatpush1.xpose.msra.mxu0 0.0
    %984 = vmatprep.subr.mxu0 0.0
    %985 = vmatpush1.xpose.msra.mxu0 0.0
    %986 = vmatprep.subr.mxu0 0.0
    %987 = vmatpush1.xpose.msra.mxu0 0.0
    %988 = vmatprep.subr.mxu0 0.0
    %989 = vmatpush1.xpose.msra.mxu0 0.0
    %990 = vmatprep.subr.mxu0 0.0
    %991 = vmatpush1.xpose.msra.mxu0 0.0
    %992 = vmatprep.subr.mxu0 0.0
    %993 = vmatpush1.xpose.msra.mxu0 0.0
    %994 = vmatprep.subr.mxu0 0.0
    %995 = vmatpush1.xpose.msra.mxu0 0.0
    %996 = vmatprep.subr.mxu0 0.0
    %997 = vmatpush1.xpose.msra.mxu0 0.0
    %998 = vmatprep.subr.mxu0 0.0
    %999 = vmatpush1.xpose.msra.mxu0 0.0
    %1000 = vmatprep.subr.mxu0 0.0
    %1001 = vmatpush1.xpose.msra.mxu0 0.0
    %1002 = vmatprep.subr.mxu0 0.0
    %1003 = vmatpush1.xpose.msra.mxu0 0.0
    %1004 = vmatprep.subr.mxu0 0.0
    %1005 = vmatpush1.xpose.msra.mxu0 0.0
    %1006 = vmatprep.subr.mxu0 0.0
    %1007 = vmatpush1.xpose.msra.mxu0 0.0
    %1008 = vmatprep.subr.mxu0 0.0
    %1009 = vmatpush1.xpose.msra.mxu0 0.0
    %1010 = vmatprep.subr.mxu0 0.0
    %1011 = vmatpush1.xpose.msra.mxu0 0.0
    %1012 = vmatprep.mubr.f32.mxu0 0.0
    %1013 = vmatmul.mubr.f32.gmra.mrb[0].mxu0 %v944
    %v1014 = vpop.f32.mrb[0].mxu0
    %v1015 = vadd.f32 0.0, %v1014
    %v1016 = vpop.f32.mrb[0].mxu0
    %1017 = vdwg.mxu0
    %1018 = vrot.lane.b32.xlu0 %v384, 96
    %v1019 = vpop.permute.xlu0 %1018
    %v1020 = vsel %vm66, %v360, 0
    %v1022 = vsel %vm66, %v1019, 0
    %1024 = vmatprep.subr.mxu0 0.0
    %1025 = vmatpush1.xpose.msra.mxu0 %v1022
    %1026 = vmatprep.subr.mxu0 0.0
    %1027 = vmatpush1.xpose.msra.mxu0 0.0
    %1028 = vmatprep.subr.mxu0 0.0
    %1029 = vmatpush1.xpose.msra.mxu0 0.0
    %1030 = vmatprep.subr.mxu0 0.0
    %1031 = vmatpush1.xpose.msra.mxu0 0.0
    %1032 = vmatprep.subr.mxu0 0.0
    %1033 = vmatpush1.xpose.msra.mxu0 0.0
    %1034 = vmatprep.subr.mxu0 0.0
    %1035 = vmatpush1.xpose.msra.mxu0 0.0
    %1036 = vmatprep.subr.mxu0 0.0
    %1037 = vmatpush1.xpose.msra.mxu0 0.0
    %1038 = vmatprep.subr.mxu0 0.0
    %1039 = vmatpush1.xpose.msra.mxu0 0.0
    %1040 = vmatprep.subr.mxu0 0.0
    %1041 = vmatpush1.xpose.msra.mxu0 0.0
    %1042 = vmatprep.subr.mxu0 0.0
    %1043 = vmatpush1.xpose.msra.mxu0 0.0
    %1044 = vmatprep.subr.mxu0 0.0
    %1045 = vmatpush1.xpose.msra.mxu0 0.0
    %1046 = vmatprep.subr.mxu0 0.0
    %1047 = vmatpush1.xpose.msra.mxu0 0.0
    %1048 = vmatprep.subr.mxu0 0.0
    %1049 = vmatpush1.xpose.msra.mxu0 0.0
    %1050 = vmatprep.subr.mxu0 0.0
    %1051 = vmatpush1.xpose.msra.mxu0 0.0
    %1052 = vmatprep.subr.mxu0 0.0
    %1053 = vmatpush1.xpose.msra.mxu0 0.0
    %1054 = vmatprep.subr.mxu0 0.0
    %1055 = vmatpush1.xpose.msra.mxu0 0.0
    %1056 = vmatprep.subr.mxu0 0.0
    %1057 = vmatpush1.xpose.msra.mxu0 0.0
    %1058 = vmatprep.subr.mxu0 0.0
    %1059 = vmatpush1.xpose.msra.mxu0 0.0
    %1060 = vmatprep.subr.mxu0 0.0
    %1061 = vmatpush1.xpose.msra.mxu0 0.0
    %1062 = vmatprep.subr.mxu0 0.0
    %1063 = vmatpush1.xpose.msra.mxu0 0.0
    %1064 = vmatprep.subr.mxu0 0.0
    %1065 = vmatpush1.xpose.msra.mxu0 0.0
    %1066 = vmatprep.subr.mxu0 0.0
    %1067 = vmatpush1.xpose.msra.mxu0 0.0
    %1068 = vmatprep.subr.mxu0 0.0
    %1069 = vmatpush1.xpose.msra.mxu0 0.0
    %1070 = vmatprep.subr.mxu0 0.0
    %1071 = vmatpush1.xpose.msra.mxu0 0.0
    %1072 = vmatprep.subr.mxu0 0.0
    %1073 = vmatpush1.xpose.msra.mxu0 0.0
    %1074 = vmatprep.subr.mxu0 0.0
    %1075 = vmatpush1.xpose.msra.mxu0 0.0
    %1076 = vmatprep.subr.mxu0 0.0
    %1077 = vmatpush1.xpose.msra.mxu0 0.0
    %1078 = vmatprep.subr.mxu0 0.0
    %1079 = vmatpush1.xpose.msra.mxu0 0.0
    %1080 = vmatprep.subr.mxu0 0.0
    %1081 = vmatpush1.xpose.msra.mxu0 0.0
    %1082 = vmatprep.subr.mxu0 0.0
    %1083 = vmatpush1.xpose.msra.mxu0 0.0
    %1084 = vmatprep.subr.mxu0 0.0
    %1085 = vmatpush1.xpose.msra.mxu0 0.0
    %1086 = vmatprep.subr.mxu0 0.0
    %1087 = vmatpush1.xpose.msra.mxu0 0.0
    %1088 = vmatprep.mubr.f32.mxu0 0.0
    %1089 = vmatmul.mubr.f32.gmra.mrb[0].mxu0 %v1020
    %v1090 = vpop.f32.mrb[0].mxu0
    %v1091 = vadd.f32 0.0, %v1090
    %v1092 = vpop.f32.mrb[0].mxu0
    %1093 = vdwg.mxu0
    %1094 = vrot.lane.b32.xlu0 %v385, 96
    %v1095 = vpop.permute.xlu0 %1094
    %v1096 = vsel %vm66, %v361, 0
    %v1098 = vsel %vm66, %v1095, 0
    %1100 = vmatprep.subr.mxu0 0.0
    %1101 = vmatpush1.xpose.msra.mxu0 %v1098
    %1102 = vmatprep.subr.mxu0 0.0
    %1103 = vmatpush1.xpose.msra.mxu0 0.0
    %1104 = vmatprep.subr.mxu0 0.0
    %1105 = vmatpush1.xpose.msra.mxu0 0.0
    %1106 = vmatprep.subr.mxu0 0.0
    %1107 = vmatpush1.xpose.msra.mxu0 0.0
    %1108 = vmatprep.subr.mxu0 0.0
    %1109 = vmatpush1.xpose.msra.mxu0 0.0
    %1110 = vmatprep.subr.mxu0 0.0
    %1111 = vmatpush1.xpose.msra.mxu0 0.0
    %1112 = vmatprep.subr.mxu0 0.0
    %1113 = vmatpush1.xpose.msra.mxu0 0.0
    %1114 = vmatprep.subr.mxu0 0.0
    %1115 = vmatpush1.xpose.msra.mxu0 0.0
    %1116 = vmatprep.subr.mxu0 0.0
    %1117 = vmatpush1.xpose.msra.mxu0 0.0
    %1118 = vmatprep.subr.mxu0 0.0
    %1119 = vmatpush1.xpose.msra.mxu0 0.0
    %1120 = vmatprep.subr.mxu0 0.0
    %1121 = vmatpush1.xpose.msra.mxu0 0.0
    %1122 = vmatprep.subr.mxu0 0.0
    %1123 = vmatpush1.xpose.msra.mxu0 0.0
    %1124 = vmatprep.subr.mxu0 0.0
    %1125 = vmatpush1.xpose.msra.mxu0 0.0
    %1126 = vmatprep.subr.mxu0 0.0
    %1127 = vmatpush1.xpose.msra.mxu0 0.0
    %1128 = vmatprep.subr.mxu0 0.0
    %1129 = vmatpush1.xpose.msra.mxu0 0.0
    %1130 = vmatprep.subr.mxu0 0.0
    %1131 = vmatpush1.xpose.msra.mxu0 0.0
    %1132 = vmatprep.subr.mxu0 0.0
    %1133 = vmatpush1.xpose.msra.mxu0 0.0
    %1134 = vmatprep.subr.mxu0 0.0
    %1135 = vmatpush1.xpose.msra.mxu0 0.0
    %1136 = vmatprep.subr.mxu0 0.0
    %1137 = vmatpush1.xpose.msra.mxu0 0.0
    %1138 = vmatprep.subr.mxu0 0.0
    %1139 = vmatpush1.xpose.msra.mxu0 0.0
    %1140 = vmatprep.subr.mxu0 0.0
    %1141 = vmatpush1.xpose.msra.mxu0 0.0
    %1142 = vmatprep.subr.mxu0 0.0
    %1143 = vmatpush1.xpose.msra.mxu0 0.0
    %1144 = vmatprep.subr.mxu0 0.0
    %1145 = vmatpush1.xpose.msra.mxu0 0.0
    %1146 = vmatprep.subr.mxu0 0.0
    %1147 = vmatpush1.xpose.msra.mxu0 0.0
    %1148 = vmatprep.subr.mxu0 0.0
    %1149 = vmatpush1.xpose.msra.mxu0 0.0
    %1150 = vmatprep.subr.mxu0 0.0
    %1151 = vmatpush1.xpose.msra.mxu0 0.0
    %1152 = vmatprep.subr.mxu0 0.0
    %1153 = vmatpush1.xpose.msra.mxu0 0.0
    %1154 = vmatprep.subr.mxu0 0.0
    %1155 = vmatpush1.xpose.msra.mxu0 0.0
    %1156 = vmatprep.subr.mxu0 0.0
    %1157 = vmatpush1.xpose.msra.mxu0 0.0
    %1158 = vmatprep.subr.mxu0 0.0
    %1159 = vmatpush1.xpose.msra.mxu0 0.0
    %1160 = vmatprep.subr.mxu0 0.0
    %1161 = vmatpush1.xpose.msra.mxu0 0.0
    %1162 = vmatprep.subr.mxu0 0.0
    %1163 = vmatpush1.xpose.msra.mxu0 0.0
    %1164 = vmatprep.mubr.f32.mxu0 0.0
    %1165 = vmatmul.mubr.f32.gmra.mrb[0].mxu0 %v1096
    %v1166 = vpop.f32.mrb[0].mxu0
    %v1167 = vadd.f32 0.0, %v1166
    %v1168 = vpop.f32.mrb[0].mxu0
    %1169 = vdwg.mxu0
    %1170 = vrot.lane.b32.xlu0 %v386, 96
    %v1171 = vpop.permute.xlu0 %1170
    %v1172 = vsel %vm66, %v362, 0
    %v1174 = vsel %vm66, %v1171, 0
    %1176 = vmatprep.subr.mxu0 0.0
    %1177 = vmatpush1.xpose.msra.mxu0 %v1174
    %1178 = vmatprep.subr.mxu0 0.0
    %1179 = vmatpush1.xpose.msra.mxu0 0.0
    %1180 = vmatprep.subr.mxu0 0.0
    %1181 = vmatpush1.xpose.msra.mxu0 0.0
    %1182 = vmatprep.subr.mxu0 0.0
    %1183 = vmatpush1.xpose.msra.mxu0 0.0
    %1184 = vmatprep.subr.mxu0 0.0
    %1185 = vmatpush1.xpose.msra.mxu0 0.0
    %1186 = vmatprep.subr.mxu0 0.0
    %1187 = vmatpush1.xpose.msra.mxu0 0.0
    %1188 = vmatprep.subr.mxu0 0.0
    %1189 = vmatpush1.xpose.msra.mxu0 0.0
    %1190 = vmatprep.subr.mxu0 0.0
    %1191 = vmatpush1.xpose.msra.mxu0 0.0
    %1192 = vmatprep.subr.mxu0 0.0
    %1193 = vmatpush1.xpose.msra.mxu0 0.0
    %1194 = vmatprep.subr.mxu0 0.0
    %1195 = vmatpush1.xpose.msra.mxu0 0.0
    %1196 = vmatprep.subr.mxu0 0.0
    %1197 = vmatpush1.xpose.msra.mxu0 0.0
    %1198 = vmatprep.subr.mxu0 0.0
    %1199 = vmatpush1.xpose.msra.mxu0 0.0
    %1200 = vmatprep.subr.mxu0 0.0
    %1201 = vmatpush1.xpose.msra.mxu0 0.0
    %1202 = vmatprep.subr.mxu0 0.0
    %1203 = vmatpush1.xpose.msra.mxu0 0.0
    %1204 = vmatprep.subr.mxu0 0.0
    %1205 = vmatpush1.xpose.msra.mxu0 0.0
    %1206 = vmatprep.subr.mxu0 0.0
    %1207 = vmatpush1.xpose.msra.mxu0 0.0
    %1208 = vmatprep.subr.mxu0 0.0
    %1209 = vmatpush1.xpose.msra.mxu0 0.0
    %1210 = vmatprep.subr.mxu0 0.0
    %1211 = vmatpush1.xpose.msra.mxu0 0.0
    %1212 = vmatprep.subr.mxu0 0.0
    %1213 = vmatpush1.xpose.msra.mxu0 0.0
    %1214 = vmatprep.subr.mxu0 0.0
    %1215 = vmatpush1.xpose.msra.mxu0 0.0
    %1216 = vmatprep.subr.mxu0 0.0
    %1217 = vmatpush1.xpose.msra.mxu0 0.0
    %1218 = vmatprep.subr.mxu0 0.0
    %1219 = vmatpush1.xpose.msra.mxu0 0.0
    %1220 = vmatprep.subr.mxu0 0.0
    %1221 = vmatpush1.xpose.msra.mxu0 0.0
    %1222 = vmatprep.subr.mxu0 0.0
    %1223 = vmatpush1.xpose.msra.mxu0 0.0
    %1224 = vmatprep.subr.mxu0 0.0
    %1225 = vmatpush1.xpose.msra.mxu0 0.0
    %1226 = vmatprep.subr.mxu0 0.0
    %1227 = vmatpush1.xpose.msra.mxu0 0.0
    %1228 = vmatprep.subr.mxu0 0.0
    %1229 = vmatpush1.xpose.msra.mxu0 0.0
    %1230 = vmatprep.subr.mxu0 0.0
    %1231 = vmatpush1.xpose.msra.mxu0 0.0
    %1232 = vmatprep.subr.mxu0 0.0
    %1233 = vmatpush1.xpose.msra.mxu0 0.0
    %1234 = vmatprep.subr.mxu0 0.0
    %1235 = vmatpush1.xpose.msra.mxu0 0.0
    %1236 = vmatprep.subr.mxu0 0.0
    %1237 = vmatpush1.xpose.msra.mxu0 0.0
    %1238 = vmatprep.subr.mxu0 0.0
    %1239 = vmatpush1.xpose.msra.mxu0 0.0
    %1240 = vmatprep.mubr.f32.mxu0 0.0
    %1241 = vmatmul.mubr.f32.gmra.mrb[0].mxu0 %v1172
    %v1242 = vpop.f32.mrb[0].mxu0
    %v1243 = vadd.f32 0.0, %v1242
    %v1244 = vpop.f32.mrb[0].mxu0
    %1245 = vdwg.mxu0
    %1246 = vrot.lane.b32.xlu0 %v387, 96
    %v1247 = vpop.permute.xlu0 %1246
    %v1248 = vsel %vm66, %v363, 0
    %v1250 = vsel %vm66, %v1247, 0
    %1252 = vmatprep.subr.mxu0 0.0
    %1253 = vmatpush1.xpose.msra.mxu0 %v1250
    %1254 = vmatprep.subr.mxu0 0.0
    %1255 = vmatpush1.xpose.msra.mxu0 0.0
    %1256 = vmatprep.subr.mxu0 0.0
    %1257 = vmatpush1.xpose.msra.mxu0 0.0
    %1258 = vmatprep.subr.mxu0 0.0
    %1259 = vmatpush1.xpose.msra.mxu0 0.0
    %1260 = vmatprep.subr.mxu0 0.0
    %1261 = vmatpush1.xpose.msra.mxu0 0.0
    %1262 = vmatprep.subr.mxu0 0.0
    %1263 = vmatpush1.xpose.msra.mxu0 0.0
    %1264 = vmatprep.subr.mxu0 0.0
    %1265 = vmatpush1.xpose.msra.mxu0 0.0
    %1266 = vmatprep.subr.mxu0 0.0
    %1267 = vmatpush1.xpose.msra.mxu0 0.0
    %1268 = vmatprep.subr.mxu0 0.0
    %1269 = vmatpush1.xpose.msra.mxu0 0.0
    %1270 = vmatprep.subr.mxu0 0.0
    %1271 = vmatpush1.xpose.msra.mxu0 0.0
    %1272 = vmatprep.subr.mxu0 0.0
    %1273 = vmatpush1.xpose.msra.mxu0 0.0
    %1274 = vmatprep.subr.mxu0 0.0
    %1275 = vmatpush1.xpose.msra.mxu0 0.0
    %1276 = vmatprep.subr.mxu0 0.0
    %1277 = vmatpush1.xpose.msra.mxu0 0.0
    %1278 = vmatprep.subr.mxu0 0.0
    %1279 = vmatpush1.xpose.msra.mxu0 0.0
    %1280 = vmatprep.subr.mxu0 0.0
    %1281 = vmatpush1.xpose.msra.mxu0 0.0
    %1282 = vmatprep.subr.mxu0 0.0
    %1283 = vmatpush1.xpose.msra.mxu0 0.0
    %1284 = vmatprep.subr.mxu0 0.0
    %1285 = vmatpush1.xpose.msra.mxu0 0.0
    %1286 = vmatprep.subr.mxu0 0.0
    %1287 = vmatpush1.xpose.msra.mxu0 0.0
    %1288 = vmatprep.subr.mxu0 0.0
    %1289 = vmatpush1.xpose.msra.mxu0 0.0
    %1290 = vmatprep.subr.mxu0 0.0
    %1291 = vmatpush1.xpose.msra.mxu0 0.0
    %1292 = vmatprep.subr.mxu0 0.0
    %1293 = vmatpush1.xpose.msra.mxu0 0.0
    %1294 = vmatprep.subr.mxu0 0.0
    %1295 = vmatpush1.xpose.msra.mxu0 0.0
    %1296 = vmatprep.subr.mxu0 0.0
    %1297 = vmatpush1.xpose.msra.mxu0 0.0
    %1298 = vmatprep.subr.mxu0 0.0
    %1299 = vmatpush1.xpose.msra.mxu0 0.0
    %1300 = vmatprep.subr.mxu0 0.0
    %1301 = vmatpush1.xpose.msra.mxu0 0.0
    %1302 = vmatprep.subr.mxu0 0.0
    %1303 = vmatpush1.xpose.msra.mxu0 0.0
    %1304 = vmatprep.subr.mxu0 0.0
    %1305 = vmatpush1.xpose.msra.mxu0 0.0
    %1306 = vmatprep.subr.mxu0 0.0
    %1307 = vmatpush1.xpose.msra.mxu0 0.0
    %1308 = vmatprep.subr.mxu0 0.0
    %1309 = vmatpush1.xpose.msra.mxu0 0.0
    %1310 = vmatprep.subr.mxu0 0.0
    %1311 = vmatpush1.xpose.msra.mxu0 0.0
    %1312 = vmatprep.subr.mxu0 0.0
    %1313 = vmatpush1.xpose.msra.mxu0 0.0
    %1314 = vmatprep.subr.mxu0 0.0
    %1315 = vmatpush1.xpose.msra.mxu0 0.0
    %1316 = vmatprep.mubr.f32.mxu0 0.0
    %1317 = vmatmul.mubr.f32.gmra.mrb[0].mxu0 %v1248
    %v1318 = vpop.f32.mrb[0].mxu0
    %v1319 = vadd.f32 0.0, %v1318
    %v1320 = vpop.f32.mrb[0].mxu0
    %1321 = vdwg.mxu0
    %1322 = vrot.lane.b32.xlu0 %v388, 96
    %v1323 = vpop.permute.xlu0 %1322
    %v1324 = vsel %vm66, %v364, 0
    %v1326 = vsel %vm66, %v1323, 0
    %1328 = vmatprep.subr.mxu0 0.0
    %1329 = vmatpush1.xpose.msra.mxu0 %v1326
    %1330 = vmatprep.subr.mxu0 0.0
    %1331 = vmatpush1.xpose.msra.mxu0 0.0
    %1332 = vmatprep.subr.mxu0 0.0
    %1333 = vmatpush1.xpose.msra.mxu0 0.0
    %1334 = vmatprep.subr.mxu0 0.0
    %1335 = vmatpush1.xpose.msra.mxu0 0.0
    %1336 = vmatprep.subr.mxu0 0.0
    %1337 = vmatpush1.xpose.msra.mxu0 0.0
    %1338 = vmatprep.subr.mxu0 0.0
    %1339 = vmatpush1.xpose.msra.mxu0 0.0
    %1340 = vmatprep.subr.mxu0 0.0
    %1341 = vmatpush1.xpose.msra.mxu0 0.0
    %1342 = vmatprep.subr.mxu0 0.0
    %1343 = vmatpush1.xpose.msra.mxu0 0.0
    %1344 = vmatprep.subr.mxu0 0.0
    %1345 = vmatpush1.xpose.msra.mxu0 0.0
    %1346 = vmatprep.subr.mxu0 0.0
    %1347 = vmatpush1.xpose.msra.mxu0 0.0
    %1348 = vmatprep.subr.mxu0 0.0
    %1349 = vmatpush1.xpose.msra.mxu0 0.0
    %1350 = vmatprep.subr.mxu0 0.0
    %1351 = vmatpush1.xpose.msra.mxu0 0.0
    %1352 = vmatprep.subr.mxu0 0.0
    %1353 = vmatpush1.xpose.msra.mxu0 0.0
    %1354 = vmatprep.subr.mxu0 0.0
    %1355 = vmatpush1.xpose.msra.mxu0 0.0
    %1356 = vmatprep.subr.mxu0 0.0
    %1357 = vmatpush1.xpose.msra.mxu0 0.0
    %1358 = vmatprep.subr.mxu0 0.0
    %1359 = vmatpush1.xpose.msra.mxu0 0.0
    %1360 = vmatprep.subr.mxu0 0.0
    %1361 = vmatpush1.xpose.msra.mxu0 0.0
    %1362 = vmatprep.subr.mxu0 0.0
    %1363 = vmatpush1.xpose.msra.mxu0 0.0
    %1364 = vmatprep.subr.mxu0 0.0
    %1365 = vmatpush1.xpose.msra.mxu0 0.0
    %1366 = vmatprep.subr.mxu0 0.0
    %1367 = vmatpush1.xpose.msra.mxu0 0.0
    %1368 = vmatprep.subr.mxu0 0.0
    %1369 = vmatpush1.xpose.msra.mxu0 0.0
    %1370 = vmatprep.subr.mxu0 0.0
    %1371 = vmatpush1.xpose.msra.mxu0 0.0
    %1372 = vmatprep.subr.mxu0 0.0
    %1373 = vmatpush1.xpose.msra.mxu0 0.0
    %1374 = vmatprep.subr.mxu0 0.0
    %1375 = vmatpush1.xpose.msra.mxu0 0.0
    %1376 = vmatprep.subr.mxu0 0.0
    %1377 = vmatpush1.xpose.msra.mxu0 0.0
    %1378 = vmatprep.subr.mxu0 0.0
    %1379 = vmatpush1.xpose.msra.mxu0 0.0
    %1380 = vmatprep.subr.mxu0 0.0
    %1381 = vmatpush1.xpose.msra.mxu0 0.0
    %1382 = vmatprep.subr.mxu0 0.0
    %1383 = vmatpush1.xpose.msra.mxu0 0.0
    %1384 = vmatprep.subr.mxu0 0.0
    %1385 = vmatpush1.xpose.msra.mxu0 0.0
    %1386 = vmatprep.subr.mxu0 0.0
    %1387 = vmatpush1.xpose.msra.mxu0 0.0
    %1388 = vmatprep.subr.mxu0 0.0
    %1389 = vmatpush1.xpose.msra.mxu0 0.0
    %1390 = vmatprep.subr.mxu0 0.0
    %1391 = vmatpush1.xpose.msra.mxu0 0.0
    %1392 = vmatprep.mubr.f32.mxu0 0.0
    %1393 = vmatmul.mubr.f32.gmra.mrb[0].mxu0 %v1324
    %v1394 = vpop.f32.mrb[0].mxu0
    %v1395 = vadd.f32 0.0, %v1394
    %v1396 = vpop.f32.mrb[0].mxu0
    %1397 = vdwg.mxu0
    %1398 = vrot.lane.b32.xlu0 %v389, 96
    %v1399 = vpop.permute.xlu0 %1398
    %v1400 = vsel %vm66, %v365, 0
    %v1402 = vsel %vm66, %v1399, 0
    %1404 = vmatprep.subr.mxu0 0.0
    %1405 = vmatpush1.xpose.msra.mxu0 %v1402
    %1406 = vmatprep.subr.mxu0 0.0
    %1407 = vmatpush1.xpose.msra.mxu0 0.0
    %1408 = vmatprep.subr.mxu0 0.0
    %1409 = vmatpush1.xpose.msra.mxu0 0.0
    %1410 = vmatprep.subr.mxu0 0.0
    %1411 = vmatpush1.xpose.msra.mxu0 0.0
    %1412 = vmatprep.subr.mxu0 0.0
    %1413 = vmatpush1.xpose.msra.mxu0 0.0
    %1414 = vmatprep.subr.mxu0 0.0
    %1415 = vmatpush1.xpose.msra.mxu0 0.0
    %1416 = vmatprep.subr.mxu0 0.0
    %1417 = vmatpush1.xpose.msra.mxu0 0.0
    %1418 = vmatprep.subr.mxu0 0.0
    %1419 = vmatpush1.xpose.msra.mxu0 0.0
    %1420 = vmatprep.subr.mxu0 0.0
    %1421 = vmatpush1.xpose.msra.mxu0 0.0
    %1422 = vmatprep.subr.mxu0 0.0
    %1423 = vmatpush1.xpose.msra.mxu0 0.0
    %1424 = vmatprep.subr.mxu0 0.0
    %1425 = vmatpush1.xpose.msra.mxu0 0.0
    %1426 = vmatprep.subr.mxu0 0.0
    %1427 = vmatpush1.xpose.msra.mxu0 0.0
    %1428 = vmatprep.subr.mxu0 0.0
    %1429 = vmatpush1.xpose.msra.mxu0 0.0
    %1430 = vmatprep.subr.mxu0 0.0
    %1431 = vmatpush1.xpose.msra.mxu0 0.0
    %1432 = vmatprep.subr.mxu0 0.0
    %1433 = vmatpush1.xpose.msra.mxu0 0.0
    %1434 = vmatprep.subr.mxu0 0.0
    %1435 = vmatpush1.xpose.msra.mxu0 0.0
    %1436 = vmatprep.subr.mxu0 0.0
    %1437 = vmatpush1.xpose.msra.mxu0 0.0
    %1438 = vmatprep.subr.mxu0 0.0
    %1439 = vmatpush1.xpose.msra.mxu0 0.0
    %1440 = vmatprep.subr.mxu0 0.0
    %1441 = vmatpush1.xpose.msra.mxu0 0.0
    %1442 = vmatprep.subr.mxu0 0.0
    %1443 = vmatpush1.xpose.msra.mxu0 0.0
    %1444 = vmatprep.subr.mxu0 0.0
    %1445 = vmatpush1.xpose.msra.mxu0 0.0
    %1446 = vmatprep.subr.mxu0 0.0
    %1447 = vmatpush1.xpose.msra.mxu0 0.0
    %1448 = vmatprep.subr.mxu0 0.0
    %1449 = vmatpush1.xpose.msra.mxu0 0.0
    %1450 = vmatprep.subr.mxu0 0.0
    %1451 = vmatpush1.xpose.msra.mxu0 0.0
    %1452 = vmatprep.subr.mxu0 0.0
    %1453 = vmatpush1.xpose.msra.mxu0 0.0
    %1454 = vmatprep.subr.mxu0 0.0
    %1455 = vmatpush1.xpose.msra.mxu0 0.0
    %1456 = vmatprep.subr.mxu0 0.0
    %1457 = vmatpush1.xpose.msra.mxu0 0.0
    %1458 = vmatprep.subr.mxu0 0.0
    %1459 = vmatpush1.xpose.msra.mxu0 0.0
    %1460 = vmatprep.subr.mxu0 0.0
    %1461 = vmatpush1.xpose.msra.mxu0 0.0
    %1462 = vmatprep.subr.mxu0 0.0
    %1463 = vmatpush1.xpose.msra.mxu0 0.0
    %1464 = vmatprep.subr.mxu0 0.0
    %1465 = vmatpush1.xpose.msra.mxu0 0.0
    %1466 = vmatprep.subr.mxu0 0.0
    %1467 = vmatpush1.xpose.msra.mxu0 0.0
    %1468 = vmatprep.mubr.f32.mxu0 0.0
    %1469 = vmatmul.mubr.f32.gmra.mrb[0].mxu0 %v1400
    %v1470 = vpop.f32.mrb[0].mxu0
    %v1471 = vadd.f32 0.0, %v1470
    %v1472 = vpop.f32.mrb[0].mxu0
    %1473 = vdwg.mxu0
    %1474 = vrot.lane.b32.xlu0 %v390, 96
    %v1475 = vpop.permute.xlu0 %1474
    %v1476 = vsel %vm66, %v366, 0
    %v1478 = vsel %vm66, %v1475, 0
    %1480 = vmatprep.subr.mxu0 0.0
    %1481 = vmatpush1.xpose.msra.mxu0 %v1478
    %1482 = vmatprep.subr.mxu0 0.0
    %1483 = vmatpush1.xpose.msra.mxu0 0.0
    %1484 = vmatprep.subr.mxu0 0.0
    %1485 = vmatpush1.xpose.msra.mxu0 0.0
    %1486 = vmatprep.subr.mxu0 0.0
    %1487 = vmatpush1.xpose.msra.mxu0 0.0
    %1488 = vmatprep.subr.mxu0 0.0
    %1489 = vmatpush1.xpose.msra.mxu0 0.0
    %1490 = vmatprep.subr.mxu0 0.0
    %1491 = vmatpush1.xpose.msra.mxu0 0.0
    %1492 = vmatprep.subr.mxu0 0.0
    %1493 = vmatpush1.xpose.msra.mxu0 0.0
    %1494 = vmatprep.subr.mxu0 0.0
    %1495 = vmatpush1.xpose.msra.mxu0 0.0
    %1496 = vmatprep.subr.mxu0 0.0
    %1497 = vmatpush1.xpose.msra.mxu0 0.0
    %1498 = vmatprep.subr.mxu0 0.0
    %1499 = vmatpush1.xpose.msra.mxu0 0.0
    %1500 = vmatprep.subr.mxu0 0.0
    %1501 = vmatpush1.xpose.msra.mxu0 0.0
    %1502 = vmatprep.subr.mxu0 0.0
    %1503 = vmatpush1.xpose.msra.mxu0 0.0
    %1504 = vmatprep.subr.mxu0 0.0
    %1505 = vmatpush1.xpose.msra.mxu0 0.0
    %1506 = vmatprep.subr.mxu0 0.0
    %1507 = vmatpush1.xpose.msra.mxu0 0.0
    %1508 = vmatprep.subr.mxu0 0.0
    %1509 = vmatpush1.xpose.msra.mxu0 0.0
    %1510 = vmatprep.subr.mxu0 0.0
    %1511 = vmatpush1.xpose.msra.mxu0 0.0
    %1512 = vmatprep.subr.mxu0 0.0
    %1513 = vmatpush1.xpose.msra.mxu0 0.0
    %1514 = vmatprep.subr.mxu0 0.0
    %1515 = vmatpush1.xpose.msra.mxu0 0.0
    %1516 = vmatprep.subr.mxu0 0.0
    %1517 = vmatpush1.xpose.msra.mxu0 0.0
    %1518 = vmatprep.subr.mxu0 0.0
    %1519 = vmatpush1.xpose.msra.mxu0 0.0
    %1520 = vmatprep.subr.mxu0 0.0
    %1521 = vmatpush1.xpose.msra.mxu0 0.0
    %1522 = vmatprep.subr.mxu0 0.0
    %1523 = vmatpush1.xpose.msra.mxu0 0.0
    %1524 = vmatprep.subr.mxu0 0.0
    %1525 = vmatpush1.xpose.msra.mxu0 0.0
    %1526 = vmatprep.subr.mxu0 0.0
    %1527 = vmatpush1.xpose.msra.mxu0 0.0
    %1528 = vmatprep.subr.mxu0 0.0
    %1529 = vmatpush1.xpose.msra.mxu0 0.0
    %1530 = vmatprep.subr.mxu0 0.0
    %1531 = vmatpush1.xpose.msra.mxu0 0.0
    %1532 = vmatprep.subr.mxu0 0.0
    %1533 = vmatpush1.xpose.msra.mxu0 0.0
    %1534 = vmatprep.subr.mxu0 0.0
    %1535 = vmatpush1.xpose.msra.mxu0 0.0
    %1536 = vmatprep.subr.mxu0 0.0
    %1537 = vmatpush1.xpose.msra.mxu0 0.0
    %1538 = vmatprep.subr.mxu0 0.0
    %1539 = vmatpush1.xpose.msra.mxu0 0.0
    %1540 = vmatprep.subr.mxu0 0.0
    %1541 = vmatpush1.xpose.msra.mxu0 0.0
    %1542 = vmatprep.subr.mxu0 0.0
    %1543 = vmatpush1.xpose.msra.mxu0 0.0
    %1544 = vmatprep.mubr.f32.mxu0 0.0
    %1545 = vmatmul.mubr.f32.gmra.mrb[0].mxu0 %v1476
    %v1546 = vpop.f32.mrb[0].mxu0
    %v1547 = vadd.f32 0.0, %v1546
    %v1548 = vpop.f32.mrb[0].mxu0
    %1549 = vdwg.mxu0
    %1550 = vrot.lane.b32.xlu0 %v391, 96
    %v1551 = vpop.permute.xlu0 %1550
    %v1552 = vsel %vm66, %v367, 0
    %v1554 = vsel %vm66, %v1551, 0
    %1556 = vmatprep.subr.mxu0 0.0
    %1557 = vmatpush1.xpose.msra.mxu0 %v1554
    %1558 = vmatprep.subr.mxu0 0.0
    %1559 = vmatpush1.xpose.msra.mxu0 0.0
    %1560 = vmatprep.subr.mxu0 0.0
    %1561 = vmatpush1.xpose.msra.mxu0 0.0
    %1562 = vmatprep.subr.mxu0 0.0
    %1563 = vmatpush1.xpose.msra.mxu0 0.0
    %1564 = vmatprep.subr.mxu0 0.0
    %1565 = vmatpush1.xpose.msra.mxu0 0.0
    %1566 = vmatprep.subr.mxu0 0.0
    %1567 = vmatpush1.xpose.msra.mxu0 0.0
    %1568 = vmatprep.subr.mxu0 0.0
    %1569 = vmatpush1.xpose.msra.mxu0 0.0
    %1570 = vmatprep.subr.mxu0 0.0
    %1571 = vmatpush1.xpose.msra.mxu0 0.0
    %1572 = vmatprep.subr.mxu0 0.0
    %1573 = vmatpush1.xpose.msra.mxu0 0.0
    %1574 = vmatprep.subr.mxu0 0.0
    %1575 = vmatpush1.xpose.msra.mxu0 0.0
    %1576 = vmatprep.subr.mxu0 0.0
    %1577 = vmatpush1.xpose.msra.mxu0 0.0
    %1578 = vmatprep.subr.mxu0 0.0
    %1579 = vmatpush1.xpose.msra.mxu0 0.0
    %1580 = vmatprep.subr.mxu0 0.0
    %1581 = vmatpush1.xpose.msra.mxu0 0.0
    %1582 = vmatprep.subr.mxu0 0.0
    %1583 = vmatpush1.xpose.msra.mxu0 0.0
    %1584 = vmatprep.subr.mxu0 0.0
    %1585 = vmatpush1.xpose.msra.mxu0 0.0
    %1586 = vmatprep.subr.mxu0 0.0
    %1587 = vmatpush1.xpose.msra.mxu0 0.0
    %1588 = vmatprep.subr.mxu0 0.0
    %1589 = vmatpush1.xpose.msra.mxu0 0.0
    %1590 = vmatprep.subr.mxu0 0.0
    %1591 = vmatpush1.xpose.msra.mxu0 0.0
    %1592 = vmatprep.subr.mxu0 0.0
    %1593 = vmatpush1.xpose.msra.mxu0 0.0
    %1594 = vmatprep.subr.mxu0 0.0
    %1595 = vmatpush1.xpose.msra.mxu0 0.0
    %1596 = vmatprep.subr.mxu0 0.0
    %1597 = vmatpush1.xpose.msra.mxu0 0.0
    %1598 = vmatprep.subr.mxu0 0.0
    %1599 = vmatpush1.xpose.msra.mxu0 0.0
    %1600 = vmatprep.subr.mxu0 0.0
    %1601 = vmatpush1.xpose.msra.mxu0 0.0
    %1602 = vmatprep.subr.mxu0 0.0
    %1603 = vmatpush1.xpose.msra.mxu0 0.0
    %1604 = vmatprep.subr.mxu0 0.0
    %1605 = vmatpush1.xpose.msra.mxu0 0.0
    %1606 = vmatprep.subr.mxu0 0.0
    %1607 = vmatpush1.xpose.msra.mxu0 0.0
    %1608 = vmatprep.subr.mxu0 0.0
    %1609 = vmatpush1.xpose.msra.mxu0 0.0
    %1610 = vmatprep.subr.mxu0 0.0
    %1611 = vmatpush1.xpose.msra.mxu0 0.0
    %1612 = vmatprep.subr.mxu0 0.0
    %1613 = vmatpush1.xpose.msra.mxu0 0.0
    %1614 = vmatprep.subr.mxu0 0.0
    %1615 = vmatpush1.xpose.msra.mxu0 0.0
    %1616 = vmatprep.subr.mxu0 0.0
    %1617 = vmatpush1.xpose.msra.mxu0 0.0
    %1618 = vmatprep.subr.mxu0 0.0
    %1619 = vmatpush1.xpose.msra.mxu0 0.0
    %1620 = vmatprep.mubr.f32.mxu0 0.0
    %1621 = vmatmul.mubr.f32.gmra.mrb[0].mxu0 %v1552
    %v1622 = vpop.f32.mrb[0].mxu0
    %v1623 = vadd.f32 0.0, %v1622
    %v1624 = vpop.f32.mrb[0].mxu0
    %1625 = vdwg.mxu0
    %1626 = vrot.lane.b32.xlu0 %v392, 96
    %v1627 = vpop.permute.xlu0 %1626
    %v1628 = vsel %vm66, %v368, 0
    %v1630 = vsel %vm66, %v1627, 0
    %1632 = vmatprep.subr.mxu0 0.0
    %1633 = vmatpush1.xpose.msra.mxu0 %v1630
    %1634 = vmatprep.subr.mxu0 0.0
    %1635 = vmatpush1.xpose.msra.mxu0 0.0
    %1636 = vmatprep.subr.mxu0 0.0
    %1637 = vmatpush1.xpose.msra.mxu0 0.0
    %1638 = vmatprep.subr.mxu0 0.0
    %1639 = vmatpush1.xpose.msra.mxu0 0.0
    %1640 = vmatprep.subr.mxu0 0.0
    %1641 = vmatpush1.xpose.msra.mxu0 0.0
    %1642 = vmatprep.subr.mxu0 0.0
    %1643 = vmatpush1.xpose.msra.mxu0 0.0
    %1644 = vmatprep.subr.mxu0 0.0
    %1645 = vmatpush1.xpose.msra.mxu0 0.0
    %1646 = vmatprep.subr.mxu0 0.0
    %1647 = vmatpush1.xpose.msra.mxu0 0.0
    %1648 = vmatprep.subr.mxu0 0.0
    %1649 = vmatpush1.xpose.msra.mxu0 0.0
    %1650 = vmatprep.subr.mxu0 0.0
    %1651 = vmatpush1.xpose.msra.mxu0 0.0
    %1652 = vmatprep.subr.mxu0 0.0
    %1653 = vmatpush1.xpose.msra.mxu0 0.0
    %1654 = vmatprep.subr.mxu0 0.0
    %1655 = vmatpush1.xpose.msra.mxu0 0.0
    %1656 = vmatprep.subr.mxu0 0.0
    %1657 = vmatpush1.xpose.msra.mxu0 0.0
    %1658 = vmatprep.subr.mxu0 0.0
    %1659 = vmatpush1.xpose.msra.mxu0 0.0
    %1660 = vmatprep.subr.mxu0 0.0
    %1661 = vmatpush1.xpose.msra.mxu0 0.0
    %1662 = vmatprep.subr.mxu0 0.0
    %1663 = vmatpush1.xpose.msra.mxu0 0.0
    %1664 = vmatprep.subr.mxu0 0.0
    %1665 = vmatpush1.xpose.msra.mxu0 0.0
    %1666 = vmatprep.subr.mxu0 0.0
    %1667 = vmatpush1.xpose.msra.mxu0 0.0
    %1668 = vmatprep.subr.mxu0 0.0
    %1669 = vmatpush1.xpose.msra.mxu0 0.0
    %1670 = vmatprep.subr.mxu0 0.0
    %1671 = vmatpush1.xpose.msra.mxu0 0.0
    %1672 = vmatprep.subr.mxu0 0.0
    %1673 = vmatpush1.xpose.msra.mxu0 0.0
    %1674 = vmatprep.subr.mxu0 0.0
    %1675 = vmatpush1.xpose.msra.mxu0 0.0
    %1676 = vmatprep.subr.mxu0 0.0
    %1677 = vmatpush1.xpose.msra.mxu0 0.0
    %1678 = vmatprep.subr.mxu0 0.0
    %1679 = vmatpush1.xpose.msra.mxu0 0.0
    %1680 = vmatprep.subr.mxu0 0.0
    %1681 = vmatpush1.xpose.msra.mxu0 0.0
    %1682 = vmatprep.subr.mxu0 0.0
    %1683 = vmatpush1.xpose.msra.mxu0 0.0
    %1684 = vmatprep.subr.mxu0 0.0
    %1685 = vmatpush1.xpose.msra.mxu0 0.0
    %1686 = vmatprep.subr.mxu0 0.0
    %1687 = vmatpush1.xpose.msra.mxu0 0.0
    %1688 = vmatprep.subr.mxu0 0.0
    %1689 = vmatpush1.xpose.msra.mxu0 0.0
    %1690 = vmatprep.subr.mxu0 0.0
    %1691 = vmatpush1.xpose.msra.mxu0 0.0
    %1692 = vmatprep.subr.mxu0 0.0
    %1693 = vmatpush1.xpose.msra.mxu0 0.0
    %1694 = vmatprep.subr.mxu0 0.0
    %1695 = vmatpush1.xpose.msra.mxu0 0.0
    %1696 = vmatprep.mubr.f32.mxu0 0.0
    %1697 = vmatmul.mubr.f32.gmra.mrb[0].mxu0 %v1628
    %v1698 = vpop.f32.mrb[0].mxu0
    %v1699 = vadd.f32 0.0, %v1698
    %v1700 = vpop.f32.mrb[0].mxu0
    %1701 = vdwg.mxu0
    %1702 = vrot.lane.b32.xlu0 %v393, 96
    %v1703 = vpop.permute.xlu0 %1702
    %v1704 = vsel %vm66, %v369, 0
    %v1706 = vsel %vm66, %v1703, 0
    %1708 = vmatprep.subr.mxu0 0.0
    %1709 = vmatpush1.xpose.msra.mxu0 %v1706
    %1710 = vmatprep.subr.mxu0 0.0
    %1711 = vmatpush1.xpose.msra.mxu0 0.0
    %1712 = vmatprep.subr.mxu0 0.0
    %1713 = vmatpush1.xpose.msra.mxu0 0.0
    %1714 = vmatprep.subr.mxu0 0.0
    %1715 = vmatpush1.xpose.msra.mxu0 0.0
    %1716 = vmatprep.subr.mxu0 0.0
    %1717 = vmatpush1.xpose.msra.mxu0 0.0
    %1718 = vmatprep.subr.mxu0 0.0
    %1719 = vmatpush1.xpose.msra.mxu0 0.0
    %1720 = vmatprep.subr.mxu0 0.0
    %1721 = vmatpush1.xpose.msra.mxu0 0.0
    %1722 = vmatprep.subr.mxu0 0.0
    %1723 = vmatpush1.xpose.msra.mxu0 0.0
    %1724 = vmatprep.subr.mxu0 0.0
    %1725 = vmatpush1.xpose.msra.mxu0 0.0
    %1726 = vmatprep.subr.mxu0 0.0
    %1727 = vmatpush1.xpose.msra.mxu0 0.0
    %1728 = vmatprep.subr.mxu0 0.0
    %1729 = vmatpush1.xpose.msra.mxu0 0.0
    %1730 = vmatprep.subr.mxu0 0.0
    %1731 = vmatpush1.xpose.msra.mxu0 0.0
    %1732 = vmatprep.subr.mxu0 0.0
    %1733 = vmatpush1.xpose.msra.mxu0 0.0
    %1734 = vmatprep.subr.mxu0 0.0
    %1735 = vmatpush1.xpose.msra.mxu0 0.0
    %1736 = vmatprep.subr.mxu0 0.0
    %1737 = vmatpush1.xpose.msra.mxu0 0.0
    %1738 = vmatprep.subr.mxu0 0.0
    %1739 = vmatpush1.xpose.msra.mxu0 0.0
    %1740 = vmatprep.subr.mxu0 0.0
    %1741 = vmatpush1.xpose.msra.mxu0 0.0
    %1742 = vmatprep.subr.mxu0 0.0
    %1743 = vmatpush1.xpose.msra.mxu0 0.0
    %1744 = vmatprep.subr.mxu0 0.0
    %1745 = vmatpush1.xpose.msra.mxu0 0.0
    %1746 = vmatprep.subr.mxu0 0.0
    %1747 = vmatpush1.xpose.msra.mxu0 0.0
    %1748 = vmatprep.subr.mxu0 0.0
    %1749 = vmatpush1.xpose.msra.mxu0 0.0
    %1750 = vmatprep.subr.mxu0 0.0
    %1751 = vmatpush1.xpose.msra.mxu0 0.0
    %1752 = vmatprep.subr.mxu0 0.0
    %1753 = vmatpush1.xpose.msra.mxu0 0.0
    %1754 = vmatprep.subr.mxu0 0.0
    %1755 = vmatpush1.xpose.msra.mxu0 0.0
    %1756 = vmatprep.subr.mxu0 0.0
    %1757 = vmatpush1.xpose.msra.mxu0 0.0
    %1758 = vmatprep.subr.mxu0 0.0
    %1759 = vmatpush1.xpose.msra.mxu0 0.0
    %1760 = vmatprep.subr.mxu0 0.0
    %1761 = vmatpush1.xpose.msra.mxu0 0.0
    %1762 = vmatprep.subr.mxu0 0.0
    %1763 = vmatpush1.xpose.msra.mxu0 0.0
    %1764 = vmatprep.subr.mxu0 0.0
    %1765 = vmatpush1.xpose.msra.mxu0 0.0
    %1766 = vmatprep.subr.mxu0 0.0
    %1767 = vmatpush1.xpose.msra.mxu0 0.0
    %1768 = vmatprep.subr.mxu0 0.0
    %1769 = vmatpush1.xpose.msra.mxu0 0.0
    %1770 = vmatprep.subr.mxu0 0.0
    %1771 = vmatpush1.xpose.msra.mxu0 0.0
    %1772 = vmatprep.mubr.f32.mxu0 0.0
    %1773 = vmatmul.mubr.f32.gmra.mrb[0].mxu0 %v1704
    %v1774 = vpop.f32.mrb[0].mxu0
    %v1775 = vadd.f32 0.0, %v1774
    %v1776 = vpop.f32.mrb[0].mxu0
    %1777 = vdwg.mxu0
    %1778 = vrot.lane.b32.xlu0 %v483, 96
    %v1779 = vpop.permute.xlu0 %1778
    %v1780 = vsel %vm66, %v435, 0
    %v1782 = vsel %vm66, %v1779, 0
    %1784 = vmatprep.subr.mxu0 0.0
    %1785 = vmatpush1.xpose.msra.mxu0 %v1782
    %1786 = vmatprep.subr.mxu0 0.0
    %1787 = vmatpush1.xpose.msra.mxu0 0.0
    %1788 = vmatprep.subr.mxu0 0.0
    %1789 = vmatpush1.xpose.msra.mxu0 0.0
    %1790 = vmatprep.subr.mxu0 0.0
    %1791 = vmatpush1.xpose.msra.mxu0 0.0
    %1792 = vmatprep.subr.mxu0 0.0
    %1793 = vmatpush1.xpose.msra.mxu0 0.0
    %1794 = vmatprep.subr.mxu0 0.0
    %1795 = vmatpush1.xpose.msra.mxu0 0.0
    %1796 = vmatprep.subr.mxu0 0.0
    %1797 = vmatpush1.xpose.msra.mxu0 0.0
    %1798 = vmatprep.subr.mxu0 0.0
    %1799 = vmatpush1.xpose.msra.mxu0 0.0
    %1800 = vmatprep.subr.mxu0 0.0
    %1801 = vmatpush1.xpose.msra.mxu0 0.0
    %1802 = vmatprep.subr.mxu0 0.0
    %1803 = vmatpush1.xpose.msra.mxu0 0.0
    %1804 = vmatprep.subr.mxu0 0.0
    %1805 = vmatpush1.xpose.msra.mxu0 0.0
    %1806 = vmatprep.subr.mxu0 0.0
    %1807 = vmatpush1.xpose.msra.mxu0 0.0
    %1808 = vmatprep.subr.mxu0 0.0
    %1809 = vmatpush1.xpose.msra.mxu0 0.0
    %1810 = vmatprep.subr.mxu0 0.0
    %1811 = vmatpush1.xpose.msra.mxu0 0.0
    %1812 = vmatprep.subr.mxu0 0.0
    %1813 = vmatpush1.xpose.msra.mxu0 0.0
    %1814 = vmatprep.subr.mxu0 0.0
    %1815 = vmatpush1.xpose.msra.mxu0 0.0
    %1816 = vmatprep.subr.mxu0 0.0
    %1817 = vmatpush1.xpose.msra.mxu0 0.0
    %1818 = vmatprep.subr.mxu0 0.0
    %1819 = vmatpush1.xpose.msra.mxu0 0.0
    %1820 = vmatprep.subr.mxu0 0.0
    %1821 = vmatpush1.xpose.msra.mxu0 0.0
    %1822 = vmatprep.subr.mxu0 0.0
    %1823 = vmatpush1.xpose.msra.mxu0 0.0
    %1824 = vmatprep.subr.mxu0 0.0
    %1825 = vmatpush1.xpose.msra.mxu0 0.0
    %1826 = vmatprep.subr.mxu0 0.0
    %1827 = vmatpush1.xpose.msra.mxu0 0.0
    %1828 = vmatprep.subr.mxu0 0.0
    %1829 = vmatpush1.xpose.msra.mxu0 0.0
    %1830 = vmatprep.subr.mxu0 0.0
    %1831 = vmatpush1.xpose.msra.mxu0 0.0
    %1832 = vmatprep.subr.mxu0 0.0
    %1833 = vmatpush1.xpose.msra.mxu0 0.0
    %1834 = vmatprep.subr.mxu0 0.0
    %1835 = vmatpush1.xpose.msra.mxu0 0.0
    %1836 = vmatprep.subr.mxu0 0.0
    %1837 = vmatpush1.xpose.msra.mxu0 0.0
    %1838 = vmatprep.subr.mxu0 0.0
    %1839 = vmatpush1.xpose.msra.mxu0 0.0
    %1840 = vmatprep.subr.mxu0 0.0
    %1841 = vmatpush1.xpose.msra.mxu0 0.0
    %1842 = vmatprep.subr.mxu0 0.0
    %1843 = vmatpush1.xpose.msra.mxu0 0.0
    %1844 = vmatprep.subr.mxu0 0.0
    %1845 = vmatpush1.xpose.msra.mxu0 0.0
    %1846 = vmatprep.subr.mxu0 0.0
    %1847 = vmatpush1.xpose.msra.mxu0 0.0
    %1848 = vmatprep.mubr.f32.mxu0 0.0
    %1849 = vmatmul.mubr.f32.gmra.mrb[0].mxu0 %v1780
    %v1850 = vpop.f32.mrb[0].mxu0
    %v1851 = vadd.f32 0.0, %v1850
    %v1852 = vpop.f32.mrb[0].mxu0
    %1853 = vdwg.mxu0
    %1854 = vrot.lane.b32.xlu0 %v485, 96
    %v1855 = vpop.permute.xlu0 %1854
    %v1856 = vsel %vm66, %v437, 0
    %v1858 = vsel %vm66, %v1855, 0
    %1860 = vmatprep.subr.mxu0 0.0
    %1861 = vmatpush1.xpose.msra.mxu0 %v1858
    %1862 = vmatprep.subr.mxu0 0.0
    %1863 = vmatpush1.xpose.msra.mxu0 0.0
    %1864 = vmatprep.subr.mxu0 0.0
    %1865 = vmatpush1.xpose.msra.mxu0 0.0
    %1866 = vmatprep.subr.mxu0 0.0
    %1867 = vmatpush1.xpose.msra.mxu0 0.0
    %1868 = vmatprep.subr.mxu0 0.0
    %1869 = vmatpush1.xpose.msra.mxu0 0.0
    %1870 = vmatprep.subr.mxu0 0.0
    %1871 = vmatpush1.xpose.msra.mxu0 0.0
    %1872 = vmatprep.subr.mxu0 0.0
    %1873 = vmatpush1.xpose.msra.mxu0 0.0
    %1874 = vmatprep.subr.mxu0 0.0
    %1875 = vmatpush1.xpose.msra.mxu0 0.0
    %1876 = vmatprep.subr.mxu0 0.0
    %1877 = vmatpush1.xpose.msra.mxu0 0.0
    %1878 = vmatprep.subr.mxu0 0.0
    %1879 = vmatpush1.xpose.msra.mxu0 0.0
    %1880 = vmatprep.subr.mxu0 0.0
    %1881 = vmatpush1.xpose.msra.mxu0 0.0
    %1882 = vmatprep.subr.mxu0 0.0
    %1883 = vmatpush1.xpose.msra.mxu0 0.0
    %1884 = vmatprep.subr.mxu0 0.0
    %1885 = vmatpush1.xpose.msra.mxu0 0.0
    %1886 = vmatprep.subr.mxu0 0.0
    %1887 = vmatpush1.xpose.msra.mxu0 0.0
    %1888 = vmatprep.subr.mxu0 0.0
    %1889 = vmatpush1.xpose.msra.mxu0 0.0
    %1890 = vmatprep.subr.mxu0 0.0
    %1891 = vmatpush1.xpose.msra.mxu0 0.0
    %1892 = vmatprep.subr.mxu0 0.0
    %1893 = vmatpush1.xpose.msra.mxu0 0.0
    %1894 = vmatprep.subr.mxu0 0.0
    %1895 = vmatpush1.xpose.msra.mxu0 0.0
    %1896 = vmatprep.subr.mxu0 0.0
    %1897 = vmatpush1.xpose.msra.mxu0 0.0
    %1898 = vmatprep.subr.mxu0 0.0
    %1899 = vmatpush1.xpose.msra.mxu0 0.0
    %1900 = vmatprep.subr.mxu0 0.0
    %1901 = vmatpush1.xpose.msra.mxu0 0.0
    %1902 = vmatprep.subr.mxu0 0.0
    %1903 = vmatpush1.xpose.msra.mxu0 0.0
    %1904 = vmatprep.subr.mxu0 0.0
    %1905 = vmatpush1.xpose.msra.mxu0 0.0
    %1906 = vmatprep.subr.mxu0 0.0
    %1907 = vmatpush1.xpose.msra.mxu0 0.0
    %1908 = vmatprep.subr.mxu0 0.0
    %1909 = vmatpush1.xpose.msra.mxu0 0.0
    %1910 = vmatprep.subr.mxu0 0.0
    %1911 = vmatpush1.xpose.msra.mxu0 0.0
    %1912 = vmatprep.subr.mxu0 0.0
    %1913 = vmatpush1.xpose.msra.mxu0 0.0
    %1914 = vmatprep.subr.mxu0 0.0
    %1915 = vmatpush1.xpose.msra.mxu0 0.0
    %1916 = vmatprep.subr.mxu0 0.0
    %1917 = vmatpush1.xpose.msra.mxu0 0.0
    %1918 = vmatprep.subr.mxu0 0.0
    %1919 = vmatpush1.xpose.msra.mxu0 0.0
    %1920 = vmatprep.subr.mxu0 0.0
    %1921 = vmatpush1.xpose.msra.mxu0 0.0
    %1922 = vmatprep.subr.mxu0 0.0
    %1923 = vmatpush1.xpose.msra.mxu0 0.0
    %1924 = vmatprep.mubr.f32.mxu0 0.0
    %1925 = vmatmul.mubr.f32.gmra.mrb[0].mxu0 %v1856
    %v1926 = vpop.f32.mrb[0].mxu0
    %v1927 = vadd.f32 0.0, %v1926
    %v1928 = vpop.f32.mrb[0].mxu0
    %1929 = vdwg.mxu0
    %1930 = vrot.lane.b32.xlu0 %v487, 96
    %v1931 = vpop.permute.xlu0 %1930
    %v1932 = vsel %vm66, %v439, 0
    %v1934 = vsel %vm66, %v1931, 0
    %1936 = vmatprep.subr.mxu0 0.0
    %1937 = vmatpush1.xpose.msra.mxu0 %v1934
    %1938 = vmatprep.subr.mxu0 0.0
    %1939 = vmatpush1.xpose.msra.mxu0 0.0
    %1940 = vmatprep.subr.mxu0 0.0
    %1941 = vmatpush1.xpose.msra.mxu0 0.0
    %1942 = vmatprep.subr.mxu0 0.0
    %1943 = vmatpush1.xpose.msra.mxu0 0.0
    %1944 = vmatprep.subr.mxu0 0.0
    %1945 = vmatpush1.xpose.msra.mxu0 0.0
    %1946 = vmatprep.subr.mxu0 0.0
    %1947 = vmatpush1.xpose.msra.mxu0 0.0
    %1948 = vmatprep.subr.mxu0 0.0
    %1949 = vmatpush1.xpose.msra.mxu0 0.0
    %1950 = vmatprep.subr.mxu0 0.0
    %1951 = vmatpush1.xpose.msra.mxu0 0.0
    %1952 = vmatprep.subr.mxu0 0.0
    %1953 = vmatpush1.xpose.msra.mxu0 0.0
    %1954 = vmatprep.subr.mxu0 0.0
    %1955 = vmatpush1.xpose.msra.mxu0 0.0
    %1956 = vmatprep.subr.mxu0 0.0
    %1957 = vmatpush1.xpose.msra.mxu0 0.0
    %1958 = vmatprep.subr.mxu0 0.0
    %1959 = vmatpush1.xpose.msra.mxu0 0.0
    %1960 = vmatprep.subr.mxu0 0.0
    %1961 = vmatpush1.xpose.msra.mxu0 0.0
    %1962 = vmatprep.subr.mxu0 0.0
    %1963 = vmatpush1.xpose.msra.mxu0 0.0
    %1964 = vmatprep.subr.mxu0 0.0
    %1965 = vmatpush1.xpose.msra.mxu0 0.0
    %1966 = vmatprep.subr.mxu0 0.0
    %1967 = vmatpush1.xpose.msra.mxu0 0.0
    %1968 = vmatprep.subr.mxu0 0.0
    %1969 = vmatpush1.xpose.msra.mxu0 0.0
    %1970 = vmatprep.subr.mxu0 0.0
    %1971 = vmatpush1.xpose.msra.mxu0 0.0
    %1972 = vmatprep.subr.mxu0 0.0
    %1973 = vmatpush1.xpose.msra.mxu0 0.0
    %1974 = vmatprep.subr.mxu0 0.0
    %1975 = vmatpush1.xpose.msra.mxu0 0.0
    %1976 = vmatprep.subr.mxu0 0.0
    %1977 = vmatpush1.xpose.msra.mxu0 0.0
    %1978 = vmatprep.subr.mxu0 0.0
    %1979 = vmatpush1.xpose.msra.mxu0 0.0
    %1980 = vmatprep.subr.mxu0 0.0
    %1981 = vmatpush1.xpose.msra.mxu0 0.0
    %1982 = vmatprep.subr.mxu0 0.0
    %1983 = vmatpush1.xpose.msra.mxu0 0.0
    %1984 = vmatprep.subr.mxu0 0.0
    %1985 = vmatpush1.xpose.msra.mxu0 0.0
    %1986 = vmatprep.subr.mxu0 0.0
    %1987 = vmatpush1.xpose.msra.mxu0 0.0
    %1988 = vmatprep.subr.mxu0 0.0
    %1989 = vmatpush1.xpose.msra.mxu0 0.0
    %1990 = vmatprep.subr.mxu0 0.0
    %1991 = vmatpush1.xpose.msra.mxu0 0.0
    %1992 = vmatprep.subr.mxu0 0.0
    %1993 = vmatpush1.xpose.msra.mxu0 0.0
    %1994 = vmatprep.subr.mxu0 0.0
    %1995 = vmatpush1.xpose.msra.mxu0 0.0
    %1996 = vmatprep.subr.mxu0 0.0
    %1997 = vmatpush1.xpose.msra.mxu0 0.0
    %1998 = vmatprep.subr.mxu0 0.0
    %1999 = vmatpush1.xpose.msra.mxu0 0.0
    %2000 = vmatprep.mubr.f32.mxu0 0.0
    %2001 = vmatmul.mubr.f32.gmra.mrb[0].mxu0 %v1932
    %v2002 = vpop.f32.mrb[0].mxu0
    %v2003 = vadd.f32 0.0, %v2002
    %v2004 = vpop.f32.mrb[0].mxu0
    %2005 = vdwg.mxu0
    %2006 = vrot.lane.b32.xlu0 %v489, 96
    %v2007 = vpop.permute.xlu0 %2006
    %v2008 = vsel %vm66, %v441, 0
    %v2010 = vsel %vm66, %v2007, 0
    %2012 = vmatprep.subr.mxu0 0.0
    %2013 = vmatpush1.xpose.msra.mxu0 %v2010
    %2014 = vmatprep.subr.mxu0 0.0
    %2015 = vmatpush1.xpose.msra.mxu0 0.0
    %2016 = vmatprep.subr.mxu0 0.0
    %2017 = vmatpush1.xpose.msra.mxu0 0.0
    %2018 = vmatprep.subr.mxu0 0.0
    %2019 = vmatpush1.xpose.msra.mxu0 0.0
    %2020 = vmatprep.subr.mxu0 0.0
    %2021 = vmatpush1.xpose.msra.mxu0 0.0
    %2022 = vmatprep.subr.mxu0 0.0
    %2023 = vmatpush1.xpose.msra.mxu0 0.0
    %2024 = vmatprep.subr.mxu0 0.0
    %2025 = vmatpush1.xpose.msra.mxu0 0.0
    %2026 = vmatprep.subr.mxu0 0.0
    %2027 = vmatpush1.xpose.msra.mxu0 0.0
    %2028 = vmatprep.subr.mxu0 0.0
    %2029 = vmatpush1.xpose.msra.mxu0 0.0
    %2030 = vmatprep.subr.mxu0 0.0
    %2031 = vmatpush1.xpose.msra.mxu0 0.0
    %2032 = vmatprep.subr.mxu0 0.0
    %2033 = vmatpush1.xpose.msra.mxu0 0.0
    %2034 = vmatprep.subr.mxu0 0.0
    %2035 = vmatpush1.xpose.msra.mxu0 0.0
    %2036 = vmatprep.subr.mxu0 0.0
    %2037 = vmatpush1.xpose.msra.mxu0 0.0
    %2038 = vmatprep.subr.mxu0 0.0
    %2039 = vmatpush1.xpose.msra.mxu0 0.0
    %2040 = vmatprep.subr.mxu0 0.0
    %2041 = vmatpush1.xpose.msra.mxu0 0.0
    %2042 = vmatprep.subr.mxu0 0.0
    %2043 = vmatpush1.xpose.msra.mxu0 0.0
    %2044 = vmatprep.subr.mxu0 0.0
    %2045 = vmatpush1.xpose.msra.mxu0 0.0
    %2046 = vmatprep.subr.mxu0 0.0
    %2047 = vmatpush1.xpose.msra.mxu0 0.0
    %2048 = vmatprep.subr.mxu0 0.0
    %2049 = vmatpush1.xpose.msra.mxu0 0.0
    %2050 = vmatprep.subr.mxu0 0.0
    %2051 = vmatpush1.xpose.msra.mxu0 0.0
    %2052 = vmatprep.subr.mxu0 0.0
    %2053 = vmatpush1.xpose.msra.mxu0 0.0
    %2054 = vmatprep.subr.mxu0 0.0
    %2055 = vmatpush1.xpose.msra.mxu0 0.0
    %2056 = vmatprep.subr.mxu0 0.0
    %2057 = vmatpush1.xpose.msra.mxu0 0.0
    %2058 = vmatprep.subr.mxu0 0.0
    %2059 = vmatpush1.xpose.msra.mxu0 0.0
    %2060 = vmatprep.subr.mxu0 0.0
    %2061 = vmatpush1.xpose.msra.mxu0 0.0
    %2062 = vmatprep.subr.mxu0 0.0
    %2063 = vmatpush1.xpose.msra.mxu0 0.0
    %2064 = vmatprep.subr.mxu0 0.0
    %2065 = vmatpush1.xpose.msra.mxu0 0.0
    %2066 = vmatprep.subr.mxu0 0.0
    %2067 = vmatpush1.xpose.msra.mxu0 0.0
    %2068 = vmatprep.subr.mxu0 0.0
    %2069 = vmatpush1.xpose.msra.mxu0 0.0
    %2070 = vmatprep.subr.mxu0 0.0
    %2071 = vmatpush1.xpose.msra.mxu0 0.0
    %2072 = vmatprep.subr.mxu0 0.0
    %2073 = vmatpush1.xpose.msra.mxu0 0.0
    %2074 = vmatprep.subr.mxu0 0.0
    %2075 = vmatpush1.xpose.msra.mxu0 0.0
    %2076 = vmatprep.mubr.f32.mxu0 0.0
    %2077 = vmatmul.mubr.f32.gmra.mrb[0].mxu0 %v2008
    %v2078 = vpop.f32.mrb[0].mxu0
    %v2079 = vadd.f32 0.0, %v2078
    %v2080 = vpop.f32.mrb[0].mxu0
    %2081 = vdwg.mxu0
    %2082 = vrot.lane.b32.xlu0 %v491, 96
    %v2083 = vpop.permute.xlu0 %2082
    %v2084 = vsel %vm66, %v443, 0
    %v2086 = vsel %vm66, %v2083, 0
    %2088 = vmatprep.subr.mxu0 0.0
    %2089 = vmatpush1.xpose.msra.mxu0 %v2086
    %2090 = vmatprep.subr.mxu0 0.0
    %2091 = vmatpush1.xpose.msra.mxu0 0.0
    %2092 = vmatprep.subr.mxu0 0.0
    %2093 = vmatpush1.xpose.msra.mxu0 0.0
    %2094 = vmatprep.subr.mxu0 0.0
    %2095 = vmatpush1.xpose.msra.mxu0 0.0
    %2096 = vmatprep.subr.mxu0 0.0
    %2097 = vmatpush1.xpose.msra.mxu0 0.0
    %2098 = vmatprep.subr.mxu0 0.0
    %2099 = vmatpush1.xpose.msra.mxu0 0.0
    %2100 = vmatprep.subr.mxu0 0.0
    %2101 = vmatpush1.xpose.msra.mxu0 0.0
    %2102 = vmatprep.subr.mxu0 0.0
    %2103 = vmatpush1.xpose.msra.mxu0 0.0
    %2104 = vmatprep.subr.mxu0 0.0
    %2105 = vmatpush1.xpose.msra.mxu0 0.0
    %2106 = vmatprep.subr.mxu0 0.0
    %2107 = vmatpush1.xpose.msra.mxu0 0.0
    %2108 = vmatprep.subr.mxu0 0.0
    %2109 = vmatpush1.xpose.msra.mxu0 0.0
    %2110 = vmatprep.subr.mxu0 0.0
    %2111 = vmatpush1.xpose.msra.mxu0 0.0
    %2112 = vmatprep.subr.mxu0 0.0
    %2113 = vmatpush1.xpose.msra.mxu0 0.0
    %2114 = vmatprep.subr.mxu0 0.0
    %2115 = vmatpush1.xpose.msra.mxu0 0.0
    %2116 = vmatprep.subr.mxu0 0.0
    %2117 = vmatpush1.xpose.msra.mxu0 0.0
    %2118 = vmatprep.subr.mxu0 0.0
    %2119 = vmatpush1.xpose.msra.mxu0 0.0
    %2120 = vmatprep.subr.mxu0 0.0
    %2121 = vmatpush1.xpose.msra.mxu0 0.0
    %2122 = vmatprep.subr.mxu0 0.0
    %2123 = vmatpush1.xpose.msra.mxu0 0.0
    %2124 = vmatprep.subr.mxu0 0.0
    %2125 = vmatpush1.xpose.msra.mxu0 0.0
    %2126 = vmatprep.subr.mxu0 0.0
    %2127 = vmatpush1.xpose.msra.mxu0 0.0
    %2128 = vmatprep.subr.mxu0 0.0
    %2129 = vmatpush1.xpose.msra.mxu0 0.0
    %2130 = vmatprep.subr.mxu0 0.0
    %2131 = vmatpush1.xpose.msra.mxu0 0.0
    %2132 = vmatprep.subr.mxu0 0.0
    %2133 = vmatpush1.xpose.msra.mxu0 0.0
    %2134 = vmatprep.subr.mxu0 0.0
    %2135 = vmatpush1.xpose.msra.mxu0 0.0
    %2136 = vmatprep.subr.mxu0 0.0
    %2137 = vmatpush1.xpose.msra.mxu0 0.0
    %2138 = vmatprep.subr.mxu0 0.0
    %2139 = vmatpush1.xpose.msra.mxu0 0.0
    %2140 = vmatprep.subr.mxu0 0.0
    %2141 = vmatpush1.xpose.msra.mxu0 0.0
    %2142 = vmatprep.subr.mxu0 0.0
    %2143 = vmatpush1.xpose.msra.mxu0 0.0
    %2144 = vmatprep.subr.mxu0 0.0
    %2145 = vmatpush1.xpose.msra.mxu0 0.0
    %2146 = vmatprep.subr.mxu0 0.0
    %2147 = vmatpush1.xpose.msra.mxu0 0.0
    %2148 = vmatprep.subr.mxu0 0.0
    %2149 = vmatpush1.xpose.msra.mxu0 0.0
    %2150 = vmatprep.subr.mxu0 0.0
    %2151 = vmatpush1.xpose.msra.mxu0 0.0
    %2152 = vmatprep.mubr.f32.mxu0 0.0
    %2153 = vmatmul.mubr.f32.gmra.mrb[0].mxu0 %v2084
    %v2154 = vpop.f32.mrb[0].mxu0
    %v2155 = vadd.f32 0.0, %v2154
    %v2156 = vpop.f32.mrb[0].mxu0
    %2157 = vdwg.mxu0
    %2158 = vrot.lane.b32.xlu0 %v493, 96
    %v2159 = vpop.permute.xlu0 %2158
    %v2160 = vsel %vm66, %v445, 0
    %v2162 = vsel %vm66, %v2159, 0
    %2164 = vmatprep.subr.mxu0 0.0
    %2165 = vmatpush1.xpose.msra.mxu0 %v2162
    %2166 = vmatprep.subr.mxu0 0.0
    %2167 = vmatpush1.xpose.msra.mxu0 0.0
    %2168 = vmatprep.subr.mxu0 0.0
    %2169 = vmatpush1.xpose.msra.mxu0 0.0
    %2170 = vmatprep.subr.mxu0 0.0
    %2171 = vmatpush1.xpose.msra.mxu0 0.0
    %2172 = vmatprep.subr.mxu0 0.0
    %2173 = vmatpush1.xpose.msra.mxu0 0.0
    %2174 = vmatprep.subr.mxu0 0.0
    %2175 = vmatpush1.xpose.msra.mxu0 0.0
    %2176 = vmatprep.subr.mxu0 0.0
    %2177 = vmatpush1.xpose.msra.mxu0 0.0
    %2178 = vmatprep.subr.mxu0 0.0
    %2179 = vmatpush1.xpose.msra.mxu0 0.0
    %2180 = vmatprep.subr.mxu0 0.0
    %2181 = vmatpush1.xpose.msra.mxu0 0.0
    %2182 = vmatprep.subr.mxu0 0.0
    %2183 = vmatpush1.xpose.msra.mxu0 0.0
    %2184 = vmatprep.subr.mxu0 0.0
    %2185 = vmatpush1.xpose.msra.mxu0 0.0
    %2186 = vmatprep.subr.mxu0 0.0
    %2187 = vmatpush1.xpose.msra.mxu0 0.0
    %2188 = vmatprep.subr.mxu0 0.0
    %2189 = vmatpush1.xpose.msra.mxu0 0.0
    %2190 = vmatprep.subr.mxu0 0.0
    %2191 = vmatpush1.xpose.msra.mxu0 0.0
    %2192 = vmatprep.subr.mxu0 0.0
    %2193 = vmatpush1.xpose.msra.mxu0 0.0
    %2194 = vmatprep.subr.mxu0 0.0
    %2195 = vmatpush1.xpose.msra.mxu0 0.0
    %2196 = vmatprep.subr.mxu0 0.0
    %2197 = vmatpush1.xpose.msra.mxu0 0.0
    %2198 = vmatprep.subr.mxu0 0.0
    %2199 = vmatpush1.xpose.msra.mxu0 0.0
    %2200 = vmatprep.subr.mxu0 0.0
    %2201 = vmatpush1.xpose.msra.mxu0 0.0
    %2202 = vmatprep.subr.mxu0 0.0
    %2203 = vmatpush1.xpose.msra.mxu0 0.0
    %2204 = vmatprep.subr.mxu0 0.0
    %2205 = vmatpush1.xpose.msra.mxu0 0.0
    %2206 = vmatprep.subr.mxu0 0.0
    %2207 = vmatpush1.xpose.msra.mxu0 0.0
    %2208 = vmatprep.subr.mxu0 0.0
    %2209 = vmatpush1.xpose.msra.mxu0 0.0
    %2210 = vmatprep.subr.mxu0 0.0
    %2211 = vmatpush1.xpose.msra.mxu0 0.0
    %2212 = vmatprep.subr.mxu0 0.0
    %2213 = vmatpush1.xpose.msra.mxu0 0.0
    %2214 = vmatprep.subr.mxu0 0.0
    %2215 = vmatpush1.xpose.msra.mxu0 0.0
    %2216 = vmatprep.subr.mxu0 0.0
    %2217 = vmatpush1.xpose.msra.mxu0 0.0
    %2218 = vmatprep.subr.mxu0 0.0
    %2219 = vmatpush1.xpose.msra.mxu0 0.0
    %2220 = vmatprep.subr.mxu0 0.0
    %2221 = vmatpush1.xpose.msra.mxu0 0.0
    %2222 = vmatprep.subr.mxu0 0.0
    %2223 = vmatpush1.xpose.msra.mxu0 0.0
    %2224 = vmatprep.subr.mxu0 0.0
    %2225 = vmatpush1.xpose.msra.mxu0 0.0
    %2226 = vmatprep.subr.mxu0 0.0
    %2227 = vmatpush1.xpose.msra.mxu0 0.0
    %2228 = vmatprep.mubr.f32.mxu0 0.0
    %2229 = vmatmul.mubr.f32.gmra.mrb[0].mxu0 %v2160
    %v2230 = vpop.f32.mrb[0].mxu0
    %v2231 = vadd.f32 0.0, %v2230
    %v2232 = vpop.f32.mrb[0].mxu0
    %2233 = vdwg.mxu0
    %2234 = vrot.lane.b32.xlu0 %v495, 96
    %v2235 = vpop.permute.xlu0 %2234
    %v2236 = vsel %vm66, %v447, 0
    %v2238 = vsel %vm66, %v2235, 0
    %2240 = vmatprep.subr.mxu0 0.0
    %2241 = vmatpush1.xpose.msra.mxu0 %v2238
    %2242 = vmatprep.subr.mxu0 0.0
    %2243 = vmatpush1.xpose.msra.mxu0 0.0
    %2244 = vmatprep.subr.mxu0 0.0
    %2245 = vmatpush1.xpose.msra.mxu0 0.0
    %2246 = vmatprep.subr.mxu0 0.0
    %2247 = vmatpush1.xpose.msra.mxu0 0.0
    %2248 = vmatprep.subr.mxu0 0.0
    %2249 = vmatpush1.xpose.msra.mxu0 0.0
    %2250 = vmatprep.subr.mxu0 0.0
    %2251 = vmatpush1.xpose.msra.mxu0 0.0
    %2252 = vmatprep.subr.mxu0 0.0
    %2253 = vmatpush1.xpose.msra.mxu0 0.0
    %2254 = vmatprep.subr.mxu0 0.0
    %2255 = vmatpush1.xpose.msra.mxu0 0.0
    %2256 = vmatprep.subr.mxu0 0.0
    %2257 = vmatpush1.xpose.msra.mxu0 0.0
    %2258 = vmatprep.subr.mxu0 0.0
    %2259 = vmatpush1.xpose.msra.mxu0 0.0
    %2260 = vmatprep.subr.mxu0 0.0
    %2261 = vmatpush1.xpose.msra.mxu0 0.0
    %2262 = vmatprep.subr.mxu0 0.0
    %2263 = vmatpush1.xpose.msra.mxu0 0.0
    %2264 = vmatprep.subr.mxu0 0.0
    %2265 = vmatpush1.xpose.msra.mxu0 0.0
    %2266 = vmatprep.subr.mxu0 0.0
    %2267 = vmatpush1.xpose.msra.mxu0 0.0
    %2268 = vmatprep.subr.mxu0 0.0
    %2269 = vmatpush1.xpose.msra.mxu0 0.0
    %2270 = vmatprep.subr.mxu0 0.0
    %2271 = vmatpush1.xpose.msra.mxu0 0.0
    %2272 = vmatprep.subr.mxu0 0.0
    %2273 = vmatpush1.xpose.msra.mxu0 0.0
    %2274 = vmatprep.subr.mxu0 0.0
    %2275 = vmatpush1.xpose.msra.mxu0 0.0
    %2276 = vmatprep.subr.mxu0 0.0
    %2277 = vmatpush1.xpose.msra.mxu0 0.0
    %2278 = vmatprep.subr.mxu0 0.0
    %2279 = vmatpush1.xpose.msra.mxu0 0.0
    %2280 = vmatprep.subr.mxu0 0.0
    %2281 = vmatpush1.xpose.msra.mxu0 0.0
    %2282 = vmatprep.subr.mxu0 0.0
    %2283 = vmatpush1.xpose.msra.mxu0 0.0
    %2284 = vmatprep.subr.mxu0 0.0
    %2285 = vmatpush1.xpose.msra.mxu0 0.0
    %2286 = vmatprep.subr.mxu0 0.0
    %2287 = vmatpush1.xpose.msra.mxu0 0.0
    %2288 = vmatprep.subr.mxu0 0.0
    %2289 = vmatpush1.xpose.msra.mxu0 0.0
    %2290 = vmatprep.subr.mxu0 0.0
    %2291 = vmatpush1.xpose.msra.mxu0 0.0
    %2292 = vmatprep.subr.mxu0 0.0
    %2293 = vmatpush1.xpose.msra.mxu0 0.0
    %2294 = vmatprep.subr.mxu0 0.0
    %2295 = vmatpush1.xpose.msra.mxu0 0.0
    %2296 = vmatprep.subr.mxu0 0.0
    %2297 = vmatpush1.xpose.msra.mxu0 0.0
    %2298 = vmatprep.subr.mxu0 0.0
    %2299 = vmatpush1.xpose.msra.mxu0 0.0
    %2300 = vmatprep.subr.mxu0 0.0
    %2301 = vmatpush1.xpose.msra.mxu0 0.0
    %2302 = vmatprep.subr.mxu0 0.0
    %2303 = vmatpush1.xpose.msra.mxu0 0.0
    %2304 = vmatprep.mubr.f32.mxu0 0.0
    %2305 = vmatmul.mubr.f32.gmra.mrb[0].mxu0 %v2236
    %v2306 = vpop.f32.mrb[0].mxu0
    %v2307 = vadd.f32 0.0, %v2306
    %v2308 = vpop.f32.mrb[0].mxu0
    %2309 = vdwg.mxu0
    %2310 = vrot.lane.b32.xlu0 %v497, 96
    %v2311 = vpop.permute.xlu0 %2310
    %v2312 = vsel %vm66, %v449, 0
    %v2314 = vsel %vm66, %v2311, 0
    %2316 = vmatprep.subr.mxu0 0.0
    %2317 = vmatpush1.xpose.msra.mxu0 %v2314
    %2318 = vmatprep.subr.mxu0 0.0
    %2319 = vmatpush1.xpose.msra.mxu0 0.0
    %2320 = vmatprep.subr.mxu0 0.0
    %2321 = vmatpush1.xpose.msra.mxu0 0.0
    %2322 = vmatprep.subr.mxu0 0.0
    %2323 = vmatpush1.xpose.msra.mxu0 0.0
    %2324 = vmatprep.subr.mxu0 0.0
    %2325 = vmatpush1.xpose.msra.mxu0 0.0
    %2326 = vmatprep.subr.mxu0 0.0
    %2327 = vmatpush1.xpose.msra.mxu0 0.0
    %2328 = vmatprep.subr.mxu0 0.0
    %2329 = vmatpush1.xpose.msra.mxu0 0.0
    %2330 = vmatprep.subr.mxu0 0.0
    %2331 = vmatpush1.xpose.msra.mxu0 0.0
    %2332 = vmatprep.subr.mxu0 0.0
    %2333 = vmatpush1.xpose.msra.mxu0 0.0
    %2334 = vmatprep.subr.mxu0 0.0
    %2335 = vmatpush1.xpose.msra.mxu0 0.0
    %2336 = vmatprep.subr.mxu0 0.0
    %2337 = vmatpush1.xpose.msra.mxu0 0.0
    %2338 = vmatprep.subr.mxu0 0.0
    %2339 = vmatpush1.xpose.msra.mxu0 0.0
    %2340 = vmatprep.subr.mxu0 0.0
    %2341 = vmatpush1.xpose.msra.mxu0 0.0
    %2342 = vmatprep.subr.mxu0 0.0
    %2343 = vmatpush1.xpose.msra.mxu0 0.0
    %2344 = vmatprep.subr.mxu0 0.0
    %2345 = vmatpush1.xpose.msra.mxu0 0.0
    %2346 = vmatprep.subr.mxu0 0.0
    %2347 = vmatpush1.xpose.msra.mxu0 0.0
    %2348 = vmatprep.subr.mxu0 0.0
    %2349 = vmatpush1.xpose.msra.mxu0 0.0
    %2350 = vmatprep.subr.mxu0 0.0
    %2351 = vmatpush1.xpose.msra.mxu0 0.0
    %2352 = vmatprep.subr.mxu0 0.0
    %2353 = vmatpush1.xpose.msra.mxu0 0.0
    %2354 = vmatprep.subr.mxu0 0.0
    %2355 = vmatpush1.xpose.msra.mxu0 0.0
    %2356 = vmatprep.subr.mxu0 0.0
    %2357 = vmatpush1.xpose.msra.mxu0 0.0
    %2358 = vmatprep.subr.mxu0 0.0
    %2359 = vmatpush1.xpose.msra.mxu0 0.0
    %2360 = vmatprep.subr.mxu0 0.0
    %2361 = vmatpush1.xpose.msra.mxu0 0.0
    %2362 = vmatprep.subr.mxu0 0.0
    %2363 = vmatpush1.xpose.msra.mxu0 0.0
    %2364 = vmatprep.subr.mxu0 0.0
    %2365 = vmatpush1.xpose.msra.mxu0 0.0
    %2366 = vmatprep.subr.mxu0 0.0
    %2367 = vmatpush1.xpose.msra.mxu0 0.0
    %2368 = vmatprep.subr.mxu0 0.0
    %2369 = vmatpush1.xpose.msra.mxu0 0.0
    %2370 = vmatprep.subr.mxu0 0.0
    %2371 = vmatpush1.xpose.msra.mxu0 0.0
    %2372 = vmatprep.subr.mxu0 0.0
    %2373 = vmatpush1.xpose.msra.mxu0 0.0
    %2374 = vmatprep.subr.mxu0 0.0
    %2375 = vmatpush1.xpose.msra.mxu0 0.0
    %2376 = vmatprep.subr.mxu0 0.0
    %2377 = vmatpush1.xpose.msra.mxu0 0.0
    %2378 = vmatprep.subr.mxu0 0.0
    %2379 = vmatpush1.xpose.msra.mxu0 0.0
    %2380 = vmatprep.mubr.f32.mxu0 0.0
    %2381 = vmatmul.mubr.f32.gmra.mrb[0].mxu0 %v2312
    %v2382 = vpop.f32.mrb[0].mxu0
    %v2383 = vadd.f32 0.0, %v2382
    %v2384 = vpop.f32.mrb[0].mxu0
    %2385 = vdwg.mxu0
    %2386 = vrot.lane.b32.xlu0 %v499, 96
    %v2387 = vpop.permute.xlu0 %2386
    %v2388 = vsel %vm66, %v451, 0
    %v2390 = vsel %vm66, %v2387, 0
    %2392 = vmatprep.subr.mxu0 0.0
    %2393 = vmatpush1.xpose.msra.mxu0 %v2390
    %2394 = vmatprep.subr.mxu0 0.0
    %2395 = vmatpush1.xpose.msra.mxu0 0.0
    %2396 = vmatprep.subr.mxu0 0.0
    %2397 = vmatpush1.xpose.msra.mxu0 0.0
    %2398 = vmatprep.subr.mxu0 0.0
    %2399 = vmatpush1.xpose.msra.mxu0 0.0
    %2400 = vmatprep.subr.mxu0 0.0
    %2401 = vmatpush1.xpose.msra.mxu0 0.0
    %2402 = vmatprep.subr.mxu0 0.0
    %2403 = vmatpush1.xpose.msra.mxu0 0.0
    %2404 = vmatprep.subr.mxu0 0.0
    %2405 = vmatpush1.xpose.msra.mxu0 0.0
    %2406 = vmatprep.subr.mxu0 0.0
    %2407 = vmatpush1.xpose.msra.mxu0 0.0
    %2408 = vmatprep.subr.mxu0 0.0
    %2409 = vmatpush1.xpose.msra.mxu0 0.0
    %2410 = vmatprep.subr.mxu0 0.0
    %2411 = vmatpush1.xpose.msra.mxu0 0.0
    %2412 = vmatprep.subr.mxu0 0.0
    %2413 = vmatpush1.xpose.msra.mxu0 0.0
    %2414 = vmatprep.subr.mxu0 0.0
    %2415 = vmatpush1.xpose.msra.mxu0 0.0
    %2416 = vmatprep.subr.mxu0 0.0
    %2417 = vmatpush1.xpose.msra.mxu0 0.0
    %2418 = vmatprep.subr.mxu0 0.0
    %2419 = vmatpush1.xpose.msra.mxu0 0.0
    %2420 = vmatprep.subr.mxu0 0.0
    %2421 = vmatpush1.xpose.msra.mxu0 0.0
    %2422 = vmatprep.subr.mxu0 0.0
    %2423 = vmatpush1.xpose.msra.mxu0 0.0
    %2424 = vmatprep.subr.mxu0 0.0
    %2425 = vmatpush1.xpose.msra.mxu0 0.0
    %2426 = vmatprep.subr.mxu0 0.0
    %2427 = vmatpush1.xpose.msra.mxu0 0.0
    %2428 = vmatprep.subr.mxu0 0.0
    %2429 = vmatpush1.xpose.msra.mxu0 0.0
    %2430 = vmatprep.subr.mxu0 0.0
    %2431 = vmatpush1.xpose.msra.mxu0 0.0
    %2432 = vmatprep.subr.mxu0 0.0
    %2433 = vmatpush1.xpose.msra.mxu0 0.0
    %2434 = vmatprep.subr.mxu0 0.0
    %2435 = vmatpush1.xpose.msra.mxu0 0.0
    %2436 = vmatprep.subr.mxu0 0.0
    %2437 = vmatpush1.xpose.msra.mxu0 0.0
    %2438 = vmatprep.subr.mxu0 0.0
    %2439 = vmatpush1.xpose.msra.mxu0 0.0
    %2440 = vmatprep.subr.mxu0 0.0
    %2441 = vmatpush1.xpose.msra.mxu0 0.0
    %2442 = vmatprep.subr.mxu0 0.0
    %2443 = vmatpush1.xpose.msra.mxu0 0.0
    %2444 = vmatprep.subr.mxu0 0.0
    %2445 = vmatpush1.xpose.msra.mxu0 0.0
    %2446 = vmatprep.subr.mxu0 0.0
    %2447 = vmatpush1.xpose.msra.mxu0 0.0
    %2448 = vmatprep.subr.mxu0 0.0
    %2449 = vmatpush1.xpose.msra.mxu0 0.0
    %2450 = vmatprep.subr.mxu0 0.0
    %2451 = vmatpush1.xpose.msra.mxu0 0.0
    %2452 = vmatprep.subr.mxu0 0.0
    %2453 = vmatpush1.xpose.msra.mxu0 0.0
    %2454 = vmatprep.subr.mxu0 0.0
    %2455 = vmatpush1.xpose.msra.mxu0 0.0
    %2456 = vmatprep.mubr.f32.mxu0 0.0
    %2457 = vmatmul.mubr.f32.gmra.mrb[0].mxu0 %v2388
    %v2458 = vpop.f32.mrb[0].mxu0
    %v2459 = vadd.f32 0.0, %v2458
    %v2460 = vpop.f32.mrb[0].mxu0
    %2461 = vdwg.mxu0
    %2462 = vrot.lane.b32.xlu0 %v501, 96
    %v2463 = vpop.permute.xlu0 %2462
    %v2464 = vsel %vm66, %v453, 0
    %v2466 = vsel %vm66, %v2463, 0
    %2468 = vmatprep.subr.mxu0 0.0
    %2469 = vmatpush1.xpose.msra.mxu0 %v2466
    %2470 = vmatprep.subr.mxu0 0.0
    %2471 = vmatpush1.xpose.msra.mxu0 0.0
    %2472 = vmatprep.subr.mxu0 0.0
    %2473 = vmatpush1.xpose.msra.mxu0 0.0
    %2474 = vmatprep.subr.mxu0 0.0
    %2475 = vmatpush1.xpose.msra.mxu0 0.0
    %2476 = vmatprep.subr.mxu0 0.0
    %2477 = vmatpush1.xpose.msra.mxu0 0.0
    %2478 = vmatprep.subr.mxu0 0.0
    %2479 = vmatpush1.xpose.msra.mxu0 0.0
    %2480 = vmatprep.subr.mxu0 0.0
    %2481 = vmatpush1.xpose.msra.mxu0 0.0
    %2482 = vmatprep.subr.mxu0 0.0
    %2483 = vmatpush1.xpose.msra.mxu0 0.0
    %2484 = vmatprep.subr.mxu0 0.0
    %2485 = vmatpush1.xpose.msra.mxu0 0.0
    %2486 = vmatprep.subr.mxu0 0.0
    %2487 = vmatpush1.xpose.msra.mxu0 0.0
    %2488 = vmatprep.subr.mxu0 0.0
    %2489 = vmatpush1.xpose.msra.mxu0 0.0
    %2490 = vmatprep.subr.mxu0 0.0
    %2491 = vmatpush1.xpose.msra.mxu0 0.0
    %2492 = vmatprep.subr.mxu0 0.0
    %2493 = vmatpush1.xpose.msra.mxu0 0.0
    %2494 = vmatprep.subr.mxu0 0.0
    %2495 = vmatpush1.xpose.msra.mxu0 0.0
    %2496 = vmatprep.subr.mxu0 0.0
    %2497 = vmatpush1.xpose.msra.mxu0 0.0
    %2498 = vmatprep.subr.mxu0 0.0
    %2499 = vmatpush1.xpose.msra.mxu0 0.0
    %2500 = vmatprep.subr.mxu0 0.0
    %2501 = vmatpush1.xpose.msra.mxu0 0.0
    %2502 = vmatprep.subr.mxu0 0.0
    %2503 = vmatpush1.xpose.msra.mxu0 0.0
    %2504 = vmatprep.subr.mxu0 0.0
    %2505 = vmatpush1.xpose.msra.mxu0 0.0
    %2506 = vmatprep.subr.mxu0 0.0
    %2507 = vmatpush1.xpose.msra.mxu0 0.0
    %2508 = vmatprep.subr.mxu0 0.0
    %2509 = vmatpush1.xpose.msra.mxu0 0.0
    %2510 = vmatprep.subr.mxu0 0.0
    %2511 = vmatpush1.xpose.msra.mxu0 0.0
    %2512 = vmatprep.subr.mxu0 0.0
    %2513 = vmatpush1.xpose.msra.mxu0 0.0
    %2514 = vmatprep.subr.mxu0 0.0
    %2515 = vmatpush1.xpose.msra.mxu0 0.0
    %2516 = vmatprep.subr.mxu0 0.0
    %2517 = vmatpush1.xpose.msra.mxu0 0.0
    %2518 = vmatprep.subr.mxu0 0.0
    %2519 = vmatpush1.xpose.msra.mxu0 0.0
    %2520 = vmatprep.subr.mxu0 0.0
    %2521 = vmatpush1.xpose.msra.mxu0 0.0
    %2522 = vmatprep.subr.mxu0 0.0
    %2523 = vmatpush1.xpose.msra.mxu0 0.0
    %2524 = vmatprep.subr.mxu0 0.0
    %2525 = vmatpush1.xpose.msra.mxu0 0.0
    %2526 = vmatprep.subr.mxu0 0.0
    %2527 = vmatpush1.xpose.msra.mxu0 0.0
    %2528 = vmatprep.subr.mxu0 0.0
    %2529 = vmatpush1.xpose.msra.mxu0 0.0
    %2530 = vmatprep.subr.mxu0 0.0
    %2531 = vmatpush1.xpose.msra.mxu0 0.0
    %2532 = vmatprep.mubr.f32.mxu0 0.0
    %2533 = vmatmul.mubr.f32.gmra.mrb[0].mxu0 %v2464
    %v2534 = vpop.f32.mrb[0].mxu0
    %v2535 = vadd.f32 0.0, %v2534
    %v2536 = vpop.f32.mrb[0].mxu0
    %2537 = vdwg.mxu0
    %2538 = vrot.lane.b32.xlu0 %v503, 96
    %v2539 = vpop.permute.xlu0 %2538
    %v2540 = vsel %vm66, %v455, 0
    %v2542 = vsel %vm66, %v2539, 0
    %2544 = vmatprep.subr.mxu0 0.0
    %2545 = vmatpush1.xpose.msra.mxu0 %v2542
    %2546 = vmatprep.subr.mxu0 0.0
    %2547 = vmatpush1.xpose.msra.mxu0 0.0
    %2548 = vmatprep.subr.mxu0 0.0
    %2549 = vmatpush1.xpose.msra.mxu0 0.0
    %2550 = vmatprep.subr.mxu0 0.0
    %2551 = vmatpush1.xpose.msra.mxu0 0.0
    %2552 = vmatprep.subr.mxu0 0.0
    %2553 = vmatpush1.xpose.msra.mxu0 0.0
    %2554 = vmatprep.subr.mxu0 0.0
    %2555 = vmatpush1.xpose.msra.mxu0 0.0
    %2556 = vmatprep.subr.mxu0 0.0
    %2557 = vmatpush1.xpose.msra.mxu0 0.0
    %2558 = vmatprep.subr.mxu0 0.0
    %2559 = vmatpush1.xpose.msra.mxu0 0.0
    %2560 = vmatprep.subr.mxu0 0.0
    %2561 = vmatpush1.xpose.msra.mxu0 0.0
    %2562 = vmatprep.subr.mxu0 0.0
    %2563 = vmatpush1.xpose.msra.mxu0 0.0
    %2564 = vmatprep.subr.mxu0 0.0
    %2565 = vmatpush1.xpose.msra.mxu0 0.0
    %2566 = vmatprep.subr.mxu0 0.0
    %2567 = vmatpush1.xpose.msra.mxu0 0.0
    %2568 = vmatprep.subr.mxu0 0.0
    %2569 = vmatpush1.xpose.msra.mxu0 0.0
    %2570 = vmatprep.subr.mxu0 0.0
    %2571 = vmatpush1.xpose.msra.mxu0 0.0
    %2572 = vmatprep.subr.mxu0 0.0
    %2573 = vmatpush1.xpose.msra.mxu0 0.0
    %2574 = vmatprep.subr.mxu0 0.0
    %2575 = vmatpush1.xpose.msra.mxu0 0.0
    %2576 = vmatprep.subr.mxu0 0.0
    %2577 = vmatpush1.xpose.msra.mxu0 0.0
    %2578 = vmatprep.subr.mxu0 0.0
    %2579 = vmatpush1.xpose.msra.mxu0 0.0
    %2580 = vmatprep.subr.mxu0 0.0
    %2581 = vmatpush1.xpose.msra.mxu0 0.0
    %2582 = vmatprep.subr.mxu0 0.0
    %2583 = vmatpush1.xpose.msra.mxu0 0.0
    %2584 = vmatprep.subr.mxu0 0.0
    %2585 = vmatpush1.xpose.msra.mxu0 0.0
    %2586 = vmatprep.subr.mxu0 0.0
    %2587 = vmatpush1.xpose.msra.mxu0 0.0
    %2588 = vmatprep.subr.mxu0 0.0
    %2589 = vmatpush1.xpose.msra.mxu0 0.0
    %2590 = vmatprep.subr.mxu0 0.0
    %2591 = vmatpush1.xpose.msra.mxu0 0.0
    %2592 = vmatprep.subr.mxu0 0.0
    %2593 = vmatpush1.xpose.msra.mxu0 0.0
    %2594 = vmatprep.subr.mxu0 0.0
    %2595 = vmatpush1.xpose.msra.mxu0 0.0
    %2596 = vmatprep.subr.mxu0 0.0
    %2597 = vmatpush1.xpose.msra.mxu0 0.0
    %2598 = vmatprep.subr.mxu0 0.0
    %2599 = vmatpush1.xpose.msra.mxu0 0.0
    %2600 = vmatprep.subr.mxu0 0.0
    %2601 = vmatpush1.xpose.msra.mxu0 0.0
    %2602 = vmatprep.subr.mxu0 0.0
    %2603 = vmatpush1.xpose.msra.mxu0 0.0
    %2604 = vmatprep.subr.mxu0 0.0
    %2605 = vmatpush1.xpose.msra.mxu0 0.0
    %2606 = vmatprep.subr.mxu0 0.0
    %2607 = vmatpush1.xpose.msra.mxu0 0.0
    %2608 = vmatprep.mubr.f32.mxu0 0.0
    %2609 = vmatmul.mubr.f32.gmra.mrb[0].mxu0 %v2540
    %v2610 = vpop.f32.mrb[0].mxu0
    %v2611 = vadd.f32 0.0, %v2610
    %v2612 = vpop.f32.mrb[0].mxu0
    %2613 = vdwg.mxu0
    %2614 = vrot.lane.b32.xlu0 %v505, 96
    %v2615 = vpop.permute.xlu0 %2614
    %v2616 = vsel %vm66, %v457, 0
    %v2618 = vsel %vm66, %v2615, 0
    %2620 = vmatprep.subr.mxu0 0.0
    %2621 = vmatpush1.xpose.msra.mxu0 %v2618
    %2622 = vmatprep.subr.mxu0 0.0
    %2623 = vmatpush1.xpose.msra.mxu0 0.0
    %2624 = vmatprep.subr.mxu0 0.0
    %2625 = vmatpush1.xpose.msra.mxu0 0.0
    %2626 = vmatprep.subr.mxu0 0.0
    %2627 = vmatpush1.xpose.msra.mxu0 0.0
    %2628 = vmatprep.subr.mxu0 0.0
    %2629 = vmatpush1.xpose.msra.mxu0 0.0
    %2630 = vmatprep.subr.mxu0 0.0
    %2631 = vmatpush1.xpose.msra.mxu0 0.0
    %2632 = vmatprep.subr.mxu0 0.0
    %2633 = vmatpush1.xpose.msra.mxu0 0.0
    %2634 = vmatprep.subr.mxu0 0.0
    %2635 = vmatpush1.xpose.msra.mxu0 0.0
    %2636 = vmatprep.subr.mxu0 0.0
    %2637 = vmatpush1.xpose.msra.mxu0 0.0
    %2638 = vmatprep.subr.mxu0 0.0
    %2639 = vmatpush1.xpose.msra.mxu0 0.0
    %2640 = vmatprep.subr.mxu0 0.0
    %2641 = vmatpush1.xpose.msra.mxu0 0.0
    %2642 = vmatprep.subr.mxu0 0.0
    %2643 = vmatpush1.xpose.msra.mxu0 0.0
    %2644 = vmatprep.subr.mxu0 0.0
    %2645 = vmatpush1.xpose.msra.mxu0 0.0
    %2646 = vmatprep.subr.mxu0 0.0
    %2647 = vmatpush1.xpose.msra.mxu0 0.0
    %2648 = vmatprep.subr.mxu0 0.0
    %2649 = vmatpush1.xpose.msra.mxu0 0.0
    %2650 = vmatprep.subr.mxu0 0.0
    %2651 = vmatpush1.xpose.msra.mxu0 0.0
    %2652 = vmatprep.subr.mxu0 0.0
    %2653 = vmatpush1.xpose.msra.mxu0 0.0
    %2654 = vmatprep.subr.mxu0 0.0
    %2655 = vmatpush1.xpose.msra.mxu0 0.0
    %2656 = vmatprep.subr.mxu0 0.0
    %2657 = vmatpush1.xpose.msra.mxu0 0.0
    %2658 = vmatprep.subr.mxu0 0.0
    %2659 = vmatpush1.xpose.msra.mxu0 0.0
    %2660 = vmatprep.subr.mxu0 0.0
    %2661 = vmatpush1.xpose.msra.mxu0 0.0
    %2662 = vmatprep.subr.mxu0 0.0
    %2663 = vmatpush1.xpose.msra.mxu0 0.0
    %2664 = vmatprep.subr.mxu0 0.0
    %2665 = vmatpush1.xpose.msra.mxu0 0.0
    %2666 = vmatprep.subr.mxu0 0.0
    %2667 = vmatpush1.xpose.msra.mxu0 0.0
    %2668 = vmatprep.subr.mxu0 0.0
    %2669 = vmatpush1.xpose.msra.mxu0 0.0
    %2670 = vmatprep.subr.mxu0 0.0
    %2671 = vmatpush1.xpose.msra.mxu0 0.0
    %2672 = vmatprep.subr.mxu0 0.0
    %2673 = vmatpush1.xpose.msra.mxu0 0.0
    %2674 = vmatprep.subr.mxu0 0.0
    %2675 = vmatpush1.xpose.msra.mxu0 0.0
    %2676 = vmatprep.subr.mxu0 0.0
    %2677 = vmatpush1.xpose.msra.mxu0 0.0
    %2678 = vmatprep.subr.mxu0 0.0
    %2679 = vmatpush1.xpose.msra.mxu0 0.0
    %2680 = vmatprep.subr.mxu0 0.0
    %2681 = vmatpush1.xpose.msra.mxu0 0.0
    %2682 = vmatprep.subr.mxu0 0.0
    %2683 = vmatpush1.xpose.msra.mxu0 0.0
    %2684 = vmatprep.mubr.f32.mxu0 0.0
    %2685 = vmatmul.mubr.f32.gmra.mrb[0].mxu0 %v2616
    %v2686 = vpop.f32.mrb[0].mxu0
    %v2687 = vadd.f32 0.0, %v2686
    %v2688 = vpop.f32.mrb[0].mxu0
    %2689 = vdwg.mxu0
    %2690 = vrot.lane.b32.xlu0 %v507, 96
    %v2691 = vpop.permute.xlu0 %2690
    %v2692 = vsel %vm66, %v459, 0
    %v2694 = vsel %vm66, %v2691, 0
    %2696 = vmatprep.subr.mxu0 0.0
    %2697 = vmatpush1.xpose.msra.mxu0 %v2694
    %2698 = vmatprep.subr.mxu0 0.0
    %2699 = vmatpush1.xpose.msra.mxu0 0.0
    %2700 = vmatprep.subr.mxu0 0.0
    %2701 = vmatpush1.xpose.msra.mxu0 0.0
    %2702 = vmatprep.subr.mxu0 0.0
    %2703 = vmatpush1.xpose.msra.mxu0 0.0
    %2704 = vmatprep.subr.mxu0 0.0
    %2705 = vmatpush1.xpose.msra.mxu0 0.0
    %2706 = vmatprep.subr.mxu0 0.0
    %2707 = vmatpush1.xpose.msra.mxu0 0.0
    %2708 = vmatprep.subr.mxu0 0.0
    %2709 = vmatpush1.xpose.msra.mxu0 0.0
    %2710 = vmatprep.subr.mxu0 0.0
    %2711 = vmatpush1.xpose.msra.mxu0 0.0
    %2712 = vmatprep.subr.mxu0 0.0
    %2713 = vmatpush1.xpose.msra.mxu0 0.0
    %2714 = vmatprep.subr.mxu0 0.0
    %2715 = vmatpush1.xpose.msra.mxu0 0.0
    %2716 = vmatprep.subr.mxu0 0.0
    %2717 = vmatpush1.xpose.msra.mxu0 0.0
    %2718 = vmatprep.subr.mxu0 0.0
    %2719 = vmatpush1.xpose.msra.mxu0 0.0
    %2720 = vmatprep.subr.mxu0 0.0
    %2721 = vmatpush1.xpose.msra.mxu0 0.0
    %2722 = vmatprep.subr.mxu0 0.0
    %2723 = vmatpush1.xpose.msra.mxu0 0.0
    %2724 = vmatprep.subr.mxu0 0.0
    %2725 = vmatpush1.xpose.msra.mxu0 0.0
    %2726 = vmatprep.subr.mxu0 0.0
    %2727 = vmatpush1.xpose.msra.mxu0 0.0
    %2728 = vmatprep.subr.mxu0 0.0
    %2729 = vmatpush1.xpose.msra.mxu0 0.0
    %2730 = vmatprep.subr.mxu0 0.0
    %2731 = vmatpush1.xpose.msra.mxu0 0.0
    %2732 = vmatprep.subr.mxu0 0.0
    %2733 = vmatpush1.xpose.msra.mxu0 0.0
    %2734 = vmatprep.subr.mxu0 0.0
    %2735 = vmatpush1.xpose.msra.mxu0 0.0
    %2736 = vmatprep.subr.mxu0 0.0
    %2737 = vmatpush1.xpose.msra.mxu0 0.0
    %2738 = vmatprep.subr.mxu0 0.0
    %2739 = vmatpush1.xpose.msra.mxu0 0.0
    %2740 = vmatprep.subr.mxu0 0.0
    %2741 = vmatpush1.xpose.msra.mxu0 0.0
    %2742 = vmatprep.subr.mxu0 0.0
    %2743 = vmatpush1.xpose.msra.mxu0 0.0
    %2744 = vmatprep.subr.mxu0 0.0
    %2745 = vmatpush1.xpose.msra.mxu0 0.0
    %2746 = vmatprep.subr.mxu0 0.0
    %2747 = vmatpush1.xpose.msra.mxu0 0.0
    %2748 = vmatprep.subr.mxu0 0.0
    %2749 = vmatpush1.xpose.msra.mxu0 0.0
    %2750 = vmatprep.subr.mxu0 0.0
    %2751 = vmatpush1.xpose.msra.mxu0 0.0
    %2752 = vmatprep.subr.mxu0 0.0
    %2753 = vmatpush1.xpose.msra.mxu0 0.0
    %2754 = vmatprep.subr.mxu0 0.0
    %2755 = vmatpush1.xpose.msra.mxu0 0.0
    %2756 = vmatprep.subr.mxu0 0.0
    %2757 = vmatpush1.xpose.msra.mxu0 0.0
    %2758 = vmatprep.subr.mxu0 0.0
    %2759 = vmatpush1.xpose.msra.mxu0 0.0
    %2760 = vmatprep.mubr.f32.mxu0 0.0
    %2761 = vmatmul.mubr.f32.gmra.mrb[0].mxu0 %v2692
    %v2762 = vpop.f32.mrb[0].mxu0
    %v2763 = vadd.f32 0.0, %v2762
    %v2764 = vpop.f32.mrb[0].mxu0
    %2765 = vdwg.mxu0
    %2766 = vrot.lane.b32.xlu0 %v509, 96
    %v2767 = vpop.permute.xlu0 %2766
    %v2768 = vsel %vm66, %v461, 0
    %v2770 = vsel %vm66, %v2767, 0
    %2772 = vmatprep.subr.mxu0 0.0
    %2773 = vmatpush1.xpose.msra.mxu0 %v2770
    %2774 = vmatprep.subr.mxu0 0.0
    %2775 = vmatpush1.xpose.msra.mxu0 0.0
    %2776 = vmatprep.subr.mxu0 0.0
    %2777 = vmatpush1.xpose.msra.mxu0 0.0
    %2778 = vmatprep.subr.mxu0 0.0
    %2779 = vmatpush1.xpose.msra.mxu0 0.0
    %2780 = vmatprep.subr.mxu0 0.0
    %2781 = vmatpush1.xpose.msra.mxu0 0.0
    %2782 = vmatprep.subr.mxu0 0.0
    %2783 = vmatpush1.xpose.msra.mxu0 0.0
    %2784 = vmatprep.subr.mxu0 0.0
    %2785 = vmatpush1.xpose.msra.mxu0 0.0
    %2786 = vmatprep.subr.mxu0 0.0
    %2787 = vmatpush1.xpose.msra.mxu0 0.0
    %2788 = vmatprep.subr.mxu0 0.0
    %2789 = vmatpush1.xpose.msra.mxu0 0.0
    %2790 = vmatprep.subr.mxu0 0.0
    %2791 = vmatpush1.xpose.msra.mxu0 0.0
    %2792 = vmatprep.subr.mxu0 0.0
    %2793 = vmatpush1.xpose.msra.mxu0 0.0
    %2794 = vmatprep.subr.mxu0 0.0
    %2795 = vmatpush1.xpose.msra.mxu0 0.0
    %2796 = vmatprep.subr.mxu0 0.0
    %2797 = vmatpush1.xpose.msra.mxu0 0.0
    %2798 = vmatprep.subr.mxu0 0.0
    %2799 = vmatpush1.xpose.msra.mxu0 0.0
    %2800 = vmatprep.subr.mxu0 0.0
    %2801 = vmatpush1.xpose.msra.mxu0 0.0
    %2802 = vmatprep.subr.mxu0 0.0
    %2803 = vmatpush1.xpose.msra.mxu0 0.0
    %2804 = vmatprep.subr.mxu0 0.0
    %2805 = vmatpush1.xpose.msra.mxu0 0.0
    %2806 = vmatprep.subr.mxu0 0.0
    %2807 = vmatpush1.xpose.msra.mxu0 0.0
    %2808 = vmatprep.subr.mxu0 0.0
    %2809 = vmatpush1.xpose.msra.mxu0 0.0
    %2810 = vmatprep.subr.mxu0 0.0
    %2811 = vmatpush1.xpose.msra.mxu0 0.0
    %2812 = vmatprep.subr.mxu0 0.0
    %2813 = vmatpush1.xpose.msra.mxu0 0.0
    %2814 = vmatprep.subr.mxu0 0.0
    %2815 = vmatpush1.xpose.msra.mxu0 0.0
    %2816 = vmatprep.subr.mxu0 0.0
    %2817 = vmatpush1.xpose.msra.mxu0 0.0
    %2818 = vmatprep.subr.mxu0 0.0
    %2819 = vmatpush1.xpose.msra.mxu0 0.0
    %2820 = vmatprep.subr.mxu0 0.0
    %2821 = vmatpush1.xpose.msra.mxu0 0.0
    %2822 = vmatprep.subr.mxu0 0.0
    %2823 = vmatpush1.xpose.msra.mxu0 0.0
    %2824 = vmatprep.subr.mxu0 0.0
    %2825 = vmatpush1.xpose.msra.mxu0 0.0
    %2826 = vmatprep.subr.mxu0 0.0
    %2827 = vmatpush1.xpose.msra.mxu0 0.0
    %2828 = vmatprep.subr.mxu0 0.0
    %2829 = vmatpush1.xpose.msra.mxu0 0.0
    %2830 = vmatprep.subr.mxu0 0.0
    %2831 = vmatpush1.xpose.msra.mxu0 0.0
    %2832 = vmatprep.subr.mxu0 0.0
    %2833 = vmatpush1.xpose.msra.mxu0 0.0
    %2834 = vmatprep.subr.mxu0 0.0
    %2835 = vmatpush1.xpose.msra.mxu0 0.0
    %2836 = vmatprep.mubr.f32.mxu0 0.0
    %2837 = vmatmul.mubr.f32.gmra.mrb[0].mxu0 %v2768
    %v2838 = vpop.f32.mrb[0].mxu0
    %v2839 = vadd.f32 0.0, %v2838
    %v2840 = vpop.f32.mrb[0].mxu0
    %2841 = vdwg.mxu0
    %2842 = vrot.lane.b32.xlu0 %v511, 96
    %v2843 = vpop.permute.xlu0 %2842
    %v2844 = vsel %vm66, %v463, 0
    %v2846 = vsel %vm66, %v2843, 0
    %2848 = vmatprep.subr.mxu0 0.0
    %2849 = vmatpush1.xpose.msra.mxu0 %v2846
    %2850 = vmatprep.subr.mxu0 0.0
    %2851 = vmatpush1.xpose.msra.mxu0 0.0
    %2852 = vmatprep.subr.mxu0 0.0
    %2853 = vmatpush1.xpose.msra.mxu0 0.0
    %2854 = vmatprep.subr.mxu0 0.0
    %2855 = vmatpush1.xpose.msra.mxu0 0.0
    %2856 = vmatprep.subr.mxu0 0.0
    %2857 = vmatpush1.xpose.msra.mxu0 0.0
    %2858 = vmatprep.subr.mxu0 0.0
    %2859 = vmatpush1.xpose.msra.mxu0 0.0
    %2860 = vmatprep.subr.mxu0 0.0
    %2861 = vmatpush1.xpose.msra.mxu0 0.0
    %2862 = vmatprep.subr.mxu0 0.0
    %2863 = vmatpush1.xpose.msra.mxu0 0.0
    %2864 = vmatprep.subr.mxu0 0.0
    %2865 = vmatpush1.xpose.msra.mxu0 0.0
    %2866 = vmatprep.subr.mxu0 0.0
    %2867 = vmatpush1.xpose.msra.mxu0 0.0
    %2868 = vmatprep.subr.mxu0 0.0
    %2869 = vmatpush1.xpose.msra.mxu0 0.0
    %2870 = vmatprep.subr.mxu0 0.0
    %2871 = vmatpush1.xpose.msra.mxu0 0.0
    %2872 = vmatprep.subr.mxu0 0.0
    %2873 = vmatpush1.xpose.msra.mxu0 0.0
    %2874 = vmatprep.subr.mxu0 0.0
    %2875 = vmatpush1.xpose.msra.mxu0 0.0
    %2876 = vmatprep.subr.mxu0 0.0
    %2877 = vmatpush1.xpose.msra.mxu0 0.0
    %2878 = vmatprep.subr.mxu0 0.0
    %2879 = vmatpush1.xpose.msra.mxu0 0.0
    %2880 = vmatprep.subr.mxu0 0.0
    %2881 = vmatpush1.xpose.msra.mxu0 0.0
    %2882 = vmatprep.subr.mxu0 0.0
    %2883 = vmatpush1.xpose.msra.mxu0 0.0
    %2884 = vmatprep.subr.mxu0 0.0
    %2885 = vmatpush1.xpose.msra.mxu0 0.0
    %2886 = vmatprep.subr.mxu0 0.0
    %2887 = vmatpush1.xpose.msra.mxu0 0.0
    %2888 = vmatprep.subr.mxu0 0.0
    %2889 = vmatpush1.xpose.msra.mxu0 0.0
    %2890 = vmatprep.subr.mxu0 0.0
    %2891 = vmatpush1.xpose.msra.mxu0 0.0
    %2892 = vmatprep.subr.mxu0 0.0
    %2893 = vmatpush1.xpose.msra.mxu0 0.0
    %2894 = vmatprep.subr.mxu0 0.0
    %2895 = vmatpush1.xpose.msra.mxu0 0.0
    %2896 = vmatprep.subr.mxu0 0.0
    %2897 = vmatpush1.xpose.msra.mxu0 0.0
    %2898 = vmatprep.subr.mxu0 0.0
    %2899 = vmatpush1.xpose.msra.mxu0 0.0
    %2900 = vmatprep.subr.mxu0 0.0
    %2901 = vmatpush1.xpose.msra.mxu0 0.0
    %2902 = vmatprep.subr.mxu0 0.0
    %2903 = vmatpush1.xpose.msra.mxu0 0.0
    %2904 = vmatprep.subr.mxu0 0.0
    %2905 = vmatpush1.xpose.msra.mxu0 0.0
    %2906 = vmatprep.subr.mxu0 0.0
    %2907 = vmatpush1.xpose.msra.mxu0 0.0
    %2908 = vmatprep.subr.mxu0 0.0
    %2909 = vmatpush1.xpose.msra.mxu0 0.0
    %2910 = vmatprep.subr.mxu0 0.0
    %2911 = vmatpush1.xpose.msra.mxu0 0.0
    %2912 = vmatprep.mubr.f32.mxu0 0.0
    %2913 = vmatmul.mubr.f32.gmra.mrb[0].mxu0 %v2844
    %v2914 = vpop.f32.mrb[0].mxu0
    %v2915 = vadd.f32 0.0, %v2914
    %v2916 = vpop.f32.mrb[0].mxu0
    %2917 = vdwg.mxu0
    %2918 = vrot.lane.b32.xlu0 %v513, 96
    %v2919 = vpop.permute.xlu0 %2918
    %v2920 = vsel %vm66, %v465, 0
    %v2922 = vsel %vm66, %v2919, 0
    %2924 = vmatprep.subr.mxu0 0.0
    %2925 = vmatpush1.xpose.msra.mxu0 %v2922
    %2926 = vmatprep.subr.mxu0 0.0
    %2927 = vmatpush1.xpose.msra.mxu0 0.0
    %2928 = vmatprep.subr.mxu0 0.0
    %2929 = vmatpush1.xpose.msra.mxu0 0.0
    %2930 = vmatprep.subr.mxu0 0.0
    %2931 = vmatpush1.xpose.msra.mxu0 0.0
    %2932 = vmatprep.subr.mxu0 0.0
    %2933 = vmatpush1.xpose.msra.mxu0 0.0
    %2934 = vmatprep.subr.mxu0 0.0
    %2935 = vmatpush1.xpose.msra.mxu0 0.0
    %2936 = vmatprep.subr.mxu0 0.0
    %2937 = vmatpush1.xpose.msra.mxu0 0.0
    %2938 = vmatprep.subr.mxu0 0.0
    %2939 = vmatpush1.xpose.msra.mxu0 0.0
    %2940 = vmatprep.subr.mxu0 0.0
    %2941 = vmatpush1.xpose.msra.mxu0 0.0
    %2942 = vmatprep.subr.mxu0 0.0
    %2943 = vmatpush1.xpose.msra.mxu0 0.0
    %2944 = vmatprep.subr.mxu0 0.0
    %2945 = vmatpush1.xpose.msra.mxu0 0.0
    %2946 = vmatprep.subr.mxu0 0.0
    %2947 = vmatpush1.xpose.msra.mxu0 0.0
    %2948 = vmatprep.subr.mxu0 0.0
    %2949 = vmatpush1.xpose.msra.mxu0 0.0
    %2950 = vmatprep.subr.mxu0 0.0
    %2951 = vmatpush1.xpose.msra.mxu0 0.0
    %2952 = vmatprep.subr.mxu0 0.0
    %2953 = vmatpush1.xpose.msra.mxu0 0.0
    %2954 = vmatprep.subr.mxu0 0.0
    %2955 = vmatpush1.xpose.msra.mxu0 0.0
    %2956 = vmatprep.subr.mxu0 0.0
    %2957 = vmatpush1.xpose.msra.mxu0 0.0
    %2958 = vmatprep.subr.mxu0 0.0
    %2959 = vmatpush1.xpose.msra.mxu0 0.0
    %2960 = vmatprep.subr.mxu0 0.0
    %2961 = vmatpush1.xpose.msra.mxu0 0.0
    %2962 = vmatprep.subr.mxu0 0.0
    %2963 = vmatpush1.xpose.msra.mxu0 0.0
    %2964 = vmatprep.subr.mxu0 0.0
    %2965 = vmatpush1.xpose.msra.mxu0 0.0
    %2966 = vmatprep.subr.mxu0 0.0
    %2967 = vmatpush1.xpose.msra.mxu0 0.0
    %2968 = vmatprep.subr.mxu0 0.0
    %2969 = vmatpush1.xpose.msra.mxu0 0.0
    %2970 = vmatprep.subr.mxu0 0.0
    %2971 = vmatpush1.xpose.msra.mxu0 0.0
    %2972 = vmatprep.subr.mxu0 0.0
    %2973 = vmatpush1.xpose.msra.mxu0 0.0
    %2974 = vmatprep.subr.mxu0 0.0
    %2975 = vmatpush1.xpose.msra.mxu0 0.0
    %2976 = vmatprep.subr.mxu0 0.0
    %2977 = vmatpush1.xpose.msra.mxu0 0.0
    %2978 = vmatprep.subr.mxu0 0.0
    %2979 = vmatpush1.xpose.msra.mxu0 0.0
    %2980 = vmatprep.subr.mxu0 0.0
    %2981 = vmatpush1.xpose.msra.mxu0 0.0
    %2982 = vmatprep.subr.mxu0 0.0
    %2983 = vmatpush1.xpose.msra.mxu0 0.0
    %2984 = vmatprep.subr.mxu0 0.0
    %2985 = vmatpush1.xpose.msra.mxu0 0.0
    %2986 = vmatprep.subr.mxu0 0.0
    %2987 = vmatpush1.xpose.msra.mxu0 0.0
    %2988 = vmatprep.mubr.f32.mxu0 0.0
    %2989 = vmatmul.mubr.f32.gmra.mrb[0].mxu0 %v2920
    %v2990 = vpop.f32.mrb[0].mxu0
    %v2991 = vadd.f32 0.0, %v2990
    %v2992 = vpop.f32.mrb[0].mxu0
    %2993 = vdwg.mxu0
    %vm2994 = vcmask 64512
    %v2995 = vsel %vm2994, %v635, -inf
    %2996 = vmax.xlane.f32.xlu0 %v2995
    %v2997 = vpop.xlane.xlu0 %2996
    %v2998 = vsel %vm2994, %v711, -inf
    %2999 = vmax.xlane.f32.xlu0 %v2998
    %v3000 = vpop.xlane.xlu0 %2999
    %v3001 = vsel %vm2994, %v787, -inf
    %3002 = vmax.xlane.f32.xlu0 %v3001
    %v3003 = vpop.xlane.xlu0 %3002
    %v3004 = vsel %vm2994, %v863, -inf
    %3005 = vmax.xlane.f32.xlu0 %v3004
    %v3006 = vpop.xlane.xlu0 %3005
    %v3007 = vsel %vm2994, %v939, -inf
    %3008 = vmax.xlane.f32.xlu0 %v3007
    %v3009 = vpop.xlane.xlu0 %3008
    %v3010 = vsel %vm2994, %v1015, -inf
    %3011 = vmax.xlane.f32.xlu0 %v3010
    %v3012 = vpop.xlane.xlu0 %3011
    %v3013 = vsel %vm2994, %v1091, -inf
    %3014 = vmax.xlane.f32.xlu0 %v3013
    %v3015 = vpop.xlane.xlu0 %3014
    %v3016 = vsel %vm2994, %v1167, -inf
    %3017 = vmax.xlane.f32.xlu0 %v3016
    %v3018 = vpop.xlane.xlu0 %3017
    %v3019 = vsel %vm2994, %v1243, -inf
    %3020 = vmax.xlane.f32.xlu0 %v3019
    %v3021 = vpop.xlane.xlu0 %3020
    %v3022 = vsel %vm2994, %v1319, -inf
    %3023 = vmax.xlane.f32.xlu0 %v3022
    %v3024 = vpop.xlane.xlu0 %3023
    %v3025 = vsel %vm2994, %v1395, -inf
    %3026 = vmax.xlane.f32.xlu0 %v3025
    %v3027 = vpop.xlane.xlu0 %3026
    %v3028 = vsel %vm2994, %v1471, -inf
    %3029 = vmax.xlane.f32.xlu0 %v3028
    %v3030 = vpop.xlane.xlu0 %3029
    %v3031 = vsel %vm2994, %v1547, -inf
    %3032 = vmax.xlane.f32.xlu0 %v3031
    %v3033 = vpop.xlane.xlu0 %3032
    %v3034 = vsel %vm2994, %v1623, -inf
    %3035 = vmax.xlane.f32.xlu0 %v3034
    %v3036 = vpop.xlane.xlu0 %3035
    %v3037 = vsel %vm2994, %v1699, -inf
    %3038 = vmax.xlane.f32.xlu0 %v3037
    %v3039 = vpop.xlane.xlu0 %3038
    %v3040 = vsel %vm2994, %v1775, -inf
    %3041 = vmax.xlane.f32.xlu0 %v3040
    %v3042 = vpop.xlane.xlu0 %3041
    %v3043 = vsel %vm2994, %v1851, -inf
    %3044 = vmax.xlane.f32.xlu0 %v3043
    %v3045 = vpop.xlane.xlu0 %3044
    %v3046 = vsel %vm2994, %v1927, -inf
    %3047 = vmax.xlane.f32.xlu0 %v3046
    %v3048 = vpop.xlane.xlu0 %3047
    %v3049 = vsel %vm2994, %v2003, -inf
    %3050 = vmax.xlane.f32.xlu0 %v3049
    %v3051 = vpop.xlane.xlu0 %3050
    %v3052 = vsel %vm2994, %v2079, -inf
    %3053 = vmax.xlane.f32.xlu0 %v3052
    %v3054 = vpop.xlane.xlu0 %3053
    %v3055 = vsel %vm2994, %v2155, -inf
    %3056 = vmax.xlane.f32.xlu0 %v3055
    %v3057 = vpop.xlane.xlu0 %3056
    %v3058 = vsel %vm2994, %v2231, -inf
    %3059 = vmax.xlane.f32.xlu0 %v3058
    %v3060 = vpop.xlane.xlu0 %3059
    %v3061 = vsel %vm2994, %v2307, -inf
    %3062 = vmax.xlane.f32.xlu0 %v3061
    %v3063 = vpop.xlane.xlu0 %3062
    %v3064 = vsel %vm2994, %v2383, -inf
    %3065 = vmax.xlane.f32.xlu0 %v3064
    %v3066 = vpop.xlane.xlu0 %3065
    %v3067 = vsel %vm2994, %v2459, -inf
    %3068 = vmax.xlane.f32.xlu0 %v3067
    %v3069 = vpop.xlane.xlu0 %3068
    %v3070 = vsel %vm2994, %v2535, -inf
    %3071 = vmax.xlane.f32.xlu0 %v3070
    %v3072 = vpop.xlane.xlu0 %3071
    %v3073 = vsel %vm2994, %v2611, -inf
    %3074 = vmax.xlane.f32.xlu0 %v3073
    %v3075 = vpop.xlane.xlu0 %3074
    %v3076 = vsel %vm2994, %v2687, -inf
    %3077 = vmax.xlane.f32.xlu0 %v3076
    %v3078 = vpop.xlane.xlu0 %3077
    %v3079 = vsel %vm2994, %v2763, -inf
    %3080 = vmax.xlane.f32.xlu0 %v3079
    %v3081 = vpop.xlane.xlu0 %3080
    %v3082 = vsel %vm2994, %v2839, -inf
    %3083 = vmax.xlane.f32.xlu0 %v3082
    %v3084 = vpop.xlane.xlu0 %3083
    %v3085 = vsel %vm2994, %v2915, -inf
    %3086 = vmax.xlane.f32.xlu0 %v3085
    %v3087 = vpop.xlane.xlu0 %3086
    %v3088 = vsel %vm2994, %v2991, -inf
    %3089 = vmax.xlane.f32.xlu0 %v3088
    %v3090 = vpop.xlane.xlu0 %3089
    %v3091 = vsub.f32 %v635, %v2997
    %v3092 = vsub.f32 %v711, %v3000
    %v3093 = vsub.f32 %v787, %v3003
    %v3094 = vsub.f32 %v863, %v3006
    %v3095 = vsub.f32 %v939, %v3009
    %v3096 = vsub.f32 %v1015, %v3012
    %v3097 = vsub.f32 %v1091, %v3015
    %v3098 = vsub.f32 %v1167, %v3018
    %v3099 = vsub.f32 %v1243, %v3021
    %v3100 = vsub.f32 %v1319, %v3024
    %v3101 = vsub.f32 %v1395, %v3027
    %v3102 = vsub.f32 %v1471, %v3030
    %v3103 = vsub.f32 %v1547, %v3033
    %v3104 = vsub.f32 %v1623, %v3036
    %v3105 = vsub.f32 %v1699, %v3039
    %v3106 = vsub.f32 %v1775, %v3042
    %v3107 = vsub.f32 %v1851, %v3045
    %v3108 = vsub.f32 %v1927, %v3048
    %v3109 = vsub.f32 %v2003, %v3051
    %v3110 = vsub.f32 %v2079, %v3054
    %v3111 = vsub.f32 %v2155, %v3057
    %v3112 = vsub.f32 %v2231, %v3060
    %v3113 = vsub.f32 %v2307, %v3063
    %v3114 = vsub.f32 %v2383, %v3066
    %v3115 = vsub.f32 %v2459, %v3069
    %v3116 = vsub.f32 %v2535, %v3072
    %v3117 = vsub.f32 %v2611, %v3075
    %v3118 = vsub.f32 %v2687, %v3078
    %v3119 = vsub.f32 %v2763, %v3081
    %v3120 = vsub.f32 %v2839, %v3084
    %v3121 = vsub.f32 %v2915, %v3087
    %v3122 = vsub.f32 %v2991, %v3090
    %v3123 = vmul.f32 %v3091, 1.442695
    %v3124 = vpow.pop %v3123
    %v3125 = vmul.f32 %v3092, 1.442695
    %v3126 = vpow.pop %v3125
    %v3127 = vmul.f32 %v3093, 1.442695
    %v3128 = vpow.pop %v3127
    %v3129 = vmul.f32 %v3094, 1.442695
    %v3130 = vpow.pop %v3129
    %v3131 = vmul.f32 %v3095, 1.442695
    %v3132 = vpow.pop %v3131
    %v3133 = vmul.f32 %v3096, 1.442695
    %v3134 = vpow.pop %v3133
    %v3135 = vmul.f32 %v3097, 1.442695
    %v3136 = vpow.pop %v3135
    %v3137 = vmul.f32 %v3098, 1.442695
    %v3138 = vpow.pop %v3137
    %v3139 = vmul.f32 %v3099, 1.442695
    %v3140 = vpow.pop %v3139
    %v3141 = vmul.f32 %v3100, 1.442695
    %v3142 = vpow.pop %v3141
    %v3143 = vmul.f32 %v3101, 1.442695
    %v3144 = vpow.pop %v3143
    %v3145 = vmul.f32 %v3102, 1.442695
    %v3146 = vpow.pop %v3145
    %v3147 = vmul.f32 %v3103, 1.442695
    %v3148 = vpow.pop %v3147
    %v3149 = vmul.f32 %v3104, 1.442695
    %v3150 = vpow.pop %v3149
    %v3151 = vmul.f32 %v3105, 1.442695
    %v3152 = vpow.pop %v3151
    %v3153 = vmul.f32 %v3106, 1.442695
    %v3154 = vpow.pop %v3153
    %v3155 = vmul.f32 %v3107, 1.442695
    %v3156 = vpow.pop %v3155
    %v3157 = vmul.f32 %v3108, 1.442695
    %v3158 = vpow.pop %v3157
    %v3159 = vmul.f32 %v3109, 1.442695
    %v3160 = vpow.pop %v3159
    %v3161 = vmul.f32 %v3110, 1.442695
    %v3162 = vpow.pop %v3161
    %v3163 = vmul.f32 %v3111, 1.442695
    %v3164 = vpow.pop %v3163
    %v3165 = vmul.f32 %v3112, 1.442695
    %v3166 = vpow.pop %v3165
    %v3167 = vmul.f32 %v3113, 1.442695
    %v3168 = vpow.pop %v3167
    %v3169 = vmul.f32 %v3114, 1.442695
    %v3170 = vpow.pop %v3169
    %v3171 = vmul.f32 %v3115, 1.442695
    %v3172 = vpow.pop %v3171
    %v3173 = vmul.f32 %v3116, 1.442695
    %v3174 = vpow.pop %v3173
    %v3175 = vmul.f32 %v3117, 1.442695
    %v3176 = vpow.pop %v3175
    %v3177 = vmul.f32 %v3118, 1.442695
    %v3178 = vpow.pop %v3177
    %v3179 = vmul.f32 %v3119, 1.442695
    %v3180 = vpow.pop %v3179
    %v3181 = vmul.f32 %v3120, 1.442695
    %v3182 = vpow.pop %v3181
    %v3183 = vmul.f32 %v3121, 1.442695
    %v3184 = vpow.pop %v3183
    %v3185 = vmul.f32 %v3122, 1.442695
    %v3186 = vpow.pop %v3185
    %v3187 = vsel %vm2994, %v3124, 0.0
    %3188 = vadd.xlane.f32.xlu0 %v3187
    %v3189 = vpop.xlane.xlu0 %3188
    %v3190 = vsel %vm2994, %v3126, 0.0
    %3191 = vadd.xlane.f32.xlu0 %v3190
    %v3192 = vpop.xlane.xlu0 %3191
    %v3193 = vsel %vm2994, %v3128, 0.0
    %3194 = vadd.xlane.f32.xlu0 %v3193
    %v3195 = vpop.xlane.xlu0 %3194
    %v3196 = vsel %vm2994, %v3130, 0.0
    %3197 = vadd.xlane.f32.xlu0 %v3196
    %v3198 = vpop.xlane.xlu0 %3197
    %v3199 = vsel %vm2994, %v3132, 0.0
    %3200 = vadd.xlane.f32.xlu0 %v3199
    %v3201 = vpop.xlane.xlu0 %3200
    %v3202 = vsel %vm2994, %v3134, 0.0
    %3203 = vadd.xlane.f32.xlu0 %v3202
    %v3204 = vpop.xlane.xlu0 %3203
    %v3205 = vsel %vm2994, %v3136, 0.0
    %3206 = vadd.xlane.f32.xlu0 %v3205
    %v3207 = vpop.xlane.xlu0 %3206
    %v3208 = vsel %vm2994, %v3138, 0.0
    %3209 = vadd.xlane.f32.xlu0 %v3208
    %v3210 = vpop.xlane.xlu0 %3209
    %v3211 = vsel %vm2994, %v3140, 0.0
    %3212 = vadd.xlane.f32.xlu0 %v3211
    %v3213 = vpop.xlane.xlu0 %3212
    %v3214 = vsel %vm2994, %v3142, 0.0
    %3215 = vadd.xlane.f32.xlu0 %v3214
    %v3216 = vpop.xlane.xlu0 %3215
    %v3217 = vsel %vm2994, %v3144, 0.0
    %3218 = vadd.xlane.f32.xlu0 %v3217
    %v3219 = vpop.xlane.xlu0 %3218
    %v3220 = vsel %vm2994, %v3146, 0.0
    %3221 = vadd.xlane.f32.xlu0 %v3220
    %v3222 = vpop.xlane.xlu0 %3221
    %v3223 = vsel %vm2994, %v3148, 0.0
    %3224 = vadd.xlane.f32.xlu0 %v3223
    %v3225 = vpop.xlane.xlu0 %3224
    %v3226 = vsel %vm2994, %v3150, 0.0
    %3227 = vadd.xlane.f32.xlu0 %v3226
    %v3228 = vpop.xlane.xlu0 %3227
    %v3229 = vsel %vm2994, %v3152, 0.0
    %3230 = vadd.xlane.f32.xlu0 %v3229
    %v3231 = vpop.xlane.xlu0 %3230
    %v3232 = vsel %vm2994, %v3154, 0.0
    %3233 = vadd.xlane.f32.xlu0 %v3232
    %v3234 = vpop.xlane.xlu0 %3233
    %v3235 = vsel %vm2994, %v3156, 0.0
    %3236 = vadd.xlane.f32.xlu0 %v3235
    %v3237 = vpop.xlane.xlu0 %3236
    %v3238 = vsel %vm2994, %v3158, 0.0
    %3239 = vadd.xlane.f32.xlu0 %v3238
    %v3240 = vpop.xlane.xlu0 %3239
    %v3241 = vsel %vm2994, %v3160, 0.0
    %3242 = vadd.xlane.f32.xlu0 %v3241
    %v3243 = vpop.xlane.xlu0 %3242
    %v3244 = vsel %vm2994, %v3162, 0.0
    %3245 = vadd.xlane.f32.xlu0 %v3244
    %v3246 = vpop.xlane.xlu0 %3245
    %v3247 = vsel %vm2994, %v3164, 0.0
    %3248 = vadd.xlane.f32.xlu0 %v3247
    %v3249 = vpop.xlane.xlu0 %3248
    %v3250 = vsel %vm2994, %v3166, 0.0
    %3251 = vadd.xlane.f32.xlu0 %v3250
    %v3252 = vpop.xlane.xlu0 %3251
    %v3253 = vsel %vm2994, %v3168, 0.0
    %3254 = vadd.xlane.f32.xlu0 %v3253
    %v3255 = vpop.xlane.xlu0 %3254
    %v3256 = vsel %vm2994, %v3170, 0.0
    %3257 = vadd.xlane.f32.xlu0 %v3256
    %v3258 = vpop.xlane.xlu0 %3257
    %v3259 = vsel %vm2994, %v3172, 0.0
    %3260 = vadd.xlane.f32.xlu0 %v3259
    %v3261 = vpop.xlane.xlu0 %3260
    %v3262 = vsel %vm2994, %v3174, 0.0
    %3263 = vadd.xlane.f32.xlu0 %v3262
    %v3264 = vpop.xlane.xlu0 %3263
    %v3265 = vsel %vm2994, %v3176, 0.0
    %3266 = vadd.xlane.f32.xlu0 %v3265
    %v3267 = vpop.xlane.xlu0 %3266
    %v3268 = vsel %vm2994, %v3178, 0.0
    %3269 = vadd.xlane.f32.xlu0 %v3268
    %v3270 = vpop.xlane.xlu0 %3269
    %v3271 = vsel %vm2994, %v3180, 0.0
    %3272 = vadd.xlane.f32.xlu0 %v3271
    %v3273 = vpop.xlane.xlu0 %3272
    %v3274 = vsel %vm2994, %v3182, 0.0
    %3275 = vadd.xlane.f32.xlu0 %v3274
    %v3276 = vpop.xlane.xlu0 %3275
    %v3277 = vsel %vm2994, %v3184, 0.0
    %3278 = vadd.xlane.f32.xlu0 %v3277
    %v3279 = vpop.xlane.xlu0 %3278
    %v3280 = vsel %vm2994, %v3186, 0.0
    %3281 = vadd.xlane.f32.xlu0 %v3280
    %v3282 = vpop.xlane.xlu0 %3281
    %v3283 = vrcp.pop %v3189
    %v3284 = vrcp.pop %v3192
    %v3285 = vrcp.pop %v3195
    %v3286 = vrcp.pop %v3198
    %v3287 = vrcp.pop %v3201
    %v3288 = vrcp.pop %v3204
    %v3289 = vrcp.pop %v3207
    %v3290 = vrcp.pop %v3210
    %v3291 = vrcp.pop %v3213
    %v3292 = vrcp.pop %v3216
    %v3293 = vrcp.pop %v3219
    %v3294 = vrcp.pop %v3222
    %v3295 = vrcp.pop %v3225
    %v3296 = vrcp.pop %v3228
    %v3297 = vrcp.pop %v3231
    %v3298 = vrcp.pop %v3234
    %v3299 = vrcp.pop %v3237
    %v3300 = vrcp.pop %v3240
    %v3301 = vrcp.pop %v3243
    %v3302 = vrcp.pop %v3246
    %v3303 = vrcp.pop %v3249
    %v3304 = vrcp.pop %v3252
    %v3305 = vrcp.pop %v3255
    %v3306 = vrcp.pop %v3258
    %v3307 = vrcp.pop %v3261
    %v3308 = vrcp.pop %v3264
    %v3309 = vrcp.pop %v3267
    %v3310 = vrcp.pop %v3270
    %v3311 = vrcp.pop %v3273
    %v3312 = vrcp.pop %v3276
    %v3313 = vrcp.pop %v3279
    %v3314 = vrcp.pop %v3282
    %v3315 = vmul.f32 %v3124, %v3283
    %v3316 = vmul.f32 %v3126, %v3284
    %v3317 = vmul.f32 %v3128, %v3285
    %v3318 = vmul.f32 %v3130, %v3286
    %v3319 = vmul.f32 %v3132, %v3287
    %v3320 = vmul.f32 %v3134, %v3288
    %v3321 = vmul.f32 %v3136, %v3289
    %v3322 = vmul.f32 %v3138, %v3290
    %v3323 = vmul.f32 %v3140, %v3291
    %v3324 = vmul.f32 %v3142, %v3292
    %v3325 = vmul.f32 %v3144, %v3293
    %v3326 = vmul.f32 %v3146, %v3294
    %v3327 = vmul.f32 %v3148, %v3295
    %v3328 = vmul.f32 %v3150, %v3296
    %v3329 = vmul.f32 %v3152, %v3297
    %v3330 = vmul.f32 %v3154, %v3298
    %v3331 = vmul.f32 %v3156, %v3299
    %v3332 = vmul.f32 %v3158, %v3300
    %v3333 = vmul.f32 %v3160, %v3301
    %v3334 = vmul.f32 %v3162, %v3302
    %v3335 = vmul.f32 %v3164, %v3303
    %v3336 = vmul.f32 %v3166, %v3304
    %v3337 = vmul.f32 %v3168, %v3305
    %v3338 = vmul.f32 %v3170, %v3306
    %v3339 = vmul.f32 %v3172, %v3307
    %v3340 = vmul.f32 %v3174, %v3308
    %v3341 = vmul.f32 %v3176, %v3309
    %v3342 = vmul.f32 %v3178, %v3310
    %v3343 = vmul.f32 %v3180, %v3311
    %v3344 = vmul.f32 %v3182, %v3312
    %v3345 = vmul.f32 %v3184, %v3313
    %v3346 = vmul.f32 %v3186, %v3314
    %3347 = vrot.lane.b32.xlu0 %v402, 64
    %v3348 = vpop.permute.xlu0 %3347
    %v3351 = vsel %vm2994, %v3315, 0
    %3353 = vmatprep.subr.mxu0 0.0
    %3354 = vmatpush1.msra.mxu0 %v3348
    %3355 = vmatprep.subr.mxu0 0.0
    %3356 = vmatpush1.msra.mxu0 0.0
    %3357 = vmatprep.subr.mxu0 0.0
    %3358 = vmatpush1.msra.mxu0 0.0
    %3359 = vmatprep.subr.mxu0 0.0
    %3360 = vmatpush1.msra.mxu0 0.0
    %3361 = vmatprep.subr.mxu0 0.0
    %3362 = vmatpush1.msra.mxu0 0.0
    %3363 = vmatprep.subr.mxu0 0.0
    %3364 = vmatpush1.msra.mxu0 0.0
    %3365 = vmatprep.subr.mxu0 0.0
    %3366 = vmatpush1.msra.mxu0 0.0
    %3367 = vmatprep.subr.mxu0 0.0
    %3368 = vmatpush1.msra.mxu0 0.0
    %3369 = vmatprep.subr.mxu0 0.0
    %3370 = vmatpush1.msra.mxu0 0.0
    %3371 = vmatprep.subr.mxu0 0.0
    %3372 = vmatpush1.msra.mxu0 0.0
    %3373 = vmatprep.subr.mxu0 0.0
    %3374 = vmatpush1.msra.mxu0 0.0
    %3375 = vmatprep.subr.mxu0 0.0
    %3376 = vmatpush1.msra.mxu0 0.0
    %3377 = vmatprep.subr.mxu0 0.0
    %3378 = vmatpush1.msra.mxu0 0.0
    %3379 = vmatprep.subr.mxu0 0.0
    %3380 = vmatpush1.msra.mxu0 0.0
    %3381 = vmatprep.subr.mxu0 0.0
    %3382 = vmatpush1.msra.mxu0 0.0
    %3383 = vmatprep.subr.mxu0 0.0
    %3384 = vmatpush1.msra.mxu0 0.0
    %3385 = vmatprep.subr.mxu0 0.0
    %3386 = vmatpush1.msra.mxu0 0.0
    %3387 = vmatprep.subr.mxu0 0.0
    %3388 = vmatpush1.msra.mxu0 0.0
    %3389 = vmatprep.subr.mxu0 0.0
    %3390 = vmatpush1.msra.mxu0 0.0
    %3391 = vmatprep.subr.mxu0 0.0
    %3392 = vmatpush1.msra.mxu0 0.0
    %3393 = vmatprep.subr.mxu0 0.0
    %3394 = vmatpush1.msra.mxu0 0.0
    %3395 = vmatprep.subr.mxu0 0.0
    %3396 = vmatpush1.msra.mxu0 0.0
    %3397 = vmatprep.subr.mxu0 0.0
    %3398 = vmatpush1.msra.mxu0 0.0
    %3399 = vmatprep.subr.mxu0 0.0
    %3400 = vmatpush1.msra.mxu0 0.0
    %3401 = vmatprep.subr.mxu0 0.0
    %3402 = vmatpush1.msra.mxu0 0.0
    %3403 = vmatprep.subr.mxu0 0.0
    %3404 = vmatpush1.msra.mxu0 0.0
    %3405 = vmatprep.subr.mxu0 0.0
    %3406 = vmatpush1.msra.mxu0 0.0
    %3407 = vmatprep.subr.mxu0 0.0
    %3408 = vmatpush1.msra.mxu0 0.0
    %3409 = vmatprep.subr.mxu0 0.0
    %3410 = vmatpush1.msra.mxu0 0.0
    %3411 = vmatprep.subr.mxu0 0.0
    %3412 = vmatpush1.msra.mxu0 0.0
    %3413 = vmatprep.subr.mxu0 0.0
    %3414 = vmatpush1.msra.mxu0 0.0
    %3415 = vmatprep.subr.mxu0 0.0
    %3416 = vmatpush1.msra.mxu0 0.0
    %3417 = vmatprep.mubr.f32.mxu0 0.0
    %3418 = vmatmul.mubr.f32.gmra.mrb[0].mxu0 %v3351
    %v3419 = vpop.f32.mrb[0].mxu0
    %v3420 = vadd.f32 0.0, %v3419
    %v3421 = vpop.f32.mrb[0].mxu0
    %3422 = vdwg.mxu0
    %3423 = vrot.lane.b32.xlu0 %v403, 64
    %v3424 = vpop.permute.xlu0 %3423
    %v3427 = vsel %vm2994, %v3316, 0
    %3429 = vmatprep.subr.mxu0 0.0
    %3430 = vmatpush1.msra.mxu0 %v3424
    %3431 = vmatprep.subr.mxu0 0.0
    %3432 = vmatpush1.msra.mxu0 0.0
    %3433 = vmatprep.subr.mxu0 0.0
    %3434 = vmatpush1.msra.mxu0 0.0
    %3435 = vmatprep.subr.mxu0 0.0
    %3436 = vmatpush1.msra.mxu0 0.0
    %3437 = vmatprep.subr.mxu0 0.0
    %3438 = vmatpush1.msra.mxu0 0.0
    %3439 = vmatprep.subr.mxu0 0.0
    %3440 = vmatpush1.msra.mxu0 0.0
    %3441 = vmatprep.subr.mxu0 0.0
    %3442 = vmatpush1.msra.mxu0 0.0
    %3443 = vmatprep.subr.mxu0 0.0
    %3444 = vmatpush1.msra.mxu0 0.0
    %3445 = vmatprep.subr.mxu0 0.0
    %3446 = vmatpush1.msra.mxu0 0.0
    %3447 = vmatprep.subr.mxu0 0.0
    %3448 = vmatpush1.msra.mxu0 0.0
    %3449 = vmatprep.subr.mxu0 0.0
    %3450 = vmatpush1.msra.mxu0 0.0
    %3451 = vmatprep.subr.mxu0 0.0
    %3452 = vmatpush1.msra.mxu0 0.0
    %3453 = vmatprep.subr.mxu0 0.0
    %3454 = vmatpush1.msra.mxu0 0.0
    %3455 = vmatprep.subr.mxu0 0.0
    %3456 = vmatpush1.msra.mxu0 0.0
    %3457 = vmatprep.subr.mxu0 0.0
    %3458 = vmatpush1.msra.mxu0 0.0
    %3459 = vmatprep.subr.mxu0 0.0
    %3460 = vmatpush1.msra.mxu0 0.0
    %3461 = vmatprep.subr.mxu0 0.0
    %3462 = vmatpush1.msra.mxu0 0.0
    %3463 = vmatprep.subr.mxu0 0.0
    %3464 = vmatpush1.msra.mxu0 0.0
    %3465 = vmatprep.subr.mxu0 0.0
    %3466 = vmatpush1.msra.mxu0 0.0
    %3467 = vmatprep.subr.mxu0 0.0
    %3468 = vmatpush1.msra.mxu0 0.0
    %3469 = vmatprep.subr.mxu0 0.0
    %3470 = vmatpush1.msra.mxu0 0.0
    %3471 = vmatprep.subr.mxu0 0.0
    %3472 = vmatpush1.msra.mxu0 0.0
    %3473 = vmatprep.subr.mxu0 0.0
    %3474 = vmatpush1.msra.mxu0 0.0
    %3475 = vmatprep.subr.mxu0 0.0
    %3476 = vmatpush1.msra.mxu0 0.0
    %3477 = vmatprep.subr.mxu0 0.0
    %3478 = vmatpush1.msra.mxu0 0.0
    %3479 = vmatprep.subr.mxu0 0.0
    %3480 = vmatpush1.msra.mxu0 0.0
    %3481 = vmatprep.subr.mxu0 0.0
    %3482 = vmatpush1.msra.mxu0 0.0
    %3483 = vmatprep.subr.mxu0 0.0
    %3484 = vmatpush1.msra.mxu0 0.0
    %3485 = vmatprep.subr.mxu0 0.0
    %3486 = vmatpush1.msra.mxu0 0.0
    %3487 = vmatprep.subr.mxu0 0.0
    %3488 = vmatpush1.msra.mxu0 0.0
    %3489 = vmatprep.subr.mxu0 0.0
    %3490 = vmatpush1.msra.mxu0 0.0
    %3491 = vmatprep.subr.mxu0 0.0
    %3492 = vmatpush1.msra.mxu0 0.0
    %3493 = vmatprep.mubr.f32.mxu0 0.0
    %3494 = vmatmul.mubr.f32.gmra.mrb[0].mxu0 %v3427
    %v3495 = vpop.f32.mrb[0].mxu0
    %v3496 = vadd.f32 0.0, %v3495
    %v3497 = vpop.f32.mrb[0].mxu0
    %3498 = vdwg.mxu0
    %3499 = vrot.lane.b32.xlu0 %v404, 64
    %v3500 = vpop.permute.xlu0 %3499
    %v3503 = vsel %vm2994, %v3317, 0
    %3505 = vmatprep.subr.mxu0 0.0
    %3506 = vmatpush1.msra.mxu0 %v3500
    %3507 = vmatprep.subr.mxu0 0.0
    %3508 = vmatpush1.msra.mxu0 0.0
    %3509 = vmatprep.subr.mxu0 0.0
    %3510 = vmatpush1.msra.mxu0 0.0
    %3511 = vmatprep.subr.mxu0 0.0
    %3512 = vmatpush1.msra.mxu0 0.0
    %3513 = vmatprep.subr.mxu0 0.0
    %3514 = vmatpush1.msra.mxu0 0.0
    %3515 = vmatprep.subr.mxu0 0.0
    %3516 = vmatpush1.msra.mxu0 0.0
    %3517 = vmatprep.subr.mxu0 0.0
    %3518 = vmatpush1.msra.mxu0 0.0
    %3519 = vmatprep.subr.mxu0 0.0
    %3520 = vmatpush1.msra.mxu0 0.0
    %3521 = vmatprep.subr.mxu0 0.0
    %3522 = vmatpush1.msra.mxu0 0.0
    %3523 = vmatprep.subr.mxu0 0.0
    %3524 = vmatpush1.msra.mxu0 0.0
    %3525 = vmatprep.subr.mxu0 0.0
    %3526 = vmatpush1.msra.mxu0 0.0
    %3527 = vmatprep.subr.mxu0 0.0
    %3528 = vmatpush1.msra.mxu0 0.0
    %3529 = vmatprep.subr.mxu0 0.0
    %3530 = vmatpush1.msra.mxu0 0.0
    %3531 = vmatprep.subr.mxu0 0.0
    %3532 = vmatpush1.msra.mxu0 0.0
    %3533 = vmatprep.subr.mxu0 0.0
    %3534 = vmatpush1.msra.mxu0 0.0
    %3535 = vmatprep.subr.mxu0 0.0
    %3536 = vmatpush1.msra.mxu0 0.0
    %3537 = vmatprep.subr.mxu0 0.0
    %3538 = vmatpush1.msra.mxu0 0.0
    %3539 = vmatprep.subr.mxu0 0.0
    %3540 = vmatpush1.msra.mxu0 0.0
    %3541 = vmatprep.subr.mxu0 0.0
    %3542 = vmatpush1.msra.mxu0 0.0
    %3543 = vmatprep.subr.mxu0 0.0
    %3544 = vmatpush1.msra.mxu0 0.0
    %3545 = vmatprep.subr.mxu0 0.0
    %3546 = vmatpush1.msra.mxu0 0.0
    %3547 = vmatprep.subr.mxu0 0.0
    %3548 = vmatpush1.msra.mxu0 0.0
    %3549 = vmatprep.subr.mxu0 0.0
    %3550 = vmatpush1.msra.mxu0 0.0
    %3551 = vmatprep.subr.mxu0 0.0
    %3552 = vmatpush1.msra.mxu0 0.0
    %3553 = vmatprep.subr.mxu0 0.0
    %3554 = vmatpush1.msra.mxu0 0.0
    %3555 = vmatprep.subr.mxu0 0.0
    %3556 = vmatpush1.msra.mxu0 0.0
    %3557 = vmatprep.subr.mxu0 0.0
    %3558 = vmatpush1.msra.mxu0 0.0
    %3559 = vmatprep.subr.mxu0 0.0
    %3560 = vmatpush1.msra.mxu0 0.0
    %3561 = vmatprep.subr.mxu0 0.0
    %3562 = vmatpush1.msra.mxu0 0.0
    %3563 = vmatprep.subr.mxu0 0.0
    %3564 = vmatpush1.msra.mxu0 0.0
    %3565 = vmatprep.subr.mxu0 0.0
    %3566 = vmatpush1.msra.mxu0 0.0
    %3567 = vmatprep.subr.mxu0 0.0
    %3568 = vmatpush1.msra.mxu0 0.0
    %3569 = vmatprep.mubr.f32.mxu0 0.0
    %3570 = vmatmul.mubr.f32.gmra.mrb[0].mxu0 %v3503
    %v3571 = vpop.f32.mrb[0].mxu0
    %v3572 = vadd.f32 0.0, %v3571
    %v3573 = vpop.f32.mrb[0].mxu0
    %3574 = vdwg.mxu0
    %3575 = vrot.lane.b32.xlu0 %v405, 64
    %v3576 = vpop.permute.xlu0 %3575
    %v3579 = vsel %vm2994, %v3318, 0
    %3581 = vmatprep.subr.mxu0 0.0
    %3582 = vmatpush1.msra.mxu0 %v3576
    %3583 = vmatprep.subr.mxu0 0.0
    %3584 = vmatpush1.msra.mxu0 0.0
    %3585 = vmatprep.subr.mxu0 0.0
    %3586 = vmatpush1.msra.mxu0 0.0
    %3587 = vmatprep.subr.mxu0 0.0
    %3588 = vmatpush1.msra.mxu0 0.0
    %3589 = vmatprep.subr.mxu0 0.0
    %3590 = vmatpush1.msra.mxu0 0.0
    %3591 = vmatprep.subr.mxu0 0.0
    %3592 = vmatpush1.msra.mxu0 0.0
    %3593 = vmatprep.subr.mxu0 0.0
    %3594 = vmatpush1.msra.mxu0 0.0
    %3595 = vmatprep.subr.mxu0 0.0
    %3596 = vmatpush1.msra.mxu0 0.0
    %3597 = vmatprep.subr.mxu0 0.0
    %3598 = vmatpush1.msra.mxu0 0.0
    %3599 = vmatprep.subr.mxu0 0.0
    %3600 = vmatpush1.msra.mxu0 0.0
    %3601 = vmatprep.subr.mxu0 0.0
    %3602 = vmatpush1.msra.mxu0 0.0
    %3603 = vmatprep.subr.mxu0 0.0
    %3604 = vmatpush1.msra.mxu0 0.0
    %3605 = vmatprep.subr.mxu0 0.0
    %3606 = vmatpush1.msra.mxu0 0.0
    %3607 = vmatprep.subr.mxu0 0.0
    %3608 = vmatpush1.msra.mxu0 0.0
    %3609 = vmatprep.subr.mxu0 0.0
    %3610 = vmatpush1.msra.mxu0 0.0
    %3611 = vmatprep.subr.mxu0 0.0
    %3612 = vmatpush1.msra.mxu0 0.0
    %3613 = vmatprep.subr.mxu0 0.0
    %3614 = vmatpush1.msra.mxu0 0.0
    %3615 = vmatprep.subr.mxu0 0.0
    %3616 = vmatpush1.msra.mxu0 0.0
    %3617 = vmatprep.subr.mxu0 0.0
    %3618 = vmatpush1.msra.mxu0 0.0
    %3619 = vmatprep.subr.mxu0 0.0
    %3620 = vmatpush1.msra.mxu0 0.0
    %3621 = vmatprep.subr.mxu0 0.0
    %3622 = vmatpush1.msra.mxu0 0.0
    %3623 = vmatprep.subr.mxu0 0.0
    %3624 = vmatpush1.msra.mxu0 0.0
    %3625 = vmatprep.subr.mxu0 0.0
    %3626 = vmatpush1.msra.mxu0 0.0
    %3627 = vmatprep.subr.mxu0 0.0
    %3628 = vmatpush1.msra.mxu0 0.0
    %3629 = vmatprep.subr.mxu0 0.0
    %3630 = vmatpush1.msra.mxu0 0.0
    %3631 = vmatprep.subr.mxu0 0.0
    %3632 = vmatpush1.msra.mxu0 0.0
    %3633 = vmatprep.subr.mxu0 0.0
    %3634 = vmatpush1.msra.mxu0 0.0
    %3635 = vmatprep.subr.mxu0 0.0
    %3636 = vmatpush1.msra.mxu0 0.0
    %3637 = vmatprep.subr.mxu0 0.0
    %3638 = vmatpush1.msra.mxu0 0.0
    %3639 = vmatprep.subr.mxu0 0.0
    %3640 = vmatpush1.msra.mxu0 0.0
    %3641 = vmatprep.subr.mxu0 0.0
    %3642 = vmatpush1.msra.mxu0 0.0
    %3643 = vmatprep.subr.mxu0 0.0
    %3644 = vmatpush1.msra.mxu0 0.0
    %3645 = vmatprep.mubr.f32.mxu0 0.0
    %3646 = vmatmul.mubr.f32.gmra.mrb[0].mxu0 %v3579
    %v3647 = vpop.f32.mrb[0].mxu0
    %v3648 = vadd.f32 0.0, %v3647
    %v3649 = vpop.f32.mrb[0].mxu0
    %3650 = vdwg.mxu0
    %3651 = vrot.lane.b32.xlu0 %v406, 64
    %v3652 = vpop.permute.xlu0 %3651
    %v3655 = vsel %vm2994, %v3319, 0
    %3657 = vmatprep.subr.mxu0 0.0
    %3658 = vmatpush1.msra.mxu0 %v3652
    %3659 = vmatprep.subr.mxu0 0.0
    %3660 = vmatpush1.msra.mxu0 0.0
    %3661 = vmatprep.subr.mxu0 0.0
    %3662 = vmatpush1.msra.mxu0 0.0
    %3663 = vmatprep.subr.mxu0 0.0
    %3664 = vmatpush1.msra.mxu0 0.0
    %3665 = vmatprep.subr.mxu0 0.0
    %3666 = vmatpush1.msra.mxu0 0.0
    %3667 = vmatprep.subr.mxu0 0.0
    %3668 = vmatpush1.msra.mxu0 0.0
    %3669 = vmatprep.subr.mxu0 0.0
    %3670 = vmatpush1.msra.mxu0 0.0
    %3671 = vmatprep.subr.mxu0 0.0
    %3672 = vmatpush1.msra.mxu0 0.0
    %3673 = vmatprep.subr.mxu0 0.0
    %3674 = vmatpush1.msra.mxu0 0.0
    %3675 = vmatprep.subr.mxu0 0.0
    %3676 = vmatpush1.msra.mxu0 0.0
    %3677 = vmatprep.subr.mxu0 0.0
    %3678 = vmatpush1.msra.mxu0 0.0
    %3679 = vmatprep.subr.mxu0 0.0
    %3680 = vmatpush1.msra.mxu0 0.0
    %3681 = vmatprep.subr.mxu0 0.0
    %3682 = vmatpush1.msra.mxu0 0.0
    %3683 = vmatprep.subr.mxu0 0.0
    %3684 = vmatpush1.msra.mxu0 0.0
    %3685 = vmatprep.subr.mxu0 0.0
    %3686 = vmatpush1.msra.mxu0 0.0
    %3687 = vmatprep.subr.mxu0 0.0
    %3688 = vmatpush1.msra.mxu0 0.0
    %3689 = vmatprep.subr.mxu0 0.0
    %3690 = vmatpush1.msra.mxu0 0.0
    %3691 = vmatprep.subr.mxu0 0.0
    %3692 = vmatpush1.msra.mxu0 0.0
    %3693 = vmatprep.subr.mxu0 0.0
    %3694 = vmatpush1.msra.mxu0 0.0
    %3695 = vmatprep.subr.mxu0 0.0
    %3696 = vmatpush1.msra.mxu0 0.0
    %3697 = vmatprep.subr.mxu0 0.0
    %3698 = vmatpush1.msra.mxu0 0.0
    %3699 = vmatprep.subr.mxu0 0.0
    %3700 = vmatpush1.msra.mxu0 0.0
    %3701 = vmatprep.subr.mxu0 0.0
    %3702 = vmatpush1.msra.mxu0 0.0
    %3703 = vmatprep.subr.mxu0 0.0
    %3704 = vmatpush1.msra.mxu0 0.0
    %3705 = vmatprep.subr.mxu0 0.0
    %3706 = vmatpush1.msra.mxu0 0.0
    %3707 = vmatprep.subr.mxu0 0.0
    %3708 = vmatpush1.msra.mxu0 0.0
    %3709 = vmatprep.subr.mxu0 0.0
    %3710 = vmatpush1.msra.mxu0 0.0
    %3711 = vmatprep.subr.mxu0 0.0
    %3712 = vmatpush1.msra.mxu0 0.0
    %3713 = vmatprep.subr.mxu0 0.0
    %3714 = vmatpush1.msra.mxu0 0.0
    %3715 = vmatprep.subr.mxu0 0.0
    %3716 = vmatpush1.msra.mxu0 0.0
    %3717 = vmatprep.subr.mxu0 0.0
    %3718 = vmatpush1.msra.mxu0 0.0
    %3719 = vmatprep.subr.mxu0 0.0
    %3720 = vmatpush1.msra.mxu0 0.0
    %3721 = vmatprep.mubr.f32.mxu0 0.0
    %3722 = vmatmul.mubr.f32.gmra.mrb[0].mxu0 %v3655
    %v3723 = vpop.f32.mrb[0].mxu0
    %v3724 = vadd.f32 0.0, %v3723
    %v3725 = vpop.f32.mrb[0].mxu0
    %3726 = vdwg.mxu0
    %3727 = vrot.lane.b32.xlu0 %v407, 64
    %v3728 = vpop.permute.xlu0 %3727
    %v3731 = vsel %vm2994, %v3320, 0
    %3733 = vmatprep.subr.mxu0 0.0
    %3734 = vmatpush1.msra.mxu0 %v3728
    %3735 = vmatprep.subr.mxu0 0.0
    %3736 = vmatpush1.msra.mxu0 0.0
    %3737 = vmatprep.subr.mxu0 0.0
    %3738 = vmatpush1.msra.mxu0 0.0
    %3739 = vmatprep.subr.mxu0 0.0
    %3740 = vmatpush1.msra.mxu0 0.0
    %3741 = vmatprep.subr.mxu0 0.0
    %3742 = vmatpush1.msra.mxu0 0.0
    %3743 = vmatprep.subr.mxu0 0.0
    %3744 = vmatpush1.msra.mxu0 0.0
    %3745 = vmatprep.subr.mxu0 0.0
    %3746 = vmatpush1.msra.mxu0 0.0
    %3747 = vmatprep.subr.mxu0 0.0
    %3748 = vmatpush1.msra.mxu0 0.0
    %3749 = vmatprep.subr.mxu0 0.0
    %3750 = vmatpush1.msra.mxu0 0.0
    %3751 = vmatprep.subr.mxu0 0.0
    %3752 = vmatpush1.msra.mxu0 0.0
    %3753 = vmatprep.subr.mxu0 0.0
    %3754 = vmatpush1.msra.mxu0 0.0
    %3755 = vmatprep.subr.mxu0 0.0
    %3756 = vmatpush1.msra.mxu0 0.0
    %3757 = vmatprep.subr.mxu0 0.0
    %3758 = vmatpush1.msra.mxu0 0.0
    %3759 = vmatprep.subr.mxu0 0.0
    %3760 = vmatpush1.msra.mxu0 0.0
    %3761 = vmatprep.subr.mxu0 0.0
    %3762 = vmatpush1.msra.mxu0 0.0
    %3763 = vmatprep.subr.mxu0 0.0
    %3764 = vmatpush1.msra.mxu0 0.0
    %3765 = vmatprep.subr.mxu0 0.0
    %3766 = vmatpush1.msra.mxu0 0.0
    %3767 = vmatprep.subr.mxu0 0.0
    %3768 = vmatpush1.msra.mxu0 0.0
    %3769 = vmatprep.subr.mxu0 0.0
    %3770 = vmatpush1.msra.mxu0 0.0
    %3771 = vmatprep.subr.mxu0 0.0
    %3772 = vmatpush1.msra.mxu0 0.0
    %3773 = vmatprep.subr.mxu0 0.0
    %3774 = vmatpush1.msra.mxu0 0.0
    %3775 = vmatprep.subr.mxu0 0.0
    %3776 = vmatpush1.msra.mxu0 0.0
    %3777 = vmatprep.subr.mxu0 0.0
    %3778 = vmatpush1.msra.mxu0 0.0
    %3779 = vmatprep.subr.mxu0 0.0
    %3780 = vmatpush1.msra.mxu0 0.0
    %3781 = vmatprep.subr.mxu0 0.0
    %3782 = vmatpush1.msra.mxu0 0.0
    %3783 = vmatprep.subr.mxu0 0.0
    %3784 = vmatpush1.msra.mxu0 0.0
    %3785 = vmatprep.subr.mxu0 0.0
    %3786 = vmatpush1.msra.mxu0 0.0
    %3787 = vmatprep.subr.mxu0 0.0
    %3788 = vmatpush1.msra.mxu0 0.0
    %3789 = vmatprep.subr.mxu0 0.0
    %3790 = vmatpush1.msra.mxu0 0.0
    %3791 = vmatprep.subr.mxu0 0.0
    %3792 = vmatpush1.msra.mxu0 0.0
    %3793 = vmatprep.subr.mxu0 0.0
    %3794 = vmatpush1.msra.mxu0 0.0
    %3795 = vmatprep.subr.mxu0 0.0
    %3796 = vmatpush1.msra.mxu0 0.0
    %3797 = vmatprep.mubr.f32.mxu0 0.0
    %3798 = vmatmul.mubr.f32.gmra.mrb[0].mxu0 %v3731
    %v3799 = vpop.f32.mrb[0].mxu0
    %v3800 = vadd.f32 0.0, %v3799
    %v3801 = vpop.f32.mrb[0].mxu0
    %3802 = vdwg.mxu0
    %3803 = vrot.lane.b32.xlu0 %v408, 64
    %v3804 = vpop.permute.xlu0 %3803
    %v3807 = vsel %vm2994, %v3321, 0
    %3809 = vmatprep.subr.mxu0 0.0
    %3810 = vmatpush1.msra.mxu0 %v3804
    %3811 = vmatprep.subr.mxu0 0.0
    %3812 = vmatpush1.msra.mxu0 0.0
    %3813 = vmatprep.subr.mxu0 0.0
    %3814 = vmatpush1.msra.mxu0 0.0
    %3815 = vmatprep.subr.mxu0 0.0
    %3816 = vmatpush1.msra.mxu0 0.0
    %3817 = vmatprep.subr.mxu0 0.0
    %3818 = vmatpush1.msra.mxu0 0.0
    %3819 = vmatprep.subr.mxu0 0.0
    %3820 = vmatpush1.msra.mxu0 0.0
    %3821 = vmatprep.subr.mxu0 0.0
    %3822 = vmatpush1.msra.mxu0 0.0
    %3823 = vmatprep.subr.mxu0 0.0
    %3824 = vmatpush1.msra.mxu0 0.0
    %3825 = vmatprep.subr.mxu0 0.0
    %3826 = vmatpush1.msra.mxu0 0.0
    %3827 = vmatprep.subr.mxu0 0.0
    %3828 = vmatpush1.msra.mxu0 0.0
    %3829 = vmatprep.subr.mxu0 0.0
    %3830 = vmatpush1.msra.mxu0 0.0
    %3831 = vmatprep.subr.mxu0 0.0
    %3832 = vmatpush1.msra.mxu0 0.0
    %3833 = vmatprep.subr.mxu0 0.0
    %3834 = vmatpush1.msra.mxu0 0.0
    %3835 = vmatprep.subr.mxu0 0.0
    %3836 = vmatpush1.msra.mxu0 0.0
    %3837 = vmatprep.subr.mxu0 0.0
    %3838 = vmatpush1.msra.mxu0 0.0
    %3839 = vmatprep.subr.mxu0 0.0
    %3840 = vmatpush1.msra.mxu0 0.0
    %3841 = vmatprep.subr.mxu0 0.0
    %3842 = vmatpush1.msra.mxu0 0.0
    %3843 = vmatprep.subr.mxu0 0.0
    %3844 = vmatpush1.msra.mxu0 0.0
    %3845 = vmatprep.subr.mxu0 0.0
    %3846 = vmatpush1.msra.mxu0 0.0
    %3847 = vmatprep.subr.mxu0 0.0
    %3848 = vmatpush1.msra.mxu0 0.0
    %3849 = vmatprep.subr.mxu0 0.0
    %3850 = vmatpush1.msra.mxu0 0.0
    %3851 = vmatprep.subr.mxu0 0.0
    %3852 = vmatpush1.msra.mxu0 0.0
    %3853 = vmatprep.subr.mxu0 0.0
    %3854 = vmatpush1.msra.mxu0 0.0
    %3855 = vmatprep.subr.mxu0 0.0
    %3856 = vmatpush1.msra.mxu0 0.0
    %3857 = vmatprep.subr.mxu0 0.0
    %3858 = vmatpush1.msra.mxu0 0.0
    %3859 = vmatprep.subr.mxu0 0.0
    %3860 = vmatpush1.msra.mxu0 0.0
    %3861 = vmatprep.subr.mxu0 0.0
    %3862 = vmatpush1.msra.mxu0 0.0
    %3863 = vmatprep.subr.mxu0 0.0
    %3864 = vmatpush1.msra.mxu0 0.0
    %3865 = vmatprep.subr.mxu0 0.0
    %3866 = vmatpush1.msra.mxu0 0.0
    %3867 = vmatprep.subr.mxu0 0.0
    %3868 = vmatpush1.msra.mxu0 0.0
    %3869 = vmatprep.subr.mxu0 0.0
    %3870 = vmatpush1.msra.mxu0 0.0
    %3871 = vmatprep.subr.mxu0 0.0
    %3872 = vmatpush1.msra.mxu0 0.0
    %3873 = vmatprep.mubr.f32.mxu0 0.0
    %3874 = vmatmul.mubr.f32.gmra.mrb[0].mxu0 %v3807
    %v3875 = vpop.f32.mrb[0].mxu0
    %v3876 = vadd.f32 0.0, %v3875
    %v3877 = vpop.f32.mrb[0].mxu0
    %3878 = vdwg.mxu0
    %3879 = vrot.lane.b32.xlu0 %v409, 64
    %v3880 = vpop.permute.xlu0 %3879
    %v3883 = vsel %vm2994, %v3322, 0
    %3885 = vmatprep.subr.mxu0 0.0
    %3886 = vmatpush1.msra.mxu0 %v3880
    %3887 = vmatprep.subr.mxu0 0.0
    %3888 = vmatpush1.msra.mxu0 0.0
    %3889 = vmatprep.subr.mxu0 0.0
    %3890 = vmatpush1.msra.mxu0 0.0
    %3891 = vmatprep.subr.mxu0 0.0
    %3892 = vmatpush1.msra.mxu0 0.0
    %3893 = vmatprep.subr.mxu0 0.0
    %3894 = vmatpush1.msra.mxu0 0.0
    %3895 = vmatprep.subr.mxu0 0.0
    %3896 = vmatpush1.msra.mxu0 0.0
    %3897 = vmatprep.subr.mxu0 0.0
    %3898 = vmatpush1.msra.mxu0 0.0
    %3899 = vmatprep.subr.mxu0 0.0
    %3900 = vmatpush1.msra.mxu0 0.0
    %3901 = vmatprep.subr.mxu0 0.0
    %3902 = vmatpush1.msra.mxu0 0.0
    %3903 = vmatprep.subr.mxu0 0.0
    %3904 = vmatpush1.msra.mxu0 0.0
    %3905 = vmatprep.subr.mxu0 0.0
    %3906 = vmatpush1.msra.mxu0 0.0
    %3907 = vmatprep.subr.mxu0 0.0
    %3908 = vmatpush1.msra.mxu0 0.0
    %3909 = vmatprep.subr.mxu0 0.0
    %3910 = vmatpush1.msra.mxu0 0.0
    %3911 = vmatprep.subr.mxu0 0.0
    %3912 = vmatpush1.msra.mxu0 0.0
    %3913 = vmatprep.subr.mxu0 0.0
    %3914 = vmatpush1.msra.mxu0 0.0
    %3915 = vmatprep.subr.mxu0 0.0
    %3916 = vmatpush1.msra.mxu0 0.0
    %3917 = vmatprep.subr.mxu0 0.0
    %3918 = vmatpush1.msra.mxu0 0.0
    %3919 = vmatprep.subr.mxu0 0.0
    %3920 = vmatpush1.msra.mxu0 0.0
    %3921 = vmatprep.subr.mxu0 0.0
    %3922 = vmatpush1.msra.mxu0 0.0
    %3923 = vmatprep.subr.mxu0 0.0
    %3924 = vmatpush1.msra.mxu0 0.0
    %3925 = vmatprep.subr.mxu0 0.0
    %3926 = vmatpush1.msra.mxu0 0.0
    %3927 = vmatprep.subr.mxu0 0.0
    %3928 = vmatpush1.msra.mxu0 0.0
    %3929 = vmatprep.subr.mxu0 0.0
    %3930 = vmatpush1.msra.mxu0 0.0
    %3931 = vmatprep.subr.mxu0 0.0
    %3932 = vmatpush1.msra.mxu0 0.0
    %3933 = vmatprep.subr.mxu0 0.0
    %3934 = vmatpush1.msra.mxu0 0.0
    %3935 = vmatprep.subr.mxu0 0.0
    %3936 = vmatpush1.msra.mxu0 0.0
    %3937 = vmatprep.subr.mxu0 0.0
    %3938 = vmatpush1.msra.mxu0 0.0
    %3939 = vmatprep.subr.mxu0 0.0
    %3940 = vmatpush1.msra.mxu0 0.0
    %3941 = vmatprep.subr.mxu0 0.0
    %3942 = vmatpush1.msra.mxu0 0.0
    %3943 = vmatprep.subr.mxu0 0.0
    %3944 = vmatpush1.msra.mxu0 0.0
    %3945 = vmatprep.subr.mxu0 0.0
    %3946 = vmatpush1.msra.mxu0 0.0
    %3947 = vmatprep.subr.mxu0 0.0
    %3948 = vmatpush1.msra.mxu0 0.0
    %3949 = vmatprep.mubr.f32.mxu0 0.0
    %3950 = vmatmul.mubr.f32.gmra.mrb[0].mxu0 %v3883
    %v3951 = vpop.f32.mrb[0].mxu0
    %v3952 = vadd.f32 0.0, %v3951
    %v3953 = vpop.f32.mrb[0].mxu0
    %3954 = vdwg.mxu0
    %3955 = vrot.lane.b32.xlu0 %v410, 64
    %v3956 = vpop.permute.xlu0 %3955
    %v3959 = vsel %vm2994, %v3323, 0
    %3961 = vmatprep.subr.mxu0 0.0
    %3962 = vmatpush1.msra.mxu0 %v3956
    %3963 = vmatprep.subr.mxu0 0.0
    %3964 = vmatpush1.msra.mxu0 0.0
    %3965 = vmatprep.subr.mxu0 0.0
    %3966 = vmatpush1.msra.mxu0 0.0
    %3967 = vmatprep.subr.mxu0 0.0
    %3968 = vmatpush1.msra.mxu0 0.0
    %3969 = vmatprep.subr.mxu0 0.0
    %3970 = vmatpush1.msra.mxu0 0.0
    %3971 = vmatprep.subr.mxu0 0.0
    %3972 = vmatpush1.msra.mxu0 0.0
    %3973 = vmatprep.subr.mxu0 0.0
    %3974 = vmatpush1.msra.mxu0 0.0
    %3975 = vmatprep.subr.mxu0 0.0
    %3976 = vmatpush1.msra.mxu0 0.0
    %3977 = vmatprep.subr.mxu0 0.0
    %3978 = vmatpush1.msra.mxu0 0.0
    %3979 = vmatprep.subr.mxu0 0.0
    %3980 = vmatpush1.msra.mxu0 0.0
    %3981 = vmatprep.subr.mxu0 0.0
    %3982 = vmatpush1.msra.mxu0 0.0
    %3983 = vmatprep.subr.mxu0 0.0
    %3984 = vmatpush1.msra.mxu0 0.0
    %3985 = vmatprep.subr.mxu0 0.0
    %3986 = vmatpush1.msra.mxu0 0.0
    %3987 = vmatprep.subr.mxu0 0.0
    %3988 = vmatpush1.msra.mxu0 0.0
    %3989 = vmatprep.subr.mxu0 0.0
    %3990 = vmatpush1.msra.mxu0 0.0
    %3991 = vmatprep.subr.mxu0 0.0
    %3992 = vmatpush1.msra.mxu0 0.0
    %3993 = vmatprep.subr.mxu0 0.0
    %3994 = vmatpush1.msra.mxu0 0.0
    %3995 = vmatprep.subr.mxu0 0.0
    %3996 = vmatpush1.msra.mxu0 0.0
    %3997 = vmatprep.subr.mxu0 0.0
    %3998 = vmatpush1.msra.mxu0 0.0
    %3999 = vmatprep.subr.mxu0 0.0
    %4000 = vmatpush1.msra.mxu0 0.0
    %4001 = vmatprep.subr.mxu0 0.0
    %4002 = vmatpush1.msra.mxu0 0.0
    %4003 = vmatprep.subr.mxu0 0.0
    %4004 = vmatpush1.msra.mxu0 0.0
    %4005 = vmatprep.subr.mxu0 0.0
    %4006 = vmatpush1.msra.mxu0 0.0
    %4007 = vmatprep.subr.mxu0 0.0
    %4008 = vmatpush1.msra.mxu0 0.0
    %4009 = vmatprep.subr.mxu0 0.0
    %4010 = vmatpush1.msra.mxu0 0.0
    %4011 = vmatprep.subr.mxu0 0.0
    %4012 = vmatpush1.msra.mxu0 0.0
    %4013 = vmatprep.subr.mxu0 0.0
    %4014 = vmatpush1.msra.mxu0 0.0
    %4015 = vmatprep.subr.mxu0 0.0
    %4016 = vmatpush1.msra.mxu0 0.0
    %4017 = vmatprep.subr.mxu0 0.0
    %4018 = vmatpush1.msra.mxu0 0.0
    %4019 = vmatprep.subr.mxu0 0.0
    %4020 = vmatpush1.msra.mxu0 0.0
    %4021 = vmatprep.subr.mxu0 0.0
    %4022 = vmatpush1.msra.mxu0 0.0
    %4023 = vmatprep.subr.mxu0 0.0
    %4024 = vmatpush1.msra.mxu0 0.0
    %4025 = vmatprep.mubr.f32.mxu0 0.0
    %4026 = vmatmul.mubr.f32.gmra.mrb[0].mxu0 %v3959
    %v4027 = vpop.f32.mrb[0].mxu0
    %v4028 = vadd.f32 0.0, %v4027
    %v4029 = vpop.f32.mrb[0].mxu0
    %4030 = vdwg.mxu0
    %4031 = vrot.lane.b32.xlu0 %v411, 64
    %v4032 = vpop.permute.xlu0 %4031
    %v4035 = vsel %vm2994, %v3324, 0
    %4037 = vmatprep.subr.mxu0 0.0
    %4038 = vmatpush1.msra.mxu0 %v4032
    %4039 = vmatprep.subr.mxu0 0.0
    %4040 = vmatpush1.msra.mxu0 0.0
    %4041 = vmatprep.subr.mxu0 0.0
    %4042 = vmatpush1.msra.mxu0 0.0
    %4043 = vmatprep.subr.mxu0 0.0
    %4044 = vmatpush1.msra.mxu0 0.0
    %4045 = vmatprep.subr.mxu0 0.0
    %4046 = vmatpush1.msra.mxu0 0.0
    %4047 = vmatprep.subr.mxu0 0.0
    %4048 = vmatpush1.msra.mxu0 0.0
    %4049 = vmatprep.subr.mxu0 0.0
    %4050 = vmatpush1.msra.mxu0 0.0
    %4051 = vmatprep.subr.mxu0 0.0
    %4052 = vmatpush1.msra.mxu0 0.0
    %4053 = vmatprep.subr.mxu0 0.0
    %4054 = vmatpush1.msra.mxu0 0.0
    %4055 = vmatprep.subr.mxu0 0.0
    %4056 = vmatpush1.msra.mxu0 0.0
    %4057 = vmatprep.subr.mxu0 0.0
    %4058 = vmatpush1.msra.mxu0 0.0
    %4059 = vmatprep.subr.mxu0 0.0
    %4060 = vmatpush1.msra.mxu0 0.0
    %4061 = vmatprep.subr.mxu0 0.0
    %4062 = vmatpush1.msra.mxu0 0.0
    %4063 = vmatprep.subr.mxu0 0.0
    %4064 = vmatpush1.msra.mxu0 0.0
    %4065 = vmatprep.subr.mxu0 0.0
    %4066 = vmatpush1.msra.mxu0 0.0
    %4067 = vmatprep.subr.mxu0 0.0
    %4068 = vmatpush1.msra.mxu0 0.0
    %4069 = vmatprep.subr.mxu0 0.0
    %4070 = vmatpush1.msra.mxu0 0.0
    %4071 = vmatprep.subr.mxu0 0.0
    %4072 = vmatpush1.msra.mxu0 0.0
    %4073 = vmatprep.subr.mxu0 0.0
    %4074 = vmatpush1.msra.mxu0 0.0
    %4075 = vmatprep.subr.mxu0 0.0
    %4076 = vmatpush1.msra.mxu0 0.0
    %4077 = vmatprep.subr.mxu0 0.0
    %4078 = vmatpush1.msra.mxu0 0.0
    %4079 = vmatprep.subr.mxu0 0.0
    %4080 = vmatpush1.msra.mxu0 0.0
    %4081 = vmatprep.subr.mxu0 0.0
    %4082 = vmatpush1.msra.mxu0 0.0
    %4083 = vmatprep.subr.mxu0 0.0
    %4084 = vmatpush1.msra.mxu0 0.0
    %4085 = vmatprep.subr.mxu0 0.0
    %4086 = vmatpush1.msra.mxu0 0.0
    %4087 = vmatprep.subr.mxu0 0.0
    %4088 = vmatpush1.msra.mxu0 0.0
    %4089 = vmatprep.subr.mxu0 0.0
    %4090 = vmatpush1.msra.mxu0 0.0
    %4091 = vmatprep.subr.mxu0 0.0
    %4092 = vmatpush1.msra.mxu0 0.0
    %4093 = vmatprep.subr.mxu0 0.0
    %4094 = vmatpush1.msra.mxu0 0.0
    %4095 = vmatprep.subr.mxu0 0.0
    %4096 = vmatpush1.msra.mxu0 0.0
    %4097 = vmatprep.subr.mxu0 0.0
    %4098 = vmatpush1.msra.mxu0 0.0
    %4099 = vmatprep.subr.mxu0 0.0
    %4100 = vmatpush1.msra.mxu0 0.0
    %4101 = vmatprep.mubr.f32.mxu0 0.0
    %4102 = vmatmul.mubr.f32.gmra.mrb[0].mxu0 %v4035
    %v4103 = vpop.f32.mrb[0].mxu0
    %v4104 = vadd.f32 0.0, %v4103
    %v4105 = vpop.f32.mrb[0].mxu0
    %4106 = vdwg.mxu0
    %4107 = vrot.lane.b32.xlu0 %v412, 64
    %v4108 = vpop.permute.xlu0 %4107
    %v4111 = vsel %vm2994, %v3325, 0
    %4113 = vmatprep.subr.mxu0 0.0
    %4114 = vmatpush1.msra.mxu0 %v4108
    %4115 = vmatprep.subr.mxu0 0.0
    %4116 = vmatpush1.msra.mxu0 0.0
    %4117 = vmatprep.subr.mxu0 0.0
    %4118 = vmatpush1.msra.mxu0 0.0
    %4119 = vmatprep.subr.mxu0 0.0
    %4120 = vmatpush1.msra.mxu0 0.0
    %4121 = vmatprep.subr.mxu0 0.0
    %4122 = vmatpush1.msra.mxu0 0.0
    %4123 = vmatprep.subr.mxu0 0.0
    %4124 = vmatpush1.msra.mxu0 0.0
    %4125 = vmatprep.subr.mxu0 0.0
    %4126 = vmatpush1.msra.mxu0 0.0
    %4127 = vmatprep.subr.mxu0 0.0
    %4128 = vmatpush1.msra.mxu0 0.0
    %4129 = vmatprep.subr.mxu0 0.0
    %4130 = vmatpush1.msra.mxu0 0.0
    %4131 = vmatprep.subr.mxu0 0.0
    %4132 = vmatpush1.msra.mxu0 0.0
    %4133 = vmatprep.subr.mxu0 0.0
    %4134 = vmatpush1.msra.mxu0 0.0
    %4135 = vmatprep.subr.mxu0 0.0
    %4136 = vmatpush1.msra.mxu0 0.0
    %4137 = vmatprep.subr.mxu0 0.0
    %4138 = vmatpush1.msra.mxu0 0.0
    %4139 = vmatprep.subr.mxu0 0.0
    %4140 = vmatpush1.msra.mxu0 0.0
    %4141 = vmatprep.subr.mxu0 0.0
    %4142 = vmatpush1.msra.mxu0 0.0
    %4143 = vmatprep.subr.mxu0 0.0
    %4144 = vmatpush1.msra.mxu0 0.0
    %4145 = vmatprep.subr.mxu0 0.0
    %4146 = vmatpush1.msra.mxu0 0.0
    %4147 = vmatprep.subr.mxu0 0.0
    %4148 = vmatpush1.msra.mxu0 0.0
    %4149 = vmatprep.subr.mxu0 0.0
    %4150 = vmatpush1.msra.mxu0 0.0
    %4151 = vmatprep.subr.mxu0 0.0
    %4152 = vmatpush1.msra.mxu0 0.0
    %4153 = vmatprep.subr.mxu0 0.0
    %4154 = vmatpush1.msra.mxu0 0.0
    %4155 = vmatprep.subr.mxu0 0.0
    %4156 = vmatpush1.msra.mxu0 0.0
    %4157 = vmatprep.subr.mxu0 0.0
    %4158 = vmatpush1.msra.mxu0 0.0
    %4159 = vmatprep.subr.mxu0 0.0
    %4160 = vmatpush1.msra.mxu0 0.0
    %4161 = vmatprep.subr.mxu0 0.0
    %4162 = vmatpush1.msra.mxu0 0.0
    %4163 = vmatprep.subr.mxu0 0.0
    %4164 = vmatpush1.msra.mxu0 0.0
    %4165 = vmatprep.subr.mxu0 0.0
    %4166 = vmatpush1.msra.mxu0 0.0
    %4167 = vmatprep.subr.mxu0 0.0
    %4168 = vmatpush1.msra.mxu0 0.0
    %4169 = vmatprep.subr.mxu0 0.0
    %4170 = vmatpush1.msra.mxu0 0.0
    %4171 = vmatprep.subr.mxu0 0.0
    %4172 = vmatpush1.msra.mxu0 0.0
    %4173 = vmatprep.subr.mxu0 0.0
    %4174 = vmatpush1.msra.mxu0 0.0
    %4175 = vmatprep.subr.mxu0 0.0
    %4176 = vmatpush1.msra.mxu0 0.0
    %4177 = vmatprep.mubr.f32.mxu0 0.0
    %4178 = vmatmul.mubr.f32.gmra.mrb[0].mxu0 %v4111
    %v4179 = vpop.f32.mrb[0].mxu0
    %v4180 = vadd.f32 0.0, %v4179
    %v4181 = vpop.f32.mrb[0].mxu0
    %4182 = vdwg.mxu0
    %4183 = vrot.lane.b32.xlu0 %v413, 64
    %v4184 = vpop.permute.xlu0 %4183
    %v4187 = vsel %vm2994, %v3326, 0
    %4189 = vmatprep.subr.mxu0 0.0
    %4190 = vmatpush1.msra.mxu0 %v4184
    %4191 = vmatprep.subr.mxu0 0.0
    %4192 = vmatpush1.msra.mxu0 0.0
    %4193 = vmatprep.subr.mxu0 0.0
    %4194 = vmatpush1.msra.mxu0 0.0
    %4195 = vmatprep.subr.mxu0 0.0
    %4196 = vmatpush1.msra.mxu0 0.0
    %4197 = vmatprep.subr.mxu0 0.0
    %4198 = vmatpush1.msra.mxu0 0.0
    %4199 = vmatprep.subr.mxu0 0.0
    %4200 = vmatpush1.msra.mxu0 0.0
    %4201 = vmatprep.subr.mxu0 0.0
    %4202 = vmatpush1.msra.mxu0 0.0
    %4203 = vmatprep.subr.mxu0 0.0
    %4204 = vmatpush1.msra.mxu0 0.0
    %4205 = vmatprep.subr.mxu0 0.0
    %4206 = vmatpush1.msra.mxu0 0.0
    %4207 = vmatprep.subr.mxu0 0.0
    %4208 = vmatpush1.msra.mxu0 0.0
    %4209 = vmatprep.subr.mxu0 0.0
    %4210 = vmatpush1.msra.mxu0 0.0
    %4211 = vmatprep.subr.mxu0 0.0
    %4212 = vmatpush1.msra.mxu0 0.0
    %4213 = vmatprep.subr.mxu0 0.0
    %4214 = vmatpush1.msra.mxu0 0.0
    %4215 = vmatprep.subr.mxu0 0.0
    %4216 = vmatpush1.msra.mxu0 0.0
    %4217 = vmatprep.subr.mxu0 0.0
    %4218 = vmatpush1.msra.mxu0 0.0
    %4219 = vmatprep.subr.mxu0 0.0
    %4220 = vmatpush1.msra.mxu0 0.0
    %4221 = vmatprep.subr.mxu0 0.0
    %4222 = vmatpush1.msra.mxu0 0.0
    %4223 = vmatprep.subr.mxu0 0.0
    %4224 = vmatpush1.msra.mxu0 0.0
    %4225 = vmatprep.subr.mxu0 0.0
    %4226 = vmatpush1.msra.mxu0 0.0
    %4227 = vmatprep.subr.mxu0 0.0
    %4228 = vmatpush1.msra.mxu0 0.0
    %4229 = vmatprep.subr.mxu0 0.0
    %4230 = vmatpush1.msra.mxu0 0.0
    %4231 = vmatprep.subr.mxu0 0.0
    %4232 = vmatpush1.msra.mxu0 0.0
    %4233 = vmatprep.subr.mxu0 0.0
    %4234 = vmatpush1.msra.mxu0 0.0
    %4235 = vmatprep.subr.mxu0 0.0
    %4236 = vmatpush1.msra.mxu0 0.0
    %4237 = vmatprep.subr.mxu0 0.0
    %4238 = vmatpush1.msra.mxu0 0.0
    %4239 = vmatprep.subr.mxu0 0.0
    %4240 = vmatpush1.msra.mxu0 0.0
    %4241 = vmatprep.subr.mxu0 0.0
    %4242 = vmatpush1.msra.mxu0 0.0
    %4243 = vmatprep.subr.mxu0 0.0
    %4244 = vmatpush1.msra.mxu0 0.0
    %4245 = vmatprep.subr.mxu0 0.0
    %4246 = vmatpush1.msra.mxu0 0.0
    %4247 = vmatprep.subr.mxu0 0.0
    %4248 = vmatpush1.msra.mxu0 0.0
    %4249 = vmatprep.subr.mxu0 0.0
    %4250 = vmatpush1.msra.mxu0 0.0
    %4251 = vmatprep.subr.mxu0 0.0
    %4252 = vmatpush1.msra.mxu0 0.0
    %4253 = vmatprep.mubr.f32.mxu0 0.0
    %4254 = vmatmul.mubr.f32.gmra.mrb[0].mxu0 %v4187
    %v4255 = vpop.f32.mrb[0].mxu0
    %v4256 = vadd.f32 0.0, %v4255
    %v4257 = vpop.f32.mrb[0].mxu0
    %4258 = vdwg.mxu0
    %4259 = vrot.lane.b32.xlu0 %v414, 64
    %v4260 = vpop.permute.xlu0 %4259
    %v4263 = vsel %vm2994, %v3327, 0
    %4265 = vmatprep.subr.mxu0 0.0
    %4266 = vmatpush1.msra.mxu0 %v4260
    %4267 = vmatprep.subr.mxu0 0.0
    %4268 = vmatpush1.msra.mxu0 0.0
    %4269 = vmatprep.subr.mxu0 0.0
    %4270 = vmatpush1.msra.mxu0 0.0
    %4271 = vmatprep.subr.mxu0 0.0
    %4272 = vmatpush1.msra.mxu0 0.0
    %4273 = vmatprep.subr.mxu0 0.0
    %4274 = vmatpush1.msra.mxu0 0.0
    %4275 = vmatprep.subr.mxu0 0.0
    %4276 = vmatpush1.msra.mxu0 0.0
    %4277 = vmatprep.subr.mxu0 0.0
    %4278 = vmatpush1.msra.mxu0 0.0
    %4279 = vmatprep.subr.mxu0 0.0
    %4280 = vmatpush1.msra.mxu0 0.0
    %4281 = vmatprep.subr.mxu0 0.0
    %4282 = vmatpush1.msra.mxu0 0.0
    %4283 = vmatprep.subr.mxu0 0.0
    %4284 = vmatpush1.msra.mxu0 0.0
    %4285 = vmatprep.subr.mxu0 0.0
    %4286 = vmatpush1.msra.mxu0 0.0
    %4287 = vmatprep.subr.mxu0 0.0
    %4288 = vmatpush1.msra.mxu0 0.0
    %4289 = vmatprep.subr.mxu0 0.0
    %4290 = vmatpush1.msra.mxu0 0.0
    %4291 = vmatprep.subr.mxu0 0.0
    %4292 = vmatpush1.msra.mxu0 0.0
    %4293 = vmatprep.subr.mxu0 0.0
    %4294 = vmatpush1.msra.mxu0 0.0
    %4295 = vmatprep.subr.mxu0 0.0
    %4296 = vmatpush1.msra.mxu0 0.0
    %4297 = vmatprep.subr.mxu0 0.0
    %4298 = vmatpush1.msra.mxu0 0.0
    %4299 = vmatprep.subr.mxu0 0.0
    %4300 = vmatpush1.msra.mxu0 0.0
    %4301 = vmatprep.subr.mxu0 0.0
    %4302 = vmatpush1.msra.mxu0 0.0
    %4303 = vmatprep.subr.mxu0 0.0
    %4304 = vmatpush1.msra.mxu0 0.0
    %4305 = vmatprep.subr.mxu0 0.0
    %4306 = vmatpush1.msra.mxu0 0.0
    %4307 = vmatprep.subr.mxu0 0.0
    %4308 = vmatpush1.msra.mxu0 0.0
    %4309 = vmatprep.subr.mxu0 0.0
    %4310 = vmatpush1.msra.mxu0 0.0
    %4311 = vmatprep.subr.mxu0 0.0
    %4312 = vmatpush1.msra.mxu0 0.0
    %4313 = vmatprep.subr.mxu0 0.0
    %4314 = vmatpush1.msra.mxu0 0.0
    %4315 = vmatprep.subr.mxu0 0.0
    %4316 = vmatpush1.msra.mxu0 0.0
    %4317 = vmatprep.subr.mxu0 0.0
    %4318 = vmatpush1.msra.mxu0 0.0
    %4319 = vmatprep.subr.mxu0 0.0
    %4320 = vmatpush1.msra.mxu0 0.0
    %4321 = vmatprep.subr.mxu0 0.0
    %4322 = vmatpush1.msra.mxu0 0.0
    %4323 = vmatprep.subr.mxu0 0.0
    %4324 = vmatpush1.msra.mxu0 0.0
    %4325 = vmatprep.subr.mxu0 0.0
    %4326 = vmatpush1.msra.mxu0 0.0
    %4327 = vmatprep.subr.mxu0 0.0
    %4328 = vmatpush1.msra.mxu0 0.0
    %4329 = vmatprep.mubr.f32.mxu0 0.0
    %4330 = vmatmul.mubr.f32.gmra.mrb[0].mxu0 %v4263
    %v4331 = vpop.f32.mrb[0].mxu0
    %v4332 = vadd.f32 0.0, %v4331
    %v4333 = vpop.f32.mrb[0].mxu0
    %4334 = vdwg.mxu0
    %4335 = vrot.lane.b32.xlu0 %v415, 64
    %v4336 = vpop.permute.xlu0 %4335
    %v4339 = vsel %vm2994, %v3328, 0
    %4341 = vmatprep.subr.mxu0 0.0
    %4342 = vmatpush1.msra.mxu0 %v4336
    %4343 = vmatprep.subr.mxu0 0.0
    %4344 = vmatpush1.msra.mxu0 0.0
    %4345 = vmatprep.subr.mxu0 0.0
    %4346 = vmatpush1.msra.mxu0 0.0
    %4347 = vmatprep.subr.mxu0 0.0
    %4348 = vmatpush1.msra.mxu0 0.0
    %4349 = vmatprep.subr.mxu0 0.0
    %4350 = vmatpush1.msra.mxu0 0.0
    %4351 = vmatprep.subr.mxu0 0.0
    %4352 = vmatpush1.msra.mxu0 0.0
    %4353 = vmatprep.subr.mxu0 0.0
    %4354 = vmatpush1.msra.mxu0 0.0
    %4355 = vmatprep.subr.mxu0 0.0
    %4356 = vmatpush1.msra.mxu0 0.0
    %4357 = vmatprep.subr.mxu0 0.0
    %4358 = vmatpush1.msra.mxu0 0.0
    %4359 = vmatprep.subr.mxu0 0.0
    %4360 = vmatpush1.msra.mxu0 0.0
    %4361 = vmatprep.subr.mxu0 0.0
    %4362 = vmatpush1.msra.mxu0 0.0
    %4363 = vmatprep.subr.mxu0 0.0
    %4364 = vmatpush1.msra.mxu0 0.0
    %4365 = vmatprep.subr.mxu0 0.0
    %4366 = vmatpush1.msra.mxu0 0.0
    %4367 = vmatprep.subr.mxu0 0.0
    %4368 = vmatpush1.msra.mxu0 0.0
    %4369 = vmatprep.subr.mxu0 0.0
    %4370 = vmatpush1.msra.mxu0 0.0
    %4371 = vmatprep.subr.mxu0 0.0
    %4372 = vmatpush1.msra.mxu0 0.0
    %4373 = vmatprep.subr.mxu0 0.0
    %4374 = vmatpush1.msra.mxu0 0.0
    %4375 = vmatprep.subr.mxu0 0.0
    %4376 = vmatpush1.msra.mxu0 0.0
    %4377 = vmatprep.subr.mxu0 0.0
    %4378 = vmatpush1.msra.mxu0 0.0
    %4379 = vmatprep.subr.mxu0 0.0
    %4380 = vmatpush1.msra.mxu0 0.0
    %4381 = vmatprep.subr.mxu0 0.0
    %4382 = vmatpush1.msra.mxu0 0.0
    %4383 = vmatprep.subr.mxu0 0.0
    %4384 = vmatpush1.msra.mxu0 0.0
    %4385 = vmatprep.subr.mxu0 0.0
    %4386 = vmatpush1.msra.mxu0 0.0
    %4387 = vmatprep.subr.mxu0 0.0
    %4388 = vmatpush1.msra.mxu0 0.0
    %4389 = vmatprep.subr.mxu0 0.0
    %4390 = vmatpush1.msra.mxu0 0.0
    %4391 = vmatprep.subr.mxu0 0.0
    %4392 = vmatpush1.msra.mxu0 0.0
    %4393 = vmatprep.subr.mxu0 0.0
    %4394 = vmatpush1.msra.mxu0 0.0
    %4395 = vmatprep.subr.mxu0 0.0
    %4396 = vmatpush1.msra.mxu0 0.0
    %4397 = vmatprep.subr.mxu0 0.0
    %4398 = vmatpush1.msra.mxu0 0.0
    %4399 = vmatprep.subr.mxu0 0.0
    %4400 = vmatpush1.msra.mxu0 0.0
    %4401 = vmatprep.subr.mxu0 0.0
    %4402 = vmatpush1.msra.mxu0 0.0
    %4403 = vmatprep.subr.mxu0 0.0
    %4404 = vmatpush1.msra.mxu0 0.0
    %4405 = vmatprep.mubr.f32.mxu0 0.0
    %4406 = vmatmul.mubr.f32.gmra.mrb[0].mxu0 %v4339
    %v4407 = vpop.f32.mrb[0].mxu0
    %v4408 = vadd.f32 0.0, %v4407
    %v4409 = vpop.f32.mrb[0].mxu0
    %4410 = vdwg.mxu0
    %4411 = vrot.lane.b32.xlu0 %v416, 64
    %v4412 = vpop.permute.xlu0 %4411
    %v4415 = vsel %vm2994, %v3329, 0
    %4417 = vmatprep.subr.mxu0 0.0
    %4418 = vmatpush1.msra.mxu0 %v4412
    %4419 = vmatprep.subr.mxu0 0.0
    %4420 = vmatpush1.msra.mxu0 0.0
    %4421 = vmatprep.subr.mxu0 0.0
    %4422 = vmatpush1.msra.mxu0 0.0
    %4423 = vmatprep.subr.mxu0 0.0
    %4424 = vmatpush1.msra.mxu0 0.0
    %4425 = vmatprep.subr.mxu0 0.0
    %4426 = vmatpush1.msra.mxu0 0.0
    %4427 = vmatprep.subr.mxu0 0.0
    %4428 = vmatpush1.msra.mxu0 0.0
    %4429 = vmatprep.subr.mxu0 0.0
    %4430 = vmatpush1.msra.mxu0 0.0
    %4431 = vmatprep.subr.mxu0 0.0
    %4432 = vmatpush1.msra.mxu0 0.0
    %4433 = vmatprep.subr.mxu0 0.0
    %4434 = vmatpush1.msra.mxu0 0.0
    %4435 = vmatprep.subr.mxu0 0.0
    %4436 = vmatpush1.msra.mxu0 0.0
    %4437 = vmatprep.subr.mxu0 0.0
    %4438 = vmatpush1.msra.mxu0 0.0
    %4439 = vmatprep.subr.mxu0 0.0
    %4440 = vmatpush1.msra.mxu0 0.0
    %4441 = vmatprep.subr.mxu0 0.0
    %4442 = vmatpush1.msra.mxu0 0.0
    %4443 = vmatprep.subr.mxu0 0.0
    %4444 = vmatpush1.msra.mxu0 0.0
    %4445 = vmatprep.subr.mxu0 0.0
    %4446 = vmatpush1.msra.mxu0 0.0
    %4447 = vmatprep.subr.mxu0 0.0
    %4448 = vmatpush1.msra.mxu0 0.0
    %4449 = vmatprep.subr.mxu0 0.0
    %4450 = vmatpush1.msra.mxu0 0.0
    %4451 = vmatprep.subr.mxu0 0.0
    %4452 = vmatpush1.msra.mxu0 0.0
    %4453 = vmatprep.subr.mxu0 0.0
    %4454 = vmatpush1.msra.mxu0 0.0
    %4455 = vmatprep.subr.mxu0 0.0
    %4456 = vmatpush1.msra.mxu0 0.0
    %4457 = vmatprep.subr.mxu0 0.0
    %4458 = vmatpush1.msra.mxu0 0.0
    %4459 = vmatprep.subr.mxu0 0.0
    %4460 = vmatpush1.msra.mxu0 0.0
    %4461 = vmatprep.subr.mxu0 0.0
    %4462 = vmatpush1.msra.mxu0 0.0
    %4463 = vmatprep.subr.mxu0 0.0
    %4464 = vmatpush1.msra.mxu0 0.0
    %4465 = vmatprep.subr.mxu0 0.0
    %4466 = vmatpush1.msra.mxu0 0.0
    %4467 = vmatprep.subr.mxu0 0.0
    %4468 = vmatpush1.msra.mxu0 0.0
    %4469 = vmatprep.subr.mxu0 0.0
    %4470 = vmatpush1.msra.mxu0 0.0
    %4471 = vmatprep.subr.mxu0 0.0
    %4472 = vmatpush1.msra.mxu0 0.0
    %4473 = vmatprep.subr.mxu0 0.0
    %4474 = vmatpush1.msra.mxu0 0.0
    %4475 = vmatprep.subr.mxu0 0.0
    %4476 = vmatpush1.msra.mxu0 0.0
    %4477 = vmatprep.subr.mxu0 0.0
    %4478 = vmatpush1.msra.mxu0 0.0
    %4479 = vmatprep.subr.mxu0 0.0
    %4480 = vmatpush1.msra.mxu0 0.0
    %4481 = vmatprep.mubr.f32.mxu0 0.0
    %4482 = vmatmul.mubr.f32.gmra.mrb[0].mxu0 %v4415
    %v4483 = vpop.f32.mrb[0].mxu0
    %v4484 = vadd.f32 0.0, %v4483
    %v4485 = vpop.f32.mrb[0].mxu0
    %4486 = vdwg.mxu0
    %4487 = vrot.lane.b32.xlu0 %v417, 64
    %v4488 = vpop.permute.xlu0 %4487
    %v4491 = vsel %vm2994, %v3330, 0
    %4493 = vmatprep.subr.mxu0 0.0
    %4494 = vmatpush1.msra.mxu0 %v4488
    %4495 = vmatprep.subr.mxu0 0.0
    %4496 = vmatpush1.msra.mxu0 0.0
    %4497 = vmatprep.subr.mxu0 0.0
    %4498 = vmatpush1.msra.mxu0 0.0
    %4499 = vmatprep.subr.mxu0 0.0
    %4500 = vmatpush1.msra.mxu0 0.0
    %4501 = vmatprep.subr.mxu0 0.0
    %4502 = vmatpush1.msra.mxu0 0.0
    %4503 = vmatprep.subr.mxu0 0.0
    %4504 = vmatpush1.msra.mxu0 0.0
    %4505 = vmatprep.subr.mxu0 0.0
    %4506 = vmatpush1.msra.mxu0 0.0
    %4507 = vmatprep.subr.mxu0 0.0
    %4508 = vmatpush1.msra.mxu0 0.0
    %4509 = vmatprep.subr.mxu0 0.0
    %4510 = vmatpush1.msra.mxu0 0.0
    %4511 = vmatprep.subr.mxu0 0.0
    %4512 = vmatpush1.msra.mxu0 0.0
    %4513 = vmatprep.subr.mxu0 0.0
    %4514 = vmatpush1.msra.mxu0 0.0
    %4515 = vmatprep.subr.mxu0 0.0
    %4516 = vmatpush1.msra.mxu0 0.0
    %4517 = vmatprep.subr.mxu0 0.0
    %4518 = vmatpush1.msra.mxu0 0.0
    %4519 = vmatprep.subr.mxu0 0.0
    %4520 = vmatpush1.msra.mxu0 0.0
    %4521 = vmatprep.subr.mxu0 0.0
    %4522 = vmatpush1.msra.mxu0 0.0
    %4523 = vmatprep.subr.mxu0 0.0
    %4524 = vmatpush1.msra.mxu0 0.0
    %4525 = vmatprep.subr.mxu0 0.0
    %4526 = vmatpush1.msra.mxu0 0.0
    %4527 = vmatprep.subr.mxu0 0.0
    %4528 = vmatpush1.msra.mxu0 0.0
    %4529 = vmatprep.subr.mxu0 0.0
    %4530 = vmatpush1.msra.mxu0 0.0
    %4531 = vmatprep.subr.mxu0 0.0
    %4532 = vmatpush1.msra.mxu0 0.0
    %4533 = vmatprep.subr.mxu0 0.0
    %4534 = vmatpush1.msra.mxu0 0.0
    %4535 = vmatprep.subr.mxu0 0.0
    %4536 = vmatpush1.msra.mxu0 0.0
    %4537 = vmatprep.subr.mxu0 0.0
    %4538 = vmatpush1.msra.mxu0 0.0
    %4539 = vmatprep.subr.mxu0 0.0
    %4540 = vmatpush1.msra.mxu0 0.0
    %4541 = vmatprep.subr.mxu0 0.0
    %4542 = vmatpush1.msra.mxu0 0.0
    %4543 = vmatprep.subr.mxu0 0.0
    %4544 = vmatpush1.msra.mxu0 0.0
    %4545 = vmatprep.subr.mxu0 0.0
    %4546 = vmatpush1.msra.mxu0 0.0
    %4547 = vmatprep.subr.mxu0 0.0
    %4548 = vmatpush1.msra.mxu0 0.0
    %4549 = vmatprep.subr.mxu0 0.0
    %4550 = vmatpush1.msra.mxu0 0.0
    %4551 = vmatprep.subr.mxu0 0.0
    %4552 = vmatpush1.msra.mxu0 0.0
    %4553 = vmatprep.subr.mxu0 0.0
    %4554 = vmatpush1.msra.mxu0 0.0
    %4555 = vmatprep.subr.mxu0 0.0
    %4556 = vmatpush1.msra.mxu0 0.0
    %4557 = vmatprep.mubr.f32.mxu0 0.0
    %4558 = vmatmul.mubr.f32.gmra.mrb[0].mxu0 %v4491
    %v4559 = vpop.f32.mrb[0].mxu0
    %v4560 = vadd.f32 0.0, %v4559
    %v4561 = vpop.f32.mrb[0].mxu0
    %4562 = vdwg.mxu0
    %4563 = vrot.lane.b32.xlu0 %v531, 64
    %v4564 = vpop.permute.xlu0 %4563
    %v4567 = vsel %vm2994, %v3331, 0
    %4569 = vmatprep.subr.mxu0 0.0
    %4570 = vmatpush1.msra.mxu0 %v4564
    %4571 = vmatprep.subr.mxu0 0.0
    %4572 = vmatpush1.msra.mxu0 0.0
    %4573 = vmatprep.subr.mxu0 0.0
    %4574 = vmatpush1.msra.mxu0 0.0
    %4575 = vmatprep.subr.mxu0 0.0
    %4576 = vmatpush1.msra.mxu0 0.0
    %4577 = vmatprep.subr.mxu0 0.0
    %4578 = vmatpush1.msra.mxu0 0.0
    %4579 = vmatprep.subr.mxu0 0.0
    %4580 = vmatpush1.msra.mxu0 0.0
    %4581 = vmatprep.subr.mxu0 0.0
    %4582 = vmatpush1.msra.mxu0 0.0
    %4583 = vmatprep.subr.mxu0 0.0
    %4584 = vmatpush1.msra.mxu0 0.0
    %4585 = vmatprep.subr.mxu0 0.0
    %4586 = vmatpush1.msra.mxu0 0.0
    %4587 = vmatprep.subr.mxu0 0.0
    %4588 = vmatpush1.msra.mxu0 0.0
    %4589 = vmatprep.subr.mxu0 0.0
    %4590 = vmatpush1.msra.mxu0 0.0
    %4591 = vmatprep.subr.mxu0 0.0
    %4592 = vmatpush1.msra.mxu0 0.0
    %4593 = vmatprep.subr.mxu0 0.0
    %4594 = vmatpush1.msra.mxu0 0.0
    %4595 = vmatprep.subr.mxu0 0.0
    %4596 = vmatpush1.msra.mxu0 0.0
    %4597 = vmatprep.subr.mxu0 0.0
    %4598 = vmatpush1.msra.mxu0 0.0
    %4599 = vmatprep.subr.mxu0 0.0
    %4600 = vmatpush1.msra.mxu0 0.0
    %4601 = vmatprep.subr.mxu0 0.0
    %4602 = vmatpush1.msra.mxu0 0.0
    %4603 = vmatprep.subr.mxu0 0.0
    %4604 = vmatpush1.msra.mxu0 0.0
    %4605 = vmatprep.subr.mxu0 0.0
    %4606 = vmatpush1.msra.mxu0 0.0
    %4607 = vmatprep.subr.mxu0 0.0
    %4608 = vmatpush1.msra.mxu0 0.0
    %4609 = vmatprep.subr.mxu0 0.0
    %4610 = vmatpush1.msra.mxu0 0.0
    %4611 = vmatprep.subr.mxu0 0.0
    %4612 = vmatpush1.msra.mxu0 0.0
    %4613 = vmatprep.subr.mxu0 0.0
    %4614 = vmatpush1.msra.mxu0 0.0
    %4615 = vmatprep.subr.mxu0 0.0
    %4616 = vmatpush1.msra.mxu0 0.0
    %4617 = vmatprep.subr.mxu0 0.0
    %4618 = vmatpush1.msra.mxu0 0.0
    %4619 = vmatprep.subr.mxu0 0.0
    %4620 = vmatpush1.msra.mxu0 0.0
    %4621 = vmatprep.subr.mxu0 0.0
    %4622 = vmatpush1.msra.mxu0 0.0
    %4623 = vmatprep.subr.mxu0 0.0
    %4624 = vmatpush1.msra.mxu0 0.0
    %4625 = vmatprep.subr.mxu0 0.0
    %4626 = vmatpush1.msra.mxu0 0.0
    %4627 = vmatprep.subr.mxu0 0.0
    %4628 = vmatpush1.msra.mxu0 0.0
    %4629 = vmatprep.subr.mxu0 0.0
    %4630 = vmatpush1.msra.mxu0 0.0
    %4631 = vmatprep.subr.mxu0 0.0
    %4632 = vmatpush1.msra.mxu0 0.0
    %4633 = vmatprep.mubr.f32.mxu0 0.0
    %4634 = vmatmul.mubr.f32.gmra.mrb[0].mxu0 %v4567
    %v4635 = vpop.f32.mrb[0].mxu0
    %v4636 = vadd.f32 0.0, %v4635
    %v4637 = vpop.f32.mrb[0].mxu0
    %4638 = vdwg.mxu0
    %4639 = vrot.lane.b32.xlu0 %v533, 64
    %v4640 = vpop.permute.xlu0 %4639
    %v4643 = vsel %vm2994, %v3332, 0
    %4645 = vmatprep.subr.mxu0 0.0
    %4646 = vmatpush1.msra.mxu0 %v4640
    %4647 = vmatprep.subr.mxu0 0.0
    %4648 = vmatpush1.msra.mxu0 0.0
    %4649 = vmatprep.subr.mxu0 0.0
    %4650 = vmatpush1.msra.mxu0 0.0
    %4651 = vmatprep.subr.mxu0 0.0
    %4652 = vmatpush1.msra.mxu0 0.0
    %4653 = vmatprep.subr.mxu0 0.0
    %4654 = vmatpush1.msra.mxu0 0.0
    %4655 = vmatprep.subr.mxu0 0.0
    %4656 = vmatpush1.msra.mxu0 0.0
    %4657 = vmatprep.subr.mxu0 0.0
    %4658 = vmatpush1.msra.mxu0 0.0
    %4659 = vmatprep.subr.mxu0 0.0
    %4660 = vmatpush1.msra.mxu0 0.0
    %4661 = vmatprep.subr.mxu0 0.0
    %4662 = vmatpush1.msra.mxu0 0.0
    %4663 = vmatprep.subr.mxu0 0.0
    %4664 = vmatpush1.msra.mxu0 0.0
    %4665 = vmatprep.subr.mxu0 0.0
    %4666 = vmatpush1.msra.mxu0 0.0
    %4667 = vmatprep.subr.mxu0 0.0
    %4668 = vmatpush1.msra.mxu0 0.0
    %4669 = vmatprep.subr.mxu0 0.0
    %4670 = vmatpush1.msra.mxu0 0.0
    %4671 = vmatprep.subr.mxu0 0.0
    %4672 = vmatpush1.msra.mxu0 0.0
    %4673 = vmatprep.subr.mxu0 0.0
    %4674 = vmatpush1.msra.mxu0 0.0
    %4675 = vmatprep.subr.mxu0 0.0
    %4676 = vmatpush1.msra.mxu0 0.0
    %4677 = vmatprep.subr.mxu0 0.0
    %4678 = vmatpush1.msra.mxu0 0.0
    %4679 = vmatprep.subr.mxu0 0.0
    %4680 = vmatpush1.msra.mxu0 0.0
    %4681 = vmatprep.subr.mxu0 0.0
    %4682 = vmatpush1.msra.mxu0 0.0
    %4683 = vmatprep.subr.mxu0 0.0
    %4684 = vmatpush1.msra.mxu0 0.0
    %4685 = vmatprep.subr.mxu0 0.0
    %4686 = vmatpush1.msra.mxu0 0.0
    %4687 = vmatprep.subr.mxu0 0.0
    %4688 = vmatpush1.msra.mxu0 0.0
    %4689 = vmatprep.subr.mxu0 0.0
    %4690 = vmatpush1.msra.mxu0 0.0
    %4691 = vmatprep.subr.mxu0 0.0
    %4692 = vmatpush1.msra.mxu0 0.0
    %4693 = vmatprep.subr.mxu0 0.0
    %4694 = vmatpush1.msra.mxu0 0.0
    %4695 = vmatprep.subr.mxu0 0.0
    %4696 = vmatpush1.msra.mxu0 0.0
    %4697 = vmatprep.subr.mxu0 0.0
    %4698 = vmatpush1.msra.mxu0 0.0
    %4699 = vmatprep.subr.mxu0 0.0
    %4700 = vmatpush1.msra.mxu0 0.0
    %4701 = vmatprep.subr.mxu0 0.0
    %4702 = vmatpush1.msra.mxu0 0.0
    %4703 = vmatprep.subr.mxu0 0.0
    %4704 = vmatpush1.msra.mxu0 0.0
    %4705 = vmatprep.subr.mxu0 0.0
    %4706 = vmatpush1.msra.mxu0 0.0
    %4707 = vmatprep.subr.mxu0 0.0
    %4708 = vmatpush1.msra.mxu0 0.0
    %4709 = vmatprep.mubr.f32.mxu0 0.0
    %4710 = vmatmul.mubr.f32.gmra.mrb[0].mxu0 %v4643
    %v4711 = vpop.f32.mrb[0].mxu0
    %v4712 = vadd.f32 0.0, %v4711
    %v4713 = vpop.f32.mrb[0].mxu0
    %4714 = vdwg.mxu0
    %4715 = vrot.lane.b32.xlu0 %v535, 64
    %v4716 = vpop.permute.xlu0 %4715
    %v4719 = vsel %vm2994, %v3333, 0
    %4721 = vmatprep.subr.mxu0 0.0
    %4722 = vmatpush1.msra.mxu0 %v4716
    %4723 = vmatprep.subr.mxu0 0.0
    %4724 = vmatpush1.msra.mxu0 0.0
    %4725 = vmatprep.subr.mxu0 0.0
    %4726 = vmatpush1.msra.mxu0 0.0
    %4727 = vmatprep.subr.mxu0 0.0
    %4728 = vmatpush1.msra.mxu0 0.0
    %4729 = vmatprep.subr.mxu0 0.0
    %4730 = vmatpush1.msra.mxu0 0.0
    %4731 = vmatprep.subr.mxu0 0.0
    %4732 = vmatpush1.msra.mxu0 0.0
    %4733 = vmatprep.subr.mxu0 0.0
    %4734 = vmatpush1.msra.mxu0 0.0
    %4735 = vmatprep.subr.mxu0 0.0
    %4736 = vmatpush1.msra.mxu0 0.0
    %4737 = vmatprep.subr.mxu0 0.0
    %4738 = vmatpush1.msra.mxu0 0.0
    %4739 = vmatprep.subr.mxu0 0.0
    %4740 = vmatpush1.msra.mxu0 0.0
    %4741 = vmatprep.subr.mxu0 0.0
    %4742 = vmatpush1.msra.mxu0 0.0
    %4743 = vmatprep.subr.mxu0 0.0
    %4744 = vmatpush1.msra.mxu0 0.0
    %4745 = vmatprep.subr.mxu0 0.0
    %4746 = vmatpush1.msra.mxu0 0.0
    %4747 = vmatprep.subr.mxu0 0.0
    %4748 = vmatpush1.msra.mxu0 0.0
    %4749 = vmatprep.subr.mxu0 0.0
    %4750 = vmatpush1.msra.mxu0 0.0
    %4751 = vmatprep.subr.mxu0 0.0
    %4752 = vmatpush1.msra.mxu0 0.0
    %4753 = vmatprep.subr.mxu0 0.0
    %4754 = vmatpush1.msra.mxu0 0.0
    %4755 = vmatprep.subr.mxu0 0.0
    %4756 = vmatpush1.msra.mxu0 0.0
    %4757 = vmatprep.subr.mxu0 0.0
    %4758 = vmatpush1.msra.mxu0 0.0
    %4759 = vmatprep.subr.mxu0 0.0
    %4760 = vmatpush1.msra.mxu0 0.0
    %4761 = vmatprep.subr.mxu0 0.0
    %4762 = vmatpush1.msra.mxu0 0.0
    %4763 = vmatprep.subr.mxu0 0.0
    %4764 = vmatpush1.msra.mxu0 0.0
    %4765 = vmatprep.subr.mxu0 0.0
    %4766 = vmatpush1.msra.mxu0 0.0
    %4767 = vmatprep.subr.mxu0 0.0
    %4768 = vmatpush1.msra.mxu0 0.0
    %4769 = vmatprep.subr.mxu0 0.0
    %4770 = vmatpush1.msra.mxu0 0.0
    %4771 = vmatprep.subr.mxu0 0.0
    %4772 = vmatpush1.msra.mxu0 0.0
    %4773 = vmatprep.subr.mxu0 0.0
    %4774 = vmatpush1.msra.mxu0 0.0
    %4775 = vmatprep.subr.mxu0 0.0
    %4776 = vmatpush1.msra.mxu0 0.0
    %4777 = vmatprep.subr.mxu0 0.0
    %4778 = vmatpush1.msra.mxu0 0.0
    %4779 = vmatprep.subr.mxu0 0.0
    %4780 = vmatpush1.msra.mxu0 0.0
    %4781 = vmatprep.subr.mxu0 0.0
    %4782 = vmatpush1.msra.mxu0 0.0
    %4783 = vmatprep.subr.mxu0 0.0
    %4784 = vmatpush1.msra.mxu0 0.0
    %4785 = vmatprep.mubr.f32.mxu0 0.0
    %4786 = vmatmul.mubr.f32.gmra.mrb[0].mxu0 %v4719
    %v4787 = vpop.f32.mrb[0].mxu0
    %v4788 = vadd.f32 0.0, %v4787
    %v4789 = vpop.f32.mrb[0].mxu0
    %4790 = vdwg.mxu0
    %4791 = vrot.lane.b32.xlu0 %v537, 64
    %v4792 = vpop.permute.xlu0 %4791
    %v4795 = vsel %vm2994, %v3334, 0
    %4797 = vmatprep.subr.mxu0 0.0
    %4798 = vmatpush1.msra.mxu0 %v4792
    %4799 = vmatprep.subr.mxu0 0.0
    %4800 = vmatpush1.msra.mxu0 0.0
    %4801 = vmatprep.subr.mxu0 0.0
    %4802 = vmatpush1.msra.mxu0 0.0
    %4803 = vmatprep.subr.mxu0 0.0
    %4804 = vmatpush1.msra.mxu0 0.0
    %4805 = vmatprep.subr.mxu0 0.0
    %4806 = vmatpush1.msra.mxu0 0.0
    %4807 = vmatprep.subr.mxu0 0.0
    %4808 = vmatpush1.msra.mxu0 0.0
    %4809 = vmatprep.subr.mxu0 0.0
    %4810 = vmatpush1.msra.mxu0 0.0
    %4811 = vmatprep.subr.mxu0 0.0
    %4812 = vmatpush1.msra.mxu0 0.0
    %4813 = vmatprep.subr.mxu0 0.0
    %4814 = vmatpush1.msra.mxu0 0.0
    %4815 = vmatprep.subr.mxu0 0.0
    %4816 = vmatpush1.msra.mxu0 0.0
    %4817 = vmatprep.subr.mxu0 0.0
    %4818 = vmatpush1.msra.mxu0 0.0
    %4819 = vmatprep.subr.mxu0 0.0
    %4820 = vmatpush1.msra.mxu0 0.0
    %4821 = vmatprep.subr.mxu0 0.0
    %4822 = vmatpush1.msra.mxu0 0.0
    %4823 = vmatprep.subr.mxu0 0.0
    %4824 = vmatpush1.msra.mxu0 0.0
    %4825 = vmatprep.subr.mxu0 0.0
    %4826 = vmatpush1.msra.mxu0 0.0
    %4827 = vmatprep.subr.mxu0 0.0
    %4828 = vmatpush1.msra.mxu0 0.0
    %4829 = vmatprep.subr.mxu0 0.0
    %4830 = vmatpush1.msra.mxu0 0.0
    %4831 = vmatprep.subr.mxu0 0.0
    %4832 = vmatpush1.msra.mxu0 0.0
    %4833 = vmatprep.subr.mxu0 0.0
    %4834 = vmatpush1.msra.mxu0 0.0
    %4835 = vmatprep.subr.mxu0 0.0
    %4836 = vmatpush1.msra.mxu0 0.0
    %4837 = vmatprep.subr.mxu0 0.0
    %4838 = vmatpush1.msra.mxu0 0.0
    %4839 = vmatprep.subr.mxu0 0.0
    %4840 = vmatpush1.msra.mxu0 0.0
    %4841 = vmatprep.subr.mxu0 0.0
    %4842 = vmatpush1.msra.mxu0 0.0
    %4843 = vmatprep.subr.mxu0 0.0
    %4844 = vmatpush1.msra.mxu0 0.0
    %4845 = vmatprep.subr.mxu0 0.0
    %4846 = vmatpush1.msra.mxu0 0.0
    %4847 = vmatprep.subr.mxu0 0.0
    %4848 = vmatpush1.msra.mxu0 0.0
    %4849 = vmatprep.subr.mxu0 0.0
    %4850 = vmatpush1.msra.mxu0 0.0
    %4851 = vmatprep.subr.mxu0 0.0
    %4852 = vmatpush1.msra.mxu0 0.0
    %4853 = vmatprep.subr.mxu0 0.0
    %4854 = vmatpush1.msra.mxu0 0.0
    %4855 = vmatprep.subr.mxu0 0.0
    %4856 = vmatpush1.msra.mxu0 0.0
    %4857 = vmatprep.subr.mxu0 0.0
    %4858 = vmatpush1.msra.mxu0 0.0
    %4859 = vmatprep.subr.mxu0 0.0
    %4860 = vmatpush1.msra.mxu0 0.0
    %4861 = vmatprep.mubr.f32.mxu0 0.0
    %4862 = vmatmul.mubr.f32.gmra.mrb[0].mxu0 %v4795
    %v4863 = vpop.f32.mrb[0].mxu0
    %v4864 = vadd.f32 0.0, %v4863
    %v4865 = vpop.f32.mrb[0].mxu0
    %4866 = vdwg.mxu0
    %4867 = vrot.lane.b32.xlu0 %v539, 64
    %v4868 = vpop.permute.xlu0 %4867
    %v4871 = vsel %vm2994, %v3335, 0
    %4873 = vmatprep.subr.mxu0 0.0
    %4874 = vmatpush1.msra.mxu0 %v4868
    %4875 = vmatprep.subr.mxu0 0.0
    %4876 = vmatpush1.msra.mxu0 0.0
    %4877 = vmatprep.subr.mxu0 0.0
    %4878 = vmatpush1.msra.mxu0 0.0
    %4879 = vmatprep.subr.mxu0 0.0
    %4880 = vmatpush1.msra.mxu0 0.0
    %4881 = vmatprep.subr.mxu0 0.0
    %4882 = vmatpush1.msra.mxu0 0.0
    %4883 = vmatprep.subr.mxu0 0.0
    %4884 = vmatpush1.msra.mxu0 0.0
    %4885 = vmatprep.subr.mxu0 0.0
    %4886 = vmatpush1.msra.mxu0 0.0
    %4887 = vmatprep.subr.mxu0 0.0
    %4888 = vmatpush1.msra.mxu0 0.0
    %4889 = vmatprep.subr.mxu0 0.0
    %4890 = vmatpush1.msra.mxu0 0.0
    %4891 = vmatprep.subr.mxu0 0.0
    %4892 = vmatpush1.msra.mxu0 0.0
    %4893 = vmatprep.subr.mxu0 0.0
    %4894 = vmatpush1.msra.mxu0 0.0
    %4895 = vmatprep.subr.mxu0 0.0
    %4896 = vmatpush1.msra.mxu0 0.0
    %4897 = vmatprep.subr.mxu0 0.0
    %4898 = vmatpush1.msra.mxu0 0.0
    %4899 = vmatprep.subr.mxu0 0.0
    %4900 = vmatpush1.msra.mxu0 0.0
    %4901 = vmatprep.subr.mxu0 0.0
    %4902 = vmatpush1.msra.mxu0 0.0
    %4903 = vmatprep.subr.mxu0 0.0
    %4904 = vmatpush1.msra.mxu0 0.0
    %4905 = vmatprep.subr.mxu0 0.0
    %4906 = vmatpush1.msra.mxu0 0.0
    %4907 = vmatprep.subr.mxu0 0.0
    %4908 = vmatpush1.msra.mxu0 0.0
    %4909 = vmatprep.subr.mxu0 0.0
    %4910 = vmatpush1.msra.mxu0 0.0
    %4911 = vmatprep.subr.mxu0 0.0
    %4912 = vmatpush1.msra.mxu0 0.0
    %4913 = vmatprep.subr.mxu0 0.0
    %4914 = vmatpush1.msra.mxu0 0.0
    %4915 = vmatprep.subr.mxu0 0.0
    %4916 = vmatpush1.msra.mxu0 0.0
    %4917 = vmatprep.subr.mxu0 0.0
    %4918 = vmatpush1.msra.mxu0 0.0
    %4919 = vmatprep.subr.mxu0 0.0
    %4920 = vmatpush1.msra.mxu0 0.0
    %4921 = vmatprep.subr.mxu0 0.0
    %4922 = vmatpush1.msra.mxu0 0.0
    %4923 = vmatprep.subr.mxu0 0.0
    %4924 = vmatpush1.msra.mxu0 0.0
    %4925 = vmatprep.subr.mxu0 0.0
    %4926 = vmatpush1.msra.mxu0 0.0
    %4927 = vmatprep.subr.mxu0 0.0
    %4928 = vmatpush1.msra.mxu0 0.0
    %4929 = vmatprep.subr.mxu0 0.0
    %4930 = vmatpush1.msra.mxu0 0.0
    %4931 = vmatprep.subr.mxu0 0.0
    %4932 = vmatpush1.msra.mxu0 0.0
    %4933 = vmatprep.subr.mxu0 0.0
    %4934 = vmatpush1.msra.mxu0 0.0
    %4935 = vmatprep.subr.mxu0 0.0
    %4936 = vmatpush1.msra.mxu0 0.0
    %4937 = vmatprep.mubr.f32.mxu0 0.0
    %4938 = vmatmul.mubr.f32.gmra.mrb[0].mxu0 %v4871
    %v4939 = vpop.f32.mrb[0].mxu0
    %v4940 = vadd.f32 0.0, %v4939
    %v4941 = vpop.f32.mrb[0].mxu0
    %4942 = vdwg.mxu0
    %4943 = vrot.lane.b32.xlu0 %v541, 64
    %v4944 = vpop.permute.xlu0 %4943
    %v4947 = vsel %vm2994, %v3336, 0
    %4949 = vmatprep.subr.mxu0 0.0
    %4950 = vmatpush1.msra.mxu0 %v4944
    %4951 = vmatprep.subr.mxu0 0.0
    %4952 = vmatpush1.msra.mxu0 0.0
    %4953 = vmatprep.subr.mxu0 0.0
    %4954 = vmatpush1.msra.mxu0 0.0
    %4955 = vmatprep.subr.mxu0 0.0
    %4956 = vmatpush1.msra.mxu0 0.0
    %4957 = vmatprep.subr.mxu0 0.0
    %4958 = vmatpush1.msra.mxu0 0.0
    %4959 = vmatprep.subr.mxu0 0.0
    %4960 = vmatpush1.msra.mxu0 0.0
    %4961 = vmatprep.subr.mxu0 0.0
    %4962 = vmatpush1.msra.mxu0 0.0
    %4963 = vmatprep.subr.mxu0 0.0
    %4964 = vmatpush1.msra.mxu0 0.0
    %4965 = vmatprep.subr.mxu0 0.0
    %4966 = vmatpush1.msra.mxu0 0.0
    %4967 = vmatprep.subr.mxu0 0.0
    %4968 = vmatpush1.msra.mxu0 0.0
    %4969 = vmatprep.subr.mxu0 0.0
    %4970 = vmatpush1.msra.mxu0 0.0
    %4971 = vmatprep.subr.mxu0 0.0
    %4972 = vmatpush1.msra.mxu0 0.0
    %4973 = vmatprep.subr.mxu0 0.0
    %4974 = vmatpush1.msra.mxu0 0.0
    %4975 = vmatprep.subr.mxu0 0.0
    %4976 = vmatpush1.msra.mxu0 0.0
    %4977 = vmatprep.subr.mxu0 0.0
    %4978 = vmatpush1.msra.mxu0 0.0
    %4979 = vmatprep.subr.mxu0 0.0
    %4980 = vmatpush1.msra.mxu0 0.0
    %4981 = vmatprep.subr.mxu0 0.0
    %4982 = vmatpush1.msra.mxu0 0.0
    %4983 = vmatprep.subr.mxu0 0.0
    %4984 = vmatpush1.msra.mxu0 0.0
    %4985 = vmatprep.subr.mxu0 0.0
    %4986 = vmatpush1.msra.mxu0 0.0
    %4987 = vmatprep.subr.mxu0 0.0
    %4988 = vmatpush1.msra.mxu0 0.0
    %4989 = vmatprep.subr.mxu0 0.0
    %4990 = vmatpush1.msra.mxu0 0.0
    %4991 = vmatprep.subr.mxu0 0.0
    %4992 = vmatpush1.msra.mxu0 0.0
    %4993 = vmatprep.subr.mxu0 0.0
    %4994 = vmatpush1.msra.mxu0 0.0
    %4995 = vmatprep.subr.mxu0 0.0
    %4996 = vmatpush1.msra.mxu0 0.0
    %4997 = vmatprep.subr.mxu0 0.0
    %4998 = vmatpush1.msra.mxu0 0.0
    %4999 = vmatprep.subr.mxu0 0.0
    %5000 = vmatpush1.msra.mxu0 0.0
    %5001 = vmatprep.subr.mxu0 0.0
    %5002 = vmatpush1.msra.mxu0 0.0
    %5003 = vmatprep.subr.mxu0 0.0
    %5004 = vmatpush1.msra.mxu0 0.0
    %5005 = vmatprep.subr.mxu0 0.0
    %5006 = vmatpush1.msra.mxu0 0.0
    %5007 = vmatprep.subr.mxu0 0.0
    %5008 = vmatpush1.msra.mxu0 0.0
    %5009 = vmatprep.subr.mxu0 0.0
    %5010 = vmatpush1.msra.mxu0 0.0
    %5011 = vmatprep.subr.mxu0 0.0
    %5012 = vmatpush1.msra.mxu0 0.0
    %5013 = vmatprep.mubr.f32.mxu0 0.0
    %5014 = vmatmul.mubr.f32.gmra.mrb[0].mxu0 %v4947
    %v5015 = vpop.f32.mrb[0].mxu0
    %v5016 = vadd.f32 0.0, %v5015
    %v5017 = vpop.f32.mrb[0].mxu0
    %5018 = vdwg.mxu0
    %5019 = vrot.lane.b32.xlu0 %v543, 64
    %v5020 = vpop.permute.xlu0 %5019
    %v5023 = vsel %vm2994, %v3337, 0
    %5025 = vmatprep.subr.mxu0 0.0
    %5026 = vmatpush1.msra.mxu0 %v5020
    %5027 = vmatprep.subr.mxu0 0.0
    %5028 = vmatpush1.msra.mxu0 0.0
    %5029 = vmatprep.subr.mxu0 0.0
    %5030 = vmatpush1.msra.mxu0 0.0
    %5031 = vmatprep.subr.mxu0 0.0
    %5032 = vmatpush1.msra.mxu0 0.0
    %5033 = vmatprep.subr.mxu0 0.0
    %5034 = vmatpush1.msra.mxu0 0.0
    %5035 = vmatprep.subr.mxu0 0.0
    %5036 = vmatpush1.msra.mxu0 0.0
    %5037 = vmatprep.subr.mxu0 0.0
    %5038 = vmatpush1.msra.mxu0 0.0
    %5039 = vmatprep.subr.mxu0 0.0
    %5040 = vmatpush1.msra.mxu0 0.0
    %5041 = vmatprep.subr.mxu0 0.0
    %5042 = vmatpush1.msra.mxu0 0.0
    %5043 = vmatprep.subr.mxu0 0.0
    %5044 = vmatpush1.msra.mxu0 0.0
    %5045 = vmatprep.subr.mxu0 0.0
    %5046 = vmatpush1.msra.mxu0 0.0
    %5047 = vmatprep.subr.mxu0 0.0
    %5048 = vmatpush1.msra.mxu0 0.0
    %5049 = vmatprep.subr.mxu0 0.0
    %5050 = vmatpush1.msra.mxu0 0.0
    %5051 = vmatprep.subr.mxu0 0.0
    %5052 = vmatpush1.msra.mxu0 0.0
    %5053 = vmatprep.subr.mxu0 0.0
    %5054 = vmatpush1.msra.mxu0 0.0
    %5055 = vmatprep.subr.mxu0 0.0
    %5056 = vmatpush1.msra.mxu0 0.0
    %5057 = vmatprep.subr.mxu0 0.0
    %5058 = vmatpush1.msra.mxu0 0.0
    %5059 = vmatprep.subr.mxu0 0.0
    %5060 = vmatpush1.msra.mxu0 0.0
    %5061 = vmatprep.subr.mxu0 0.0
    %5062 = vmatpush1.msra.mxu0 0.0
    %5063 = vmatprep.subr.mxu0 0.0
    %5064 = vmatpush1.msra.mxu0 0.0
    %5065 = vmatprep.subr.mxu0 0.0
    %5066 = vmatpush1.msra.mxu0 0.0
    %5067 = vmatprep.subr.mxu0 0.0
    %5068 = vmatpush1.msra.mxu0 0.0
    %5069 = vmatprep.subr.mxu0 0.0
    %5070 = vmatpush1.msra.mxu0 0.0
    %5071 = vmatprep.subr.mxu0 0.0
    %5072 = vmatpush1.msra.mxu0 0.0
    %5073 = vmatprep.subr.mxu0 0.0
    %5074 = vmatpush1.msra.mxu0 0.0
    %5075 = vmatprep.subr.mxu0 0.0
    %5076 = vmatpush1.msra.mxu0 0.0
    %5077 = vmatprep.subr.mxu0 0.0
    %5078 = vmatpush1.msra.mxu0 0.0
    %5079 = vmatprep.subr.mxu0 0.0
    %5080 = vmatpush1.msra.mxu0 0.0
    %5081 = vmatprep.subr.mxu0 0.0
    %5082 = vmatpush1.msra.mxu0 0.0
    %5083 = vmatprep.subr.mxu0 0.0
    %5084 = vmatpush1.msra.mxu0 0.0
    %5085 = vmatprep.subr.mxu0 0.0
    %5086 = vmatpush1.msra.mxu0 0.0
    %5087 = vmatprep.subr.mxu0 0.0
    %5088 = vmatpush1.msra.mxu0 0.0
    %5089 = vmatprep.mubr.f32.mxu0 0.0
    %5090 = vmatmul.mubr.f32.gmra.mrb[0].mxu0 %v5023
    %v5091 = vpop.f32.mrb[0].mxu0
    %v5092 = vadd.f32 0.0, %v5091
    %v5093 = vpop.f32.mrb[0].mxu0
    %5094 = vdwg.mxu0
    %5095 = vrot.lane.b32.xlu0 %v545, 64
    %v5096 = vpop.permute.xlu0 %5095
    %v5099 = vsel %vm2994, %v3338, 0
    %5101 = vmatprep.subr.mxu0 0.0
    %5102 = vmatpush1.msra.mxu0 %v5096
    %5103 = vmatprep.subr.mxu0 0.0
    %5104 = vmatpush1.msra.mxu0 0.0
    %5105 = vmatprep.subr.mxu0 0.0
    %5106 = vmatpush1.msra.mxu0 0.0
    %5107 = vmatprep.subr.mxu0 0.0
    %5108 = vmatpush1.msra.mxu0 0.0
    %5109 = vmatprep.subr.mxu0 0.0
    %5110 = vmatpush1.msra.mxu0 0.0
    %5111 = vmatprep.subr.mxu0 0.0
    %5112 = vmatpush1.msra.mxu0 0.0
    %5113 = vmatprep.subr.mxu0 0.0
    %5114 = vmatpush1.msra.mxu0 0.0
    %5115 = vmatprep.subr.mxu0 0.0
    %5116 = vmatpush1.msra.mxu0 0.0
    %5117 = vmatprep.subr.mxu0 0.0
    %5118 = vmatpush1.msra.mxu0 0.0
    %5119 = vmatprep.subr.mxu0 0.0
    %5120 = vmatpush1.msra.mxu0 0.0
    %5121 = vmatprep.subr.mxu0 0.0
    %5122 = vmatpush1.msra.mxu0 0.0
    %5123 = vmatprep.subr.mxu0 0.0
    %5124 = vmatpush1.msra.mxu0 0.0
    %5125 = vmatprep.subr.mxu0 0.0
    %5126 = vmatpush1.msra.mxu0 0.0
    %5127 = vmatprep.subr.mxu0 0.0
    %5128 = vmatpush1.msra.mxu0 0.0
    %5129 = vmatprep.subr.mxu0 0.0
    %5130 = vmatpush1.msra.mxu0 0.0
    %5131 = vmatprep.subr.mxu0 0.0
    %5132 = vmatpush1.msra.mxu0 0.0
    %5133 = vmatprep.subr.mxu0 0.0
    %5134 = vmatpush1.msra.mxu0 0.0
    %5135 = vmatprep.subr.mxu0 0.0
    %5136 = vmatpush1.msra.mxu0 0.0
    %5137 = vmatprep.subr.mxu0 0.0
    %5138 = vmatpush1.msra.mxu0 0.0
    %5139 = vmatprep.subr.mxu0 0.0
    %5140 = vmatpush1.msra.mxu0 0.0
    %5141 = vmatprep.subr.mxu0 0.0
    %5142 = vmatpush1.msra.mxu0 0.0
    %5143 = vmatprep.subr.mxu0 0.0
    %5144 = vmatpush1.msra.mxu0 0.0
    %5145 = vmatprep.subr.mxu0 0.0
    %5146 = vmatpush1.msra.mxu0 0.0
    %5147 = vmatprep.subr.mxu0 0.0
    %5148 = vmatpush1.msra.mxu0 0.0
    %5149 = vmatprep.subr.mxu0 0.0
    %5150 = vmatpush1.msra.mxu0 0.0
    %5151 = vmatprep.subr.mxu0 0.0
    %5152 = vmatpush1.msra.mxu0 0.0
    %5153 = vmatprep.subr.mxu0 0.0
    %5154 = vmatpush1.msra.mxu0 0.0
    %5155 = vmatprep.subr.mxu0 0.0
    %5156 = vmatpush1.msra.mxu0 0.0
    %5157 = vmatprep.subr.mxu0 0.0
    %5158 = vmatpush1.msra.mxu0 0.0
    %5159 = vmatprep.subr.mxu0 0.0
    %5160 = vmatpush1.msra.mxu0 0.0
    %5161 = vmatprep.subr.mxu0 0.0
    %5162 = vmatpush1.msra.mxu0 0.0
    %5163 = vmatprep.subr.mxu0 0.0
    %5164 = vmatpush1.msra.mxu0 0.0
    %5165 = vmatprep.mubr.f32.mxu0 0.0
    %5166 = vmatmul.mubr.f32.gmra.mrb[0].mxu0 %v5099
    %v5167 = vpop.f32.mrb[0].mxu0
    %v5168 = vadd.f32 0.0, %v5167
    %v5169 = vpop.f32.mrb[0].mxu0
    %5170 = vdwg.mxu0
    %5171 = vrot.lane.b32.xlu0 %v547, 64
    %v5172 = vpop.permute.xlu0 %5171
    %v5175 = vsel %vm2994, %v3339, 0
    %5177 = vmatprep.subr.mxu0 0.0
    %5178 = vmatpush1.msra.mxu0 %v5172
    %5179 = vmatprep.subr.mxu0 0.0
    %5180 = vmatpush1.msra.mxu0 0.0
    %5181 = vmatprep.subr.mxu0 0.0
    %5182 = vmatpush1.msra.mxu0 0.0
    %5183 = vmatprep.subr.mxu0 0.0
    %5184 = vmatpush1.msra.mxu0 0.0
    %5185 = vmatprep.subr.mxu0 0.0
    %5186 = vmatpush1.msra.mxu0 0.0
    %5187 = vmatprep.subr.mxu0 0.0
    %5188 = vmatpush1.msra.mxu0 0.0
    %5189 = vmatprep.subr.mxu0 0.0
    %5190 = vmatpush1.msra.mxu0 0.0
    %5191 = vmatprep.subr.mxu0 0.0
    %5192 = vmatpush1.msra.mxu0 0.0
    %5193 = vmatprep.subr.mxu0 0.0
    %5194 = vmatpush1.msra.mxu0 0.0
    %5195 = vmatprep.subr.mxu0 0.0
    %5196 = vmatpush1.msra.mxu0 0.0
    %5197 = vmatprep.subr.mxu0 0.0
    %5198 = vmatpush1.msra.mxu0 0.0
    %5199 = vmatprep.subr.mxu0 0.0
    %5200 = vmatpush1.msra.mxu0 0.0
    %5201 = vmatprep.subr.mxu0 0.0
    %5202 = vmatpush1.msra.mxu0 0.0
    %5203 = vmatprep.subr.mxu0 0.0
    %5204 = vmatpush1.msra.mxu0 0.0
    %5205 = vmatprep.subr.mxu0 0.0
    %5206 = vmatpush1.msra.mxu0 0.0
    %5207 = vmatprep.subr.mxu0 0.0
    %5208 = vmatpush1.msra.mxu0 0.0
    %5209 = vmatprep.subr.mxu0 0.0
    %5210 = vmatpush1.msra.mxu0 0.0
    %5211 = vmatprep.subr.mxu0 0.0
    %5212 = vmatpush1.msra.mxu0 0.0
    %5213 = vmatprep.subr.mxu0 0.0
    %5214 = vmatpush1.msra.mxu0 0.0
    %5215 = vmatprep.subr.mxu0 0.0
    %5216 = vmatpush1.msra.mxu0 0.0
    %5217 = vmatprep.subr.mxu0 0.0
    %5218 = vmatpush1.msra.mxu0 0.0
    %5219 = vmatprep.subr.mxu0 0.0
    %5220 = vmatpush1.msra.mxu0 0.0
    %5221 = vmatprep.subr.mxu0 0.0
    %5222 = vmatpush1.msra.mxu0 0.0
    %5223 = vmatprep.subr.mxu0 0.0
    %5224 = vmatpush1.msra.mxu0 0.0
    %5225 = vmatprep.subr.mxu0 0.0
    %5226 = vmatpush1.msra.mxu0 0.0
    %5227 = vmatprep.subr.mxu0 0.0
    %5228 = vmatpush1.msra.mxu0 0.0
    %5229 = vmatprep.subr.mxu0 0.0
    %5230 = vmatpush1.msra.mxu0 0.0
    %5231 = vmatprep.subr.mxu0 0.0
    %5232 = vmatpush1.msra.mxu0 0.0
    %5233 = vmatprep.subr.mxu0 0.0
    %5234 = vmatpush1.msra.mxu0 0.0
    %5235 = vmatprep.subr.mxu0 0.0
    %5236 = vmatpush1.msra.mxu0 0.0
    %5237 = vmatprep.subr.mxu0 0.0
    %5238 = vmatpush1.msra.mxu0 0.0
    %5239 = vmatprep.subr.mxu0 0.0
    %5240 = vmatpush1.msra.mxu0 0.0
    %5241 = vmatprep.mubr.f32.mxu0 0.0
    %5242 = vmatmul.mubr.f32.gmra.mrb[0].mxu0 %v5175
    %v5243 = vpop.f32.mrb[0].mxu0
    %v5244 = vadd.f32 0.0, %v5243
    %v5245 = vpop.f32.mrb[0].mxu0
    %5246 = vdwg.mxu0
    %5247 = vrot.lane.b32.xlu0 %v549, 64
    %v5248 = vpop.permute.xlu0 %5247
    %v5251 = vsel %vm2994, %v3340, 0
    %5253 = vmatprep.subr.mxu0 0.0
    %5254 = vmatpush1.msra.mxu0 %v5248
    %5255 = vmatprep.subr.mxu0 0.0
    %5256 = vmatpush1.msra.mxu0 0.0
    %5257 = vmatprep.subr.mxu0 0.0
    %5258 = vmatpush1.msra.mxu0 0.0
    %5259 = vmatprep.subr.mxu0 0.0
    %5260 = vmatpush1.msra.mxu0 0.0
    %5261 = vmatprep.subr.mxu0 0.0
    %5262 = vmatpush1.msra.mxu0 0.0
    %5263 = vmatprep.subr.mxu0 0.0
    %5264 = vmatpush1.msra.mxu0 0.0
    %5265 = vmatprep.subr.mxu0 0.0
    %5266 = vmatpush1.msra.mxu0 0.0
    %5267 = vmatprep.subr.mxu0 0.0
    %5268 = vmatpush1.msra.mxu0 0.0
    %5269 = vmatprep.subr.mxu0 0.0
    %5270 = vmatpush1.msra.mxu0 0.0
    %5271 = vmatprep.subr.mxu0 0.0
    %5272 = vmatpush1.msra.mxu0 0.0
    %5273 = vmatprep.subr.mxu0 0.0
    %5274 = vmatpush1.msra.mxu0 0.0
    %5275 = vmatprep.subr.mxu0 0.0
    %5276 = vmatpush1.msra.mxu0 0.0
    %5277 = vmatprep.subr.mxu0 0.0
    %5278 = vmatpush1.msra.mxu0 0.0
    %5279 = vmatprep.subr.mxu0 0.0
    %5280 = vmatpush1.msra.mxu0 0.0
    %5281 = vmatprep.subr.mxu0 0.0
    %5282 = vmatpush1.msra.mxu0 0.0
    %5283 = vmatprep.subr.mxu0 0.0
    %5284 = vmatpush1.msra.mxu0 0.0
    %5285 = vmatprep.subr.mxu0 0.0
    %5286 = vmatpush1.msra.mxu0 0.0
    %5287 = vmatprep.subr.mxu0 0.0
    %5288 = vmatpush1.msra.mxu0 0.0
    %5289 = vmatprep.subr.mxu0 0.0
    %5290 = vmatpush1.msra.mxu0 0.0
    %5291 = vmatprep.subr.mxu0 0.0
    %5292 = vmatpush1.msra.mxu0 0.0
    %5293 = vmatprep.subr.mxu0 0.0
    %5294 = vmatpush1.msra.mxu0 0.0
    %5295 = vmatprep.subr.mxu0 0.0
    %5296 = vmatpush1.msra.mxu0 0.0
    %5297 = vmatprep.subr.mxu0 0.0
    %5298 = vmatpush1.msra.mxu0 0.0
    %5299 = vmatprep.subr.mxu0 0.0
    %5300 = vmatpush1.msra.mxu0 0.0
    %5301 = vmatprep.subr.mxu0 0.0
    %5302 = vmatpush1.msra.mxu0 0.0
    %5303 = vmatprep.subr.mxu0 0.0
    %5304 = vmatpush1.msra.mxu0 0.0
    %5305 = vmatprep.subr.mxu0 0.0
    %5306 = vmatpush1.msra.mxu0 0.0
    %5307 = vmatprep.subr.mxu0 0.0
    %5308 = vmatpush1.msra.mxu0 0.0
    %5309 = vmatprep.subr.mxu0 0.0
    %5310 = vmatpush1.msra.mxu0 0.0
    %5311 = vmatprep.subr.mxu0 0.0
    %5312 = vmatpush1.msra.mxu0 0.0
    %5313 = vmatprep.subr.mxu0 0.0
    %5314 = vmatpush1.msra.mxu0 0.0
    %5315 = vmatprep.subr.mxu0 0.0
    %5316 = vmatpush1.msra.mxu0 0.0
    %5317 = vmatprep.mubr.f32.mxu0 0.0
    %5318 = vmatmul.mubr.f32.gmra.mrb[0].mxu0 %v5251
    %v5319 = vpop.f32.mrb[0].mxu0
    %v5320 = vadd.f32 0.0, %v5319
    %v5321 = vpop.f32.mrb[0].mxu0
    %5322 = vdwg.mxu0
    %5323 = vrot.lane.b32.xlu0 %v551, 64
    %v5324 = vpop.permute.xlu0 %5323
    %v5327 = vsel %vm2994, %v3341, 0
    %5329 = vmatprep.subr.mxu0 0.0
    %5330 = vmatpush1.msra.mxu0 %v5324
    %5331 = vmatprep.subr.mxu0 0.0
    %5332 = vmatpush1.msra.mxu0 0.0
    %5333 = vmatprep.subr.mxu0 0.0
    %5334 = vmatpush1.msra.mxu0 0.0
    %5335 = vmatprep.subr.mxu0 0.0
    %5336 = vmatpush1.msra.mxu0 0.0
    %5337 = vmatprep.subr.mxu0 0.0
    %5338 = vmatpush1.msra.mxu0 0.0
    %5339 = vmatprep.subr.mxu0 0.0
    %5340 = vmatpush1.msra.mxu0 0.0
    %5341 = vmatprep.subr.mxu0 0.0
    %5342 = vmatpush1.msra.mxu0 0.0
    %5343 = vmatprep.subr.mxu0 0.0
    %5344 = vmatpush1.msra.mxu0 0.0
    %5345 = vmatprep.subr.mxu0 0.0
    %5346 = vmatpush1.msra.mxu0 0.0
    %5347 = vmatprep.subr.mxu0 0.0
    %5348 = vmatpush1.msra.mxu0 0.0
    %5349 = vmatprep.subr.mxu0 0.0
    %5350 = vmatpush1.msra.mxu0 0.0
    %5351 = vmatprep.subr.mxu0 0.0
    %5352 = vmatpush1.msra.mxu0 0.0
    %5353 = vmatprep.subr.mxu0 0.0
    %5354 = vmatpush1.msra.mxu0 0.0
    %5355 = vmatprep.subr.mxu0 0.0
    %5356 = vmatpush1.msra.mxu0 0.0
    %5357 = vmatprep.subr.mxu0 0.0
    %5358 = vmatpush1.msra.mxu0 0.0
    %5359 = vmatprep.subr.mxu0 0.0
    %5360 = vmatpush1.msra.mxu0 0.0
    %5361 = vmatprep.subr.mxu0 0.0
    %5362 = vmatpush1.msra.mxu0 0.0
    %5363 = vmatprep.subr.mxu0 0.0
    %5364 = vmatpush1.msra.mxu0 0.0
    %5365 = vmatprep.subr.mxu0 0.0
    %5366 = vmatpush1.msra.mxu0 0.0
    %5367 = vmatprep.subr.mxu0 0.0
    %5368 = vmatpush1.msra.mxu0 0.0
    %5369 = vmatprep.subr.mxu0 0.0
    %5370 = vmatpush1.msra.mxu0 0.0
    %5371 = vmatprep.subr.mxu0 0.0
    %5372 = vmatpush1.msra.mxu0 0.0
    %5373 = vmatprep.subr.mxu0 0.0
    %5374 = vmatpush1.msra.mxu0 0.0
    %5375 = vmatprep.subr.mxu0 0.0
    %5376 = vmatpush1.msra.mxu0 0.0
    %5377 = vmatprep.subr.mxu0 0.0
    %5378 = vmatpush1.msra.mxu0 0.0
    %5379 = vmatprep.subr.mxu0 0.0
    %5380 = vmatpush1.msra.mxu0 0.0
    %5381 = vmatprep.subr.mxu0 0.0
    %5382 = vmatpush1.msra.mxu0 0.0
    %5383 = vmatprep.subr.mxu0 0.0
    %5384 = vmatpush1.msra.mxu0 0.0
    %5385 = vmatprep.subr.mxu0 0.0
    %5386 = vmatpush1.msra.mxu0 0.0
    %5387 = vmatprep.subr.mxu0 0.0
    %5388 = vmatpush1.msra.mxu0 0.0
    %5389 = vmatprep.subr.mxu0 0.0
    %5390 = vmatpush1.msra.mxu0 0.0
    %5391 = vmatprep.subr.mxu0 0.0
    %5392 = vmatpush1.msra.mxu0 0.0
    %5393 = vmatprep.mubr.f32.mxu0 0.0
    %5394 = vmatmul.mubr.f32.gmra.mrb[0].mxu0 %v5327
    %v5395 = vpop.f32.mrb[0].mxu0
    %v5396 = vadd.f32 0.0, %v5395
    %v5397 = vpop.f32.mrb[0].mxu0
    %5398 = vdwg.mxu0
    %5399 = vrot.lane.b32.xlu0 %v553, 64
    %v5400 = vpop.permute.xlu0 %5399
    %v5403 = vsel %vm2994, %v3342, 0
    %5405 = vmatprep.subr.mxu0 0.0
    %5406 = vmatpush1.msra.mxu0 %v5400
    %5407 = vmatprep.subr.mxu0 0.0
    %5408 = vmatpush1.msra.mxu0 0.0
    %5409 = vmatprep.subr.mxu0 0.0
    %5410 = vmatpush1.msra.mxu0 0.0
    %5411 = vmatprep.subr.mxu0 0.0
    %5412 = vmatpush1.msra.mxu0 0.0
    %5413 = vmatprep.subr.mxu0 0.0
    %5414 = vmatpush1.msra.mxu0 0.0
    %5415 = vmatprep.subr.mxu0 0.0
    %5416 = vmatpush1.msra.mxu0 0.0
    %5417 = vmatprep.subr.mxu0 0.0
    %5418 = vmatpush1.msra.mxu0 0.0
    %5419 = vmatprep.subr.mxu0 0.0
    %5420 = vmatpush1.msra.mxu0 0.0
    %5421 = vmatprep.subr.mxu0 0.0
    %5422 = vmatpush1.msra.mxu0 0.0
    %5423 = vmatprep.subr.mxu0 0.0
    %5424 = vmatpush1.msra.mxu0 0.0
    %5425 = vmatprep.subr.mxu0 0.0
    %5426 = vmatpush1.msra.mxu0 0.0
    %5427 = vmatprep.subr.mxu0 0.0
    %5428 = vmatpush1.msra.mxu0 0.0
    %5429 = vmatprep.subr.mxu0 0.0
    %5430 = vmatpush1.msra.mxu0 0.0
    %5431 = vmatprep.subr.mxu0 0.0
    %5432 = vmatpush1.msra.mxu0 0.0
    %5433 = vmatprep.subr.mxu0 0.0
    %5434 = vmatpush1.msra.mxu0 0.0
    %5435 = vmatprep.subr.mxu0 0.0
    %5436 = vmatpush1.msra.mxu0 0.0
    %5437 = vmatprep.subr.mxu0 0.0
    %5438 = vmatpush1.msra.mxu0 0.0
    %5439 = vmatprep.subr.mxu0 0.0
    %5440 = vmatpush1.msra.mxu0 0.0
    %5441 = vmatprep.subr.mxu0 0.0
    %5442 = vmatpush1.msra.mxu0 0.0
    %5443 = vmatprep.subr.mxu0 0.0
    %5444 = vmatpush1.msra.mxu0 0.0
    %5445 = vmatprep.subr.mxu0 0.0
    %5446 = vmatpush1.msra.mxu0 0.0
    %5447 = vmatprep.subr.mxu0 0.0
    %5448 = vmatpush1.msra.mxu0 0.0
    %5449 = vmatprep.subr.mxu0 0.0
    %5450 = vmatpush1.msra.mxu0 0.0
    %5451 = vmatprep.subr.mxu0 0.0
    %5452 = vmatpush1.msra.mxu0 0.0
    %5453 = vmatprep.subr.mxu0 0.0
    %5454 = vmatpush1.msra.mxu0 0.0
    %5455 = vmatprep.subr.mxu0 0.0
    %5456 = vmatpush1.msra.mxu0 0.0
    %5457 = vmatprep.subr.mxu0 0.0
    %5458 = vmatpush1.msra.mxu0 0.0
    %5459 = vmatprep.subr.mxu0 0.0
    %5460 = vmatpush1.msra.mxu0 0.0
    %5461 = vmatprep.subr.mxu0 0.0
    %5462 = vmatpush1.msra.mxu0 0.0
    %5463 = vmatprep.subr.mxu0 0.0
    %5464 = vmatpush1.msra.mxu0 0.0
    %5465 = vmatprep.subr.mxu0 0.0
    %5466 = vmatpush1.msra.mxu0 0.0
    %5467 = vmatprep.subr.mxu0 0.0
    %5468 = vmatpush1.msra.mxu0 0.0
    %5469 = vmatprep.mubr.f32.mxu0 0.0
    %5470 = vmatmul.mubr.f32.gmra.mrb[0].mxu0 %v5403
    %v5471 = vpop.f32.mrb[0].mxu0
    %v5472 = vadd.f32 0.0, %v5471
    %v5473 = vpop.f32.mrb[0].mxu0
    %5474 = vdwg.mxu0
    %5475 = vrot.lane.b32.xlu0 %v555, 64
    %v5476 = vpop.permute.xlu0 %5475
    %v5479 = vsel %vm2994, %v3343, 0
    %5481 = vmatprep.subr.mxu0 0.0
    %5482 = vmatpush1.msra.mxu0 %v5476
    %5483 = vmatprep.subr.mxu0 0.0
    %5484 = vmatpush1.msra.mxu0 0.0
    %5485 = vmatprep.subr.mxu0 0.0
    %5486 = vmatpush1.msra.mxu0 0.0
    %5487 = vmatprep.subr.mxu0 0.0
    %5488 = vmatpush1.msra.mxu0 0.0
    %5489 = vmatprep.subr.mxu0 0.0
    %5490 = vmatpush1.msra.mxu0 0.0
    %5491 = vmatprep.subr.mxu0 0.0
    %5492 = vmatpush1.msra.mxu0 0.0
    %5493 = vmatprep.subr.mxu0 0.0
    %5494 = vmatpush1.msra.mxu0 0.0
    %5495 = vmatprep.subr.mxu0 0.0
    %5496 = vmatpush1.msra.mxu0 0.0
    %5497 = vmatprep.subr.mxu0 0.0
    %5498 = vmatpush1.msra.mxu0 0.0
    %5499 = vmatprep.subr.mxu0 0.0
    %5500 = vmatpush1.msra.mxu0 0.0
    %5501 = vmatprep.subr.mxu0 0.0
    %5502 = vmatpush1.msra.mxu0 0.0
    %5503 = vmatprep.subr.mxu0 0.0
    %5504 = vmatpush1.msra.mxu0 0.0
    %5505 = vmatprep.subr.mxu0 0.0
    %5506 = vmatpush1.msra.mxu0 0.0
    %5507 = vmatprep.subr.mxu0 0.0
    %5508 = vmatpush1.msra.mxu0 0.0
    %5509 = vmatprep.subr.mxu0 0.0
    %5510 = vmatpush1.msra.mxu0 0.0
    %5511 = vmatprep.subr.mxu0 0.0
    %5512 = vmatpush1.msra.mxu0 0.0
    %5513 = vmatprep.subr.mxu0 0.0
    %5514 = vmatpush1.msra.mxu0 0.0
    %5515 = vmatprep.subr.mxu0 0.0
    %5516 = vmatpush1.msra.mxu0 0.0
    %5517 = vmatprep.subr.mxu0 0.0
    %5518 = vmatpush1.msra.mxu0 0.0
    %5519 = vmatprep.subr.mxu0 0.0
    %5520 = vmatpush1.msra.mxu0 0.0
    %5521 = vmatprep.subr.mxu0 0.0
    %5522 = vmatpush1.msra.mxu0 0.0
    %5523 = vmatprep.subr.mxu0 0.0
    %5524 = vmatpush1.msra.mxu0 0.0
    %5525 = vmatprep.subr.mxu0 0.0
    %5526 = vmatpush1.msra.mxu0 0.0
    %5527 = vmatprep.subr.mxu0 0.0
    %5528 = vmatpush1.msra.mxu0 0.0
    %5529 = vmatprep.subr.mxu0 0.0
    %5530 = vmatpush1.msra.mxu0 0.0
    %5531 = vmatprep.subr.mxu0 0.0
    %5532 = vmatpush1.msra.mxu0 0.0
    %5533 = vmatprep.subr.mxu0 0.0
    %5534 = vmatpush1.msra.mxu0 0.0
    %5535 = vmatprep.subr.mxu0 0.0
    %5536 = vmatpush1.msra.mxu0 0.0
    %5537 = vmatprep.subr.mxu0 0.0
    %5538 = vmatpush1.msra.mxu0 0.0
    %5539 = vmatprep.subr.mxu0 0.0
    %5540 = vmatpush1.msra.mxu0 0.0
    %5541 = vmatprep.subr.mxu0 0.0
    %5542 = vmatpush1.msra.mxu0 0.0
    %5543 = vmatprep.subr.mxu0 0.0
    %5544 = vmatpush1.msra.mxu0 0.0
    %5545 = vmatprep.mubr.f32.mxu0 0.0
    %5546 = vmatmul.mubr.f32.gmra.mrb[0].mxu0 %v5479
    %v5547 = vpop.f32.mrb[0].mxu0
    %v5548 = vadd.f32 0.0, %v5547
    %v5549 = vpop.f32.mrb[0].mxu0
    %5550 = vdwg.mxu0
    %5551 = vrot.lane.b32.xlu0 %v557, 64
    %v5552 = vpop.permute.xlu0 %5551
    %v5555 = vsel %vm2994, %v3344, 0
    %5557 = vmatprep.subr.mxu0 0.0
    %5558 = vmatpush1.msra.mxu0 %v5552
    %5559 = vmatprep.subr.mxu0 0.0
    %5560 = vmatpush1.msra.mxu0 0.0
    %5561 = vmatprep.subr.mxu0 0.0
    %5562 = vmatpush1.msra.mxu0 0.0
    %5563 = vmatprep.subr.mxu0 0.0
    %5564 = vmatpush1.msra.mxu0 0.0
    %5565 = vmatprep.subr.mxu0 0.0
    %5566 = vmatpush1.msra.mxu0 0.0
    %5567 = vmatprep.subr.mxu0 0.0
    %5568 = vmatpush1.msra.mxu0 0.0
    %5569 = vmatprep.subr.mxu0 0.0
    %5570 = vmatpush1.msra.mxu0 0.0
    %5571 = vmatprep.subr.mxu0 0.0
    %5572 = vmatpush1.msra.mxu0 0.0
    %5573 = vmatprep.subr.mxu0 0.0
    %5574 = vmatpush1.msra.mxu0 0.0
    %5575 = vmatprep.subr.mxu0 0.0
    %5576 = vmatpush1.msra.mxu0 0.0
    %5577 = vmatprep.subr.mxu0 0.0
    %5578 = vmatpush1.msra.mxu0 0.0
    %5579 = vmatprep.subr.mxu0 0.0
    %5580 = vmatpush1.msra.mxu0 0.0
    %5581 = vmatprep.subr.mxu0 0.0
    %5582 = vmatpush1.msra.mxu0 0.0
    %5583 = vmatprep.subr.mxu0 0.0
    %5584 = vmatpush1.msra.mxu0 0.0
    %5585 = vmatprep.subr.mxu0 0.0
    %5586 = vmatpush1.msra.mxu0 0.0
    %5587 = vmatprep.subr.mxu0 0.0
    %5588 = vmatpush1.msra.mxu0 0.0
    %5589 = vmatprep.subr.mxu0 0.0
    %5590 = vmatpush1.msra.mxu0 0.0
    %5591 = vmatprep.subr.mxu0 0.0
    %5592 = vmatpush1.msra.mxu0 0.0
    %5593 = vmatprep.subr.mxu0 0.0
    %5594 = vmatpush1.msra.mxu0 0.0
    %5595 = vmatprep.subr.mxu0 0.0
    %5596 = vmatpush1.msra.mxu0 0.0
    %5597 = vmatprep.subr.mxu0 0.0
    %5598 = vmatpush1.msra.mxu0 0.0
    %5599 = vmatprep.subr.mxu0 0.0
    %5600 = vmatpush1.msra.mxu0 0.0
    %5601 = vmatprep.subr.mxu0 0.0
    %5602 = vmatpush1.msra.mxu0 0.0
    %5603 = vmatprep.subr.mxu0 0.0
    %5604 = vmatpush1.msra.mxu0 0.0
    %5605 = vmatprep.subr.mxu0 0.0
    %5606 = vmatpush1.msra.mxu0 0.0
    %5607 = vmatprep.subr.mxu0 0.0
    %5608 = vmatpush1.msra.mxu0 0.0
    %5609 = vmatprep.subr.mxu0 0.0
    %5610 = vmatpush1.msra.mxu0 0.0
    %5611 = vmatprep.subr.mxu0 0.0
    %5612 = vmatpush1.msra.mxu0 0.0
    %5613 = vmatprep.subr.mxu0 0.0
    %5614 = vmatpush1.msra.mxu0 0.0
    %5615 = vmatprep.subr.mxu0 0.0
    %5616 = vmatpush1.msra.mxu0 0.0
    %5617 = vmatprep.subr.mxu0 0.0
    %5618 = vmatpush1.msra.mxu0 0.0
    %5619 = vmatprep.subr.mxu0 0.0
    %5620 = vmatpush1.msra.mxu0 0.0
    %5621 = vmatprep.mubr.f32.mxu0 0.0
    %5622 = vmatmul.mubr.f32.gmra.mrb[0].mxu0 %v5555
    %v5623 = vpop.f32.mrb[0].mxu0
    %v5624 = vadd.f32 0.0, %v5623
    %v5625 = vpop.f32.mrb[0].mxu0
    %5626 = vdwg.mxu0
    %5627 = vrot.lane.b32.xlu0 %v559, 64
    %v5628 = vpop.permute.xlu0 %5627
    %v5631 = vsel %vm2994, %v3345, 0
    %5633 = vmatprep.subr.mxu0 0.0
    %5634 = vmatpush1.msra.mxu0 %v5628
    %5635 = vmatprep.subr.mxu0 0.0
    %5636 = vmatpush1.msra.mxu0 0.0
    %5637 = vmatprep.subr.mxu0 0.0
    %5638 = vmatpush1.msra.mxu0 0.0
    %5639 = vmatprep.subr.mxu0 0.0
    %5640 = vmatpush1.msra.mxu0 0.0
    %5641 = vmatprep.subr.mxu0 0.0
    %5642 = vmatpush1.msra.mxu0 0.0
    %5643 = vmatprep.subr.mxu0 0.0
    %5644 = vmatpush1.msra.mxu0 0.0
    %5645 = vmatprep.subr.mxu0 0.0
    %5646 = vmatpush1.msra.mxu0 0.0
    %5647 = vmatprep.subr.mxu0 0.0
    %5648 = vmatpush1.msra.mxu0 0.0
    %5649 = vmatprep.subr.mxu0 0.0
    %5650 = vmatpush1.msra.mxu0 0.0
    %5651 = vmatprep.subr.mxu0 0.0
    %5652 = vmatpush1.msra.mxu0 0.0
    %5653 = vmatprep.subr.mxu0 0.0
    %5654 = vmatpush1.msra.mxu0 0.0
    %5655 = vmatprep.subr.mxu0 0.0
    %5656 = vmatpush1.msra.mxu0 0.0
    %5657 = vmatprep.subr.mxu0 0.0
    %5658 = vmatpush1.msra.mxu0 0.0
    %5659 = vmatprep.subr.mxu0 0.0
    %5660 = vmatpush1.msra.mxu0 0.0
    %5661 = vmatprep.subr.mxu0 0.0
    %5662 = vmatpush1.msra.mxu0 0.0
    %5663 = vmatprep.subr.mxu0 0.0
    %5664 = vmatpush1.msra.mxu0 0.0
    %5665 = vmatprep.subr.mxu0 0.0
    %5666 = vmatpush1.msra.mxu0 0.0
    %5667 = vmatprep.subr.mxu0 0.0
    %5668 = vmatpush1.msra.mxu0 0.0
    %5669 = vmatprep.subr.mxu0 0.0
    %5670 = vmatpush1.msra.mxu0 0.0
    %5671 = vmatprep.subr.mxu0 0.0
    %5672 = vmatpush1.msra.mxu0 0.0
    %5673 = vmatprep.subr.mxu0 0.0
    %5674 = vmatpush1.msra.mxu0 0.0
    %5675 = vmatprep.subr.mxu0 0.0
    %5676 = vmatpush1.msra.mxu0 0.0
    %5677 = vmatprep.subr.mxu0 0.0
    %5678 = vmatpush1.msra.mxu0 0.0
    %5679 = vmatprep.subr.mxu0 0.0
    %5680 = vmatpush1.msra.mxu0 0.0
    %5681 = vmatprep.subr.mxu0 0.0
    %5682 = vmatpush1.msra.mxu0 0.0
    %5683 = vmatprep.subr.mxu0 0.0
    %5684 = vmatpush1.msra.mxu0 0.0
    %5685 = vmatprep.subr.mxu0 0.0
    %5686 = vmatpush1.msra.mxu0 0.0
    %5687 = vmatprep.subr.mxu0 0.0
    %5688 = vmatpush1.msra.mxu0 0.0
    %5689 = vmatprep.subr.mxu0 0.0
    %5690 = vmatpush1.msra.mxu0 0.0
    %5691 = vmatprep.subr.mxu0 0.0
    %5692 = vmatpush1.msra.mxu0 0.0
    %5693 = vmatprep.subr.mxu0 0.0
    %5694 = vmatpush1.msra.mxu0 0.0
    %5695 = vmatprep.subr.mxu0 0.0
    %5696 = vmatpush1.msra.mxu0 0.0
    %5697 = vmatprep.mubr.f32.mxu0 0.0
    %5698 = vmatmul.mubr.f32.gmra.mrb[0].mxu0 %v5631
    %v5699 = vpop.f32.mrb[0].mxu0
    %v5700 = vadd.f32 0.0, %v5699
    %v5701 = vpop.f32.mrb[0].mxu0
    %5702 = vdwg.mxu0
    %5703 = vrot.lane.b32.xlu0 %v561, 64
    %v5704 = vpop.permute.xlu0 %5703
    %v5707 = vsel %vm2994, %v3346, 0
    %5709 = vmatprep.subr.mxu0 0.0
    %5710 = vmatpush1.msra.mxu0 %v5704
    %5711 = vmatprep.subr.mxu0 0.0
    %5712 = vmatpush1.msra.mxu0 0.0
    %5713 = vmatprep.subr.mxu0 0.0
    %5714 = vmatpush1.msra.mxu0 0.0
    %5715 = vmatprep.subr.mxu0 0.0
    %5716 = vmatpush1.msra.mxu0 0.0
    %5717 = vmatprep.subr.mxu0 0.0
    %5718 = vmatpush1.msra.mxu0 0.0
    %5719 = vmatprep.subr.mxu0 0.0
    %5720 = vmatpush1.msra.mxu0 0.0
    %5721 = vmatprep.subr.mxu0 0.0
    %5722 = vmatpush1.msra.mxu0 0.0
    %5723 = vmatprep.subr.mxu0 0.0
    %5724 = vmatpush1.msra.mxu0 0.0
    %5725 = vmatprep.subr.mxu0 0.0
    %5726 = vmatpush1.msra.mxu0 0.0
    %5727 = vmatprep.subr.mxu0 0.0
    %5728 = vmatpush1.msra.mxu0 0.0
    %5729 = vmatprep.subr.mxu0 0.0
    %5730 = vmatpush1.msra.mxu0 0.0
    %5731 = vmatprep.subr.mxu0 0.0
    %5732 = vmatpush1.msra.mxu0 0.0
    %5733 = vmatprep.subr.mxu0 0.0
    %5734 = vmatpush1.msra.mxu0 0.0
    %5735 = vmatprep.subr.mxu0 0.0
    %5736 = vmatpush1.msra.mxu0 0.0
    %5737 = vmatprep.subr.mxu0 0.0
    %5738 = vmatpush1.msra.mxu0 0.0
    %5739 = vmatprep.subr.mxu0 0.0
    %5740 = vmatpush1.msra.mxu0 0.0
    %5741 = vmatprep.subr.mxu0 0.0
    %5742 = vmatpush1.msra.mxu0 0.0
    %5743 = vmatprep.subr.mxu0 0.0
    %5744 = vmatpush1.msra.mxu0 0.0
    %5745 = vmatprep.subr.mxu0 0.0
    %5746 = vmatpush1.msra.mxu0 0.0
    %5747 = vmatprep.subr.mxu0 0.0
    %5748 = vmatpush1.msra.mxu0 0.0
    %5749 = vmatprep.subr.mxu0 0.0
    %5750 = vmatpush1.msra.mxu0 0.0
    %5751 = vmatprep.subr.mxu0 0.0
    %5752 = vmatpush1.msra.mxu0 0.0
    %5753 = vmatprep.subr.mxu0 0.0
    %5754 = vmatpush1.msra.mxu0 0.0
    %5755 = vmatprep.subr.mxu0 0.0
    %5756 = vmatpush1.msra.mxu0 0.0
    %5757 = vmatprep.subr.mxu0 0.0
    %5758 = vmatpush1.msra.mxu0 0.0
    %5759 = vmatprep.subr.mxu0 0.0
    %5760 = vmatpush1.msra.mxu0 0.0
    %5761 = vmatprep.subr.mxu0 0.0
    %5762 = vmatpush1.msra.mxu0 0.0
    %5763 = vmatprep.subr.mxu0 0.0
    %5764 = vmatpush1.msra.mxu0 0.0
    %5765 = vmatprep.subr.mxu0 0.0
    %5766 = vmatpush1.msra.mxu0 0.0
    %5767 = vmatprep.subr.mxu0 0.0
    %5768 = vmatpush1.msra.mxu0 0.0
    %5769 = vmatprep.subr.mxu0 0.0
    %5770 = vmatpush1.msra.mxu0 0.0
    %5771 = vmatprep.subr.mxu0 0.0
    %5772 = vmatpush1.msra.mxu0 0.0
    %5773 = vmatprep.mubr.f32.mxu0 0.0
    %5774 = vmatmul.mubr.f32.gmra.mrb[0].mxu0 %v5707
    %v5775 = vpop.f32.mrb[0].mxu0
    %v5776 = vadd.f32 0.0, %v5775
    %v5777 = vpop.f32.mrb[0].mxu0
    %5778 = vdwg.mxu0
    %5795 = vrot.lane.b32.xlu0 %v4636, 16
    %v5796 = vpop.permute.xlu0 %5795
    %5797 = vrot.lane.b32.xlu0 %v4712, 16
    %v5798 = vpop.permute.xlu0 %5797
    %5799 = vrot.lane.b32.xlu0 %v4788, 16
    %v5800 = vpop.permute.xlu0 %5799
    %5801 = vrot.lane.b32.xlu0 %v4864, 16
    %v5802 = vpop.permute.xlu0 %5801
    %5803 = vrot.lane.b32.xlu0 %v4940, 16
    %v5804 = vpop.permute.xlu0 %5803
    %5805 = vrot.lane.b32.xlu0 %v5016, 16
    %v5806 = vpop.permute.xlu0 %5805
    %5807 = vrot.lane.b32.xlu0 %v5092, 16
    %v5808 = vpop.permute.xlu0 %5807
    %5809 = vrot.lane.b32.xlu0 %v5168, 16
    %v5810 = vpop.permute.xlu0 %5809
    %5811 = vrot.lane.b32.xlu0 %v5244, 16
    %v5812 = vpop.permute.xlu0 %5811
    %5813 = vrot.lane.b32.xlu0 %v5320, 16
    %v5814 = vpop.permute.xlu0 %5813
    %5815 = vrot.lane.b32.xlu0 %v5396, 16
    %v5816 = vpop.permute.xlu0 %5815
    %5817 = vrot.lane.b32.xlu0 %v5472, 16
    %v5818 = vpop.permute.xlu0 %5817
    %5819 = vrot.lane.b32.xlu0 %v5548, 16
    %v5820 = vpop.permute.xlu0 %5819
    %5821 = vrot.lane.b32.xlu0 %v5624, 16
    %v5822 = vpop.permute.xlu0 %5821
    %5823 = vrot.lane.b32.xlu0 %v5700, 16
    %v5824 = vpop.permute.xlu0 %5823
    %5825 = vrot.lane.b32.xlu0 %v5776, 16
    %v5826 = vpop.permute.xlu0 %5825
    %v5843 = vsel %vm66, %v3420, %v5796
    %v5844 = vsel %vm66, %v3496, %v5798
    %v5845 = vsel %vm66, %v3572, %v5800
    %v5846 = vsel %vm66, %v3648, %v5802
    %v5847 = vsel %vm66, %v3724, %v5804
    %v5848 = vsel %vm66, %v3800, %v5806
    %v5849 = vsel %vm66, %v3876, %v5808
    %v5850 = vsel %vm66, %v3952, %v5810
    %v5851 = vsel %vm66, %v4028, %v5812
    %v5852 = vsel %vm66, %v4104, %v5814
    %v5853 = vsel %vm66, %v4180, %v5816
    %v5854 = vsel %vm66, %v4256, %v5818
    %v5855 = vsel %vm66, %v4332, %v5820
    %v5856 = vsel %vm66, %v4408, %v5822
    %v5857 = vsel %vm66, %v4484, %v5824
    %v5858 = vsel %vm66, %v4560, %v5826
    %v5859 = vld [vmem:[%s3] sm:$0xf]
    %v5860 = vld [vmem:[%s3 + $0x4] sm:$0xf]
    %v5861 = vld [vmem:[%s3 + $0x8] sm:$0xf]
    %v5862 = vld [vmem:[%s3 + $0xc] sm:$0xf]
    %v5863 = vpack.c.bf16 %v5844, %v5843
    %v5864 = vpack.c.bf16 %v5846, %v5845
    %v5865 = vpack.c.bf16 %v5848, %v5847
    %v5866 = vpack.c.bf16 %v5850, %v5849
    %v5867 = vpack.c.bf16 %v5852, %v5851
    %v5868 = vpack.c.bf16 %v5854, %v5853
    %v5869 = vpack.c.bf16 %v5856, %v5855
    %v5870 = vpack.c.bf16 %v5858, %v5857
    %v5871 = vlaneseq
    %v5872 = vshrl.u32 %v5871, 7
    %v5873 = vsub.s32 4, %v5872
    %v5874 = vrot.slane %v28, %v5873
    %v5879 = vunpack.c.l.b16 %v5859
    %v5880 = vunpack.c.l.b16 %v5860
    %v5881 = vunpack.c.l.b16 %v5861
    %v5882 = vunpack.c.l.b16 %v5862
    %v5883 = vpack.c.b16 %v5880, %v5879
    %v5884 = vpack.c.b16 %v5882, %v5881
    %v5888 = vsel %vm212, %v5863, 0
    %v5891 = vsel %vm212, %v5864, 0
    %v5894 = vsel %vm212, %v5865, 0
    %v5897 = vsel %vm212, %v5866, 0
    %v5900 = vsel %vm212, %v5867, 0
    %v5903 = vsel %vm212, %v5868, 0
    %v5906 = vsel %vm212, %v5869, 0
    %v5909 = vsel %vm212, %v5870, 0
    %5911 = vmatprep.subr.bf16.mxu0 0
    %5912 = vmatpush1.bf16.msra.mxu0 %v5883
    %5913 = vmatprep.subr.bf16.mxu0 0
    %5914 = vmatpush1.bf16.msra.mxu0 %v5884
    %5915 = vmatprep.subr.bf16.mxu0 0
    %5916 = vmatpush1.bf16.msra.mxu0 0
    %5917 = vmatprep.subr.bf16.mxu0 0
    %5918 = vmatpush1.bf16.msra.mxu0 0
    %5919 = vmatprep.subr.bf16.mxu0 0
    %5920 = vmatpush1.bf16.msra.mxu0 0
    %5921 = vmatprep.subr.bf16.mxu0 0
    %5922 = vmatpush1.bf16.msra.mxu0 0
    %5923 = vmatprep.subr.bf16.mxu0 0
    %5924 = vmatpush1.bf16.msra.mxu0 0
    %5925 = vmatprep.subr.bf16.mxu0 0
    %5926 = vmatpush1.bf16.msra.mxu0 0
    %5927 = vmatprep.subr.bf16.mxu0 0
    %5928 = vmatpush1.bf16.msra.mxu0 0
    %5929 = vmatprep.subr.bf16.mxu0 0
    %5930 = vmatpush1.bf16.msra.mxu0 0
    %5931 = vmatprep.subr.bf16.mxu0 0
    %5932 = vmatpush1.bf16.msra.mxu0 0
    %5933 = vmatprep.subr.bf16.mxu0 0
    %5934 = vmatpush1.bf16.msra.mxu0 0
    %5935 = vmatprep.subr.bf16.mxu0 0
    %5936 = vmatpush1.bf16.msra.mxu0 0
    %5937 = vmatprep.subr.bf16.mxu0 0
    %5938 = vmatpush1.bf16.msra.mxu0 0
    %5939 = vmatprep.subr.bf16.mxu0 0
    %5940 = vmatpush1.bf16.msra.mxu0 0
    %5941 = vmatprep.subr.bf16.mxu0 0
    %5942 = vmatpush1.bf16.msra.mxu0 0
    %5943 = vmatprep.mubr.bf16.mxu0 0
    %5944 = vmatmul.mubr.bf16.gmra.mrb[0].mxu0 %v5888
    %v5945 = vpop.f32.mrb[0].mxu0
    %v5946 = vadd.f32 %v5874, %v5945
    %v5947 = vpop.f32.mrb[0].mxu0
    %v5948 = vpop.f32.mrb[0].mxu0
    %v5949 = vadd.f32 %v5874, %v5948
    %v5950 = vpop.f32.mrb[0].mxu0
    %5951 = vmatprep.mubr.bf16.mxu0 0
    %5952 = vmatmul.mubr.bf16.gmra.mrb[0].mxu0 %v5891
    %v5953 = vpop.f32.mrb[0].mxu0
    %v5954 = vadd.f32 %v5874, %v5953
    %v5955 = vpop.f32.mrb[0].mxu0
    %v5956 = vpop.f32.mrb[0].mxu0
    %v5957 = vadd.f32 %v5874, %v5956
    %v5958 = vpop.f32.mrb[0].mxu0
    %5959 = vmatprep.mubr.bf16.mxu0 0
    %5960 = vmatmul.mubr.bf16.gmra.mrb[0].mxu0 %v5894
    %v5961 = vpop.f32.mrb[0].mxu0
    %v5962 = vadd.f32 %v5874, %v5961
    %v5963 = vpop.f32.mrb[0].mxu0
    %v5964 = vpop.f32.mrb[0].mxu0
    %v5965 = vadd.f32 %v5874, %v5964
    %v5966 = vpop.f32.mrb[0].mxu0
    %5967 = vmatprep.mubr.bf16.mxu0 0
    %5968 = vmatmul.mubr.bf16.gmra.mrb[0].mxu0 %v5897
    %v5969 = vpop.f32.mrb[0].mxu0
    %v5970 = vadd.f32 %v5874, %v5969
    %v5971 = vpop.f32.mrb[0].mxu0
    %v5972 = vpop.f32.mrb[0].mxu0
    %v5973 = vadd.f32 %v5874, %v5972
    %v5974 = vpop.f32.mrb[0].mxu0
    %5975 = vmatprep.mubr.bf16.mxu0 0
    %5976 = vmatmul.mubr.bf16.gmra.mrb[0].mxu0 %v5900
    %v5977 = vpop.f32.mrb[0].mxu0
    %v5978 = vadd.f32 %v5874, %v5977
    %v5979 = vpop.f32.mrb[0].mxu0
    %v5980 = vpop.f32.mrb[0].mxu0
    %v5981 = vadd.f32 %v5874, %v5980
    %v5982 = vpop.f32.mrb[0].mxu0
    %5983 = vmatprep.mubr.bf16.mxu0 0
    %5984 = vmatmul.mubr.bf16.gmra.mrb[0].mxu0 %v5903
    %v5985 = vpop.f32.mrb[0].mxu0
    %v5986 = vadd.f32 %v5874, %v5985
    %v5987 = vpop.f32.mrb[0].mxu0
    %v5988 = vpop.f32.mrb[0].mxu0
    %v5989 = vadd.f32 %v5874, %v5988
    %v5990 = vpop.f32.mrb[0].mxu0
    %5991 = vmatprep.mubr.bf16.mxu0 0
    %5992 = vmatmul.mubr.bf16.gmra.mrb[0].mxu0 %v5906
    %v5993 = vpop.f32.mrb[0].mxu0
    %v5994 = vadd.f32 %v5874, %v5993
    %v5995 = vpop.f32.mrb[0].mxu0
    %v5996 = vpop.f32.mrb[0].mxu0
    %v5997 = vadd.f32 %v5874, %v5996
    %v5998 = vpop.f32.mrb[0].mxu0
    %5999 = vmatprep.mubr.bf16.mxu0 0
    %6000 = vmatmul.mubr.bf16.gmra.mrb[0].mxu0 %v5909
    %v6001 = vpop.f32.mrb[0].mxu0
    %v6002 = vadd.f32 %v5874, %v6001
    %v6003 = vpop.f32.mrb[0].mxu0
    %v6004 = vpop.f32.mrb[0].mxu0
    %v6005 = vadd.f32 %v5874, %v6004
    %v6006 = vpop.f32.mrb[0].mxu0
    %6007 = vdwg.mxu0
    %v6008 = vadd.f32 %v126, %v5946
    %v6009 = vadd.f32 %v129, %v5949
    %v6010 = vadd.f32 %v134, %v5954
    %v6011 = vadd.f32 %v137, %v5957
    %v6012 = vadd.f32 %v142, %v5962
    %v6013 = vadd.f32 %v145, %v5965
    %v6014 = vadd.f32 %v150, %v5970
    %v6015 = vadd.f32 %v153, %v5973
    %v6016 = vadd.f32 %v158, %v5978
    %v6017 = vadd.f32 %v161, %v5981
    %v6018 = vadd.f32 %v166, %v5986
    %v6019 = vadd.f32 %v169, %v5989
    %v6020 = vadd.f32 %v174, %v5994
    %v6021 = vadd.f32 %v177, %v5997
    %v6022 = vadd.f32 %v182, %v6002
    %v6023 = vadd.f32 %v185, %v6005
    %v6024 = vsel %vm212, %v6008, 0.0
    %6025 = vadd.xlane.f32.xlu0 %v6024
    %v6026 = vpop.xlane.xlu0 %6025
    %v6027 = vsel %vm212, %v6009, 0.0
    %6028 = vadd.xlane.f32.xlu0 %v6027
    %v6029 = vpop.xlane.xlu0 %6028
    %v6030 = vsel %vm212, %v6010, 0.0
    %6031 = vadd.xlane.f32.xlu0 %v6030
    %v6032 = vpop.xlane.xlu0 %6031
    %v6033 = vsel %vm212, %v6011, 0.0
    %6034 = vadd.xlane.f32.xlu0 %v6033
    %v6035 = vpop.xlane.xlu0 %6034
    %v6036 = vsel %vm212, %v6012, 0.0
    %6037 = vadd.xlane.f32.xlu0 %v6036
    %v6038 = vpop.xlane.xlu0 %6037
    %v6039 = vsel %vm212, %v6013, 0.0
    %6040 = vadd.xlane.f32.xlu0 %v6039
    %v6041 = vpop.xlane.xlu0 %6040
    %v6042 = vsel %vm212, %v6014, 0.0
    %6043 = vadd.xlane.f32.xlu0 %v6042
    %v6044 = vpop.xlane.xlu0 %6043
    %v6045 = vsel %vm212, %v6015, 0.0
    %6046 = vadd.xlane.f32.xlu0 %v6045
    %v6047 = vpop.xlane.xlu0 %6046
    %v6048 = vsel %vm212, %v6016, 0.0
    %6049 = vadd.xlane.f32.xlu0 %v6048
    %v6050 = vpop.xlane.xlu0 %6049
    %v6051 = vsel %vm212, %v6017, 0.0
    %6052 = vadd.xlane.f32.xlu0 %v6051
    %v6053 = vpop.xlane.xlu0 %6052
    %v6054 = vsel %vm212, %v6018, 0.0
    %6055 = vadd.xlane.f32.xlu0 %v6054
    %v6056 = vpop.xlane.xlu0 %6055
    %v6057 = vsel %vm212, %v6019, 0.0
    %6058 = vadd.xlane.f32.xlu0 %v6057
    %v6059 = vpop.xlane.xlu0 %6058
    %v6060 = vsel %vm212, %v6020, 0.0
    %6061 = vadd.xlane.f32.xlu0 %v6060
    %v6062 = vpop.xlane.xlu0 %6061
    %v6063 = vsel %vm212, %v6021, 0.0
    %6064 = vadd.xlane.f32.xlu0 %v6063
    %v6065 = vpop.xlane.xlu0 %6064
    %v6066 = vsel %vm212, %v6022, 0.0
    %6067 = vadd.xlane.f32.xlu0 %v6066
    %v6068 = vpop.xlane.xlu0 %6067
    %v6069 = vsel %vm212, %v6023, 0.0
    %6070 = vadd.xlane.f32.xlu0 %v6069
    %v6071 = vpop.xlane.xlu0 %6070
    %v6072 = vrcp.pop 32.0
    %v6073 = vmul.f32 %v6026, %v6072
    %v6074 = vmul.f32 %v6029, %v6072
    %v6075 = vmul.f32 %v6032, %v6072
    %v6076 = vmul.f32 %v6035, %v6072
    %v6077 = vmul.f32 %v6038, %v6072
    %v6078 = vmul.f32 %v6041, %v6072
    %v6079 = vmul.f32 %v6044, %v6072
    %v6080 = vmul.f32 %v6047, %v6072
    %v6081 = vmul.f32 %v6050, %v6072
    %v6082 = vmul.f32 %v6053, %v6072
    %v6083 = vmul.f32 %v6056, %v6072
    %v6084 = vmul.f32 %v6059, %v6072
    %v6085 = vmul.f32 %v6062, %v6072
    %v6086 = vmul.f32 %v6065, %v6072
    %v6087 = vmul.f32 %v6068, %v6072
    %v6088 = vmul.f32 %v6071, %v6072
    %v6089 = vsub.f32 %v6008, %v6073
    %v6090 = vsub.f32 %v6009, %v6074
    %v6091 = vsub.f32 %v6010, %v6075
    %v6092 = vsub.f32 %v6011, %v6076
    %v6093 = vsub.f32 %v6012, %v6077
    %v6094 = vsub.f32 %v6013, %v6078
    %v6095 = vsub.f32 %v6014, %v6079
    %v6096 = vsub.f32 %v6015, %v6080
    %v6097 = vsub.f32 %v6016, %v6081
    %v6098 = vsub.f32 %v6017, %v6082
    %v6099 = vsub.f32 %v6018, %v6083
    %v6100 = vsub.f32 %v6019, %v6084
    %v6101 = vsub.f32 %v6020, %v6085
    %v6102 = vsub.f32 %v6021, %v6086
    %v6103 = vsub.f32 %v6022, %v6087
    %v6104 = vsub.f32 %v6023, %v6088
    %v6105 = vmul.f32 %v6089, %v6089
    %v6106 = vmul.f32 %v6090, %v6090
    %v6107 = vmul.f32 %v6091, %v6091
    %v6108 = vmul.f32 %v6092, %v6092
    %v6109 = vmul.f32 %v6093, %v6093
    %v6110 = vmul.f32 %v6094, %v6094
    %v6111 = vmul.f32 %v6095, %v6095
    %v6112 = vmul.f32 %v6096, %v6096
    %v6113 = vmul.f32 %v6097, %v6097
    %v6114 = vmul.f32 %v6098, %v6098
    %v6115 = vmul.f32 %v6099, %v6099
    %v6116 = vmul.f32 %v6100, %v6100
    %v6117 = vmul.f32 %v6101, %v6101
    %v6118 = vmul.f32 %v6102, %v6102
    %v6119 = vmul.f32 %v6103, %v6103
    %v6120 = vmul.f32 %v6104, %v6104
    %v6121 = vsel %vm212, %v6105, 0.0
    %6122 = vadd.xlane.f32.xlu0 %v6121
    %v6123 = vpop.xlane.xlu0 %6122
    %v6124 = vsel %vm212, %v6106, 0.0
    %6125 = vadd.xlane.f32.xlu0 %v6124
    %v6126 = vpop.xlane.xlu0 %6125
    %v6127 = vsel %vm212, %v6107, 0.0
    %6128 = vadd.xlane.f32.xlu0 %v6127
    %v6129 = vpop.xlane.xlu0 %6128
    %v6130 = vsel %vm212, %v6108, 0.0
    %6131 = vadd.xlane.f32.xlu0 %v6130
    %v6132 = vpop.xlane.xlu0 %6131
    %v6133 = vsel %vm212, %v6109, 0.0
    %6134 = vadd.xlane.f32.xlu0 %v6133
    %v6135 = vpop.xlane.xlu0 %6134
    %v6136 = vsel %vm212, %v6110, 0.0
    %6137 = vadd.xlane.f32.xlu0 %v6136
    %v6138 = vpop.xlane.xlu0 %6137
    %v6139 = vsel %vm212, %v6111, 0.0
    %6140 = vadd.xlane.f32.xlu0 %v6139
    %v6141 = vpop.xlane.xlu0 %6140
    %v6142 = vsel %vm212, %v6112, 0.0
    %6143 = vadd.xlane.f32.xlu0 %v6142
    %v6144 = vpop.xlane.xlu0 %6143
    %v6145 = vsel %vm212, %v6113, 0.0
    %6146 = vadd.xlane.f32.xlu0 %v6145
    %v6147 = vpop.xlane.xlu0 %6146
    %v6148 = vsel %vm212, %v6114, 0.0
    %6149 = vadd.xlane.f32.xlu0 %v6148
    %v6150 = vpop.xlane.xlu0 %6149
    %v6151 = vsel %vm212, %v6115, 0.0
    %6152 = vadd.xlane.f32.xlu0 %v6151
    %v6153 = vpop.xlane.xlu0 %6152
    %v6154 = vsel %vm212, %v6116, 0.0
    %6155 = vadd.xlane.f32.xlu0 %v6154
    %v6156 = vpop.xlane.xlu0 %6155
    %v6157 = vsel %vm212, %v6117, 0.0
    %6158 = vadd.xlane.f32.xlu0 %v6157
    %v6159 = vpop.xlane.xlu0 %6158
    %v6160 = vsel %vm212, %v6118, 0.0
    %6161 = vadd.xlane.f32.xlu0 %v6160
    %v6162 = vpop.xlane.xlu0 %6161
    %v6163 = vsel %vm212, %v6119, 0.0
    %6164 = vadd.xlane.f32.xlu0 %v6163
    %v6165 = vpop.xlane.xlu0 %6164
    %v6166 = vsel %vm212, %v6120, 0.0
    %6167 = vadd.xlane.f32.xlu0 %v6166
    %v6168 = vpop.xlane.xlu0 %6167
    %v6169 = vmul.f32 %v6123, %v6072
    %v6170 = vmul.f32 %v6126, %v6072
    %v6171 = vmul.f32 %v6129, %v6072
    %v6172 = vmul.f32 %v6132, %v6072
    %v6173 = vmul.f32 %v6135, %v6072
    %v6174 = vmul.f32 %v6138, %v6072
    %v6175 = vmul.f32 %v6141, %v6072
    %v6176 = vmul.f32 %v6144, %v6072
    %v6177 = vmul.f32 %v6147, %v6072
    %v6178 = vmul.f32 %v6150, %v6072
    %v6179 = vmul.f32 %v6153, %v6072
    %v6180 = vmul.f32 %v6156, %v6072
    %v6181 = vmul.f32 %v6159, %v6072
    %v6182 = vmul.f32 %v6162, %v6072
    %v6183 = vmul.f32 %v6165, %v6072
    %v6184 = vmul.f32 %v6168, %v6072
    %v6185 = vadd.f32 %v6169, 1e-05
    %v6186 = vadd.f32 %v6170, 1e-05
    %v6187 = vadd.f32 %v6171, 1e-05
    %v6188 = vadd.f32 %v6172, 1e-05
    %v6189 = vadd.f32 %v6173, 1e-05
    %v6190 = vadd.f32 %v6174, 1e-05
    %v6191 = vadd.f32 %v6175, 1e-05
    %v6192 = vadd.f32 %v6176, 1e-05
    %v6193 = vadd.f32 %v6177, 1e-05
    %v6194 = vadd.f32 %v6178, 1e-05
    %v6195 = vadd.f32 %v6179, 1e-05
    %v6196 = vadd.f32 %v6180, 1e-05
    %v6197 = vadd.f32 %v6181, 1e-05
    %v6198 = vadd.f32 %v6182, 1e-05
    %v6199 = vadd.f32 %v6183, 1e-05
    %v6200 = vadd.f32 %v6184, 1e-05
    %v6201 = vrsqrt.pop %v6185
    %v6202 = vrsqrt.pop %v6186
    %v6203 = vrsqrt.pop %v6187
    %v6204 = vrsqrt.pop %v6188
    %v6205 = vrsqrt.pop %v6189
    %v6206 = vrsqrt.pop %v6190
    %v6207 = vrsqrt.pop %v6191
    %v6208 = vrsqrt.pop %v6192
    %v6209 = vrsqrt.pop %v6193
    %v6210 = vrsqrt.pop %v6194
    %v6211 = vrsqrt.pop %v6195
    %v6212 = vrsqrt.pop %v6196
    %v6213 = vrsqrt.pop %v6197
    %v6214 = vrsqrt.pop %v6198
    %v6215 = vrsqrt.pop %v6199
    %v6216 = vrsqrt.pop %v6200
    %v6217 = vmul.f32 %v6089, %v6201
    %v6218 = vmul.f32 %v6090, %v6202
    %v6219 = vmul.f32 %v6091, %v6203
    %v6220 = vmul.f32 %v6092, %v6204
    %v6221 = vmul.f32 %v6093, %v6205
    %v6222 = vmul.f32 %v6094, %v6206
    %v6223 = vmul.f32 %v6095, %v6207
    %v6224 = vmul.f32 %v6096, %v6208
    %v6225 = vmul.f32 %v6097, %v6209
    %v6226 = vmul.f32 %v6098, %v6210
    %v6227 = vmul.f32 %v6099, %v6211
    %v6228 = vmul.f32 %v6100, %v6212
    %v6229 = vmul.f32 %v6101, %v6213
    %v6230 = vmul.f32 %v6102, %v6214
    %v6231 = vmul.f32 %v6103, %v6215
    %v6232 = vmul.f32 %v6104, %v6216
    %v6233 = vlaneseq
    %v6234 = vshrl.u32 %v6233, 7
    %v6235 = vsub.s32 5, %v6234
    %v6236 = vrot.slane %v28, %v6235
    %v6237 = vmul.f32 %v6217, %v6236
    %v6238 = vmul.f32 %v6218, %v6236
    %v6239 = vmul.f32 %v6219, %v6236
    %v6240 = vmul.f32 %v6220, %v6236
    %v6241 = vmul.f32 %v6221, %v6236
    %v6242 = vmul.f32 %v6222, %v6236
    %v6243 = vmul.f32 %v6223, %v6236
    %v6244 = vmul.f32 %v6224, %v6236
    %v6245 = vmul.f32 %v6225, %v6236
    %v6246 = vmul.f32 %v6226, %v6236
    %v6247 = vmul.f32 %v6227, %v6236
    %v6248 = vmul.f32 %v6228, %v6236
    %v6249 = vmul.f32 %v6229, %v6236
    %v6250 = vmul.f32 %v6230, %v6236
    %v6251 = vmul.f32 %v6231, %v6236
    %v6252 = vmul.f32 %v6232, %v6236
    %v6253 = vlaneseq
    %v6254 = vshrl.u32 %v6253, 7
    %v6255 = vsub.s32 6, %v6254
    %v6256 = vrot.slane %v28, %v6255
    %v6257 = vadd.f32 %v6237, %v6256
    %v6258 = vadd.f32 %v6238, %v6256
    %v6259 = vadd.f32 %v6239, %v6256
    %v6260 = vadd.f32 %v6240, %v6256
    %v6261 = vadd.f32 %v6241, %v6256
    %v6262 = vadd.f32 %v6242, %v6256
    %v6263 = vadd.f32 %v6243, %v6256
    %v6264 = vadd.f32 %v6244, %v6256
    %v6265 = vadd.f32 %v6245, %v6256
    %v6266 = vadd.f32 %v6246, %v6256
    %v6267 = vadd.f32 %v6247, %v6256
    %v6268 = vadd.f32 %v6248, %v6256
    %v6269 = vadd.f32 %v6249, %v6256
    %v6270 = vadd.f32 %v6250, %v6256
    %v6271 = vadd.f32 %v6251, %v6256
    %v6272 = vadd.f32 %v6252, %v6256
    %s6273 = scalar_lea.vmem %s3, 16
    %v6274 = vld [vmem:[%s6273] sm:$0xf]
    %v6275 = vld [vmem:[%s6273 + $0x4] sm:$0xf]
    %v6276 = vld [vmem:[%s6273 + $0x8] sm:$0xf]
    %v6277 = vld [vmem:[%s6273 + $0xc] sm:$0xf]
    %v6278 = vpack.c.bf16 %v6258, %v6257
    %v6279 = vpack.c.bf16 %v6260, %v6259
    %v6280 = vpack.c.bf16 %v6262, %v6261
    %v6281 = vpack.c.bf16 %v6264, %v6263
    %v6282 = vpack.c.bf16 %v6266, %v6265
    %v6283 = vpack.c.bf16 %v6268, %v6267
    %v6284 = vpack.c.bf16 %v6270, %v6269
    %v6285 = vpack.c.bf16 %v6272, %v6271
    %v6286 = vlaneseq
    %v6287 = vshrl.u32 %v6286, 7
    %v6288 = vsub.s32 7, %v6287
    %v6289 = vrot.slane %v28, %v6288
    %v6294 = vunpack.c.l.b16 %v6274
    %v6295 = vunpack.c.l.b16 %v6275
    %v6296 = vunpack.c.l.b16 %v6276
    %v6297 = vunpack.c.l.b16 %v6277
    %v6298 = vpack.c.b16 %v6295, %v6294
    %v6299 = vpack.c.b16 %v6297, %v6296
    %v6303 = vsel %vm212, %v6278, 0
    %v6306 = vsel %vm212, %v6279, 0
    %v6309 = vsel %vm212, %v6280, 0
    %v6312 = vsel %vm212, %v6281, 0
    %v6315 = vsel %vm212, %v6282, 0
    %v6318 = vsel %vm212, %v6283, 0
    %v6321 = vsel %vm212, %v6284, 0
    %v6324 = vsel %vm212, %v6285, 0
    %6326 = vmatprep.subr.bf16.mxu0 0
    %6327 = vmatpush1.bf16.msra.mxu0 %v6298
    %6328 = vmatprep.subr.bf16.mxu0 0
    %6329 = vmatpush1.bf16.msra.mxu0 %v6299
    %6330 = vmatprep.subr.bf16.mxu0 0
    %6331 = vmatpush1.bf16.msra.mxu0 0
    %6332 = vmatprep.subr.bf16.mxu0 0
    %6333 = vmatpush1.bf16.msra.mxu0 0
    %6334 = vmatprep.subr.bf16.mxu0 0
    %6335 = vmatpush1.bf16.msra.mxu0 0
    %6336 = vmatprep.subr.bf16.mxu0 0
    %6337 = vmatpush1.bf16.msra.mxu0 0
    %6338 = vmatprep.subr.bf16.mxu0 0
    %6339 = vmatpush1.bf16.msra.mxu0 0
    %6340 = vmatprep.subr.bf16.mxu0 0
    %6341 = vmatpush1.bf16.msra.mxu0 0
    %6342 = vmatprep.subr.bf16.mxu0 0
    %6343 = vmatpush1.bf16.msra.mxu0 0
    %6344 = vmatprep.subr.bf16.mxu0 0
    %6345 = vmatpush1.bf16.msra.mxu0 0
    %6346 = vmatprep.subr.bf16.mxu0 0
    %6347 = vmatpush1.bf16.msra.mxu0 0
    %6348 = vmatprep.subr.bf16.mxu0 0
    %6349 = vmatpush1.bf16.msra.mxu0 0
    %6350 = vmatprep.subr.bf16.mxu0 0
    %6351 = vmatpush1.bf16.msra.mxu0 0
    %6352 = vmatprep.subr.bf16.mxu0 0
    %6353 = vmatpush1.bf16.msra.mxu0 0
    %6354 = vmatprep.subr.bf16.mxu0 0
    %6355 = vmatpush1.bf16.msra.mxu0 0
    %6356 = vmatprep.subr.bf16.mxu0 0
    %6357 = vmatpush1.bf16.msra.mxu0 0
    %6358 = vmatprep.mubr.bf16.mxu0 0
    %6359 = vmatmul.mubr.bf16.gmra.mrb[0].mxu0 %v6303
    %v6360 = vpop.f32.mrb[0].mxu0
    %v6361 = vadd.f32 %v6289, %v6360
    %v6362 = vpop.f32.mrb[0].mxu0
    %v6363 = vpop.f32.mrb[0].mxu0
    %v6364 = vadd.f32 %v6289, %v6363
    %v6365 = vpop.f32.mrb[0].mxu0
    %6366 = vmatprep.mubr.bf16.mxu0 0
    %6367 = vmatmul.mubr.bf16.gmra.mrb[0].mxu0 %v6306
    %v6368 = vpop.f32.mrb[0].mxu0
    %v6369 = vadd.f32 %v6289, %v6368
    %v6370 = vpop.f32.mrb[0].mxu0
    %v6371 = vpop.f32.mrb[0].mxu0
    %v6372 = vadd.f32 %v6289, %v6371
    %v6373 = vpop.f32.mrb[0].mxu0
    %6374 = vmatprep.mubr.bf16.mxu0 0
    %6375 = vmatmul.mubr.bf16.gmra.mrb[0].mxu0 %v6309
    %v6376 = vpop.f32.mrb[0].mxu0
    %v6377 = vadd.f32 %v6289, %v6376
    %v6378 = vpop.f32.mrb[0].mxu0
    %v6379 = vpop.f32.mrb[0].mxu0
    %v6380 = vadd.f32 %v6289, %v6379
    %v6381 = vpop.f32.mrb[0].mxu0
    %6382 = vmatprep.mubr.bf16.mxu0 0
    %6383 = vmatmul.mubr.bf16.gmra.mrb[0].mxu0 %v6312
    %v6384 = vpop.f32.mrb[0].mxu0
    %v6385 = vadd.f32 %v6289, %v6384
    %v6386 = vpop.f32.mrb[0].mxu0
    %v6387 = vpop.f32.mrb[0].mxu0
    %v6388 = vadd.f32 %v6289, %v6387
    %v6389 = vpop.f32.mrb[0].mxu0
    %6390 = vmatprep.mubr.bf16.mxu0 0
    %6391 = vmatmul.mubr.bf16.gmra.mrb[0].mxu0 %v6315
    %v6392 = vpop.f32.mrb[0].mxu0
    %v6393 = vadd.f32 %v6289, %v6392
    %v6394 = vpop.f32.mrb[0].mxu0
    %v6395 = vpop.f32.mrb[0].mxu0
    %v6396 = vadd.f32 %v6289, %v6395
    %v6397 = vpop.f32.mrb[0].mxu0
    %6398 = vmatprep.mubr.bf16.mxu0 0
    %6399 = vmatmul.mubr.bf16.gmra.mrb[0].mxu0 %v6318
    %v6400 = vpop.f32.mrb[0].mxu0
    %v6401 = vadd.f32 %v6289, %v6400
    %v6402 = vpop.f32.mrb[0].mxu0
    %v6403 = vpop.f32.mrb[0].mxu0
    %v6404 = vadd.f32 %v6289, %v6403
    %v6405 = vpop.f32.mrb[0].mxu0
    %6406 = vmatprep.mubr.bf16.mxu0 0
    %6407 = vmatmul.mubr.bf16.gmra.mrb[0].mxu0 %v6321
    %v6408 = vpop.f32.mrb[0].mxu0
    %v6409 = vadd.f32 %v6289, %v6408
    %v6410 = vpop.f32.mrb[0].mxu0
    %v6411 = vpop.f32.mrb[0].mxu0
    %v6412 = vadd.f32 %v6289, %v6411
    %v6413 = vpop.f32.mrb[0].mxu0
    %6414 = vmatprep.mubr.bf16.mxu0 0
    %6415 = vmatmul.mubr.bf16.gmra.mrb[0].mxu0 %v6324
    %v6416 = vpop.f32.mrb[0].mxu0
    %v6417 = vadd.f32 %v6289, %v6416
    %v6418 = vpop.f32.mrb[0].mxu0
    %v6419 = vpop.f32.mrb[0].mxu0
    %v6420 = vadd.f32 %v6289, %v6419
    %v6421 = vpop.f32.mrb[0].mxu0
    %6422 = vdwg.mxu0
    %v6423 = vmax.f32 %v6361, 0.0
    %v6424 = vmax.f32 %v6364, 0.0
    %v6425 = vmax.f32 %v6369, 0.0
    %v6426 = vmax.f32 %v6372, 0.0
    %v6427 = vmax.f32 %v6377, 0.0
    %v6428 = vmax.f32 %v6380, 0.0
    %v6429 = vmax.f32 %v6385, 0.0
    %v6430 = vmax.f32 %v6388, 0.0
    %v6431 = vmax.f32 %v6393, 0.0
    %v6432 = vmax.f32 %v6396, 0.0
    %v6433 = vmax.f32 %v6401, 0.0
    %v6434 = vmax.f32 %v6404, 0.0
    %v6435 = vmax.f32 %v6409, 0.0
    %v6436 = vmax.f32 %v6412, 0.0
    %v6437 = vmax.f32 %v6417, 0.0
    %v6438 = vmax.f32 %v6420, 0.0
    %s6439 = scalar_lea.vmem %s3, 32
    %v6440 = vld [vmem:[%s6439] sm:$0xf]
    %v6441 = vld [vmem:[%s6439 + $0x4] sm:$0xf]
    %v6442 = vld [vmem:[%s6439 + $0x8] sm:$0xf]
    %v6443 = vld [vmem:[%s6439 + $0xc] sm:$0xf]
    %v6444 = vpack.c.bf16 %v6424, %v6423
    %v6445 = vpack.c.bf16 %v6426, %v6425
    %v6446 = vpack.c.bf16 %v6428, %v6427
    %v6447 = vpack.c.bf16 %v6430, %v6429
    %v6448 = vpack.c.bf16 %v6432, %v6431
    %v6449 = vpack.c.bf16 %v6434, %v6433
    %v6450 = vpack.c.bf16 %v6436, %v6435
    %v6451 = vpack.c.bf16 %v6438, %v6437
    %v6452 = vlaneseq
    %v6453 = vshrl.u32 %v6452, 7
    %v6454 = vsub.s32 0, %v6453
    %v6455 = vrot.slane %v29, %v6454
    %v6460 = vunpack.c.l.b16 %v6440
    %v6461 = vunpack.c.l.b16 %v6441
    %v6462 = vunpack.c.l.b16 %v6442
    %v6463 = vunpack.c.l.b16 %v6443
    %v6464 = vpack.c.b16 %v6461, %v6460
    %v6465 = vpack.c.b16 %v6463, %v6462
    %v6469 = vsel %vm212, %v6444, 0
    %v6472 = vsel %vm212, %v6445, 0
    %v6475 = vsel %vm212, %v6446, 0
    %v6478 = vsel %vm212, %v6447, 0
    %v6481 = vsel %vm212, %v6448, 0
    %v6484 = vsel %vm212, %v6449, 0
    %v6487 = vsel %vm212, %v6450, 0
    %v6490 = vsel %vm212, %v6451, 0
    %6492 = vmatprep.subr.bf16.mxu0 0
    %6493 = vmatpush1.bf16.msra.mxu0 %v6464
    %6494 = vmatprep.subr.bf16.mxu0 0
    %6495 = vmatpush1.bf16.msra.mxu0 %v6465
    %6496 = vmatprep.subr.bf16.mxu0 0
    %6497 = vmatpush1.bf16.msra.mxu0 0
    %6498 = vmatprep.subr.bf16.mxu0 0
    %6499 = vmatpush1.bf16.msra.mxu0 0
    %6500 = vmatprep.subr.bf16.mxu0 0
    %6501 = vmatpush1.bf16.msra.mxu0 0
    %6502 = vmatprep.subr.bf16.mxu0 0
    %6503 = vmatpush1.bf16.msra.mxu0 0
    %6504 = vmatprep.subr.bf16.mxu0 0
    %6505 = vmatpush1.bf16.msra.mxu0 0
    %6506 = vmatprep.subr.bf16.mxu0 0
    %6507 = vmatpush1.bf16.msra.mxu0 0
    %6508 = vmatprep.subr.bf16.mxu0 0
    %6509 = vmatpush1.bf16.msra.mxu0 0
    %6510 = vmatprep.subr.bf16.mxu0 0
    %6511 = vmatpush1.bf16.msra.mxu0 0
    %6512 = vmatprep.subr.bf16.mxu0 0
    %6513 = vmatpush1.bf16.msra.mxu0 0
    %6514 = vmatprep.subr.bf16.mxu0 0
    %6515 = vmatpush1.bf16.msra.mxu0 0
    %6516 = vmatprep.subr.bf16.mxu0 0
    %6517 = vmatpush1.bf16.msra.mxu0 0
    %6518 = vmatprep.subr.bf16.mxu0 0
    %6519 = vmatpush1.bf16.msra.mxu0 0
    %6520 = vmatprep.subr.bf16.mxu0 0
    %6521 = vmatpush1.bf16.msra.mxu0 0
    %6522 = vmatprep.subr.bf16.mxu0 0
    %6523 = vmatpush1.bf16.msra.mxu0 0
    %6524 = vmatprep.mubr.bf16.mxu0 0
    %6525 = vmatmul.mubr.bf16.gmra.mrb[0].mxu0 %v6469
    %v6526 = vpop.f32.mrb[0].mxu0
    %v6527 = vadd.f32 %v6455, %v6526
    %v6528 = vpop.f32.mrb[0].mxu0
    %v6529 = vpop.f32.mrb[0].mxu0
    %v6530 = vadd.f32 %v6455, %v6529
    %v6531 = vpop.f32.mrb[0].mxu0
    %6532 = vmatprep.mubr.bf16.mxu0 0
    %6533 = vmatmul.mubr.bf16.gmra.mrb[0].mxu0 %v6472
    %v6534 = vpop.f32.mrb[0].mxu0
    %v6535 = vadd.f32 %v6455, %v6534
    %v6536 = vpop.f32.mrb[0].mxu0
    %v6537 = vpop.f32.mrb[0].mxu0
    %v6538 = vadd.f32 %v6455, %v6537
    %v6539 = vpop.f32.mrb[0].mxu0
    %6540 = vmatprep.mubr.bf16.mxu0 0
    %6541 = vmatmul.mubr.bf16.gmra.mrb[0].mxu0 %v6475
    %v6542 = vpop.f32.mrb[0].mxu0
    %v6543 = vadd.f32 %v6455, %v6542
    %v6544 = vpop.f32.mrb[0].mxu0
    %v6545 = vpop.f32.mrb[0].mxu0
    %v6546 = vadd.f32 %v6455, %v6545
    %v6547 = vpop.f32.mrb[0].mxu0
    %6548 = vmatprep.mubr.bf16.mxu0 0
    %6549 = vmatmul.mubr.bf16.gmra.mrb[0].mxu0 %v6478
    %v6550 = vpop.f32.mrb[0].mxu0
    %v6551 = vadd.f32 %v6455, %v6550
    %v6552 = vpop.f32.mrb[0].mxu0
    %v6553 = vpop.f32.mrb[0].mxu0
    %v6554 = vadd.f32 %v6455, %v6553
    %v6555 = vpop.f32.mrb[0].mxu0
    %6556 = vmatprep.mubr.bf16.mxu0 0
    %6557 = vmatmul.mubr.bf16.gmra.mrb[0].mxu0 %v6481
    %v6558 = vpop.f32.mrb[0].mxu0
    %v6559 = vadd.f32 %v6455, %v6558
    %v6560 = vpop.f32.mrb[0].mxu0
    %v6561 = vpop.f32.mrb[0].mxu0
    %v6562 = vadd.f32 %v6455, %v6561
    %v6563 = vpop.f32.mrb[0].mxu0
    %6564 = vmatprep.mubr.bf16.mxu0 0
    %6565 = vmatmul.mubr.bf16.gmra.mrb[0].mxu0 %v6484
    %v6566 = vpop.f32.mrb[0].mxu0
    %v6567 = vadd.f32 %v6455, %v6566
    %v6568 = vpop.f32.mrb[0].mxu0
    %v6569 = vpop.f32.mrb[0].mxu0
    %v6570 = vadd.f32 %v6455, %v6569
    %v6571 = vpop.f32.mrb[0].mxu0
    %6572 = vmatprep.mubr.bf16.mxu0 0
    %6573 = vmatmul.mubr.bf16.gmra.mrb[0].mxu0 %v6487
    %v6574 = vpop.f32.mrb[0].mxu0
    %v6575 = vadd.f32 %v6455, %v6574
    %v6576 = vpop.f32.mrb[0].mxu0
    %v6577 = vpop.f32.mrb[0].mxu0
    %v6578 = vadd.f32 %v6455, %v6577
    %v6579 = vpop.f32.mrb[0].mxu0
    %6580 = vmatprep.mubr.bf16.mxu0 0
    %6581 = vmatmul.mubr.bf16.gmra.mrb[0].mxu0 %v6490
    %v6582 = vpop.f32.mrb[0].mxu0
    %v6583 = vadd.f32 %v6455, %v6582
    %v6584 = vpop.f32.mrb[0].mxu0
    %v6585 = vpop.f32.mrb[0].mxu0
    %v6586 = vadd.f32 %v6455, %v6585
    %v6587 = vpop.f32.mrb[0].mxu0
    %6588 = vdwg.mxu0
    %v6589 = vadd.f32 %v6257, %v6527
    %v6590 = vadd.f32 %v6258, %v6530
    %v6591 = vadd.f32 %v6259, %v6535
    %v6592 = vadd.f32 %v6260, %v6538
    %v6593 = vadd.f32 %v6261, %v6543
    %v6594 = vadd.f32 %v6262, %v6546
    %v6595 = vadd.f32 %v6263, %v6551
    %v6596 = vadd.f32 %v6264, %v6554
    %v6597 = vadd.f32 %v6265, %v6559
    %v6598 = vadd.f32 %v6266, %v6562
    %v6599 = vadd.f32 %v6267, %v6567
    %v6600 = vadd.f32 %v6268, %v6570
    %v6601 = vadd.f32 %v6269, %v6575
    %v6602 = vadd.f32 %v6270, %v6578
    %v6603 = vadd.f32 %v6271, %v6583
    %v6604 = vadd.f32 %v6272, %v6586
    %v6605 = vsel %vm212, %v6589, 0.0
    %6606 = vadd.xlane.f32.xlu0 %v6605
    %v6607 = vpop.xlane.xlu0 %6606
    %v6608 = vsel %vm212, %v6590, 0.0
    %6609 = vadd.xlane.f32.xlu0 %v6608
    %v6610 = vpop.xlane.xlu0 %6609
    %v6611 = vsel %vm212, %v6591, 0.0
    %6612 = vadd.xlane.f32.xlu0 %v6611
    %v6613 = vpop.xlane.xlu0 %6612
    %v6614 = vsel %vm212, %v6592, 0.0
    %6615 = vadd.xlane.f32.xlu0 %v6614
    %v6616 = vpop.xlane.xlu0 %6615
    %v6617 = vsel %vm212, %v6593, 0.0
    %6618 = vadd.xlane.f32.xlu0 %v6617
    %v6619 = vpop.xlane.xlu0 %6618
    %v6620 = vsel %vm212, %v6594, 0.0
    %6621 = vadd.xlane.f32.xlu0 %v6620
    %v6622 = vpop.xlane.xlu0 %6621
    %v6623 = vsel %vm212, %v6595, 0.0
    %6624 = vadd.xlane.f32.xlu0 %v6623
    %v6625 = vpop.xlane.xlu0 %6624
    %v6626 = vsel %vm212, %v6596, 0.0
    %6627 = vadd.xlane.f32.xlu0 %v6626
    %v6628 = vpop.xlane.xlu0 %6627
    %v6629 = vsel %vm212, %v6597, 0.0
    %6630 = vadd.xlane.f32.xlu0 %v6629
    %v6631 = vpop.xlane.xlu0 %6630
    %v6632 = vsel %vm212, %v6598, 0.0
    %6633 = vadd.xlane.f32.xlu0 %v6632
    %v6634 = vpop.xlane.xlu0 %6633
    %v6635 = vsel %vm212, %v6599, 0.0
    %6636 = vadd.xlane.f32.xlu0 %v6635
    %v6637 = vpop.xlane.xlu0 %6636
    %v6638 = vsel %vm212, %v6600, 0.0
    %6639 = vadd.xlane.f32.xlu0 %v6638
    %v6640 = vpop.xlane.xlu0 %6639
    %v6641 = vsel %vm212, %v6601, 0.0
    %6642 = vadd.xlane.f32.xlu0 %v6641
    %v6643 = vpop.xlane.xlu0 %6642
    %v6644 = vsel %vm212, %v6602, 0.0
    %6645 = vadd.xlane.f32.xlu0 %v6644
    %v6646 = vpop.xlane.xlu0 %6645
    %v6647 = vsel %vm212, %v6603, 0.0
    %6648 = vadd.xlane.f32.xlu0 %v6647
    %v6649 = vpop.xlane.xlu0 %6648
    %v6650 = vsel %vm212, %v6604, 0.0
    %6651 = vadd.xlane.f32.xlu0 %v6650
    %v6652 = vpop.xlane.xlu0 %6651
    %v6653 = vmul.f32 %v6607, %v6072
    %v6654 = vmul.f32 %v6610, %v6072
    %v6655 = vmul.f32 %v6613, %v6072
    %v6656 = vmul.f32 %v6616, %v6072
    %v6657 = vmul.f32 %v6619, %v6072
    %v6658 = vmul.f32 %v6622, %v6072
    %v6659 = vmul.f32 %v6625, %v6072
    %v6660 = vmul.f32 %v6628, %v6072
    %v6661 = vmul.f32 %v6631, %v6072
    %v6662 = vmul.f32 %v6634, %v6072
    %v6663 = vmul.f32 %v6637, %v6072
    %v6664 = vmul.f32 %v6640, %v6072
    %v6665 = vmul.f32 %v6643, %v6072
    %v6666 = vmul.f32 %v6646, %v6072
    %v6667 = vmul.f32 %v6649, %v6072
    %v6668 = vmul.f32 %v6652, %v6072
    %v6669 = vsub.f32 %v6589, %v6653
    %v6670 = vsub.f32 %v6590, %v6654
    %v6671 = vsub.f32 %v6591, %v6655
    %v6672 = vsub.f32 %v6592, %v6656
    %v6673 = vsub.f32 %v6593, %v6657
    %v6674 = vsub.f32 %v6594, %v6658
    %v6675 = vsub.f32 %v6595, %v6659
    %v6676 = vsub.f32 %v6596, %v6660
    %v6677 = vsub.f32 %v6597, %v6661
    %v6678 = vsub.f32 %v6598, %v6662
    %v6679 = vsub.f32 %v6599, %v6663
    %v6680 = vsub.f32 %v6600, %v6664
    %v6681 = vsub.f32 %v6601, %v6665
    %v6682 = vsub.f32 %v6602, %v6666
    %v6683 = vsub.f32 %v6603, %v6667
    %v6684 = vsub.f32 %v6604, %v6668
    %v6685 = vmul.f32 %v6669, %v6669
    %v6686 = vmul.f32 %v6670, %v6670
    %v6687 = vmul.f32 %v6671, %v6671
    %v6688 = vmul.f32 %v6672, %v6672
    %v6689 = vmul.f32 %v6673, %v6673
    %v6690 = vmul.f32 %v6674, %v6674
    %v6691 = vmul.f32 %v6675, %v6675
    %v6692 = vmul.f32 %v6676, %v6676
    %v6693 = vmul.f32 %v6677, %v6677
    %v6694 = vmul.f32 %v6678, %v6678
    %v6695 = vmul.f32 %v6679, %v6679
    %v6696 = vmul.f32 %v6680, %v6680
    %v6697 = vmul.f32 %v6681, %v6681
    %v6698 = vmul.f32 %v6682, %v6682
    %v6699 = vmul.f32 %v6683, %v6683
    %v6700 = vmul.f32 %v6684, %v6684
    %v6701 = vsel %vm212, %v6685, 0.0
    %6702 = vadd.xlane.f32.xlu0 %v6701
    %v6703 = vpop.xlane.xlu0 %6702
    %v6704 = vsel %vm212, %v6686, 0.0
    %6705 = vadd.xlane.f32.xlu0 %v6704
    %v6706 = vpop.xlane.xlu0 %6705
    %v6707 = vsel %vm212, %v6687, 0.0
    %6708 = vadd.xlane.f32.xlu0 %v6707
    %v6709 = vpop.xlane.xlu0 %6708
    %v6710 = vsel %vm212, %v6688, 0.0
    %6711 = vadd.xlane.f32.xlu0 %v6710
    %v6712 = vpop.xlane.xlu0 %6711
    %v6713 = vsel %vm212, %v6689, 0.0
    %6714 = vadd.xlane.f32.xlu0 %v6713
    %v6715 = vpop.xlane.xlu0 %6714
    %v6716 = vsel %vm212, %v6690, 0.0
    %6717 = vadd.xlane.f32.xlu0 %v6716
    %v6718 = vpop.xlane.xlu0 %6717
    %v6719 = vsel %vm212, %v6691, 0.0
    %6720 = vadd.xlane.f32.xlu0 %v6719
    %v6721 = vpop.xlane.xlu0 %6720
    %v6722 = vsel %vm212, %v6692, 0.0
    %6723 = vadd.xlane.f32.xlu0 %v6722
    %v6724 = vpop.xlane.xlu0 %6723
    %v6725 = vsel %vm212, %v6693, 0.0
    %6726 = vadd.xlane.f32.xlu0 %v6725
    %v6727 = vpop.xlane.xlu0 %6726
    %v6728 = vsel %vm212, %v6694, 0.0
    %6729 = vadd.xlane.f32.xlu0 %v6728
    %v6730 = vpop.xlane.xlu0 %6729
    %v6731 = vsel %vm212, %v6695, 0.0
    %6732 = vadd.xlane.f32.xlu0 %v6731
    %v6733 = vpop.xlane.xlu0 %6732
    %v6734 = vsel %vm212, %v6696, 0.0
    %6735 = vadd.xlane.f32.xlu0 %v6734
    %v6736 = vpop.xlane.xlu0 %6735
    %v6737 = vsel %vm212, %v6697, 0.0
    %6738 = vadd.xlane.f32.xlu0 %v6737
    %v6739 = vpop.xlane.xlu0 %6738
    %v6740 = vsel %vm212, %v6698, 0.0
    %6741 = vadd.xlane.f32.xlu0 %v6740
    %v6742 = vpop.xlane.xlu0 %6741
    %v6743 = vsel %vm212, %v6699, 0.0
    %6744 = vadd.xlane.f32.xlu0 %v6743
    %v6745 = vpop.xlane.xlu0 %6744
    %v6746 = vsel %vm212, %v6700, 0.0
    %6747 = vadd.xlane.f32.xlu0 %v6746
    %v6748 = vpop.xlane.xlu0 %6747
    %v6749 = vmul.f32 %v6703, %v6072
    %v6750 = vmul.f32 %v6706, %v6072
    %v6751 = vmul.f32 %v6709, %v6072
    %v6752 = vmul.f32 %v6712, %v6072
    %v6753 = vmul.f32 %v6715, %v6072
    %v6754 = vmul.f32 %v6718, %v6072
    %v6755 = vmul.f32 %v6721, %v6072
    %v6756 = vmul.f32 %v6724, %v6072
    %v6757 = vmul.f32 %v6727, %v6072
    %v6758 = vmul.f32 %v6730, %v6072
    %v6759 = vmul.f32 %v6733, %v6072
    %v6760 = vmul.f32 %v6736, %v6072
    %v6761 = vmul.f32 %v6739, %v6072
    %v6762 = vmul.f32 %v6742, %v6072
    %v6763 = vmul.f32 %v6745, %v6072
    %v6764 = vmul.f32 %v6748, %v6072
    %v6765 = vadd.f32 %v6749, 1e-05
    %v6766 = vadd.f32 %v6750, 1e-05
    %v6767 = vadd.f32 %v6751, 1e-05
    %v6768 = vadd.f32 %v6752, 1e-05
    %v6769 = vadd.f32 %v6753, 1e-05
    %v6770 = vadd.f32 %v6754, 1e-05
    %v6771 = vadd.f32 %v6755, 1e-05
    %v6772 = vadd.f32 %v6756, 1e-05
    %v6773 = vadd.f32 %v6757, 1e-05
    %v6774 = vadd.f32 %v6758, 1e-05
    %v6775 = vadd.f32 %v6759, 1e-05
    %v6776 = vadd.f32 %v6760, 1e-05
    %v6777 = vadd.f32 %v6761, 1e-05
    %v6778 = vadd.f32 %v6762, 1e-05
    %v6779 = vadd.f32 %v6763, 1e-05
    %v6780 = vadd.f32 %v6764, 1e-05
    %v6781 = vrsqrt.pop %v6765
    %v6782 = vrsqrt.pop %v6766
    %v6783 = vrsqrt.pop %v6767
    %v6784 = vrsqrt.pop %v6768
    %v6785 = vrsqrt.pop %v6769
    %v6786 = vrsqrt.pop %v6770
    %v6787 = vrsqrt.pop %v6771
    %v6788 = vrsqrt.pop %v6772
    %v6789 = vrsqrt.pop %v6773
    %v6790 = vrsqrt.pop %v6774
    %v6791 = vrsqrt.pop %v6775
    %v6792 = vrsqrt.pop %v6776
    %v6793 = vrsqrt.pop %v6777
    %v6794 = vrsqrt.pop %v6778
    %v6795 = vrsqrt.pop %v6779
    %v6796 = vrsqrt.pop %v6780
    %v6797 = vmul.f32 %v6669, %v6781
    %v6798 = vmul.f32 %v6670, %v6782
    %v6799 = vmul.f32 %v6671, %v6783
    %v6800 = vmul.f32 %v6672, %v6784
    %v6801 = vmul.f32 %v6673, %v6785
    %v6802 = vmul.f32 %v6674, %v6786
    %v6803 = vmul.f32 %v6675, %v6787
    %v6804 = vmul.f32 %v6676, %v6788
    %v6805 = vmul.f32 %v6677, %v6789
    %v6806 = vmul.f32 %v6678, %v6790
    %v6807 = vmul.f32 %v6679, %v6791
    %v6808 = vmul.f32 %v6680, %v6792
    %v6809 = vmul.f32 %v6681, %v6793
    %v6810 = vmul.f32 %v6682, %v6794
    %v6811 = vmul.f32 %v6683, %v6795
    %v6812 = vmul.f32 %v6684, %v6796
    %v6813 = vlaneseq
    %v6814 = vshrl.u32 %v6813, 7
    %v6815 = vsub.s32 1, %v6814
    %v6816 = vrot.slane %v29, %v6815
    %v6817 = vmul.f32 %v6797, %v6816
    %v6818 = vmul.f32 %v6798, %v6816
    %v6819 = vmul.f32 %v6799, %v6816
    %v6820 = vmul.f32 %v6800, %v6816
    %v6821 = vmul.f32 %v6801, %v6816
    %v6822 = vmul.f32 %v6802, %v6816
    %v6823 = vmul.f32 %v6803, %v6816
    %v6824 = vmul.f32 %v6804, %v6816
    %v6825 = vmul.f32 %v6805, %v6816
    %v6826 = vmul.f32 %v6806, %v6816
    %v6827 = vmul.f32 %v6807, %v6816
    %v6828 = vmul.f32 %v6808, %v6816
    %v6829 = vmul.f32 %v6809, %v6816
    %v6830 = vmul.f32 %v6810, %v6816
    %v6831 = vmul.f32 %v6811, %v6816
    %v6832 = vmul.f32 %v6812, %v6816
    %v6833 = vlaneseq
    %v6834 = vshrl.u32 %v6833, 7
    %v6835 = vsub.s32 2, %v6834
    %v6836 = vrot.slane %v29, %v6835
    %v6837 = vadd.f32 %v6817, %v6836
    %v6838 = vadd.f32 %v6818, %v6836
    %v6839 = vadd.f32 %v6819, %v6836
    %v6840 = vadd.f32 %v6820, %v6836
    %v6841 = vadd.f32 %v6821, %v6836
    %v6842 = vadd.f32 %v6822, %v6836
    %v6843 = vadd.f32 %v6823, %v6836
    %v6844 = vadd.f32 %v6824, %v6836
    %v6845 = vadd.f32 %v6825, %v6836
    %v6846 = vadd.f32 %v6826, %v6836
    %v6847 = vadd.f32 %v6827, %v6836
    %v6848 = vadd.f32 %v6828, %v6836
    %v6849 = vadd.f32 %v6829, %v6836
    %v6850 = vadd.f32 %v6830, %v6836
    %v6851 = vadd.f32 %v6831, %v6836
    %v6852 = vadd.f32 %v6832, %v6836
    %vm6853 = vcmp.gt.f32.partialorder %v6837, 0.0
    %vm6854 = vcmp.gt.f32.partialorder %v6838, 0.0
    %vm6855 = vcmp.gt.f32.partialorder %v6839, 0.0
    %vm6856 = vcmp.gt.f32.partialorder %v6840, 0.0
    %vm6857 = vcmp.gt.f32.partialorder %v6841, 0.0
    %vm6858 = vcmp.gt.f32.partialorder %v6842, 0.0
    %vm6859 = vcmp.gt.f32.partialorder %v6843, 0.0
    %vm6860 = vcmp.gt.f32.partialorder %v6844, 0.0
    %vm6861 = vcmp.gt.f32.partialorder %v6845, 0.0
    %vm6862 = vcmp.gt.f32.partialorder %v6846, 0.0
    %vm6863 = vcmp.gt.f32.partialorder %v6847, 0.0
    %vm6864 = vcmp.gt.f32.partialorder %v6848, 0.0
    %vm6865 = vcmp.gt.f32.partialorder %v6849, 0.0
    %vm6866 = vcmp.gt.f32.partialorder %v6850, 0.0
    %vm6867 = vcmp.gt.f32.partialorder %v6851, 0.0
    %vm6868 = vcmp.gt.f32.partialorder %v6852, 0.0
    %v6869 = vmul.f32 %v6837, 0.01
    %v6870 = vmul.f32 %v6838, 0.01
    %v6871 = vmul.f32 %v6839, 0.01
    %v6872 = vmul.f32 %v6840, 0.01
    %v6873 = vmul.f32 %v6841, 0.01
    %v6874 = vmul.f32 %v6842, 0.01
    %v6875 = vmul.f32 %v6843, 0.01
    %v6876 = vmul.f32 %v6844, 0.01
    %v6877 = vmul.f32 %v6845, 0.01
    %v6878 = vmul.f32 %v6846, 0.01
    %v6879 = vmul.f32 %v6847, 0.01
    %v6880 = vmul.f32 %v6848, 0.01
    %v6881 = vmul.f32 %v6849, 0.01
    %v6882 = vmul.f32 %v6850, 0.01
    %v6883 = vmul.f32 %v6851, 0.01
    %v6884 = vmul.f32 %v6852, 0.01
    %v6885 = vsel %vm6853, %v6837, %v6869
    %v6886 = vsel %vm6854, %v6838, %v6870
    %v6887 = vsel %vm6855, %v6839, %v6871
    %v6888 = vsel %vm6856, %v6840, %v6872
    %v6889 = vsel %vm6857, %v6841, %v6873
    %v6890 = vsel %vm6858, %v6842, %v6874
    %v6891 = vsel %vm6859, %v6843, %v6875
    %v6892 = vsel %vm6860, %v6844, %v6876
    %v6893 = vsel %vm6861, %v6845, %v6877
    %v6894 = vsel %vm6862, %v6846, %v6878
    %v6895 = vsel %vm6863, %v6847, %v6879
    %v6896 = vsel %vm6864, %v6848, %v6880
    %v6897 = vsel %vm6865, %v6849, %v6881
    %v6898 = vsel %vm6866, %v6850, %v6882
    %v6899 = vsel %vm6867, %v6851, %v6883
    %v6900 = vsel %vm6868, %v6852, %v6884
    %s6901 = scalar_lea.vmem %s3, 48
    %v6902 = vld [vmem:[%s6901] sm:$0xf]
    %v6903 = vld [vmem:[%s6901 + $0x4] sm:$0xf]
    %v6904 = vld [vmem:[%s6901 + $0x8] sm:$0xf]
    %v6905 = vld [vmem:[%s6901 + $0xc] sm:$0xf]
    %v6906 = vpack.c.bf16 %v6886, %v6885
    %v6907 = vpack.c.bf16 %v6888, %v6887
    %v6908 = vpack.c.bf16 %v6890, %v6889
    %v6909 = vpack.c.bf16 %v6892, %v6891
    %v6910 = vpack.c.bf16 %v6894, %v6893
    %v6911 = vpack.c.bf16 %v6896, %v6895
    %v6912 = vpack.c.bf16 %v6898, %v6897
    %v6913 = vpack.c.bf16 %v6900, %v6899
    %v6914 = vlaneseq
    %v6915 = vshrl.u32 %v6914, 7
    %v6916 = vsub.s32 3, %v6915
    %v6917 = vrot.slane %v29, %v6916
    %v6922 = vunpack.c.l.b16 %v6902
    %v6923 = vunpack.c.l.b16 %v6903
    %v6924 = vunpack.c.l.b16 %v6904
    %v6925 = vunpack.c.l.b16 %v6905
    %v6926 = vpack.c.b16 %v6923, %v6922
    %v6927 = vpack.c.b16 %v6925, %v6924
    %v6931 = vsel %vm212, %v6906, 0
    %v6934 = vsel %vm212, %v6907, 0
    %v6937 = vsel %vm212, %v6908, 0
    %v6940 = vsel %vm212, %v6909, 0
    %v6943 = vsel %vm212, %v6910, 0
    %v6946 = vsel %vm212, %v6911, 0
    %v6949 = vsel %vm212, %v6912, 0
    %v6952 = vsel %vm212, %v6913, 0
    %6954 = vmatprep.subr.bf16.mxu0 0
    %6955 = vmatpush1.bf16.msra.mxu0 %v6926
    %6956 = vmatprep.subr.bf16.mxu0 0
    %6957 = vmatpush1.bf16.msra.mxu0 %v6927
    %6958 = vmatprep.subr.bf16.mxu0 0
    %6959 = vmatpush1.bf16.msra.mxu0 0
    %6960 = vmatprep.subr.bf16.mxu0 0
    %6961 = vmatpush1.bf16.msra.mxu0 0
    %6962 = vmatprep.subr.bf16.mxu0 0
    %6963 = vmatpush1.bf16.msra.mxu0 0
    %6964 = vmatprep.subr.bf16.mxu0 0
    %6965 = vmatpush1.bf16.msra.mxu0 0
    %6966 = vmatprep.subr.bf16.mxu0 0
    %6967 = vmatpush1.bf16.msra.mxu0 0
    %6968 = vmatprep.subr.bf16.mxu0 0
    %6969 = vmatpush1.bf16.msra.mxu0 0
    %6970 = vmatprep.subr.bf16.mxu0 0
    %6971 = vmatpush1.bf16.msra.mxu0 0
    %6972 = vmatprep.subr.bf16.mxu0 0
    %6973 = vmatpush1.bf16.msra.mxu0 0
    %6974 = vmatprep.subr.bf16.mxu0 0
    %6975 = vmatpush1.bf16.msra.mxu0 0
    %6976 = vmatprep.subr.bf16.mxu0 0
    %6977 = vmatpush1.bf16.msra.mxu0 0
    %6978 = vmatprep.subr.bf16.mxu0 0
    %6979 = vmatpush1.bf16.msra.mxu0 0
    %6980 = vmatprep.subr.bf16.mxu0 0
    %6981 = vmatpush1.bf16.msra.mxu0 0
    %6982 = vmatprep.subr.bf16.mxu0 0
    %6983 = vmatpush1.bf16.msra.mxu0 0
    %6984 = vmatprep.subr.bf16.mxu0 0
    %6985 = vmatpush1.bf16.msra.mxu0 0
    %6986 = vmatprep.mubr.bf16.mxu0 0
    %6987 = vmatmul.mubr.bf16.gmra.mrb[0].mxu0 %v6931
    %v6988 = vpop.f32.mrb[0].mxu0
    %v6989 = vadd.f32 %v6917, %v6988
    %v6990 = vpop.f32.mrb[0].mxu0
    %v6991 = vpop.f32.mrb[0].mxu0
    %v6992 = vadd.f32 %v6917, %v6991
    %v6993 = vpop.f32.mrb[0].mxu0
    %6994 = vmatprep.mubr.bf16.mxu0 0
    %6995 = vmatmul.mubr.bf16.gmra.mrb[0].mxu0 %v6934
    %v6996 = vpop.f32.mrb[0].mxu0
    %v6997 = vadd.f32 %v6917, %v6996
    %v6998 = vpop.f32.mrb[0].mxu0
    %v6999 = vpop.f32.mrb[0].mxu0
    %v7000 = vadd.f32 %v6917, %v6999
    %v7001 = vpop.f32.mrb[0].mxu0
    %7002 = vmatprep.mubr.bf16.mxu0 0
    %7003 = vmatmul.mubr.bf16.gmra.mrb[0].mxu0 %v6937
    %v7004 = vpop.f32.mrb[0].mxu0
    %v7005 = vadd.f32 %v6917, %v7004
    %v7006 = vpop.f32.mrb[0].mxu0
    %v7007 = vpop.f32.mrb[0].mxu0
    %v7008 = vadd.f32 %v6917, %v7007
    %v7009 = vpop.f32.mrb[0].mxu0
    %7010 = vmatprep.mubr.bf16.mxu0 0
    %7011 = vmatmul.mubr.bf16.gmra.mrb[0].mxu0 %v6940
    %v7012 = vpop.f32.mrb[0].mxu0
    %v7013 = vadd.f32 %v6917, %v7012
    %v7014 = vpop.f32.mrb[0].mxu0
    %v7015 = vpop.f32.mrb[0].mxu0
    %v7016 = vadd.f32 %v6917, %v7015
    %v7017 = vpop.f32.mrb[0].mxu0
    %7018 = vmatprep.mubr.bf16.mxu0 0
    %7019 = vmatmul.mubr.bf16.gmra.mrb[0].mxu0 %v6943
    %v7020 = vpop.f32.mrb[0].mxu0
    %v7021 = vadd.f32 %v6917, %v7020
    %v7022 = vpop.f32.mrb[0].mxu0
    %v7023 = vpop.f32.mrb[0].mxu0
    %v7024 = vadd.f32 %v6917, %v7023
    %v7025 = vpop.f32.mrb[0].mxu0
    %7026 = vmatprep.mubr.bf16.mxu0 0
    %7027 = vmatmul.mubr.bf16.gmra.mrb[0].mxu0 %v6946
    %v7028 = vpop.f32.mrb[0].mxu0
    %v7029 = vadd.f32 %v6917, %v7028
    %v7030 = vpop.f32.mrb[0].mxu0
    %v7031 = vpop.f32.mrb[0].mxu0
    %v7032 = vadd.f32 %v6917, %v7031
    %v7033 = vpop.f32.mrb[0].mxu0
    %7034 = vmatprep.mubr.bf16.mxu0 0
    %7035 = vmatmul.mubr.bf16.gmra.mrb[0].mxu0 %v6949
    %v7036 = vpop.f32.mrb[0].mxu0
    %v7037 = vadd.f32 %v6917, %v7036
    %v7038 = vpop.f32.mrb[0].mxu0
    %v7039 = vpop.f32.mrb[0].mxu0
    %v7040 = vadd.f32 %v6917, %v7039
    %v7041 = vpop.f32.mrb[0].mxu0
    %7042 = vmatprep.mubr.bf16.mxu0 0
    %7043 = vmatmul.mubr.bf16.gmra.mrb[0].mxu0 %v6952
    %v7044 = vpop.f32.mrb[0].mxu0
    %v7045 = vadd.f32 %v6917, %v7044
    %v7046 = vpop.f32.mrb[0].mxu0
    %v7047 = vpop.f32.mrb[0].mxu0
    %v7048 = vadd.f32 %v6917, %v7047
    %v7049 = vpop.f32.mrb[0].mxu0
    %7050 = vdwg.mxu0
    %vm7051 = vcmp.gt.f32.partialorder %v6989, 0.0
    %vm7052 = vcmp.gt.f32.partialorder %v6992, 0.0
    %vm7053 = vcmp.gt.f32.partialorder %v6997, 0.0
    %vm7054 = vcmp.gt.f32.partialorder %v7000, 0.0
    %vm7055 = vcmp.gt.f32.partialorder %v7005, 0.0
    %vm7056 = vcmp.gt.f32.partialorder %v7008, 0.0
    %vm7057 = vcmp.gt.f32.partialorder %v7013, 0.0
    %vm7058 = vcmp.gt.f32.partialorder %v7016, 0.0
    %vm7059 = vcmp.gt.f32.partialorder %v7021, 0.0
    %vm7060 = vcmp.gt.f32.partialorder %v7024, 0.0
    %vm7061 = vcmp.gt.f32.partialorder %v7029, 0.0
    %vm7062 = vcmp.gt.f32.partialorder %v7032, 0.0
    %vm7063 = vcmp.gt.f32.partialorder %v7037, 0.0
    %vm7064 = vcmp.gt.f32.partialorder %v7040, 0.0
    %vm7065 = vcmp.gt.f32.partialorder %v7045, 0.0
    %vm7066 = vcmp.gt.f32.partialorder %v7048, 0.0
    %v7067 = vmul.f32 %v6989, 0.01
    %v7068 = vmul.f32 %v6992, 0.01
    %v7069 = vmul.f32 %v6997, 0.01
    %v7070 = vmul.f32 %v7000, 0.01
    %v7071 = vmul.f32 %v7005, 0.01
    %v7072 = vmul.f32 %v7008, 0.01
    %v7073 = vmul.f32 %v7013, 0.01
    %v7074 = vmul.f32 %v7016, 0.01
    %v7075 = vmul.f32 %v7021, 0.01
    %v7076 = vmul.f32 %v7024, 0.01
    %v7077 = vmul.f32 %v7029, 0.01
    %v7078 = vmul.f32 %v7032, 0.01
    %v7079 = vmul.f32 %v7037, 0.01
    %v7080 = vmul.f32 %v7040, 0.01
    %v7081 = vmul.f32 %v7045, 0.01
    %v7082 = vmul.f32 %v7048, 0.01
    %v7083 = vsel %vm7051, %v6989, %v7067
    %v7084 = vsel %vm7052, %v6992, %v7068
    %v7085 = vsel %vm7053, %v6997, %v7069
    %v7086 = vsel %vm7054, %v7000, %v7070
    %v7087 = vsel %vm7055, %v7005, %v7071
    %v7088 = vsel %vm7056, %v7008, %v7072
    %v7089 = vsel %vm7057, %v7013, %v7073
    %v7090 = vsel %vm7058, %v7016, %v7074
    %v7091 = vsel %vm7059, %v7021, %v7075
    %v7092 = vsel %vm7060, %v7024, %v7076
    %v7093 = vsel %vm7061, %v7029, %v7077
    %v7094 = vsel %vm7062, %v7032, %v7078
    %v7095 = vsel %vm7063, %v7037, %v7079
    %v7096 = vsel %vm7064, %v7040, %v7080
    %v7097 = vsel %vm7065, %v7045, %v7081
    %v7098 = vsel %vm7066, %v7048, %v7082
    %v7099 = vadd.f32 %v6885, %v7083
    %v7100 = vadd.f32 %v6886, %v7084
    %v7101 = vadd.f32 %v6887, %v7085
    %v7102 = vadd.f32 %v6888, %v7086
    %v7103 = vadd.f32 %v6889, %v7087
    %v7104 = vadd.f32 %v6890, %v7088
    %v7105 = vadd.f32 %v6891, %v7089
    %v7106 = vadd.f32 %v6892, %v7090
    %v7107 = vadd.f32 %v6893, %v7091
    %v7108 = vadd.f32 %v6894, %v7092
    %v7109 = vadd.f32 %v6895, %v7093
    %v7110 = vadd.f32 %v6896, %v7094
    %v7111 = vadd.f32 %v6897, %v7095
    %v7112 = vadd.f32 %v6898, %v7096
    %v7113 = vadd.f32 %v6899, %v7097
    %v7114 = vadd.f32 %v6900, %v7098
    %s7115 = scalar_lea.vmem %s3, 64
    %v7116 = vld [vmem:[%s7115] sm:$0xf]
    %v7117 = vld [vmem:[%s7115 + $0x4] sm:$0xf]
    %v7118 = vld [vmem:[%s7115 + $0x8] sm:$0xf]
    %v7119 = vld [vmem:[%s7115 + $0xc] sm:$0xf]
    %v7120 = vpack.c.bf16 %v7100, %v7099
    %v7121 = vpack.c.bf16 %v7102, %v7101
    %v7122 = vpack.c.bf16 %v7104, %v7103
    %v7123 = vpack.c.bf16 %v7106, %v7105
    %v7124 = vpack.c.bf16 %v7108, %v7107
    %v7125 = vpack.c.bf16 %v7110, %v7109
    %v7126 = vpack.c.bf16 %v7112, %v7111
    %v7127 = vpack.c.bf16 %v7114, %v7113
    %v7128 = vlaneseq
    %v7129 = vshrl.u32 %v7128, 7
    %v7130 = vsub.s32 4, %v7129
    %v7131 = vrot.slane %v29, %v7130
    %v7136 = vunpack.c.l.b16 %v7116
    %v7137 = vunpack.c.l.b16 %v7117
    %v7138 = vunpack.c.l.b16 %v7118
    %v7139 = vunpack.c.l.b16 %v7119
    %v7140 = vpack.c.b16 %v7137, %v7136
    %v7141 = vpack.c.b16 %v7139, %v7138
    %v7145 = vsel %vm212, %v7120, 0
    %v7148 = vsel %vm212, %v7121, 0
    %v7151 = vsel %vm212, %v7122, 0
    %v7154 = vsel %vm212, %v7123, 0
    %v7157 = vsel %vm212, %v7124, 0
    %v7160 = vsel %vm212, %v7125, 0
    %v7163 = vsel %vm212, %v7126, 0
    %v7166 = vsel %vm212, %v7127, 0
    %7168 = vmatprep.subr.bf16.mxu0 0
    %7169 = vmatpush1.bf16.msra.mxu0 %v7140
    %7170 = vmatprep.subr.bf16.mxu0 0
    %7171 = vmatpush1.bf16.msra.mxu0 %v7141
    %7172 = vmatprep.subr.bf16.mxu0 0
    %7173 = vmatpush1.bf16.msra.mxu0 0
    %7174 = vmatprep.subr.bf16.mxu0 0
    %7175 = vmatpush1.bf16.msra.mxu0 0
    %7176 = vmatprep.subr.bf16.mxu0 0
    %7177 = vmatpush1.bf16.msra.mxu0 0
    %7178 = vmatprep.subr.bf16.mxu0 0
    %7179 = vmatpush1.bf16.msra.mxu0 0
    %7180 = vmatprep.subr.bf16.mxu0 0
    %7181 = vmatpush1.bf16.msra.mxu0 0
    %7182 = vmatprep.subr.bf16.mxu0 0
    %7183 = vmatpush1.bf16.msra.mxu0 0
    %7184 = vmatprep.subr.bf16.mxu0 0
    %7185 = vmatpush1.bf16.msra.mxu0 0
    %7186 = vmatprep.subr.bf16.mxu0 0
    %7187 = vmatpush1.bf16.msra.mxu0 0
    %7188 = vmatprep.subr.bf16.mxu0 0
    %7189 = vmatpush1.bf16.msra.mxu0 0
    %7190 = vmatprep.subr.bf16.mxu0 0
    %7191 = vmatpush1.bf16.msra.mxu0 0
    %7192 = vmatprep.subr.bf16.mxu0 0
    %7193 = vmatpush1.bf16.msra.mxu0 0
    %7194 = vmatprep.subr.bf16.mxu0 0
    %7195 = vmatpush1.bf16.msra.mxu0 0
    %7196 = vmatprep.subr.bf16.mxu0 0
    %7197 = vmatpush1.bf16.msra.mxu0 0
    %7198 = vmatprep.subr.bf16.mxu0 0
    %7199 = vmatpush1.bf16.msra.mxu0 0
    %7200 = vmatprep.mubr.bf16.mxu0 0
    %7201 = vmatmul.mubr.bf16.gmra.mrb[0].mxu0 %v7145
    %v7202 = vpop.f32.mrb[0].mxu0
    %v7203 = vadd.f32 %v7131, %v7202
    %v7204 = vpop.f32.mrb[0].mxu0
    %v7205 = vpop.f32.mrb[0].mxu0
    %v7206 = vadd.f32 %v7131, %v7205
    %v7207 = vpop.f32.mrb[0].mxu0
    %7208 = vmatprep.mubr.bf16.mxu0 0
    %7209 = vmatmul.mubr.bf16.gmra.mrb[0].mxu0 %v7148
    %v7210 = vpop.f32.mrb[0].mxu0
    %v7211 = vadd.f32 %v7131, %v7210
    %v7212 = vpop.f32.mrb[0].mxu0
    %v7213 = vpop.f32.mrb[0].mxu0
    %v7214 = vadd.f32 %v7131, %v7213
    %v7215 = vpop.f32.mrb[0].mxu0
    %7216 = vmatprep.mubr.bf16.mxu0 0
    %7217 = vmatmul.mubr.bf16.gmra.mrb[0].mxu0 %v7151
    %v7218 = vpop.f32.mrb[0].mxu0
    %v7219 = vadd.f32 %v7131, %v7218
    %v7220 = vpop.f32.mrb[0].mxu0
    %v7221 = vpop.f32.mrb[0].mxu0
    %v7222 = vadd.f32 %v7131, %v7221
    %v7223 = vpop.f32.mrb[0].mxu0
    %7224 = vmatprep.mubr.bf16.mxu0 0
    %7225 = vmatmul.mubr.bf16.gmra.mrb[0].mxu0 %v7154
    %v7226 = vpop.f32.mrb[0].mxu0
    %v7227 = vadd.f32 %v7131, %v7226
    %v7228 = vpop.f32.mrb[0].mxu0
    %v7229 = vpop.f32.mrb[0].mxu0
    %v7230 = vadd.f32 %v7131, %v7229
    %v7231 = vpop.f32.mrb[0].mxu0
    %7232 = vmatprep.mubr.bf16.mxu0 0
    %7233 = vmatmul.mubr.bf16.gmra.mrb[0].mxu0 %v7157
    %v7234 = vpop.f32.mrb[0].mxu0
    %v7235 = vadd.f32 %v7131, %v7234
    %v7236 = vpop.f32.mrb[0].mxu0
    %v7237 = vpop.f32.mrb[0].mxu0
    %v7238 = vadd.f32 %v7131, %v7237
    %v7239 = vpop.f32.mrb[0].mxu0
    %7240 = vmatprep.mubr.bf16.mxu0 0
    %7241 = vmatmul.mubr.bf16.gmra.mrb[0].mxu0 %v7160
    %v7242 = vpop.f32.mrb[0].mxu0
    %v7243 = vadd.f32 %v7131, %v7242
    %v7244 = vpop.f32.mrb[0].mxu0
    %v7245 = vpop.f32.mrb[0].mxu0
    %v7246 = vadd.f32 %v7131, %v7245
    %v7247 = vpop.f32.mrb[0].mxu0
    %7248 = vmatprep.mubr.bf16.mxu0 0
    %7249 = vmatmul.mubr.bf16.gmra.mrb[0].mxu0 %v7163
    %v7250 = vpop.f32.mrb[0].mxu0
    %v7251 = vadd.f32 %v7131, %v7250
    %v7252 = vpop.f32.mrb[0].mxu0
    %v7253 = vpop.f32.mrb[0].mxu0
    %v7254 = vadd.f32 %v7131, %v7253
    %v7255 = vpop.f32.mrb[0].mxu0
    %7256 = vmatprep.mubr.bf16.mxu0 0
    %7257 = vmatmul.mubr.bf16.gmra.mrb[0].mxu0 %v7166
    %v7258 = vpop.f32.mrb[0].mxu0
    %v7259 = vadd.f32 %v7131, %v7258
    %v7260 = vpop.f32.mrb[0].mxu0
    %v7261 = vpop.f32.mrb[0].mxu0
    %v7262 = vadd.f32 %v7131, %v7261
    %v7263 = vpop.f32.mrb[0].mxu0
    %7264 = vdwg.mxu0
    %vm7265 = vcmp.gt.f32.partialorder %v7203, 0.0
    %vm7266 = vcmp.gt.f32.partialorder %v7206, 0.0
    %vm7267 = vcmp.gt.f32.partialorder %v7211, 0.0
    %vm7268 = vcmp.gt.f32.partialorder %v7214, 0.0
    %vm7269 = vcmp.gt.f32.partialorder %v7219, 0.0
    %vm7270 = vcmp.gt.f32.partialorder %v7222, 0.0
    %vm7271 = vcmp.gt.f32.partialorder %v7227, 0.0
    %vm7272 = vcmp.gt.f32.partialorder %v7230, 0.0
    %vm7273 = vcmp.gt.f32.partialorder %v7235, 0.0
    %vm7274 = vcmp.gt.f32.partialorder %v7238, 0.0
    %vm7275 = vcmp.gt.f32.partialorder %v7243, 0.0
    %vm7276 = vcmp.gt.f32.partialorder %v7246, 0.0
    %vm7277 = vcmp.gt.f32.partialorder %v7251, 0.0
    %vm7278 = vcmp.gt.f32.partialorder %v7254, 0.0
    %vm7279 = vcmp.gt.f32.partialorder %v7259, 0.0
    %vm7280 = vcmp.gt.f32.partialorder %v7262, 0.0
    %v7281 = vmul.f32 %v7203, 0.01
    %v7282 = vmul.f32 %v7206, 0.01
    %v7283 = vmul.f32 %v7211, 0.01
    %v7284 = vmul.f32 %v7214, 0.01
    %v7285 = vmul.f32 %v7219, 0.01
    %v7286 = vmul.f32 %v7222, 0.01
    %v7287 = vmul.f32 %v7227, 0.01
    %v7288 = vmul.f32 %v7230, 0.01
    %v7289 = vmul.f32 %v7235, 0.01
    %v7290 = vmul.f32 %v7238, 0.01
    %v7291 = vmul.f32 %v7243, 0.01
    %v7292 = vmul.f32 %v7246, 0.01
    %v7293 = vmul.f32 %v7251, 0.01
    %v7294 = vmul.f32 %v7254, 0.01
    %v7295 = vmul.f32 %v7259, 0.01
    %v7296 = vmul.f32 %v7262, 0.01
    %v7297 = vsel %vm7265, %v7203, %v7281
    %v7298 = vsel %vm7266, %v7206, %v7282
    %v7299 = vsel %vm7267, %v7211, %v7283
    %v7300 = vsel %vm7268, %v7214, %v7284
    %v7301 = vsel %vm7269, %v7219, %v7285
    %v7302 = vsel %vm7270, %v7222, %v7286
    %v7303 = vsel %vm7271, %v7227, %v7287
    %v7304 = vsel %vm7272, %v7230, %v7288
    %v7305 = vsel %vm7273, %v7235, %v7289
    %v7306 = vsel %vm7274, %v7238, %v7290
    %v7307 = vsel %vm7275, %v7243, %v7291
    %v7308 = vsel %vm7276, %v7246, %v7292
    %v7309 = vsel %vm7277, %v7251, %v7293
    %v7310 = vsel %vm7278, %v7254, %v7294
    %v7311 = vsel %vm7279, %v7259, %v7295
    %v7312 = vsel %vm7280, %v7262, %v7296
    %v7313 = vadd.f32 %v7099, %v7297
    %v7314 = vadd.f32 %v7100, %v7298
    %v7315 = vadd.f32 %v7101, %v7299
    %v7316 = vadd.f32 %v7102, %v7300
    %v7317 = vadd.f32 %v7103, %v7301
    %v7318 = vadd.f32 %v7104, %v7302
    %v7319 = vadd.f32 %v7105, %v7303
    %v7320 = vadd.f32 %v7106, %v7304
    %v7321 = vadd.f32 %v7107, %v7305
    %v7322 = vadd.f32 %v7108, %v7306
    %v7323 = vadd.f32 %v7109, %v7307
    %v7324 = vadd.f32 %v7110, %v7308
    %v7325 = vadd.f32 %v7111, %v7309
    %v7326 = vadd.f32 %v7112, %v7310
    %v7327 = vadd.f32 %v7113, %v7311
    %v7328 = vadd.f32 %v7114, %v7312
    %v7329 = vld [vmem:[%s5] sm:$0xf]
    %v7330 = vld [vmem:[%s5 + $0x4] sm:$0xf]
    %v7331 = vld [vmem:[%s5 + $0x8] sm:$0xf]
    %v7332 = vld [vmem:[%s5 + $0xc] sm:$0xf]
    %v7333 = vld [vmem:[%s6] sm:$0x1]
    %v7334 = vpack.c.bf16 %v7314, %v7313
    %v7335 = vpack.c.bf16 %v7316, %v7315
    %v7336 = vpack.c.bf16 %v7318, %v7317
    %v7337 = vpack.c.bf16 %v7320, %v7319
    %v7338 = vpack.c.bf16 %v7322, %v7321
    %v7339 = vpack.c.bf16 %v7324, %v7323
    %v7340 = vpack.c.bf16 %v7326, %v7325
    %v7341 = vpack.c.bf16 %v7328, %v7327
    %v7343 = vlaneseq
    %v7344 = vshrl.u32 %v7343, 7
    %v7345 = vsub.s32 0, %v7344
    %v7346 = vrot.slane %v7333, %v7345
    %v7352 = vunpack.c.l.b16 %v7329
    %v7353 = vunpack.c.l.b16 %v7330
    %v7354 = vunpack.c.l.b16 %v7331
    %v7355 = vunpack.c.l.b16 %v7332
    %v7356 = vpack.c.b16 %v7353, %v7352
    %v7357 = vpack.c.b16 %v7355, %v7354
    %v7361 = vsel %vm212, %v7334, 0
    %v7364 = vsel %vm212, %v7335, 0
    %v7367 = vsel %vm212, %v7336, 0
    %v7370 = vsel %vm212, %v7337, 0
    %v7373 = vsel %vm212, %v7338, 0
    %v7376 = vsel %vm212, %v7339, 0
    %v7379 = vsel %vm212, %v7340, 0
    %v7382 = vsel %vm212, %v7341, 0
    %7384 = vmatprep.subr.bf16.mxu0 0
    %7385 = vmatpush1.bf16.msra.mxu0 %v7356
    %7386 = vmatprep.subr.bf16.mxu0 0
    %7387 = vmatpush1.bf16.msra.mxu0 %v7357
    %7388 = vmatprep.subr.bf16.mxu0 0
    %7389 = vmatpush1.bf16.msra.mxu0 0
    %7390 = vmatprep.subr.bf16.mxu0 0
    %7391 = vmatpush1.bf16.msra.mxu0 0
    %7392 = vmatprep.subr.bf16.mxu0 0
    %7393 = vmatpush1.bf16.msra.mxu0 0
    %7394 = vmatprep.subr.bf16.mxu0 0
    %7395 = vmatpush1.bf16.msra.mxu0 0
    %7396 = vmatprep.subr.bf16.mxu0 0
    %7397 = vmatpush1.bf16.msra.mxu0 0
    %7398 = vmatprep.subr.bf16.mxu0 0
    %7399 = vmatpush1.bf16.msra.mxu0 0
    %7400 = vmatprep.subr.bf16.mxu0 0
    %7401 = vmatpush1.bf16.msra.mxu0 0
    %7402 = vmatprep.subr.bf16.mxu0 0
    %7403 = vmatpush1.bf16.msra.mxu0 0
    %7404 = vmatprep.subr.bf16.mxu0 0
    %7405 = vmatpush1.bf16.msra.mxu0 0
    %7406 = vmatprep.subr.bf16.mxu0 0
    %7407 = vmatpush1.bf16.msra.mxu0 0
    %7408 = vmatprep.subr.bf16.mxu0 0
    %7409 = vmatpush1.bf16.msra.mxu0 0
    %7410 = vmatprep.subr.bf16.mxu0 0
    %7411 = vmatpush1.bf16.msra.mxu0 0
    %7412 = vmatprep.subr.bf16.mxu0 0
    %7413 = vmatpush1.bf16.msra.mxu0 0
    %7414 = vmatprep.subr.bf16.mxu0 0
    %7415 = vmatpush1.bf16.msra.mxu0 0
    %7416 = vmatprep.mubr.bf16.mxu0 0
    %7417 = vmatmul.mubr.bf16.gmra.mrb[0].mxu0 %v7361
    %v7418 = vpop.f32.mrb[0].mxu0
    %v7419 = vadd.f32 %v7346, %v7418
    %v7420 = vpop.f32.mrb[0].mxu0
    %v7421 = vpop.f32.mrb[0].mxu0
    %v7422 = vadd.f32 %v7346, %v7421
    %v7423 = vpop.f32.mrb[0].mxu0
    %7424 = vmatprep.mubr.bf16.mxu0 0
    %7425 = vmatmul.mubr.bf16.gmra.mrb[0].mxu0 %v7364
    %v7426 = vpop.f32.mrb[0].mxu0
    %v7427 = vadd.f32 %v7346, %v7426
    %v7428 = vpop.f32.mrb[0].mxu0
    %v7429 = vpop.f32.mrb[0].mxu0
    %v7430 = vadd.f32 %v7346, %v7429
    %v7431 = vpop.f32.mrb[0].mxu0
    %7432 = vmatprep.mubr.bf16.mxu0 0
    %7433 = vmatmul.mubr.bf16.gmra.mrb[0].mxu0 %v7367
    %v7434 = vpop.f32.mrb[0].mxu0
    %v7435 = vadd.f32 %v7346, %v7434
    %v7436 = vpop.f32.mrb[0].mxu0
    %v7437 = vpop.f32.mrb[0].mxu0
    %v7438 = vadd.f32 %v7346, %v7437
    %v7439 = vpop.f32.mrb[0].mxu0
    %7440 = vmatprep.mubr.bf16.mxu0 0
    %7441 = vmatmul.mubr.bf16.gmra.mrb[0].mxu0 %v7370
    %v7442 = vpop.f32.mrb[0].mxu0
    %v7443 = vadd.f32 %v7346, %v7442
    %v7444 = vpop.f32.mrb[0].mxu0
    %v7445 = vpop.f32.mrb[0].mxu0
    %v7446 = vadd.f32 %v7346, %v7445
    %v7447 = vpop.f32.mrb[0].mxu0
    %7448 = vmatprep.mubr.bf16.mxu0 0
    %7449 = vmatmul.mubr.bf16.gmra.mrb[0].mxu0 %v7373
    %v7450 = vpop.f32.mrb[0].mxu0
    %v7451 = vadd.f32 %v7346, %v7450
    %v7452 = vpop.f32.mrb[0].mxu0
    %v7453 = vpop.f32.mrb[0].mxu0
    %v7454 = vadd.f32 %v7346, %v7453
    %v7455 = vpop.f32.mrb[0].mxu0
    %7456 = vmatprep.mubr.bf16.mxu0 0
    %7457 = vmatmul.mubr.bf16.gmra.mrb[0].mxu0 %v7376
    %v7458 = vpop.f32.mrb[0].mxu0
    %v7459 = vadd.f32 %v7346, %v7458
    %v7460 = vpop.f32.mrb[0].mxu0
    %v7461 = vpop.f32.mrb[0].mxu0
    %v7462 = vadd.f32 %v7346, %v7461
    %v7463 = vpop.f32.mrb[0].mxu0
    %7464 = vmatprep.mubr.bf16.mxu0 0
    %7465 = vmatmul.mubr.bf16.gmra.mrb[0].mxu0 %v7379
    %v7466 = vpop.f32.mrb[0].mxu0
    %v7467 = vadd.f32 %v7346, %v7466
    %v7468 = vpop.f32.mrb[0].mxu0
    %v7469 = vpop.f32.mrb[0].mxu0
    %v7470 = vadd.f32 %v7346, %v7469
    %v7471 = vpop.f32.mrb[0].mxu0
    %7472 = vmatprep.mubr.bf16.mxu0 0
    %7473 = vmatmul.mubr.bf16.gmra.mrb[0].mxu0 %v7382
    %v7474 = vpop.f32.mrb[0].mxu0
    %v7475 = vadd.f32 %v7346, %v7474
    %v7476 = vpop.f32.mrb[0].mxu0
    %v7477 = vpop.f32.mrb[0].mxu0
    %v7478 = vadd.f32 %v7346, %v7477
    %v7479 = vpop.f32.mrb[0].mxu0
    %7480 = vdwg.mxu0
    %7481 = vst [vmem:[#allocation2] sm:$0xff] %v7419
    %7482 = vst [vmem:[#allocation2 + $0x8] sm:$0xff] %v7422
    %7483 = vst [vmem:[#allocation2 + $0x10] sm:$0xff] %v7427
    %7484 = vst [vmem:[#allocation2 + $0x18] sm:$0xff] %v7430
    %7485 = vst [vmem:[#allocation2 + $0x20] sm:$0xff] %v7435
    %7486 = vst [vmem:[#allocation2 + $0x28] sm:$0xff] %v7438
    %7487 = vst [vmem:[#allocation2 + $0x30] sm:$0xff] %v7443
    %7488 = vst [vmem:[#allocation2 + $0x38] sm:$0xff] %v7446
    %7489 = vst [vmem:[#allocation2 + $0x40] sm:$0xff] %v7451
    %7490 = vst [vmem:[#allocation2 + $0x48] sm:$0xff] %v7454
    %7491 = vst [vmem:[#allocation2 + $0x50] sm:$0xff] %v7459
    %7492 = vst [vmem:[#allocation2 + $0x58] sm:$0xff] %v7462
    %7493 = vst [vmem:[#allocation2 + $0x60] sm:$0xff] %v7467
    %7494 = vst [vmem:[#allocation2 + $0x68] sm:$0xff] %v7470
    %7495 = vst [vmem:[#allocation2 + $0x70] sm:$0xff] %v7475
    %7496 = vst [vmem:[#allocation2 + $0x78] sm:$0xff] %v7478
    // Predicated region
    $region30: #{tpu_custom_call.1} parent=1 // pred_check
      _
    $region31: #{tpu_custom_call.1} parent=1 // pred_check_branch
      %7498 = sbr.rel (0) target = $region33
    $region32: #{tpu_custom_call.1} parent=1 // pred_region
      %s7500 = ssub.s32 2048, 2048
      %7501 = vsyncadd [#allocation3], %s7500
      %s7502 = sshll.u32 [#allocation2], 4
      %s7503 = int_to_ptr.vmem [resolvable:$true] %s7502
      %7508 = dma.vmem_to_hbm [thread:$0]  %s7503, 2048, %s7, [#allocation3], 128, 128, 8
    $region33: #{tpu_custom_call.1} parent=1 // pred_fallthru
      _
    // Predicated region
    $region34: #{tpu_custom_call.1} parent=1 // pred_check
      _
    $region35: #{tpu_custom_call.1} parent=1 // pred_check_branch
      %7510 = sbr.rel (0) target = $region37
    $region36: #{tpu_custom_call.1} parent=1 // pred_region
      %7511 = dma.done [#allocation3], 2048
    $region37: #{tpu_custom_call.1} parent=1 // pred_fallthru
      _
    %7512 = vsyncpa [#allocation3], 1

</llo_original>
